<compile_context>
chip_gen: v5e
topology: v5e:2x2
jax: 0.10.0
libtpu: 0.0.40
codegen_flags: <defaults>
</compile_context>

<pallas_src>
import math
import jax
import jax.numpy as jnp
from jax.experimental import pallas as pl
from jax.experimental.pallas import tpu as pltpu

# -------------------- configuration (ESPNet-C, small input) ----------------
LAYERS = [0, 3, 4]
CHANNELS = [19, 131, 256]
INIT_BLOCK_CHANNELS = 16
CUT_X = [1, 1, 0]
IN_CHANNELS = 3
NUM_CLASSES = 19
BN_EPS = 1e-5
DILATIONS = [1, 2, 4, 8, 16]
LANE = 128
_TM_CANDIDATES = (512, 256, 128, 64, 32, 16)


def _round_up(x, m):
    return ((x + m - 1) // m) * m


def _pick_tile(m):
    for t in _TM_CANDIDATES:
        if m % t == 0:
            return t
    return m  # m is always a multiple of 16 here, so this never triggers


# ------------------------------ Pallas kernels ------------------------------
def _mm_plain_kernel(a_ref, w_ref, o_ref):
    """Plain matmul, no epilogue (reduce convs)."""
    o_ref[...] = jnp.dot(a_ref[...], w_ref[...],
                         preferred_element_type=jnp.float32).astype(o_ref.dtype)


def _make_fused_kernel(has_residual):
    """Accumulating matmul over the branch grid axis with a fused
    shift + PReLU epilogue.  BN scale is pre-folded into the weights; the
    hierarchical adds + channel concat are pre-baked into the replicated /
    offset weight columns, so plain accumulation over b reproduces the whole
    ESP block.  With has_residual, the accumulator is seeded with scale*x."""
    def kernel(*refs):
        if has_residual:
            a_ref, w_ref, ssa_ref, res_ref, o_ref, acc_ref = refs
        else:
            a_ref, w_ref, ssa_ref, o_ref, acc_ref = refs
        b = pl.program_id(1)

        @pl.when(b == 0)
        def _():
            if has_residual:
                acc_ref[...] = res_ref[...].astype(jnp.float32) * ssa_ref[0:1, :]
            else:
                acc_ref[...] = jnp.zeros_like(acc_ref)

        acc_ref[...] += jnp.dot(a_ref[...], w_ref[...],
                                preferred_element_type=jnp.float32)

        @pl.when(b == pl.num_programs(1) - 1)
        def _():
            y = acc_ref[...] + ssa_ref[1:2, :]                      # folded-BN shift
            o_ref[...] = jnp.where(y > 0, y, ssa_ref[2:3, :] * y).astype(o_ref.dtype)

    return kernel


def _bn_prelu_kernel(x_ref, ssa_ref, o_ref):
    """Standalone inference BatchNorm + per-channel PReLU (stage NormActivation)."""
    y = x_ref[...].astype(jnp.float32) * ssa_ref[0:1, :] + ssa_ref[1:2, :]
    o_ref[...] = jnp.where(y > 0, y, ssa_ref[2:3, :] * y).astype(o_ref.dtype)


def _mm_normact_kernel(a_ref, ssa_ref, w_ref, o_ref):
    """BN + PReLU on the A operand fused with a 1x1 conv (the head)."""
    y = a_ref[...].astype(jnp.float32) * ssa_ref[0:1, :] + ssa_ref[1:2, :]
    y = jnp.where(y > 0, y, ssa_ref[2:3, :] * y)
    o_ref[...] = jnp.dot(y.astype(jnp.bfloat16), w_ref[...],
                         preferred_element_type=jnp.float32).astype(o_ref.dtype)


# ------------------------------ kernel wrappers ------------------------------
def _matmul_plain(a, w, out_dtype):
    """a: (M, KP) -> bf16, w: (KP, NP) bf16.  Returns (M, NP) out_dtype."""
    a = a.astype(jnp.bfloat16)
    M, KP = a.shape
    NP = w.shape[-1]
    Mp = _round_up(M, 16)
    if Mp != M:
        a = jnp.pad(a, ((0, Mp - M), (0, 0)))
    tm = _pick_tile(Mp)
    out = pl.pallas_call(
        _mm_plain_kernel,
        out_shape=jax.ShapeDtypeStruct((Mp, NP), out_dtype),
        grid_spec=pltpu.PrefetchScalarGridSpec(
            num_scalar_prefetch=0,
            grid=(Mp // tm,),
            in_specs=[pl.BlockSpec((tm, KP), lambda i: (i, 0)),
                      pl.BlockSpec((KP, NP), lambda i: (0, 0))],
            out_specs=pl.BlockSpec((tm, NP), lambda i: (i, 0))),
        compiler_params=pltpu.CompilerParams(dimension_semantics=("parallel",)),
    )(a, w)
    return out[:M] if Mp != M else out


def _matmul_fused(a_b, w_b, ssa, res, out_dtype):
    """a_b: (B, M, KP) bf16; w_b: (B, KP, NP) bf16 (scale-folded, offset columns);
    ssa: (3, NP) f32 = (scale-for-residual, shift, alpha); res: (M, NP) or None.
    Returns prelu(sum_b a_b@w_b [+ scale*res] + shift) as (M, NP) out_dtype."""
    a_b = a_b.astype(jnp.bfloat16)
    B, M, KP = a_b.shape
    NP = w_b.shape[-1]
    Mp = _round_up(M, 16)
    if Mp != M:
        a_b = jnp.pad(a_b, ((0, 0), (0, Mp - M), (0, 0)))
        if res is not None:
            res = jnp.pad(res, ((0, Mp - M), (0, 0)))
    tm = _pick_tile(Mp)
    has_res = res is not None

    in_specs = [pl.BlockSpec((None, tm, KP), lambda i, b: (b, i, 0)),
                pl.BlockSpec((None, KP, NP), lambda i, b: (b, 0, 0)),
                pl.BlockSpec((3, NP), lambda i, b: (0, 0))]
    args = [a_b, w_b, ssa]
    if has_res:
        in_specs.append(pl.BlockSpec((tm, NP), lambda i, b: (i, 0)))
        args.append(res.astype(jnp.bfloat16))

    out = pl.pallas_call(
        _make_fused_kernel(has_res),
        out_shape=jax.ShapeDtypeStruct((Mp, NP), out_dtype),
        grid_spec=pltpu.PrefetchScalarGridSpec(
            num_scalar_prefetch=0,
            grid=(Mp // tm, B),
            in_specs=in_specs,
            out_specs=pl.BlockSpec((tm, NP), lambda i, b: (i, 0)),
            scratch_shapes=[pltpu.VMEM((tm, NP), jnp.float32)]),
        compiler_params=pltpu.CompilerParams(
            dimension_semantics=("parallel", "arbitrary")),
    )(*args)
    return out[:M] if Mp != M else out


def _bn_prelu(x2d, ssa):
    """x2d: (M, C); ssa: (3, C) f32.  Full-channel blocks (no lane padding)."""
    x2d = x2d.astype(jnp.bfloat16)
    M, C = x2d.shape
    Mp = _round_up(M, 16)
    if Mp != M:
        x2d = jnp.pad(x2d, ((0, Mp - M), (0, 0)))
    tm = _pick_tile(Mp)
    out = pl.pallas_call(
        _bn_prelu_kernel,
        out_shape=jax.ShapeDtypeStruct((Mp, C), jnp.bfloat16),
        grid_spec=pltpu.PrefetchScalarGridSpec(
            num_scalar_prefetch=0,
            grid=(Mp // tm,),
            in_specs=[pl.BlockSpec((tm, C), lambda i: (i, 0)),
                      pl.BlockSpec((3, C), lambda i: (0, 0))],
            out_specs=pl.BlockSpec((tm, C), lambda i: (i, 0))),
        compiler_params=pltpu.CompilerParams(dimension_semantics=("parallel",)),
    )(x2d, ssa)
    return out[:M] if Mp != M else out


def _matmul_normact(a, ssa, w, out_dtype):
    """prelu(a*scale+shift) @ w : the last stage's NormActivation fused into
    the 1x1 head conv."""
    M, C = a.shape
    KP, NP = w.shape
    if KP != C:
        a = jnp.pad(a, ((0, 0), (0, KP - C)))
        ssa = jnp.pad(ssa, ((0, 0), (0, KP - C)))
    a = a.astype(jnp.bfloat16)
    Mp = _round_up(M, 16)
    if Mp != M:
        a = jnp.pad(a, ((0, Mp - M), (0, 0)))
    tm = _pick_tile(Mp)
    out = pl.pallas_call(
        _mm_normact_kernel,
        out_shape=jax.ShapeDtypeStruct((Mp, NP), out_dtype),
        grid_spec=pltpu.PrefetchScalarGridSpec(
            num_scalar_prefetch=0,
            grid=(Mp // tm,),
            in_specs=[pl.BlockSpec((tm, KP), lambda i: (i, 0)),
                      pl.BlockSpec((3, KP), lambda i: (0, 0)),
                      pl.BlockSpec((KP, NP), lambda i: (0, 0))],
            out_specs=pl.BlockSpec((tm, NP), lambda i: (i, 0))),
        compiler_params=pltpu.CompilerParams(dimension_semantics=("parallel",)),
    )(a, ssa, w)
    return out[:M] if Mp != M else out


# ------------------------------ layer wrappers ------------------------------
def _im2col(x, kh, kw, stride, pad, dil):
    """x: (N, H, W, C) -> ((N*Ho*Wo, kh*kw*C), Ho, Wo).  XLA glue (fused in jit)."""
    N, H, W, C = x.shape
    Ho = (H + 2 * pad - dil * (kh - 1) - 1) // stride + 1
    Wo = (W + 2 * pad - dil * (kw - 1) - 1) // stride + 1
    xp = jnp.pad(x, ((0, 0), (pad, pad), (pad, pad), (0, 0)))
    patches = []
    for i in range(kh):
        for j in range(kw):
            h0, w0 = i * dil, j * dil
            patches.append(xp[:, h0:h0 + (Ho - 1) * stride + 1:stride,
                               w0:w0 + (Wo - 1) * stride + 1:stride, :])
    a = jnp.stack(patches, axis=3).reshape(N * Ho * Wo, kh * kw * C)
    return a, Ho, Wo


def _pad_k(a, KP):
    K = a.shape[-1]
    if K == KP:
        return a
    return jnp.pad(a, ((0, 0), (0, KP - K)))


def _esp_branches(pp, y_slab, N, H, W, cout, res_slab):
    """5 dilated 3x3 branch convs + hierarchical adds + concat + residual +
    BN + PReLU, all inside ONE accumulating pallas_call."""
    mid_b = cout // 5
    y = y_slab[:, :mid_b].reshape(N, H, W, mid_b)
    KP = pp['branch_w'].shape[1]
    a_list = [_pad_k(_im2col(y, 3, 3, 1, d, d)[0], KP) for d in DILATIONS]
    a_b = jnp.stack(a_list, axis=0)
    return _matmul_fused(a_b, pp['branch_w'], pp['ssa'], res_slab, jnp.bfloat16)


def esp_block_down(pp, x_nhwc, cout):
    """ESPBlock(downsample=True, residual=False).  Returns a (M, 128n) bf16
    channel slab (padded columns are exact zeros) plus output spatial dims."""
    N = x_nhwc.shape[0]
    a, Ho, Wo = _im2col(x_nhwc.astype(jnp.bfloat16), 3, 3, 2, 1, 1)
    a = _pad_k(a, pp['reduce_w'].shape[0])
    y_slab = _matmul_plain(a, pp['reduce_w'], jnp.bfloat16)
    return _esp_branches(pp, y_slab, N, Ho, Wo, cout, None), Ho, Wo


def esp_block_res(pp, slab, N, H, W, cout):
    """ESPBlock(downsample=False, residual=True).  The input slab is fed
    directly as the 1x1 reduce-conv A operand (K already lane padded) and as
    the residual of the fused branch kernel."""
    y_slab = _matmul_plain(slab, pp['reduce_w'], jnp.bfloat16)
    return _esp_branches(pp, y_slab, N, H, W, cout, slab)


def esp_unit_fwd(pp, x_nhwc, cout_unit):
    N = x_nhwc.shape[0]
    mid = cout_unit // 2
    y_slab, Ho, Wo = esp_block_down(pp['down'], x_nhwc, mid)
    z_slab = y_slab
    for bp in pp['blocks']:
        z_slab = esp_block_res(bp, z_slab, N, Ho, Wo, mid)
    out2d = jnp.concatenate([z_slab[:, :mid], y_slab[:, :mid]], axis=-1)
    return out2d, Ho, Wo


def avg_pool_3x3_s2_p1(x):
    # PyTorch AvgPool2d(3, stride=2, padding=1), count_include_pad=True (/9).
    # TODO(synk): kept as XLA glue (3-channel image branch, tiny / mem-bound).
    N, H, W, C = x.shape
    Ho, Wo = (H + 2 - 3) // 2 + 1, (W + 2 - 3) // 2 + 1
    xp = jnp.pad(x, ((0, 0), (1, 1), (1, 1), (0, 0)))
    acc = jnp.zeros((N, Ho, Wo, C), jnp.float32)
    for i in range(3):
        for j in range(3):
            acc = acc + xp[:, i:i + (Ho - 1) * 2 + 1:2, j:j + (Wo - 1) * 2 + 1:2, :]
    return acc / 9.0


def espcnet_forward(pp, x_nchw):
    N = x_nchw.shape[0]
    in_h, in_w = x_nchw.shape[2], x_nchw.shape[3]
    x = jnp.transpose(x_nchw, (0, 2, 3, 1)).astype(jnp.float32)     # NCHW -> NHWC

    # init block: conv3x3 s2 + (folded-BN) + PReLU, one fused pallas_call
    a, H_cur, W_cur = _im2col(x.astype(jnp.bfloat16), 3, 3, 2, 1, 1)
    a = _pad_k(a, pp['init_w'].shape[1])[None]                      # (1, M, KP)
    y_slab = _matmul_fused(a, pp['init_w'], pp['init_ssa'], None, jnp.bfloat16)
    y2d = y_slab[:, :INIT_BLOCK_CHANNELS]                           # (M, 16)

    x_branch = x                                                    # f32 image branch
    n_stages = len(LAYERS)
    last_ssa = None
    for i, (layers_i, y_out, cut) in enumerate(zip(LAYERS, CHANNELS, CUT_X)):
        sp = pp['stages'][i]
        if layers_i > 0:
            y_nhwc = y2d.reshape(N, H_cur, W_cur, -1)
            cout_unit = y_out - (IN_CHANNELS if cut == 1 else 0)
            y2d, H_cur, W_cur = esp_unit_fwd(sp['unit'], y_nhwc, cout_unit)
        if cut == 1:
            x_branch = avg_pool_3x3_s2_p1(x_branch)
            xb = x_branch.reshape(N * H_cur * W_cur, IN_CHANNELS).astype(jnp.bfloat16)
            y2d = jnp.concatenate([y2d, xb], axis=-1)
        if i < n_stages - 1:
            y2d = _bn_prelu(y2d, sp['ssa'])                         # stage NormActivation
        else:
            last_ssa = sp['ssa']   # fused into the head conv below

    # head: (last NormActivation + conv1x1) fused into one pallas_call
    out = _matmul_normact(y2d, last_ssa, pp['head_w'], jnp.float32)  # (M, 128)
    y = out[:, :NUM_CLASSES].reshape(N, H_cur, W_cur, NUM_CLASSES)
    y = jnp.transpose(y, (0, 3, 1, 2))                               # NHWC -> NCHW
    # TODO(synk): bilinear x8 upsampling kept in plain JAX (jax.image.resize,
    # half-pixel centers == PyTorch align_corners=False) rather than Pallas.
    y = jax.image.resize(y, (N, NUM_CLASSES, in_h, in_w), method='bilinear')
    return y


espcnet_forward_jit = jax.jit(espcnet_forward)


# ------------------------- raw parameter init -------------------------------
class KeyGen:
    def __init__(self, seed):
        self._key = jax.random.PRNGKey(seed)

    def __call__(self):
        self._key, sub = jax.random.split(self._key)
        return sub


def init_conv(kg, cin, cout, k):
    # kaiming_uniform_ default: bound = sqrt(6 / fan_in)
    bound = math.sqrt(6.0 / (cin * k * k))
    return jax.random.uniform(kg(), (cout, cin, k, k), jnp.float32, -bound, bound)


def init_norm_act(kg, c):
    return {
        'gamma': jax.random.uniform(kg(), (c,), jnp.float32, 0.5, 1.5),
        'beta': jax.random.uniform(kg(), (c,), jnp.float32, -0.1, 0.1),
        'mean': jax.random.uniform(kg(), (c,), jnp.float32, -0.1, 0.1),
        'var': jax.random.uniform(kg(), (c,), jnp.float32, 0.5, 1.5),
        'alpha': jnp.full((c,), 0.25, jnp.float32),   # PReLU default init
    }


def init_esp_block(kg, cin, cout, downsample):
    mid = cout // 5
    extra = cout - 4 * mid
    p = {'reduce_w': init_conv(kg, cin, mid, 3 if downsample else 1)}
    p['branches'] = [init_conv(kg, mid, extra if i == 0 else mid, 3)
                     for i in range(len(DILATIONS))]
    p['na'] = init_norm_act(kg, cout)
    return p


def init_esp_unit(kg, cin, cout, layers):
    mid = cout // 2
    return {
        'down': init_esp_block(kg, cin, mid, downsample=True),
        'blocks': [init_esp_block(kg, mid, mid, downsample=False)
                   for _ in range(layers - 1)],
    }


def init_params(seed=42):
    kg = KeyGen(seed)
    params = {
        'init_w': init_conv(kg, IN_CHANNELS, INIT_BLOCK_CHANNELS, 3),
        'init_na': init_norm_act(kg, INIT_BLOCK_CHANNELS),
        'stages': [],
    }
    y_in = INIT_BLOCK_CHANNELS
    for layers_i, y_out, cut in zip(LAYERS, CHANNELS, CUT_X):
        x_ch = IN_CHANNELS if cut == 1 else 0
        sp = {}
        if layers_i > 0:
            sp['unit'] = init_esp_unit(kg, y_in, y_out - x_ch, layers_i)
        sp['na'] = init_norm_act(kg, y_out)
        params['stages'].append(sp)
        y_in = y_out
    params['head_w'] = init_conv(kg, y_in, NUM_CLASSES, 1)
    return params


# ---------------- parameter preparation (done ONCE, outside jit) -------------
def _fold_bn(na):
    scale = na['gamma'] / jnp.sqrt(na['var'] + BN_EPS)
    shift = na['beta'] - na['mean'] * scale
    return scale, shift, na['alpha']


def _prep_plain_w(w):
    """(cout, cin, kh, kw) PyTorch conv weight -> (KP, NP) bf16 matmul weight."""
    cout, cin, kh, kw = w.shape
    K = kh * kw * cin
    KP = _round_up(K, LANE)
    NP = _round_up(cout, LANE)
    m = jnp.transpose(w, (2, 3, 1, 0)).reshape(K, cout)
    return jnp.pad(m, ((0, KP - K), (0, NP - cout))).astype(jnp.bfloat16)


def _prep_ssa(scale, shift, alpha, width):
    c = scale.shape[0]
    pad = (0, width - c)
    return jnp.stack([jnp.pad(scale, pad), jnp.pad(shift, pad),
                      jnp.pad(alpha, pad)], axis=0).astype(jnp.float32)


def _prep_block(raw):
    """One ESPBlock: plain reduce-conv weight; 5 dilated branch weights with
    (a) the HierarchicalConcurrent(exclude_first=True) adds + channel concat
    baked in as replicated / offset output columns, and (b) the block BN scale
    folded in; plus the packed (scale, shift, alpha) epilogue rows."""
    scale, shift, alpha = _fold_bn(raw['na'])
    cout = scale.shape[0]
    mid_b = cout // 5
    extra = cout - 4 * mid_b
    widths = [extra] + [mid_b] * 4
    offs = [0]
    for wd in widths[:-1]:
        offs.append(offs[-1] + wd)
    NP = _round_up(cout, LANE)
    K = 9 * mid_b
    KP = _round_up(K, LANE)
    mats = []
    for b, w in enumerate(raw['branches']):
        m = jnp.transpose(w, (2, 3, 1, 0)).reshape(K, widths[b])
        full = jnp.zeros((KP, NP), jnp.float32)
        groups = [0] if b == 0 else list(range(b, len(widths)))
        for g in groups:
            full = full.at[:K, offs[g]:offs[g] + widths[g]].set(m)
        mats.append(full)
    scale_pad = jnp.pad(scale, (0, NP - cout))
    branch_w = (jnp.stack(mats, axis=0) * scale_pad[None, None, :]).astype(jnp.bfloat16)
    return {'reduce_w': _prep_plain_w(raw['reduce_w']),
            'branch_w': branch_w,
            'ssa': _prep_ssa(scale, shift, alpha, NP)}


def _prep_unit(raw):
    return {'down': _prep_block(raw['down']),
            'blocks': [_prep_block(b) for b in raw['blocks']]}


def prepare_params(raw):
    pp = {'stages': []}
    # init block: fold BN scale into the conv weight
    s, sh, al = _fold_bn(raw['init_na'])
    init_w = _prep_plain_w(raw['init_w'] * s[:, None, None, None])
    pp['init_w'] = init_w[None]                                     # (1, KP, NP)
    pp['init_ssa'] = _prep_ssa(jnp.zeros_like(s), sh, al, init_w.shape[-1])
    for sp_raw in raw['stages']:
        sp = {}
        s, sh, al = _fold_bn(sp_raw['na'])
        sp['ssa'] = jnp.stack([s, sh, al], axis=0).astype(jnp.float32)   # (3, C)
        if 'unit' in sp_raw:
            sp['unit'] = _prep_unit(sp_raw['unit'])
        pp['stages'].append(sp)
    pp['head_w'] = _prep_plain_w(raw['head_w'])
    return pp


# ----------------------------------- main ------------------------------------
if __name__ == "__main__":
    raw_params = init_params(seed=42)
    pp = prepare_params(raw_params)       # pre-transpose / pad / fold / bf16 once
    x = jax.random.normal(jax.random.PRNGKey(0), (2, 3, 32, 32), jnp.float32)
    out = espcnet_forward_jit(pp, x)
    out = jax.block_until_ready(out)
    assert out.shape == (2, NUM_CLASSES, 32, 32), out.shape
    assert bool(jnp.all(jnp.isfinite(out)))
    print("KERNEL_OK")
</pallas_src>

<mosaic_0001>
module attributes {stable_mosaic.version = 11 : i64} {
  func.func @kernel(%arg0: i32, %arg1: i32, %arg2: memref<1x512x128xbf16, #tpu.memory_space<vmem>>, %arg3: memref<1x128x128xbf16, #tpu.memory_space<vmem>>, %arg4: memref<3x128xf32, #tpu.memory_space<vmem>>, %arg5: memref<512x128xbf16, #tpu.memory_space<vmem>>, %arg6: memref<512x128xf32, #tpu.memory_space<vmem>>) attributes {dimension_semantics = [#tpu.dimension_semantics<parallel>, #tpu.dimension_semantics<arbitrary>], iteration_bounds = array<i64: 1, 1>, scalar_prefetch = 0 : i64, scratch_operands = 1 : i64, tpu.core_type = #tpu.core_type<tc>, window_params = [{transform_indices = @transform_0, window_bounds = array<i64: 1, 512, 128>}, {transform_indices = @transform_1, window_bounds = array<i64: 1, 128, 128>}, {pipeline_mode = #tpu.pipeline_mode<synchronous>, transform_indices = @transform_2, window_bounds = array<i64: 3, 128>}, {transform_indices = @transform_3, window_bounds = array<i64: 512, 128>}]} {
    %c0_i32 = arith.constant 0 : i32
    %0 = arith.cmpi eq, %arg1, %c0_i32 : i32
    %1 = arith.extui %0 : i1 to i32
    %c0_i32_0 = arith.constant 0 : i32
    %2 = arith.cmpi ne, %1, %c0_i32_0 : i32
    scf.if %2 {
      %cst_12 = arith.constant 0.000000e+00 : f32
      %14 = vector.broadcast %cst_12 : f32 to vector<512x128xf32>
      %c0_13 = arith.constant 0 : index
      %c0_14 = arith.constant 0 : index
      %15 = vector.load %arg6[%c0_13, %c0_14] : memref<512x128xf32, #tpu.memory_space<vmem>>, vector<512x128xf32>
      tpu.vector_store %arg6[%c0_13, %c0_14], %14 {strides = array<i32>} : memref<512x128xf32, #tpu.memory_space<vmem>>, vector<512x128xf32>,
    } else {
    }
    %c0 = arith.constant 0 : index
    %c0_1 = arith.constant 0 : index
    %3 = vector.load %arg6[%c0, %c0_1] : memref<512x128xf32, #tpu.memory_space<vmem>>, vector<512x128xf32>
    %c0_2 = arith.constant 0 : index
    %c0_3 = arith.constant 0 : index
    %c0_4 = arith.constant 0 : index
    %4 = vector.load %arg2[%c0_2, %c0_3, %c0_4] : memref<1x512x128xbf16, #tpu.memory_space<vmem>>, vector<1x512x128xbf16>
    %5 = vector.shape_cast %4 : vector<1x512x128xbf16> to vector<512x128xbf16>
    %c0_5 = arith.constant 0 : index
    %c0_6 = arith.constant 0 : index
    %c0_7 = arith.constant 0 : index
    %6 = vector.load %arg3[%c0_5, %c0_6, %c0_7] : memref<1x128x128xbf16, #tpu.memory_space<vmem>>, vector<1x128x128xbf16>
    %7 = vector.shape_cast %6 : vector<1x128x128xbf16> to vector<128x128xbf16>
    %cst = arith.constant dense<0.000000e+00> : vector<512x128xf32>
    %8 = tpu.matmul %5, %7, %cst {dimension_numbers = #tpu.dot_dimension_numbers<[1], [0], [0], [1], [0, 0, 1, 1], [], []>} : vector<512x128xbf16>, vector<128x128xbf16>, vector<512x128xf32> -> vector<512x128xf32>
    %9 = arith.addf %3, %8 : vector<512x128xf32>
    %c0_8 = arith.constant 0 : index
    %c0_9 = arith.constant 0 : index
    %10 = vector.load %arg6[%c0_8, %c0_9] : memref<512x128xf32, #tpu.memory_space<vmem>>, vector<512x128xf32>
    tpu.vector_store %arg6[%c0_8, %c0_9], %9 {strides = array<i32>} : memref<512x128xf32, #tpu.memory_space<vmem>>, vector<512x128xf32>,
    %c0_i32_10 = arith.constant 0 : i32
    %11 = arith.cmpi eq, %arg1, %c0_i32_10 : i32
    %12 = arith.extui %11 : i1 to i32
    %c0_i32_11 = arith.constant 0 : i32
    %13 = arith.cmpi ne, %12, %c0_i32_11 : i32
    scf.if %13 {
      %c0_12 = arith.constant 0 : index
      %c0_13 = arith.constant 0 : index
      %14 = vector.load %arg6[%c0_12, %c0_13] : memref<512x128xf32, #tpu.memory_space<vmem>>, vector<512x128xf32>
      %c1 = arith.constant 1 : index
      %c0_14 = arith.constant 0 : index
      %15 = vector.load %arg4[%c1, %c0_14] : memref<3x128xf32, #tpu.memory_space<vmem>>, vector<1x128xf32>
      %16 = vector.broadcast %15 : vector<1x128xf32> to vector<512x128xf32>
      %17 = arith.addf %14, %16 : vector<512x128xf32>
      %cst_15 = arith.constant 0.000000e+00 : f32
      %18 = vector.broadcast %cst_15 : f32 to vector<512x128xf32>
      %19 = arith.cmpf ogt, %17, %18 : vector<512x128xf32>
      %c2 = arith.constant 2 : index
      %c0_16 = arith.constant 0 : index
      %20 = vector.load %arg4[%c2, %c0_16] : memref<3x128xf32, #tpu.memory_space<vmem>>, vector<1x128xf32>
      %21 = vector.broadcast %20 : vector<1x128xf32> to vector<512x128xf32>
      %22 = arith.mulf %21, %17 : vector<512x128xf32>
      %23 = arith.select %19, %17, %22 : vector<512x128xi1>, vector<512x128xf32>
      %24 = arith.truncf %23 : vector<512x128xf32> to vector<512x128xbf16>
      %c0_17 = arith.constant 0 : index
      %c0_18 = arith.constant 0 : index
      %25 = vector.load %arg5[%c0_17, %c0_18] : memref<512x128xbf16, #tpu.memory_space<vmem>>, vector<512x128xbf16>
      tpu.vector_store %arg5[%c0_17, %c0_18], %24 {strides = array<i32>} : memref<512x128xbf16, #tpu.memory_space<vmem>>, vector<512x128xbf16>,
    } else {
    }
    return
  }
  func.func @transform_0(%arg0: i32, %arg1: i32) -> (i32, i32, i32) {
    %c0_i32 = arith.constant 0 : i32
    %c0_i32_0 = arith.constant 0 : i32
    return %arg1, %arg0, %c0_i32 : i32, i32, i32
  }
  func.func @transform_1(%arg0: i32, %arg1: i32) -> (i32, i32, i32) {
    %c0_i32 = arith.constant 0 : i32
    %c0_i32_0 = arith.constant 0 : i32
    %c0_i32_1 = arith.constant 0 : i32
    return %arg1, %c0_i32, %c0_i32_0 : i32, i32, i32
  }
  func.func @transform_2(%arg0: i32, %arg1: i32) -> (i32, i32) {
    %c0_i32 = arith.constant 0 : i32
    %c0_i32_0 = arith.constant 0 : i32
    %c0_i32_1 = arith.constant 0 : i32
    return %c0_i32, %c0_i32_0 : i32, i32
  }
  func.func @transform_3(%arg0: i32, %arg1: i32) -> (i32, i32) {
    %c0_i32 = arith.constant 0 : i32
    %c0_i32_0 = arith.constant 0 : i32
    return %arg0, %c0_i32 : i32, i32
  }
}

module attributes {stable_mosaic.version = 11 : i64} {
  func.func @_bn_prelu_kernel(%arg0: i32, %arg1: memref<512x19xbf16, #tpu.memory_space<vmem>>, %arg2: memref<3x19xf32, #tpu.memory_space<vmem>>, %arg3: memref<512x19xbf16, #tpu.memory_space<vmem>>) attributes {dimension_semantics = [#tpu.dimension_semantics<parallel>], iteration_bounds = array<i64: 1>, scalar_prefetch = 0 : i64, scratch_operands = 0 : i64, tpu.core_type = #tpu.core_type<tc>, window_params = [{transform_indices = @transform_0, window_bounds = array<i64: 512, 19>}, {pipeline_mode = #tpu.pipeline_mode<synchronous>, transform_indices = @transform_1, window_bounds = array<i64: 3, 19>}, {transform_indices = @transform_2, window_bounds = array<i64: 512, 19>}]} {
    %c0 = arith.constant 0 : index
    %c0_0 = arith.constant 0 : index
    %0 = vector.load %arg1[%c0, %c0_0] : memref<512x19xbf16, #tpu.memory_space<vmem>>, vector<512x19xbf16>
    %1 = arith.extf %0 : vector<512x19xbf16> to vector<512x19xf32>
    %c0_1 = arith.constant 0 : index
    %c0_2 = arith.constant 0 : index
    %2 = vector.load %arg2[%c0_1, %c0_2] : memref<3x19xf32, #tpu.memory_space<vmem>>, vector<1x19xf32>
    %3 = vector.broadcast %2 : vector<1x19xf32> to vector<512x19xf32>
    %4 = arith.mulf %1, %3 : vector<512x19xf32>
    %c1 = arith.constant 1 : index
    %c0_3 = arith.constant 0 : index
    %5 = vector.load %arg2[%c1, %c0_3] : memref<3x19xf32, #tpu.memory_space<vmem>>, vector<1x19xf32>
    %6 = vector.broadcast %5 : vector<1x19xf32> to vector<512x19xf32>
    %7 = arith.addf %4, %6 : vector<512x19xf32>
    %cst = arith.constant 0.000000e+00 : f32
    %8 = vector.broadcast %cst : f32 to vector<512x19xf32>
    %9 = arith.cmpf ogt, %7, %8 : vector<512x19xf32>
    %c2 = arith.constant 2 : index
    %c0_4 = arith.constant 0 : index
    %10 = vector.load %arg2[%c2, %c0_4] : memref<3x19xf32, #tpu.memory_space<vmem>>, vector<1x19xf32>
    %11 = vector.broadcast %10 : vector<1x19xf32> to vector<512x19xf32>
    %12 = arith.mulf %11, %7 : vector<512x19xf32>
    %13 = arith.select %9, %7, %12 : vector<512x19xi1>, vector<512x19xf32>
    %14 = arith.truncf %13 : vector<512x19xf32> to vector<512x19xbf16>
    %c0_5 = arith.constant 0 : index
    %c0_6 = arith.constant 0 : index
    %15 = vector.load %arg3[%c0_5, %c0_6] : memref<512x19xbf16, #tpu.memory_space<vmem>>, vector<512x19xbf16>
    tpu.vector_store %arg3[%c0_5, %c0_6], %14 {strides = array<i32>} : memref<512x19xbf16, #tpu.memory_space<vmem>>, vector<512x19xbf16>,
    return
  }
  func.func @transform_0(%arg0: i32) -> (i32, i32) {
    %c0_i32 = arith.constant 0 : i32
    %c0_i32_0 = arith.constant 0 : i32
    return %arg0, %c0_i32 : i32, i32
  }
  func.func @transform_1(%arg0: i32) -> (i32, i32) {
    %c0_i32 = arith.constant 0 : i32
    %c0_i32_0 = arith.constant 0 : i32
    %c0_i32_1 = arith.constant 0 : i32
    return %c0_i32, %c0_i32_0 : i32, i32
  }
  func.func @transform_2(%arg0: i32) -> (i32, i32) {
    %c0_i32 = arith.constant 0 : i32
    %c0_i32_0 = arith.constant 0 : i32
    return %arg0, %c0_i32 : i32, i32
  }
}

module attributes {stable_mosaic.version = 11 : i64} {
  func.func @_mm_plain_kernel(%arg0: i32, %arg1: memref<128x256xbf16, #tpu.memory_space<vmem>>, %arg2: memref<256x128xbf16, #tpu.memory_space<vmem>>, %arg3: memref<128x128xbf16, #tpu.memory_space<vmem>>) attributes {dimension_semantics = [#tpu.dimension_semantics<parallel>], iteration_bounds = array<i64: 1>, scalar_prefetch = 0 : i64, scratch_operands = 0 : i64, tpu.core_type = #tpu.core_type<tc>, window_params = [{transform_indices = @transform_0, window_bounds = array<i64: 128, 256>}, {pipeline_mode = #tpu.pipeline_mode<synchronous>, transform_indices = @transform_1, window_bounds = array<i64: 256, 128>}, {transform_indices = @transform_2, window_bounds = array<i64: 128, 128>}]} {
    %c0 = arith.constant 0 : index
    %c0_0 = arith.constant 0 : index
    %0 = vector.load %arg1[%c0, %c0_0] : memref<128x256xbf16, #tpu.memory_space<vmem>>, vector<128x256xbf16>
    %c0_1 = arith.constant 0 : index
    %c0_2 = arith.constant 0 : index
    %1 = vector.load %arg2[%c0_1, %c0_2] : memref<256x128xbf16, #tpu.memory_space<vmem>>, vector<256x128xbf16>
    %cst = arith.constant dense<0.000000e+00> : vector<128x128xf32>
    %2 = tpu.matmul %0, %1, %cst {dimension_numbers = #tpu.dot_dimension_numbers<[1], [0], [0], [1], [0, 0, 1, 1], [], []>} : vector<128x256xbf16>, vector<256x128xbf16>, vector<128x128xf32> -> vector<128x128xf32>
    %3 = arith.truncf %2 : vector<128x128xf32> to vector<128x128xbf16>
    %c0_3 = arith.constant 0 : index
    %c0_4 = arith.constant 0 : index
    %4 = vector.load %arg3[%c0_3, %c0_4] : memref<128x128xbf16, #tpu.memory_space<vmem>>, vector<128x128xbf16>
    tpu.vector_store %arg3[%c0_3, %c0_4], %3 {strides = array<i32>} : memref<128x128xbf16, #tpu.memory_space<vmem>>, vector<128x128xbf16>,
    return
  }
  func.func @transform_0(%arg0: i32) -> (i32, i32) {
    %c0_i32 = arith.constant 0 : i32
    %c0_i32_0 = arith.constant 0 : i32
    return %arg0, %c0_i32 : i32, i32
  }
  func.func @transform_1(%arg0: i32) -> (i32, i32) {
    %c0_i32 = arith.constant 0 : i32
    %c0_i32_0 = arith.constant 0 : i32
    %c0_i32_1 = arith.constant 0 : i32
    return %c0_i32, %c0_i32_0 : i32, i32
  }
  func.func @transform_2(%arg0: i32) -> (i32, i32) {
    %c0_i32 = arith.constant 0 : i32
    %c0_i32_0 = arith.constant 0 : i32
    return %arg0, %c0_i32 : i32, i32
  }
}

module attributes {stable_mosaic.version = 11 : i64} {
  func.func @kernel(%arg0: i32, %arg1: i32, %arg2: memref<1x128x128xbf16, #tpu.memory_space<vmem>>, %arg3: memref<1x128x128xbf16, #tpu.memory_space<vmem>>, %arg4: memref<3x128xf32, #tpu.memory_space<vmem>>, %arg5: memref<128x128xbf16, #tpu.memory_space<vmem>>, %arg6: memref<128x128xf32, #tpu.memory_space<vmem>>) attributes {dimension_semantics = [#tpu.dimension_semantics<parallel>, #tpu.dimension_semantics<arbitrary>], iteration_bounds = array<i64: 1, 5>, scalar_prefetch = 0 : i64, scratch_operands = 1 : i64, tpu.core_type = #tpu.core_type<tc>, window_params = [{transform_indices = @transform_0, window_bounds = array<i64: 1, 128, 128>}, {transform_indices = @transform_1, window_bounds = array<i64: 1, 128, 128>}, {pipeline_mode = #tpu.pipeline_mode<synchronous>, transform_indices = @transform_2, window_bounds = array<i64: 3, 128>}, {transform_indices = @transform_3, window_bounds = array<i64: 128, 128>}]} {
    %c0_i32 = arith.constant 0 : i32
    %0 = arith.cmpi eq, %arg1, %c0_i32 : i32
    %1 = arith.extui %0 : i1 to i32
    %c0_i32_0 = arith.constant 0 : i32
    %2 = arith.cmpi ne, %1, %c0_i32_0 : i32
    scf.if %2 {
      %cst_11 = arith.constant 0.000000e+00 : f32
      %14 = vector.broadcast %cst_11 : f32 to vector<128x128xf32>
      %c0_12 = arith.constant 0 : index
      %c0_13 = arith.constant 0 : index
      %15 = vector.load %arg6[%c0_12, %c0_13] : memref<128x128xf32, #tpu.memory_space<vmem>>, vector<128x128xf32>
      tpu.vector_store %arg6[%c0_12, %c0_13], %14 {strides = array<i32>} : memref<128x128xf32, #tpu.memory_space<vmem>>, vector<128x128xf32>,
    } else {
    }
    %c0 = arith.constant 0 : index
    %c0_1 = arith.constant 0 : index
    %3 = vector.load %arg6[%c0, %c0_1] : memref<128x128xf32, #tpu.memory_space<vmem>>, vector<128x128xf32>
    %c0_2 = arith.constant 0 : index
    %c0_3 = arith.constant 0 : index
    %c0_4 = arith.constant 0 : index
    %4 = vector.load %arg2[%c0_2, %c0_3, %c0_4] : memref<1x128x128xbf16, #tpu.memory_space<vmem>>, vector<1x128x128xbf16>
    %5 = vector.shape_cast %4 : vector<1x128x128xbf16> to vector<128x128xbf16>
    %c0_5 = arith.constant 0 : index
    %c0_6 = arith.constant 0 : index
    %c0_7 = arith.constant 0 : index
    %6 = vector.load %arg3[%c0_5, %c0_6, %c0_7] : memref<1x128x128xbf16, #tpu.memory_space<vmem>>, vector<1x128x128xbf16>
    %7 = vector.shape_cast %6 : vector<1x128x128xbf16> to vector<128x128xbf16>
    %cst = arith.constant dense<0.000000e+00> : vector<128x128xf32>
    %8 = tpu.matmul %5, %7, %cst {dimension_numbers = #tpu.dot_dimension_numbers<[1], [0], [0], [1], [0, 0, 1, 1], [], []>} : vector<128x128xbf16>, vector<128x128xbf16>, vector<128x128xf32> -> vector<128x128xf32>
    %9 = arith.addf %3, %8 : vector<128x128xf32>
    %c0_8 = arith.constant 0 : index
    %c0_9 = arith.constant 0 : index
    %10 = vector.load %arg6[%c0_8, %c0_9] : memref<128x128xf32, #tpu.memory_space<vmem>>, vector<128x128xf32>
    tpu.vector_store %arg6[%c0_8, %c0_9], %9 {strides = array<i32>} : memref<128x128xf32, #tpu.memory_space<vmem>>, vector<128x128xf32>,
    %c4_i32 = arith.constant 4 : i32
    %11 = arith.cmpi eq, %arg1, %c4_i32 : i32
    %12 = arith.extui %11 : i1 to i32
    %c0_i32_10 = arith.constant 0 : i32
    %13 = arith.cmpi ne, %12, %c0_i32_10 : i32
    scf.if %13 {
      %c0_11 = arith.constant 0 : index
      %c0_12 = arith.constant 0 : index
      %14 = vector.load %arg6[%c0_11, %c0_12] : memref<128x128xf32, #tpu.memory_space<vmem>>, vector<128x128xf32>
      %c1 = arith.constant 1 : index
      %c0_13 = arith.constant 0 : index
      %15 = vector.load %arg4[%c1, %c0_13] : memref<3x128xf32, #tpu.memory_space<vmem>>, vector<1x128xf32>
      %16 = vector.broadcast %15 : vector<1x128xf32> to vector<128x128xf32>
      %17 = arith.addf %14, %16 : vector<128x128xf32>
      %cst_14 = arith.constant 0.000000e+00 : f32
      %18 = vector.broadcast %cst_14 : f32 to vector<128x128xf32>
      %19 = arith.cmpf ogt, %17, %18 : vector<128x128xf32>
      %c2 = arith.constant 2 : index
      %c0_15 = arith.constant 0 : index
      %20 = vector.load %arg4[%c2, %c0_15] : memref<3x128xf32, #tpu.memory_space<vmem>>, vector<1x128xf32>
      %21 = vector.broadcast %20 : vector<1x128xf32> to vector<128x128xf32>
      %22 = arith.mulf %21, %17 : vector<128x128xf32>
      %23 = arith.select %19, %17, %22 : vector<128x128xi1>, vector<128x128xf32>
      %24 = arith.truncf %23 : vector<128x128xf32> to vector<128x128xbf16>
      %c0_16 = arith.constant 0 : index
      %c0_17 = arith.constant 0 : index
      %25 = vector.load %arg5[%c0_16, %c0_17] : memref<128x128xbf16, #tpu.memory_space<vmem>>, vector<128x128xbf16>
      tpu.vector_store %arg5[%c0_16, %c0_17], %24 {strides = array<i32>} : memref<128x128xbf16, #tpu.memory_space<vmem>>, vector<128x128xbf16>,
    } else {
    }
    return
  }
  func.func @transform_0(%arg0: i32, %arg1: i32) -> (i32, i32, i32) {
    %c0_i32 = arith.constant 0 : i32
    %c0_i32_0 = arith.constant 0 : i32
    return %arg1, %arg0, %c0_i32 : i32, i32, i32
  }
  func.func @transform_1(%arg0: i32, %arg1: i32) -> (i32, i32, i32) {
    %c0_i32 = arith.constant 0 : i32
    %c0_i32_0 = arith.constant 0 : i32
    %c0_i32_1 = arith.constant 0 : i32
    return %arg1, %c0_i32, %c0_i32_0 : i32, i32, i32
  }
  func.func @transform_2(%arg0: i32, %arg1: i32) -> (i32, i32) {
    %c0_i32 = arith.constant 0 : i32
    %c0_i32_0 = arith.constant 0 : i32
    %c0_i32_1 = arith.constant 0 : i32
    return %c0_i32, %c0_i32_0 : i32, i32
  }
  func.func @transform_3(%arg0: i32, %arg1: i32) -> (i32, i32) {
    %c0_i32 = arith.constant 0 : i32
    %c0_i32_0 = arith.constant 0 : i32
    return %arg0, %c0_i32 : i32, i32
  }
}

module attributes {stable_mosaic.version = 11 : i64} {
  func.func @_mm_plain_kernel(%arg0: i32, %arg1: memref<128x128xbf16, #tpu.memory_space<vmem>>, %arg2: memref<128x128xbf16, #tpu.memory_space<vmem>>, %arg3: memref<128x128xbf16, #tpu.memory_space<vmem>>) attributes {dimension_semantics = [#tpu.dimension_semantics<parallel>], iteration_bounds = array<i64: 1>, scalar_prefetch = 0 : i64, scratch_operands = 0 : i64, tpu.core_type = #tpu.core_type<tc>, window_params = [{transform_indices = @transform_0, window_bounds = array<i64: 128, 128>}, {pipeline_mode = #tpu.pipeline_mode<synchronous>, transform_indices = @transform_1, window_bounds = array<i64: 128, 128>}, {transform_indices = @transform_2, window_bounds = array<i64: 128, 128>}]} {
    %c0 = arith.constant 0 : index
    %c0_0 = arith.constant 0 : index
    %0 = vector.load %arg1[%c0, %c0_0] : memref<128x128xbf16, #tpu.memory_space<vmem>>, vector<128x128xbf16>
    %c0_1 = arith.constant 0 : index
    %c0_2 = arith.constant 0 : index
    %1 = vector.load %arg2[%c0_1, %c0_2] : memref<128x128xbf16, #tpu.memory_space<vmem>>, vector<128x128xbf16>
    %cst = arith.constant dense<0.000000e+00> : vector<128x128xf32>
    %2 = tpu.matmul %0, %1, %cst {dimension_numbers = #tpu.dot_dimension_numbers<[1], [0], [0], [1], [0, 0, 1, 1], [], []>} : vector<128x128xbf16>, vector<128x128xbf16>, vector<128x128xf32> -> vector<128x128xf32>
    %3 = arith.truncf %2 : vector<128x128xf32> to vector<128x128xbf16>
    %c0_3 = arith.constant 0 : index
    %c0_4 = arith.constant 0 : index
    %4 = vector.load %arg3[%c0_3, %c0_4] : memref<128x128xbf16, #tpu.memory_space<vmem>>, vector<128x128xbf16>
    tpu.vector_store %arg3[%c0_3, %c0_4], %3 {strides = array<i32>} : memref<128x128xbf16, #tpu.memory_space<vmem>>, vector<128x128xbf16>,
    return
  }
  func.func @transform_0(%arg0: i32) -> (i32, i32) {
    %c0_i32 = arith.constant 0 : i32
    %c0_i32_0 = arith.constant 0 : i32
    return %arg0, %c0_i32 : i32, i32
  }
  func.func @transform_1(%arg0: i32) -> (i32, i32) {
    %c0_i32 = arith.constant 0 : i32
    %c0_i32_0 = arith.constant 0 : i32
    %c0_i32_1 = arith.constant 0 : i32
    return %c0_i32, %c0_i32_0 : i32, i32
  }
  func.func @transform_2(%arg0: i32) -> (i32, i32) {
    %c0_i32 = arith.constant 0 : i32
    %c0_i32_0 = arith.constant 0 : i32
    return %arg0, %c0_i32 : i32, i32
  }
}

module attributes {stable_mosaic.version = 11 : i64} {
  func.func @kernel(%arg0: i32, %arg1: i32, %arg2: memref<1x128x128xbf16, #tpu.memory_space<vmem>>, %arg3: memref<1x128x128xbf16, #tpu.memory_space<vmem>>, %arg4: memref<3x128xf32, #tpu.memory_space<vmem>>, %arg5: memref<128x128xbf16, #tpu.memory_space<vmem>>, %arg6: memref<128x128xbf16, #tpu.memory_space<vmem>>, %arg7: memref<128x128xf32, #tpu.memory_space<vmem>>) attributes {dimension_semantics = [#tpu.dimension_semantics<parallel>, #tpu.dimension_semantics<arbitrary>], iteration_bounds = array<i64: 1, 5>, scalar_prefetch = 0 : i64, scratch_operands = 1 : i64, tpu.core_type = #tpu.core_type<tc>, window_params = [{transform_indices = @transform_0, window_bounds = array<i64: 1, 128, 128>}, {transform_indices = @transform_1, window_bounds = array<i64: 1, 128, 128>}, {pipeline_mode = #tpu.pipeline_mode<synchronous>, transform_indices = @transform_2, window_bounds = array<i64: 3, 128>}, {transform_indices = @transform_3, window_bounds = array<i64: 128, 128>}, {transform_indices = @transform_4, window_bounds = array<i64: 128, 128>}]} {
    %c0_i32 = arith.constant 0 : i32
    %0 = arith.cmpi eq, %arg1, %c0_i32 : i32
    %1 = arith.extui %0 : i1 to i32
    %c0_i32_0 = arith.constant 0 : i32
    %2 = arith.cmpi ne, %1, %c0_i32_0 : i32
    scf.if %2 {
      %c0_11 = arith.constant 0 : index
      %c0_12 = arith.constant 0 : index
      %14 = vector.load %arg5[%c0_11, %c0_12] : memref<128x128xbf16, #tpu.memory_space<vmem>>, vector<128x128xbf16>
      %15 = arith.extf %14 : vector<128x128xbf16> to vector<128x128xf32>
      %c0_13 = arith.constant 0 : index
      %c0_14 = arith.constant 0 : index
      %16 = vector.load %arg4[%c0_13, %c0_14] : memref<3x128xf32, #tpu.memory_space<vmem>>, vector<1x128xf32>
      %17 = vector.broadcast %16 : vector<1x128xf32> to vector<128x128xf32>
      %18 = arith.mulf %15, %17 : vector<128x128xf32>
      %c0_15 = arith.constant 0 : index
      %c0_16 = arith.constant 0 : index
      %19 = vector.load %arg7[%c0_15, %c0_16] : memref<128x128xf32, #tpu.memory_space<vmem>>, vector<128x128xf32>
      tpu.vector_store %arg7[%c0_15, %c0_16], %18 {strides = array<i32>} : memref<128x128xf32, #tpu.memory_space<vmem>>, vector<128x128xf32>,
    } else {
    }
    %c0 = arith.constant 0 : index
    %c0_1 = arith.constant 0 : index
    %3 = vector.load %arg7[%c0, %c0_1] : memref<128x128xf32, #tpu.memory_space<vmem>>, vector<128x128xf32>
    %c0_2 = arith.constant 0 : index
    %c0_3 = arith.constant 0 : index
    %c0_4 = arith.constant 0 : index
    %4 = vector.load %arg2[%c0_2, %c0_3, %c0_4] : memref<1x128x128xbf16, #tpu.memory_space<vmem>>, vector<1x128x128xbf16>
    %5 = vector.shape_cast %4 : vector<1x128x128xbf16> to vector<128x128xbf16>
    %c0_5 = arith.constant 0 : index
    %c0_6 = arith.constant 0 : index
    %c0_7 = arith.constant 0 : index
    %6 = vector.load %arg3[%c0_5, %c0_6, %c0_7] : memref<1x128x128xbf16, #tpu.memory_space<vmem>>, vector<1x128x128xbf16>
    %7 = vector.shape_cast %6 : vector<1x128x128xbf16> to vector<128x128xbf16>
    %cst = arith.constant dense<0.000000e+00> : vector<128x128xf32>
    %8 = tpu.matmul %5, %7, %cst {dimension_numbers = #tpu.dot_dimension_numbers<[1], [0], [0], [1], [0, 0, 1, 1], [], []>} : vector<128x128xbf16>, vector<128x128xbf16>, vector<128x128xf32> -> vector<128x128xf32>
    %9 = arith.addf %3, %8 : vector<128x128xf32>
    %c0_8 = arith.constant 0 : index
    %c0_9 = arith.constant 0 : index
    %10 = vector.load %arg7[%c0_8, %c0_9] : memref<128x128xf32, #tpu.memory_space<vmem>>, vector<128x128xf32>
    tpu.vector_store %arg7[%c0_8, %c0_9], %9 {strides = array<i32>} : memref<128x128xf32, #tpu.memory_space<vmem>>, vector<128x128xf32>,
    %c4_i32 = arith.constant 4 : i32
    %11 = arith.cmpi eq, %arg1, %c4_i32 : i32
    %12 = arith.extui %11 : i1 to i32
    %c0_i32_10 = arith.constant 0 : i32
    %13 = arith.cmpi ne, %12, %c0_i32_10 : i32
    scf.if %13 {
      %c0_11 = arith.constant 0 : index
      %c0_12 = arith.constant 0 : index
      %14 = vector.load %arg7[%c0_11, %c0_12] : memref<128x128xf32, #tpu.memory_space<vmem>>, vector<128x128xf32>
      %c1 = arith.constant 1 : index
      %c0_13 = arith.constant 0 : index
      %15 = vector.load %arg4[%c1, %c0_13] : memref<3x128xf32, #tpu.memory_space<vmem>>, vector<1x128xf32>
      %16 = vector.broadcast %15 : vector<1x128xf32> to vector<128x128xf32>
      %17 = arith.addf %14, %16 : vector<128x128xf32>
      %cst_14 = arith.constant 0.000000e+00 : f32
      %18 = vector.broadcast %cst_14 : f32 to vector<128x128xf32>
      %19 = arith.cmpf ogt, %17, %18 : vector<128x128xf32>
      %c2 = arith.constant 2 : index
      %c0_15 = arith.constant 0 : index
      %20 = vector.load %arg4[%c2, %c0_15] : memref<3x128xf32, #tpu.memory_space<vmem>>, vector<1x128xf32>
      %21 = vector.broadcast %20 : vector<1x128xf32> to vector<128x128xf32>
      %22 = arith.mulf %21, %17 : vector<128x128xf32>
      %23 = arith.select %19, %17, %22 : vector<128x128xi1>, vector<128x128xf32>
      %24 = arith.truncf %23 : vector<128x128xf32> to vector<128x128xbf16>
      %c0_16 = arith.constant 0 : index
      %c0_17 = arith.constant 0 : index
      %25 = vector.load %arg6[%c0_16, %c0_17] : memref<128x128xbf16, #tpu.memory_space<vmem>>, vector<128x128xbf16>
      tpu.vector_store %arg6[%c0_16, %c0_17], %24 {strides = array<i32>} : memref<128x128xbf16, #tpu.memory_space<vmem>>, vector<128x128xbf16>,
    } else {
    }
    return
  }
  func.func @transform_0(%arg0: i32, %arg1: i32) -> (i32, i32, i32) {
    %c0_i32 = arith.constant 0 : i32
    %c0_i32_0 = arith.constant 0 : i32
    return %arg1, %arg0, %c0_i32 : i32, i32, i32
  }
  func.func @transform_1(%arg0: i32, %arg1: i32) -> (i32, i32, i32) {
    %c0_i32 = arith.constant 0 : i32
    %c0_i32_0 = arith.constant 0 : i32
    %c0_i32_1 = arith.constant 0 : i32
    return %arg1, %c0_i32, %c0_i32_0 : i32, i32, i32
  }
  func.func @transform_2(%arg0: i32, %arg1: i32) -> (i32, i32) {
    %c0_i32 = arith.constant 0 : i32
    %c0_i32_0 = arith.constant 0 : i32
    %c0_i32_1 = arith.constant 0 : i32
    return %c0_i32, %c0_i32_0 : i32, i32
  }
  func.func @transform_3(%arg0: i32, %arg1: i32) -> (i32, i32) {
    %c0_i32 = arith.constant 0 : i32
    %c0_i32_0 = arith.constant 0 : i32
    return %arg0, %c0_i32 : i32, i32
  }
  func.func @transform_4(%arg0: i32, %arg1: i32) -> (i32, i32) {
    %c0_i32 = arith.constant 0 : i32
    %c0_i32_0 = arith.constant 0 : i32
    return %arg0, %c0_i32 : i32, i32
  }
}

module attributes {stable_mosaic.version = 11 : i64} {
  func.func @_bn_prelu_kernel(%arg0: i32, %arg1: memref<128x131xbf16, #tpu.memory_space<vmem>>, %arg2: memref<3x131xf32, #tpu.memory_space<vmem>>, %arg3: memref<128x131xbf16, #tpu.memory_space<vmem>>) attributes {dimension_semantics = [#tpu.dimension_semantics<parallel>], iteration_bounds = array<i64: 1>, scalar_prefetch = 0 : i64, scratch_operands = 0 : i64, tpu.core_type = #tpu.core_type<tc>, window_params = [{transform_indices = @transform_0, window_bounds = array<i64: 128, 131>}, {pipeline_mode = #tpu.pipeline_mode<synchronous>, transform_indices = @transform_1, window_bounds = array<i64: 3, 131>}, {transform_indices = @transform_2, window_bounds = array<i64: 128, 131>}]} {
    %c0 = arith.constant 0 : index
    %c0_0 = arith.constant 0 : index
    %0 = vector.load %arg1[%c0, %c0_0] : memref<128x131xbf16, #tpu.memory_space<vmem>>, vector<128x131xbf16>
    %1 = arith.extf %0 : vector<128x131xbf16> to vector<128x131xf32>
    %c0_1 = arith.constant 0 : index
    %c0_2 = arith.constant 0 : index
    %2 = vector.load %arg2[%c0_1, %c0_2] : memref<3x131xf32, #tpu.memory_space<vmem>>, vector<1x131xf32>
    %3 = vector.broadcast %2 : vector<1x131xf32> to vector<128x131xf32>
    %4 = arith.mulf %1, %3 : vector<128x131xf32>
    %c1 = arith.constant 1 : index
    %c0_3 = arith.constant 0 : index
    %5 = vector.load %arg2[%c1, %c0_3] : memref<3x131xf32, #tpu.memory_space<vmem>>, vector<1x131xf32>
    %6 = vector.broadcast %5 : vector<1x131xf32> to vector<128x131xf32>
    %7 = arith.addf %4, %6 : vector<128x131xf32>
    %cst = arith.constant 0.000000e+00 : f32
    %8 = vector.broadcast %cst : f32 to vector<128x131xf32>
    %9 = arith.cmpf ogt, %7, %8 : vector<128x131xf32>
    %c2 = arith.constant 2 : index
    %c0_4 = arith.constant 0 : index
    %10 = vector.load %arg2[%c2, %c0_4] : memref<3x131xf32, #tpu.memory_space<vmem>>, vector<1x131xf32>
    %11 = vector.broadcast %10 : vector<1x131xf32> to vector<128x131xf32>
    %12 = arith.mulf %11, %7 : vector<128x131xf32>
    %13 = arith.select %9, %7, %12 : vector<128x131xi1>, vector<128x131xf32>
    %14 = arith.truncf %13 : vector<128x131xf32> to vector<128x131xbf16>
    %c0_5 = arith.constant 0 : index
    %c0_6 = arith.constant 0 : index
    %15 = vector.load %arg3[%c0_5, %c0_6] : memref<128x131xbf16, #tpu.memory_space<vmem>>, vector<128x131xbf16>
    tpu.vector_store %arg3[%c0_5, %c0_6], %14 {strides = array<i32>} : memref<128x131xbf16, #tpu.memory_space<vmem>>, vector<128x131xbf16>,
    return
  }
  func.func @transform_0(%arg0: i32) -> (i32, i32) {
    %c0_i32 = arith.constant 0 : i32
    %c0_i32_0 = arith.constant 0 : i32
    return %arg0, %c0_i32 : i32, i32
  }
  func.func @transform_1(%arg0: i32) -> (i32, i32) {
    %c0_i32 = arith.constant 0 : i32
    %c0_i32_0 = arith.constant 0 : i32
    %c0_i32_1 = arith.constant 0 : i32
    return %c0_i32, %c0_i32_0 : i32, i32
  }
  func.func @transform_2(%arg0: i32) -> (i32, i32) {
    %c0_i32 = arith.constant 0 : i32
    %c0_i32_0 = arith.constant 0 : i32
    return %arg0, %c0_i32 : i32, i32
  }
}

module attributes {stable_mosaic.version = 11 : i64} {
  func.func @_mm_plain_kernel(%arg0: i32, %arg1: memref<32x1280xbf16, #tpu.memory_space<vmem>>, %arg2: memref<1280x128xbf16, #tpu.memory_space<vmem>>, %arg3: memref<32x128xbf16, #tpu.memory_space<vmem>>) attributes {dimension_semantics = [#tpu.dimension_semantics<parallel>], iteration_bounds = array<i64: 1>, scalar_prefetch = 0 : i64, scratch_operands = 0 : i64, tpu.core_type = #tpu.core_type<tc>, window_params = [{transform_indices = @transform_0, window_bounds = array<i64: 32, 1280>}, {pipeline_mode = #tpu.pipeline_mode<synchronous>, transform_indices = @transform_1, window_bounds = array<i64: 1280, 128>}, {transform_indices = @transform_2, window_bounds = array<i64: 32, 128>}]} {
    %c0 = arith.constant 0 : index
    %c0_0 = arith.constant 0 : index
    %0 = vector.load %arg1[%c0, %c0_0] : memref<32x1280xbf16, #tpu.memory_space<vmem>>, vector<32x1280xbf16>
    %c0_1 = arith.constant 0 : index
    %c0_2 = arith.constant 0 : index
    %1 = vector.load %arg2[%c0_1, %c0_2] : memref<1280x128xbf16, #tpu.memory_space<vmem>>, vector<1280x128xbf16>
    %cst = arith.constant dense<0.000000e+00> : vector<32x128xf32>
    %2 = tpu.matmul %0, %1, %cst {dimension_numbers = #tpu.dot_dimension_numbers<[1], [0], [0], [1], [0, 0, 1, 1], [], []>} : vector<32x1280xbf16>, vector<1280x128xbf16>, vector<32x128xf32> -> vector<32x128xf32>
    %3 = arith.truncf %2 : vector<32x128xf32> to vector<32x128xbf16>
    %c0_3 = arith.constant 0 : index
    %c0_4 = arith.constant 0 : index
    %4 = vector.load %arg3[%c0_3, %c0_4] : memref<32x128xbf16, #tpu.memory_space<vmem>>, vector<32x128xbf16>
    tpu.vector_store %arg3[%c0_3, %c0_4], %3 {strides = array<i32>} : memref<32x128xbf16, #tpu.memory_space<vmem>>, vector<32x128xbf16>,
    return
  }
  func.func @transform_0(%arg0: i32) -> (i32, i32) {
    %c0_i32 = arith.constant 0 : i32
    %c0_i32_0 = arith.constant 0 : i32
    return %arg0, %c0_i32 : i32, i32
  }
  func.func @transform_1(%arg0: i32) -> (i32, i32) {
    %c0_i32 = arith.constant 0 : i32
    %c0_i32_0 = arith.constant 0 : i32
    %c0_i32_1 = arith.constant 0 : i32
    return %c0_i32, %c0_i32_0 : i32, i32
  }
  func.func @transform_2(%arg0: i32) -> (i32, i32) {
    %c0_i32 = arith.constant 0 : i32
    %c0_i32_0 = arith.constant 0 : i32
    return %arg0, %c0_i32 : i32, i32
  }
}

module attributes {stable_mosaic.version = 11 : i64} {
  func.func @_mm_plain_kernel(%arg0: i32, %arg1: memref<32x128xbf16, #tpu.memory_space<vmem>>, %arg2: memref<128x128xbf16, #tpu.memory_space<vmem>>, %arg3: memref<32x128xbf16, #tpu.memory_space<vmem>>) attributes {dimension_semantics = [#tpu.dimension_semantics<parallel>], iteration_bounds = array<i64: 1>, scalar_prefetch = 0 : i64, scratch_operands = 0 : i64, tpu.core_type = #tpu.core_type<tc>, window_params = [{transform_indices = @transform_0, window_bounds = array<i64: 32, 128>}, {pipeline_mode = #tpu.pipeline_mode<synchronous>, transform_indices = @transform_1, window_bounds = array<i64: 128, 128>}, {transform_indices = @transform_2, window_bounds = array<i64: 32, 128>}]} {
    %c0 = arith.constant 0 : index
    %c0_0 = arith.constant 0 : index
    %0 = vector.load %arg1[%c0, %c0_0] : memref<32x128xbf16, #tpu.memory_space<vmem>>, vector<32x128xbf16>
    %c0_1 = arith.constant 0 : index
    %c0_2 = arith.constant 0 : index
    %1 = vector.load %arg2[%c0_1, %c0_2] : memref<128x128xbf16, #tpu.memory_space<vmem>>, vector<128x128xbf16>
    %cst = arith.constant dense<0.000000e+00> : vector<32x128xf32>
    %2 = tpu.matmul %0, %1, %cst {dimension_numbers = #tpu.dot_dimension_numbers<[1], [0], [0], [1], [0, 0, 1, 1], [], []>} : vector<32x128xbf16>, vector<128x128xbf16>, vector<32x128xf32> -> vector<32x128xf32>
    %3 = arith.truncf %2 : vector<32x128xf32> to vector<32x128xbf16>
    %c0_3 = arith.constant 0 : index
    %c0_4 = arith.constant 0 : index
    %4 = vector.load %arg3[%c0_3, %c0_4] : memref<32x128xbf16, #tpu.memory_space<vmem>>, vector<32x128xbf16>
    tpu.vector_store %arg3[%c0_3, %c0_4], %3 {strides = array<i32>} : memref<32x128xbf16, #tpu.memory_space<vmem>>, vector<32x128xbf16>,
    return
  }
  func.func @transform_0(%arg0: i32) -> (i32, i32) {
    %c0_i32 = arith.constant 0 : i32
    %c0_i32_0 = arith.constant 0 : i32
    return %arg0, %c0_i32 : i32, i32
  }
  func.func @transform_1(%arg0: i32) -> (i32, i32) {
    %c0_i32 = arith.constant 0 : i32
    %c0_i32_0 = arith.constant 0 : i32
    %c0_i32_1 = arith.constant 0 : i32
    return %c0_i32, %c0_i32_0 : i32, i32
  }
  func.func @transform_2(%arg0: i32) -> (i32, i32) {
    %c0_i32 = arith.constant 0 : i32
    %c0_i32_0 = arith.constant 0 : i32
    return %arg0, %c0_i32 : i32, i32
  }
}

module attributes {stable_mosaic.version = 11 : i64} {
  func.func @kernel(%arg0: i32, %arg1: i32, %arg2: memref<1x32x256xbf16, #tpu.memory_space<vmem>>, %arg3: memref<1x256x128xbf16, #tpu.memory_space<vmem>>, %arg4: memref<3x128xf32, #tpu.memory_space<vmem>>, %arg5: memref<32x128xbf16, #tpu.memory_space<vmem>>, %arg6: memref<32x128xf32, #tpu.memory_space<vmem>>) attributes {dimension_semantics = [#tpu.dimension_semantics<parallel>, #tpu.dimension_semantics<arbitrary>], iteration_bounds = array<i64: 1, 5>, scalar_prefetch = 0 : i64, scratch_operands = 1 : i64, tpu.core_type = #tpu.core_type<tc>, window_params = [{transform_indices = @transform_0, window_bounds = array<i64: 1, 32, 256>}, {transform_indices = @transform_1, window_bounds = array<i64: 1, 256, 128>}, {pipeline_mode = #tpu.pipeline_mode<synchronous>, transform_indices = @transform_2, window_bounds = array<i64: 3, 128>}, {transform_indices = @transform_3, window_bounds = array<i64: 32, 128>}]} {
    %c0_i32 = arith.constant 0 : i32
    %0 = arith.cmpi eq, %arg1, %c0_i32 : i32
    %1 = arith.extui %0 : i1 to i32
    %c0_i32_0 = arith.constant 0 : i32
    %2 = arith.cmpi ne, %1, %c0_i32_0 : i32
    scf.if %2 {
      %cst_11 = arith.constant 0.000000e+00 : f32
      %14 = vector.broadcast %cst_11 : f32 to vector<32x128xf32>
      %c0_12 = arith.constant 0 : index
      %c0_13 = arith.constant 0 : index
      %15 = vector.load %arg6[%c0_12, %c0_13] : memref<32x128xf32, #tpu.memory_space<vmem>>, vector<32x128xf32>
      tpu.vector_store %arg6[%c0_12, %c0_13], %14 {strides = array<i32>} : memref<32x128xf32, #tpu.memory_space<vmem>>, vector<32x128xf32>,
    } else {
    }
    %c0 = arith.constant 0 : index
    %c0_1 = arith.constant 0 : index
    %3 = vector.load %arg6[%c0, %c0_1] : memref<32x128xf32, #tpu.memory_space<vmem>>, vector<32x128xf32>
    %c0_2 = arith.constant 0 : index
    %c0_3 = arith.constant 0 : index
    %c0_4 = arith.constant 0 : index
    %4 = vector.load %arg2[%c0_2, %c0_3, %c0_4] : memref<1x32x256xbf16, #tpu.memory_space<vmem>>, vector<1x32x256xbf16>
    %5 = vector.shape_cast %4 : vector<1x32x256xbf16> to vector<32x256xbf16>
    %c0_5 = arith.constant 0 : index
    %c0_6 = arith.constant 0 : index
    %c0_7 = arith.constant 0 : index
    %6 = vector.load %arg3[%c0_5, %c0_6, %c0_7] : memref<1x256x128xbf16, #tpu.memory_space<vmem>>, vector<1x256x128xbf16>
    %7 = vector.shape_cast %6 : vector<1x256x128xbf16> to vector<256x128xbf16>
    %cst = arith.constant dense<0.000000e+00> : vector<32x128xf32>
    %8 = tpu.matmul %5, %7, %cst {dimension_numbers = #tpu.dot_dimension_numbers<[1], [0], [0], [1], [0, 0, 1, 1], [], []>} : vector<32x256xbf16>, vector<256x128xbf16>, vector<32x128xf32> -> vector<32x128xf32>
    %9 = arith.addf %3, %8 : vector<32x128xf32>
    %c0_8 = arith.constant 0 : index
    %c0_9 = arith.constant 0 : index
    %10 = vector.load %arg6[%c0_8, %c0_9] : memref<32x128xf32, #tpu.memory_space<vmem>>, vector<32x128xf32>
    tpu.vector_store %arg6[%c0_8, %c0_9], %9 {strides = array<i32>} : memref<32x128xf32, #tpu.memory_space<vmem>>, vector<32x128xf32>,
    %c4_i32 = arith.constant 4 : i32
    %11 = arith.cmpi eq, %arg1, %c4_i32 : i32
    %12 = arith.extui %11 : i1 to i32
    %c0_i32_10 = arith.constant 0 : i32
    %13 = arith.cmpi ne, %12, %c0_i32_10 : i32
    scf.if %13 {
      %c0_11 = arith.constant 0 : index
      %c0_12 = arith.constant 0 : index
      %14 = vector.load %arg6[%c0_11, %c0_12] : memref<32x128xf32, #tpu.memory_space<vmem>>, vector<32x128xf32>
      %c1 = arith.constant 1 : index
      %c0_13 = arith.constant 0 : index
      %15 = vector.load %arg4[%c1, %c0_13] : memref<3x128xf32, #tpu.memory_space<vmem>>, vector<1x128xf32>
      %16 = vector.broadcast %15 : vector<1x128xf32> to vector<32x128xf32>
      %17 = arith.addf %14, %16 : vector<32x128xf32>
      %cst_14 = arith.constant 0.000000e+00 : f32
      %18 = vector.broadcast %cst_14 : f32 to vector<32x128xf32>
      %19 = arith.cmpf ogt, %17, %18 : vector<32x128xf32>
      %c2 = arith.constant 2 : index
      %c0_15 = arith.constant 0 : index
      %20 = vector.load %arg4[%c2, %c0_15] : memref<3x128xf32, #tpu.memory_space<vmem>>, vector<1x128xf32>
      %21 = vector.broadcast %20 : vector<1x128xf32> to vector<32x128xf32>
      %22 = arith.mulf %21, %17 : vector<32x128xf32>
      %23 = arith.select %19, %17, %22 : vector<32x128xi1>, vector<32x128xf32>
      %24 = arith.truncf %23 : vector<32x128xf32> to vector<32x128xbf16>
      %c0_16 = arith.constant 0 : index
      %c0_17 = arith.constant 0 : index
      %25 = vector.load %arg5[%c0_16, %c0_17] : memref<32x128xbf16, #tpu.memory_space<vmem>>, vector<32x128xbf16>
      tpu.vector_store %arg5[%c0_16, %c0_17], %24 {strides = array<i32>} : memref<32x128xbf16, #tpu.memory_space<vmem>>, vector<32x128xbf16>,
    } else {
    }
    return
  }
  func.func @transform_0(%arg0: i32, %arg1: i32) -> (i32, i32, i32) {
    %c0_i32 = arith.constant 0 : i32
    %c0_i32_0 = arith.constant 0 : i32
    return %arg1, %arg0, %c0_i32 : i32, i32, i32
  }
  func.func @transform_1(%arg0: i32, %arg1: i32) -> (i32, i32, i32) {
    %c0_i32 = arith.constant 0 : i32
    %c0_i32_0 = arith.constant 0 : i32
    %c0_i32_1 = arith.constant 0 : i32
    return %arg1, %c0_i32, %c0_i32_0 : i32, i32, i32
  }
  func.func @transform_2(%arg0: i32, %arg1: i32) -> (i32, i32) {
    %c0_i32 = arith.constant 0 : i32
    %c0_i32_0 = arith.constant 0 : i32
    %c0_i32_1 = arith.constant 0 : i32
    return %c0_i32, %c0_i32_0 : i32, i32
  }
  func.func @transform_3(%arg0: i32, %arg1: i32) -> (i32, i32) {
    %c0_i32 = arith.constant 0 : i32
    %c0_i32_0 = arith.constant 0 : i32
    return %arg0, %c0_i32 : i32, i32
  }
}

module attributes {stable_mosaic.version = 11 : i64} {
  func.func @kernel(%arg0: i32, %arg1: i32, %arg2: memref<1x32x256xbf16, #tpu.memory_space<vmem>>, %arg3: memref<1x256x128xbf16, #tpu.memory_space<vmem>>, %arg4: memref<3x128xf32, #tpu.memory_space<vmem>>, %arg5: memref<32x128xbf16, #tpu.memory_space<vmem>>, %arg6: memref<32x128xbf16, #tpu.memory_space<vmem>>, %arg7: memref<32x128xf32, #tpu.memory_space<vmem>>) attributes {dimension_semantics = [#tpu.dimension_semantics<parallel>, #tpu.dimension_semantics<arbitrary>], iteration_bounds = array<i64: 1, 5>, scalar_prefetch = 0 : i64, scratch_operands = 1 : i64, tpu.core_type = #tpu.core_type<tc>, window_params = [{transform_indices = @transform_0, window_bounds = array<i64: 1, 32, 256>}, {transform_indices = @transform_1, window_bounds = array<i64: 1, 256, 128>}, {pipeline_mode = #tpu.pipeline_mode<synchronous>, transform_indices = @transform_2, window_bounds = array<i64: 3, 128>}, {transform_indices = @transform_3, window_bounds = array<i64: 32, 128>}, {transform_indices = @transform_4, window_bounds = array<i64: 32, 128>}]} {
    %c0_i32 = arith.constant 0 : i32
    %0 = arith.cmpi eq, %arg1, %c0_i32 : i32
    %1 = arith.extui %0 : i1 to i32
    %c0_i32_0 = arith.constant 0 : i32
    %2 = arith.cmpi ne, %1, %c0_i32_0 : i32
    scf.if %2 {
      %c0_11 = arith.constant 0 : index
      %c0_12 = arith.constant 0 : index
      %14 = vector.load %arg5[%c0_11, %c0_12] : memref<32x128xbf16, #tpu.memory_space<vmem>>, vector<32x128xbf16>
      %15 = arith.extf %14 : vector<32x128xbf16> to vector<32x128xf32>
      %c0_13 = arith.constant 0 : index
      %c0_14 = arith.constant 0 : index
      %16 = vector.load %arg4[%c0_13, %c0_14] : memref<3x128xf32, #tpu.memory_space<vmem>>, vector<1x128xf32>
      %17 = vector.broadcast %16 : vector<1x128xf32> to vector<32x128xf32>
      %18 = arith.mulf %15, %17 : vector<32x128xf32>
      %c0_15 = arith.constant 0 : index
      %c0_16 = arith.constant 0 : index
      %19 = vector.load %arg7[%c0_15, %c0_16] : memref<32x128xf32, #tpu.memory_space<vmem>>, vector<32x128xf32>
      tpu.vector_store %arg7[%c0_15, %c0_16], %18 {strides = array<i32>} : memref<32x128xf32, #tpu.memory_space<vmem>>, vector<32x128xf32>,
    } else {
    }
    %c0 = arith.constant 0 : index
    %c0_1 = arith.constant 0 : index
    %3 = vector.load %arg7[%c0, %c0_1] : memref<32x128xf32, #tpu.memory_space<vmem>>, vector<32x128xf32>
    %c0_2 = arith.constant 0 : index
    %c0_3 = arith.constant 0 : index
    %c0_4 = arith.constant 0 : index
    %4 = vector.load %arg2[%c0_2, %c0_3, %c0_4] : memref<1x32x256xbf16, #tpu.memory_space<vmem>>, vector<1x32x256xbf16>
    %5 = vector.shape_cast %4 : vector<1x32x256xbf16> to vector<32x256xbf16>
    %c0_5 = arith.constant 0 : index
    %c0_6 = arith.constant 0 : index
    %c0_7 = arith.constant 0 : index
    %6 = vector.load %arg3[%c0_5, %c0_6, %c0_7] : memref<1x256x128xbf16, #tpu.memory_space<vmem>>, vector<1x256x128xbf16>
    %7 = vector.shape_cast %6 : vector<1x256x128xbf16> to vector<256x128xbf16>
    %cst = arith.constant dense<0.000000e+00> : vector<32x128xf32>
    %8 = tpu.matmul %5, %7, %cst {dimension_numbers = #tpu.dot_dimension_numbers<[1], [0], [0], [1], [0, 0, 1, 1], [], []>} : vector<32x256xbf16>, vector<256x128xbf16>, vector<32x128xf32> -> vector<32x128xf32>
    %9 = arith.addf %3, %8 : vector<32x128xf32>
    %c0_8 = arith.constant 0 : index
    %c0_9 = arith.constant 0 : index
    %10 = vector.load %arg7[%c0_8, %c0_9] : memref<32x128xf32, #tpu.memory_space<vmem>>, vector<32x128xf32>
    tpu.vector_store %arg7[%c0_8, %c0_9], %9 {strides = array<i32>} : memref<32x128xf32, #tpu.memory_space<vmem>>, vector<32x128xf32>,
    %c4_i32 = arith.constant 4 : i32
    %11 = arith.cmpi eq, %arg1, %c4_i32 : i32
    %12 = arith.extui %11 : i1 to i32
    %c0_i32_10 = arith.constant 0 : i32
    %13 = arith.cmpi ne, %12, %c0_i32_10 : i32
    scf.if %13 {
      %c0_11 = arith.constant 0 : index
      %c0_12 = arith.constant 0 : index
      %14 = vector.load %arg7[%c0_11, %c0_12] : memref<32x128xf32, #tpu.memory_space<vmem>>, vector<32x128xf32>
      %c1 = arith.constant 1 : index
      %c0_13 = arith.constant 0 : index
      %15 = vector.load %arg4[%c1, %c0_13] : memref<3x128xf32, #tpu.memory_space<vmem>>, vector<1x128xf32>
      %16 = vector.broadcast %15 : vector<1x128xf32> to vector<32x128xf32>
      %17 = arith.addf %14, %16 : vector<32x128xf32>
      %cst_14 = arith.constant 0.000000e+00 : f32
      %18 = vector.broadcast %cst_14 : f32 to vector<32x128xf32>
      %19 = arith.cmpf ogt, %17, %18 : vector<32x128xf32>
      %c2 = arith.constant 2 : index
      %c0_15 = arith.constant 0 : index
      %20 = vector.load %arg4[%c2, %c0_15] : memref<3x128xf32, #tpu.memory_space<vmem>>, vector<1x128xf32>
      %21 = vector.broadcast %20 : vector<1x128xf32> to vector<32x128xf32>
      %22 = arith.mulf %21, %17 : vector<32x128xf32>
      %23 = arith.select %19, %17, %22 : vector<32x128xi1>, vector<32x128xf32>
      %24 = arith.truncf %23 : vector<32x128xf32> to vector<32x128xbf16>
      %c0_16 = arith.constant 0 : index
      %c0_17 = arith.constant 0 : index
      %25 = vector.load %arg6[%c0_16, %c0_17] : memref<32x128xbf16, #tpu.memory_space<vmem>>, vector<32x128xbf16>
      tpu.vector_store %arg6[%c0_16, %c0_17], %24 {strides = array<i32>} : memref<32x128xbf16, #tpu.memory_space<vmem>>, vector<32x128xbf16>,
    } else {
    }
    return
  }
  func.func @transform_0(%arg0: i32, %arg1: i32) -> (i32, i32, i32) {
    %c0_i32 = arith.constant 0 : i32
    %c0_i32_0 = arith.constant 0 : i32
    return %arg1, %arg0, %c0_i32 : i32, i32, i32
  }
  func.func @transform_1(%arg0: i32, %arg1: i32) -> (i32, i32, i32) {
    %c0_i32 = arith.constant 0 : i32
    %c0_i32_0 = arith.constant 0 : i32
    %c0_i32_1 = arith.constant 0 : i32
    return %arg1, %c0_i32, %c0_i32_0 : i32, i32, i32
  }
  func.func @transform_2(%arg0: i32, %arg1: i32) -> (i32, i32) {
    %c0_i32 = arith.constant 0 : i32
    %c0_i32_0 = arith.constant 0 : i32
    %c0_i32_1 = arith.constant 0 : i32
    return %c0_i32, %c0_i32_0 : i32, i32
  }
  func.func @transform_3(%arg0: i32, %arg1: i32) -> (i32, i32) {
    %c0_i32 = arith.constant 0 : i32
    %c0_i32_0 = arith.constant 0 : i32
    return %arg0, %c0_i32 : i32, i32
  }
  func.func @transform_4(%arg0: i32, %arg1: i32) -> (i32, i32) {
    %c0_i32 = arith.constant 0 : i32
    %c0_i32_0 = arith.constant 0 : i32
    return %arg0, %c0_i32 : i32, i32
  }
}

module attributes {stable_mosaic.version = 11 : i64} {
  func.func @_mm_normact_kernel(%arg0: i32, %arg1: memref<32x256xbf16, #tpu.memory_space<vmem>>, %arg2: memref<3x256xf32, #tpu.memory_space<vmem>>, %arg3: memref<256x128xbf16, #tpu.memory_space<vmem>>, %arg4: memref<32x128xf32, #tpu.memory_space<vmem>>) attributes {dimension_semantics = [#tpu.dimension_semantics<parallel>], iteration_bounds = array<i64: 1>, scalar_prefetch = 0 : i64, scratch_operands = 0 : i64, tpu.core_type = #tpu.core_type<tc>, window_params = [{transform_indices = @transform_0, window_bounds = array<i64: 32, 256>}, {pipeline_mode = #tpu.pipeline_mode<synchronous>, transform_indices = @transform_1, window_bounds = array<i64: 3, 256>}, {pipeline_mode = #tpu.pipeline_mode<synchronous>, transform_indices = @transform_2, window_bounds = array<i64: 256, 128>}, {transform_indices = @transform_3, window_bounds = array<i64: 32, 128>}]} {
    %c0 = arith.constant 0 : index
    %c0_0 = arith.constant 0 : index
    %0 = vector.load %arg1[%c0, %c0_0] : memref<32x256xbf16, #tpu.memory_space<vmem>>, vector<32x256xbf16>
    %1 = arith.extf %0 : vector<32x256xbf16> to vector<32x256xf32>
    %c0_1 = arith.constant 0 : index
    %c0_2 = arith.constant 0 : index
    %2 = vector.load %arg2[%c0_1, %c0_2] : memref<3x256xf32, #tpu.memory_space<vmem>>, vector<1x256xf32>
    %3 = vector.broadcast %2 : vector<1x256xf32> to vector<32x256xf32>
    %4 = arith.mulf %1, %3 : vector<32x256xf32>
    %c1 = arith.constant 1 : index
    %c0_3 = arith.constant 0 : index
    %5 = vector.load %arg2[%c1, %c0_3] : memref<3x256xf32, #tpu.memory_space<vmem>>, vector<1x256xf32>
    %6 = vector.broadcast %5 : vector<1x256xf32> to vector<32x256xf32>
    %7 = arith.addf %4, %6 : vector<32x256xf32>
    %cst = arith.constant 0.000000e+00 : f32
    %8 = vector.broadcast %cst : f32 to vector<32x256xf32>
    %9 = arith.cmpf ogt, %7, %8 : vector<32x256xf32>
    %c2 = arith.constant 2 : index
    %c0_4 = arith.constant 0 : index
    %10 = vector.load %arg2[%c2, %c0_4] : memref<3x256xf32, #tpu.memory_space<vmem>>, vector<1x256xf32>
    %11 = vector.broadcast %10 : vector<1x256xf32> to vector<32x256xf32>
    %12 = arith.mulf %11, %7 : vector<32x256xf32>
    %13 = arith.select %9, %7, %12 : vector<32x256xi1>, vector<32x256xf32>
    %14 = arith.truncf %13 : vector<32x256xf32> to vector<32x256xbf16>
    %c0_5 = arith.constant 0 : index
    %c0_6 = arith.constant 0 : index
    %15 = vector.load %arg3[%c0_5, %c0_6] : memref<256x128xbf16, #tpu.memory_space<vmem>>, vector<256x128xbf16>
    %cst_7 = arith.constant dense<0.000000e+00> : vector<32x128xf32>
    %16 = tpu.matmul %14, %15, %cst_7 {dimension_numbers = #tpu.dot_dimension_numbers<[1], [0], [0], [1], [0, 0, 1, 1], [], []>} : vector<32x256xbf16>, vector<256x128xbf16>, vector<32x128xf32> -> vector<32x128xf32>
    %c0_8 = arith.constant 0 : index
    %c0_9 = arith.constant 0 : index
    %17 = vector.load %arg4[%c0_8, %c0_9] : memref<32x128xf32, #tpu.memory_space<vmem>>, vector<32x128xf32>
    tpu.vector_store %arg4[%c0_8, %c0_9], %16 {strides = array<i32>} : memref<32x128xf32, #tpu.memory_space<vmem>>, vector<32x128xf32>,
    return
  }
  func.func @transform_0(%arg0: i32) -> (i32, i32) {
    %c0_i32 = arith.constant 0 : i32
    %c0_i32_0 = arith.constant 0 : i32
    return %arg0, %c0_i32 : i32, i32
  }
  func.func @transform_1(%arg0: i32) -> (i32, i32) {
    %c0_i32 = arith.constant 0 : i32
    %c0_i32_0 = arith.constant 0 : i32
    %c0_i32_1 = arith.constant 0 : i32
    return %c0_i32, %c0_i32_0 : i32, i32
  }
  func.func @transform_2(%arg0: i32) -> (i32, i32) {
    %c0_i32 = arith.constant 0 : i32
    %c0_i32_0 = arith.constant 0 : i32
    %c0_i32_1 = arith.constant 0 : i32
    return %c0_i32, %c0_i32_0 : i32, i32
  }
  func.func @transform_3(%arg0: i32) -> (i32, i32) {
    %c0_i32 = arith.constant 0 : i32
    %c0_i32_0 = arith.constant 0 : i32
    return %arg0, %c0_i32 : i32, i32
  }
}

</mosaic_0001>

<llo_original>
// kernel: espcnet_forward.19
$region0: #{espcnet_forward.19}
  #allocation0 [shape = 'u32[]', space=smem, size = 0x4, offset = 0x4, fixed_abs, tag = 'smem constant byte address 0x4 - core index']
  #allocation1 [shape = 'u32[72,128]{1,0:T(1,128)}', space=vmem, size = 0x9000, scoped, tag = 'internal scratch']
  %s0 = inlined_call_operand.vmem [shape: bf16[512,19], index: 0, kind: input, shape index: {}]
  %s1 = inlined_call_operand.vmem [shape: f32[3,19], index: 1, kind: input, shape index: {}]
  %s2 = inlined_call_operand.vmem [shape: bf16[512,19], index: 2, kind: output, shape index: {}]
  %s3 = sld [smem:[#allocation0]]
  $region18: #{espcnet_forward.19} parent=0
    _
  %s5 = ssub.s32 1, %s3
  %s6 = scalar_select 0, %s5, %s3
  // Predicated region
  $region2: #{espcnet_forward.19} parent=0 // pred_check
    _
  $region3: #{espcnet_forward.19} parent=0 // pred_check_branch
    %8 = sbr.rel (0) target = $region5
  $region4: #{espcnet_forward.19} parent=0 // pred_region
    _
  $region5: #{espcnet_forward.19} parent=0 // pred_fallthru
    _
  // Predicated region
  $region6: #{espcnet_forward.19} parent=0 // pred_check
    _
  $region7: #{espcnet_forward.19} parent=0 // pred_check_branch
    %10 = sbr.rel (0) target = $region9
  $region8: #{espcnet_forward.19} parent=0 // pred_region
    _
  $region9: #{espcnet_forward.19} parent=0 // pred_fallthru
    _
  %v11 = vld [vmem:[%s0] sm:$0xf]
  %v12 = vld [vmem:[%s0 + $0x4] sm:$0xf]
  %v13 = vld [vmem:[%s0 + $0x8] sm:$0xf]
  %v14 = vld [vmem:[%s0 + $0xc] sm:$0xf]
  %v15 = vld [vmem:[%s0 + $0x10] sm:$0xf]
  %v16 = vld [vmem:[%s0 + $0x14] sm:$0xf]
  %v17 = vld [vmem:[%s0 + $0x18] sm:$0xf]
  %v18 = vld [vmem:[%s0 + $0x1c] sm:$0xf]
  %v19 = vld [vmem:[%s0 + $0x20] sm:$0xf]
  %v20 = vld [vmem:[%s0 + $0x24] sm:$0xf]
  %v21 = vld [vmem:[%s0 + $0x28] sm:$0xf]
  %v22 = vld [vmem:[%s0 + $0x2c] sm:$0xf]
  %v23 = vld [vmem:[%s0 + $0x30] sm:$0xf]
  %v24 = vld [vmem:[%s0 + $0x34] sm:$0xf]
  %v25 = vld [vmem:[%s0 + $0x38] sm:$0xf]
  %v26 = vld [vmem:[%s0 + $0x3c] sm:$0xf]
  %v27 = vld [vmem:[%s0 + $0x40] sm:$0xf]
  %v28 = vld [vmem:[%s0 + $0x44] sm:$0xf]
  %v29 = vld [vmem:[%s0 + $0x48] sm:$0xf]
  %v30 = vld [vmem:[%s0 + $0x4c] sm:$0xf]
  %v31 = vld [vmem:[%s0 + $0x50] sm:$0xf]
  %v32 = vld [vmem:[%s0 + $0x54] sm:$0xf]
  %v33 = vld [vmem:[%s0 + $0x58] sm:$0xf]
  %v34 = vld [vmem:[%s0 + $0x5c] sm:$0xf]
  %v35 = vld [vmem:[%s0 + $0x60] sm:$0xf]
  %v36 = vld [vmem:[%s0 + $0x64] sm:$0xf]
  %v37 = vld [vmem:[%s0 + $0x68] sm:$0xf]
  %v38 = vld [vmem:[%s0 + $0x6c] sm:$0xf]
  %v39 = vld [vmem:[%s0 + $0x70] sm:$0xf]
  %v40 = vld [vmem:[%s0 + $0x74] sm:$0xf]
  %v41 = vld [vmem:[%s0 + $0x78] sm:$0xf]
  %v42 = vld [vmem:[%s0 + $0x7c] sm:$0xf]
  %v43 = vld [vmem:[%s0 + $0x80] sm:$0xf]
  %v44 = vld [vmem:[%s0 + $0x84] sm:$0xf]
  %v45 = vld [vmem:[%s0 + $0x88] sm:$0xf]
  %v46 = vld [vmem:[%s0 + $0x8c] sm:$0xf]
  %v47 = vld [vmem:[%s0 + $0x90] sm:$0xf]
  %v48 = vld [vmem:[%s0 + $0x94] sm:$0xf]
  %v49 = vld [vmem:[%s0 + $0x98] sm:$0xf]
  %v50 = vld [vmem:[%s0 + $0x9c] sm:$0xf]
  %v51 = vld [vmem:[%s0 + $0xa0] sm:$0xf]
  %v52 = vld [vmem:[%s0 + $0xa4] sm:$0xf]
  %v53 = vld [vmem:[%s0 + $0xa8] sm:$0xf]
  %v54 = vld [vmem:[%s0 + $0xac] sm:$0xf]
  %v55 = vld [vmem:[%s0 + $0xb0] sm:$0xf]
  %v56 = vld [vmem:[%s0 + $0xb4] sm:$0xf]
  %v57 = vld [vmem:[%s0 + $0xb8] sm:$0xf]
  %v58 = vld [vmem:[%s0 + $0xbc] sm:$0xf]
  %v59 = vld [vmem:[%s0 + $0xc0] sm:$0xf]
  %v60 = vld [vmem:[%s0 + $0xc4] sm:$0xf]
  %v61 = vld [vmem:[%s0 + $0xc8] sm:$0xf]
  %v62 = vld [vmem:[%s0 + $0xcc] sm:$0xf]
  %v63 = vld [vmem:[%s0 + $0xd0] sm:$0xf]
  %v64 = vld [vmem:[%s0 + $0xd4] sm:$0xf]
  %v65 = vld [vmem:[%s0 + $0xd8] sm:$0xf]
  %v66 = vld [vmem:[%s0 + $0xdc] sm:$0xf]
  %v67 = vld [vmem:[%s0 + $0xe0] sm:$0xf]
  %v68 = vld [vmem:[%s0 + $0xe4] sm:$0xf]
  %v69 = vld [vmem:[%s0 + $0xe8] sm:$0xf]
  %v70 = vld [vmem:[%s0 + $0xec] sm:$0xf]
  %v71 = vld [vmem:[%s0 + $0xf0] sm:$0xf]
  %v72 = vld [vmem:[%s0 + $0xf4] sm:$0xf]
  %v73 = vld [vmem:[%s0 + $0xf8] sm:$0xf]
  %v74 = vld [vmem:[%s0 + $0xfc] sm:$0xf]
  %v75 = vunpack.c.l.bf16 %v11
  %v76 = vunpack.c.l.bf16 %v12
  %v77 = vunpack.c.l.bf16 %v13
  %v78 = vunpack.c.l.bf16 %v14
  %v79 = vunpack.c.l.bf16 %v15
  %v80 = vunpack.c.l.bf16 %v16
  %v81 = vunpack.c.l.bf16 %v17
  %v82 = vunpack.c.l.bf16 %v18
  %v83 = vunpack.c.l.bf16 %v19
  %v84 = vunpack.c.l.bf16 %v20
  %v85 = vunpack.c.l.bf16 %v21
  %v86 = vunpack.c.l.bf16 %v22
  %v87 = vunpack.c.l.bf16 %v23
  %v88 = vunpack.c.l.bf16 %v24
  %v89 = vunpack.c.l.bf16 %v25
  %v90 = vunpack.c.l.bf16 %v26
  %v91 = vunpack.c.l.bf16 %v27
  %v92 = vunpack.c.l.bf16 %v28
  %v93 = vunpack.c.l.bf16 %v29
  %v94 = vunpack.c.l.bf16 %v30
  %v95 = vunpack.c.l.bf16 %v31
  %v96 = vunpack.c.l.bf16 %v32
  %v97 = vunpack.c.l.bf16 %v33
  %v98 = vunpack.c.l.bf16 %v34
  %v99 = vunpack.c.l.bf16 %v35
  %v100 = vunpack.c.l.bf16 %v36
  %v101 = vunpack.c.l.bf16 %v37
  %v102 = vunpack.c.l.bf16 %v38
  %v103 = vunpack.c.l.bf16 %v39
  %v104 = vunpack.c.l.bf16 %v40
  %v105 = vunpack.c.l.bf16 %v41
  %v106 = vunpack.c.l.bf16 %v42
  %v107 = vunpack.c.l.bf16 %v43
  %v108 = vunpack.c.l.bf16 %v44
  %v109 = vunpack.c.l.bf16 %v45
  %v110 = vunpack.c.l.bf16 %v46
  %v111 = vunpack.c.l.bf16 %v47
  %v112 = vunpack.c.l.bf16 %v48
  %v113 = vunpack.c.l.bf16 %v49
  %v114 = vunpack.c.l.bf16 %v50
  %v115 = vunpack.c.l.bf16 %v51
  %v116 = vunpack.c.l.bf16 %v52
  %v117 = vunpack.c.l.bf16 %v53
  %v118 = vunpack.c.l.bf16 %v54
  %v119 = vunpack.c.l.bf16 %v55
  %v120 = vunpack.c.l.bf16 %v56
  %v121 = vunpack.c.l.bf16 %v57
  %v122 = vunpack.c.l.bf16 %v58
  %v123 = vunpack.c.l.bf16 %v59
  %v124 = vunpack.c.l.bf16 %v60
  %v125 = vunpack.c.l.bf16 %v61
  %v126 = vunpack.c.l.bf16 %v62
  %v127 = vunpack.c.l.bf16 %v63
  %v128 = vunpack.c.l.bf16 %v64
  %v129 = vunpack.c.l.bf16 %v65
  %v130 = vunpack.c.l.bf16 %v66
  %v131 = vunpack.c.l.bf16 %v67
  %v132 = vunpack.c.l.bf16 %v68
  %v133 = vunpack.c.l.bf16 %v69
  %v134 = vunpack.c.l.bf16 %v70
  %v135 = vunpack.c.l.bf16 %v71
  %v136 = vunpack.c.l.bf16 %v72
  %v137 = vunpack.c.l.bf16 %v73
  %v138 = vunpack.c.l.bf16 %v74
  %v139 = vld [vmem:[%s1] sm:$0x1]
  %v140 = vperm.slane %v139, 0
  %v141 = vmul.f32 %v75, %v140
  %v142 = vmul.f32 %v76, %v140
  %v143 = vmul.f32 %v77, %v140
  %v144 = vmul.f32 %v78, %v140
  %v145 = vmul.f32 %v79, %v140
  %v146 = vmul.f32 %v80, %v140
  %v147 = vmul.f32 %v81, %v140
  %v148 = vmul.f32 %v82, %v140
  %v149 = vmul.f32 %v83, %v140
  %v150 = vmul.f32 %v84, %v140
  %v151 = vmul.f32 %v85, %v140
  %v152 = vmul.f32 %v86, %v140
  %v153 = vmul.f32 %v87, %v140
  %v154 = vmul.f32 %v88, %v140
  %v155 = vmul.f32 %v89, %v140
  %v156 = vmul.f32 %v90, %v140
  %v157 = vmul.f32 %v91, %v140
  %v158 = vmul.f32 %v92, %v140
  %v159 = vmul.f32 %v93, %v140
  %v160 = vmul.f32 %v94, %v140
  %v161 = vmul.f32 %v95, %v140
  %v162 = vmul.f32 %v96, %v140
  %v163 = vmul.f32 %v97, %v140
  %v164 = vmul.f32 %v98, %v140
  %v165 = vmul.f32 %v99, %v140
  %v166 = vmul.f32 %v100, %v140
  %v167 = vmul.f32 %v101, %v140
  %v168 = vmul.f32 %v102, %v140
  %v169 = vmul.f32 %v103, %v140
  %v170 = vmul.f32 %v104, %v140
  %v171 = vmul.f32 %v105, %v140
  %v172 = vmul.f32 %v106, %v140
  %v173 = vmul.f32 %v107, %v140
  %v174 = vmul.f32 %v108, %v140
  %v175 = vmul.f32 %v109, %v140
  %v176 = vmul.f32 %v110, %v140
  %v177 = vmul.f32 %v111, %v140
  %v178 = vmul.f32 %v112, %v140
  %v179 = vmul.f32 %v113, %v140
  %v180 = vmul.f32 %v114, %v140
  %v181 = vmul.f32 %v115, %v140
  %v182 = vmul.f32 %v116, %v140
  %v183 = vmul.f32 %v117, %v140
  %v184 = vmul.f32 %v118, %v140
  %v185 = vmul.f32 %v119, %v140
  %v186 = vmul.f32 %v120, %v140
  %v187 = vmul.f32 %v121, %v140
  %v188 = vmul.f32 %v122, %v140
  %v189 = vmul.f32 %v123, %v140
  %v190 = vmul.f32 %v124, %v140
  %v191 = vmul.f32 %v125, %v140
  %v192 = vmul.f32 %v126, %v140
  %v193 = vmul.f32 %v127, %v140
  %v194 = vmul.f32 %v128, %v140
  %v195 = vmul.f32 %v129, %v140
  %v196 = vmul.f32 %v130, %v140
  %v197 = vmul.f32 %v131, %v140
  %v198 = vmul.f32 %v132, %v140
  %v199 = vmul.f32 %v133, %v140
  %v200 = vmul.f32 %v134, %v140
  %v201 = vmul.f32 %v135, %v140
  %v202 = vmul.f32 %v136, %v140
  %v203 = vmul.f32 %v137, %v140
  %v204 = vmul.f32 %v138, %v140
  %v205 = vld [vmem:[%s1 + $0x1] sm:$0x1]
  %v206 = vperm.slane %v205, 0
  %v207 = vadd.f32 %v141, %v206
  %v208 = vadd.f32 %v142, %v206
  %v209 = vadd.f32 %v143, %v206
  %v210 = vadd.f32 %v144, %v206
  %v211 = vadd.f32 %v145, %v206
  %v212 = vadd.f32 %v146, %v206
  %v213 = vadd.f32 %v147, %v206
  %v214 = vadd.f32 %v148, %v206
  %v215 = vadd.f32 %v149, %v206
  %v216 = vadd.f32 %v150, %v206
  %v217 = vadd.f32 %v151, %v206
  %v218 = vadd.f32 %v152, %v206
  %v219 = vadd.f32 %v153, %v206
  %v220 = vadd.f32 %v154, %v206
  %v221 = vadd.f32 %v155, %v206
  %v222 = vadd.f32 %v156, %v206
  %v223 = vadd.f32 %v157, %v206
  %v224 = vadd.f32 %v158, %v206
  %v225 = vadd.f32 %v159, %v206
  %v226 = vadd.f32 %v160, %v206
  %v227 = vadd.f32 %v161, %v206
  %v228 = vadd.f32 %v162, %v206
  %v229 = vadd.f32 %v163, %v206
  %v230 = vadd.f32 %v164, %v206
  %v231 = vadd.f32 %v165, %v206
  %v232 = vadd.f32 %v166, %v206
  %v233 = vadd.f32 %v167, %v206
  %v234 = vadd.f32 %v168, %v206
  %v235 = vadd.f32 %v169, %v206
  %v236 = vadd.f32 %v170, %v206
  %v237 = vadd.f32 %v171, %v206
  %v238 = vadd.f32 %v172, %v206
  %v239 = vadd.f32 %v173, %v206
  %v240 = vadd.f32 %v174, %v206
  %v241 = vadd.f32 %v175, %v206
  %v242 = vadd.f32 %v176, %v206
  %v243 = vadd.f32 %v177, %v206
  %v244 = vadd.f32 %v178, %v206
  %v245 = vadd.f32 %v179, %v206
  %v246 = vadd.f32 %v180, %v206
  %v247 = vadd.f32 %v181, %v206
  %v248 = vadd.f32 %v182, %v206
  %v249 = vadd.f32 %v183, %v206
  %v250 = vadd.f32 %v184, %v206
  %v251 = vadd.f32 %v185, %v206
  %v252 = vadd.f32 %v186, %v206
  %v253 = vadd.f32 %v187, %v206
  %v254 = vadd.f32 %v188, %v206
  %v255 = vadd.f32 %v189, %v206
  %v256 = vadd.f32 %v190, %v206
  %v257 = vadd.f32 %v191, %v206
  %v258 = vadd.f32 %v192, %v206
  %v259 = vadd.f32 %v193, %v206
  %v260 = vadd.f32 %v194, %v206
  %v261 = vadd.f32 %v195, %v206
  %v262 = vadd.f32 %v196, %v206
  %v263 = vadd.f32 %v197, %v206
  %v264 = vadd.f32 %v198, %v206
  %v265 = vadd.f32 %v199, %v206
  %v266 = vadd.f32 %v200, %v206
  %v267 = vadd.f32 %v201, %v206
  %v268 = vadd.f32 %v202, %v206
  %v269 = vadd.f32 %v203, %v206
  %v270 = vadd.f32 %v204, %v206
  %vm271 = vcmp.gt.f32.partialorder %v207, 0.0
  %vm272 = vcmp.gt.f32.partialorder %v208, 0.0
  %vm273 = vcmp.gt.f32.partialorder %v209, 0.0
  %vm274 = vcmp.gt.f32.partialorder %v210, 0.0
  %vm275 = vcmp.gt.f32.partialorder %v211, 0.0
  %vm276 = vcmp.gt.f32.partialorder %v212, 0.0
  %vm277 = vcmp.gt.f32.partialorder %v213, 0.0
  %vm278 = vcmp.gt.f32.partialorder %v214, 0.0
  %vm279 = vcmp.gt.f32.partialorder %v215, 0.0
  %vm280 = vcmp.gt.f32.partialorder %v216, 0.0
  %vm281 = vcmp.gt.f32.partialorder %v217, 0.0
  %vm282 = vcmp.gt.f32.partialorder %v218, 0.0
  %vm283 = vcmp.gt.f32.partialorder %v219, 0.0
  %vm284 = vcmp.gt.f32.partialorder %v220, 0.0
  %vm285 = vcmp.gt.f32.partialorder %v221, 0.0
  %vm286 = vcmp.gt.f32.partialorder %v222, 0.0
  %vm287 = vcmp.gt.f32.partialorder %v223, 0.0
  %vm288 = vcmp.gt.f32.partialorder %v224, 0.0
  %vm289 = vcmp.gt.f32.partialorder %v225, 0.0
  %vm290 = vcmp.gt.f32.partialorder %v226, 0.0
  %vm291 = vcmp.gt.f32.partialorder %v227, 0.0
  %vm292 = vcmp.gt.f32.partialorder %v228, 0.0
  %vm293 = vcmp.gt.f32.partialorder %v229, 0.0
  %vm294 = vcmp.gt.f32.partialorder %v230, 0.0
  %vm295 = vcmp.gt.f32.partialorder %v231, 0.0
  %vm296 = vcmp.gt.f32.partialorder %v232, 0.0
  %vm297 = vcmp.gt.f32.partialorder %v233, 0.0
  %vm298 = vcmp.gt.f32.partialorder %v234, 0.0
  %vm299 = vcmp.gt.f32.partialorder %v235, 0.0
  %vm300 = vcmp.gt.f32.partialorder %v236, 0.0
  %vm301 = vcmp.gt.f32.partialorder %v237, 0.0
  %vm302 = vcmp.gt.f32.partialorder %v238, 0.0
  %vm303 = vcmp.gt.f32.partialorder %v239, 0.0
  %vm304 = vcmp.gt.f32.partialorder %v240, 0.0
  %vm305 = vcmp.gt.f32.partialorder %v241, 0.0
  %vm306 = vcmp.gt.f32.partialorder %v242, 0.0
  %vm307 = vcmp.gt.f32.partialorder %v243, 0.0
  %vm308 = vcmp.gt.f32.partialorder %v244, 0.0
  %vm309 = vcmp.gt.f32.partialorder %v245, 0.0
  %vm310 = vcmp.gt.f32.partialorder %v246, 0.0
  %vm311 = vcmp.gt.f32.partialorder %v247, 0.0
  %vm312 = vcmp.gt.f32.partialorder %v248, 0.0
  %vm313 = vcmp.gt.f32.partialorder %v249, 0.0
  %vm314 = vcmp.gt.f32.partialorder %v250, 0.0
  %vm315 = vcmp.gt.f32.partialorder %v251, 0.0
  %vm316 = vcmp.gt.f32.partialorder %v252, 0.0
  %vm317 = vcmp.gt.f32.partialorder %v253, 0.0
  %vm318 = vcmp.gt.f32.partialorder %v254, 0.0
  %vm319 = vcmp.gt.f32.partialorder %v255, 0.0
  %vm320 = vcmp.gt.f32.partialorder %v256, 0.0
  %vm321 = vcmp.gt.f32.partialorder %v257, 0.0
  %vm322 = vcmp.gt.f32.partialorder %v258, 0.0
  %vm323 = vcmp.gt.f32.partialorder %v259, 0.0
  %vm324 = vcmp.gt.f32.partialorder %v260, 0.0
  %vm325 = vcmp.gt.f32.partialorder %v261, 0.0
  %vm326 = vcmp.gt.f32.partialorder %v262, 0.0
  %vm327 = vcmp.gt.f32.partialorder %v263, 0.0
  %vm328 = vcmp.gt.f32.partialorder %v264, 0.0
  %vm329 = vcmp.gt.f32.partialorder %v265, 0.0
  %vm330 = vcmp.gt.f32.partialorder %v266, 0.0
  %vm331 = vcmp.gt.f32.partialorder %v267, 0.0
  %vm332 = vcmp.gt.f32.partialorder %v268, 0.0
  %vm333 = vcmp.gt.f32.partialorder %v269, 0.0
  %vm334 = vcmp.gt.f32.partialorder %v270, 0.0
  %v335 = vld [vmem:[%s1 + $0x2] sm:$0x1]
  %v336 = vperm.slane %v335, 0
  %v337 = vmul.f32 %v336, %v207
  %v338 = vmul.f32 %v336, %v208
  %v339 = vmul.f32 %v336, %v209
  %v340 = vmul.f32 %v336, %v210
  %v341 = vmul.f32 %v336, %v211
  %v342 = vmul.f32 %v336, %v212
  %v343 = vmul.f32 %v336, %v213
  %v344 = vmul.f32 %v336, %v214
  %v345 = vmul.f32 %v336, %v215
  %v346 = vmul.f32 %v336, %v216
  %v347 = vmul.f32 %v336, %v217
  %v348 = vmul.f32 %v336, %v218
  %v349 = vmul.f32 %v336, %v219
  %v350 = vmul.f32 %v336, %v220
  %v351 = vmul.f32 %v336, %v221
  %v352 = vmul.f32 %v336, %v222
  %v353 = vmul.f32 %v336, %v223
  %v354 = vmul.f32 %v336, %v224
  %v355 = vmul.f32 %v336, %v225
  %v356 = vmul.f32 %v336, %v226
  %v357 = vmul.f32 %v336, %v227
  %v358 = vmul.f32 %v336, %v228
  %v359 = vmul.f32 %v336, %v229
  %v360 = vmul.f32 %v336, %v230
  %v361 = vmul.f32 %v336, %v231
  %v362 = vmul.f32 %v336, %v232
  %v363 = vmul.f32 %v336, %v233
  %v364 = vmul.f32 %v336, %v234
  %v365 = vmul.f32 %v336, %v235
  %v366 = vmul.f32 %v336, %v236
  %v367 = vmul.f32 %v336, %v237
  %v368 = vmul.f32 %v336, %v238
  %v369 = vmul.f32 %v336, %v239
  %v370 = vmul.f32 %v336, %v240
  %v371 = vmul.f32 %v336, %v241
  %v372 = vmul.f32 %v336, %v242
  %v373 = vmul.f32 %v336, %v243
  %v374 = vmul.f32 %v336, %v244
  %v375 = vmul.f32 %v336, %v245
  %v376 = vmul.f32 %v336, %v246
  %v377 = vmul.f32 %v336, %v247
  %v378 = vmul.f32 %v336, %v248
  %v379 = vmul.f32 %v336, %v249
  %v380 = vmul.f32 %v336, %v250
  %v381 = vmul.f32 %v336, %v251
  %v382 = vmul.f32 %v336, %v252
  %v383 = vmul.f32 %v336, %v253
  %v384 = vmul.f32 %v336, %v254
  %v385 = vmul.f32 %v336, %v255
  %v386 = vmul.f32 %v336, %v256
  %v387 = vmul.f32 %v336, %v257
  %v388 = vmul.f32 %v336, %v258
  %v389 = vmul.f32 %v336, %v259
  %v390 = vmul.f32 %v336, %v260
  %v391 = vmul.f32 %v336, %v261
  %v392 = vmul.f32 %v336, %v262
  %v393 = vmul.f32 %v336, %v263
  %v394 = vmul.f32 %v336, %v264
  %v395 = vmul.f32 %v336, %v265
  %v396 = vmul.f32 %v336, %v266
  %v397 = vmul.f32 %v336, %v267
  %v398 = vmul.f32 %v336, %v268
  %v399 = vmul.f32 %v336, %v269
  %v400 = vmul.f32 %v336, %v270
  %v401 = vsel %vm271, %v207, %v337
  %v402 = vsel %vm272, %v208, %v338
  %v403 = vsel %vm273, %v209, %v339
  %v404 = vsel %vm274, %v210, %v340
  %v405 = vsel %vm275, %v211, %v341
  %v406 = vsel %vm276, %v212, %v342
  %v407 = vsel %vm277, %v213, %v343
  %v408 = vsel %vm278, %v214, %v344
  %v409 = vsel %vm279, %v215, %v345
  %v410 = vsel %vm280, %v216, %v346
  %v411 = vsel %vm281, %v217, %v347
  %v412 = vsel %vm282, %v218, %v348
  %v413 = vsel %vm283, %v219, %v349
  %v414 = vsel %vm284, %v220, %v350
  %v415 = vsel %vm285, %v221, %v351
  %v416 = vsel %vm286, %v222, %v352
  %v417 = vsel %vm287, %v223, %v353
  %v418 = vsel %vm288, %v224, %v354
  %v419 = vsel %vm289, %v225, %v355
  %v420 = vsel %vm290, %v226, %v356
  %v421 = vsel %vm291, %v227, %v357
  %v422 = vsel %vm292, %v228, %v358
  %v423 = vsel %vm293, %v229, %v359
  %v424 = vsel %vm294, %v230, %v360
  %v425 = vsel %vm295, %v231, %v361
  %v426 = vsel %vm296, %v232, %v362
  %v427 = vsel %vm297, %v233, %v363
  %v428 = vsel %vm298, %v234, %v364
  %v429 = vsel %vm299, %v235, %v365
  %v430 = vsel %vm300, %v236, %v366
  %v431 = vsel %vm301, %v237, %v367
  %v432 = vsel %vm302, %v238, %v368
  %v433 = vsel %vm303, %v239, %v369
  %v434 = vsel %vm304, %v240, %v370
  %v435 = vsel %vm305, %v241, %v371
  %v436 = vsel %vm306, %v242, %v372
  %v437 = vsel %vm307, %v243, %v373
  %v438 = vsel %vm308, %v244, %v374
  %v439 = vsel %vm309, %v245, %v375
  %v440 = vsel %vm310, %v246, %v376
  %v441 = vsel %vm311, %v247, %v377
  %v442 = vsel %vm312, %v248, %v378
  %v443 = vsel %vm313, %v249, %v379
  %v444 = vsel %vm314, %v250, %v380
  %v445 = vsel %vm315, %v251, %v381
  %v446 = vsel %vm316, %v252, %v382
  %v447 = vsel %vm317, %v253, %v383
  %v448 = vsel %vm318, %v254, %v384
  %v449 = vsel %vm319, %v255, %v385
  %v450 = vsel %vm320, %v256, %v386
  %v451 = vsel %vm321, %v257, %v387
  %v452 = vsel %vm322, %v258, %v388
  %v453 = vsel %vm323, %v259, %v389
  %v454 = vsel %vm324, %v260, %v390
  %v455 = vsel %vm325, %v261, %v391
  %v456 = vsel %vm326, %v262, %v392
  %v457 = vsel %vm327, %v263, %v393
  %v458 = vsel %vm328, %v264, %v394
  %v459 = vsel %vm329, %v265, %v395
  %v460 = vsel %vm330, %v266, %v396
  %v461 = vsel %vm331, %v267, %v397
  %v462 = vsel %vm332, %v268, %v398
  %v463 = vsel %vm333, %v269, %v399
  %v464 = vsel %vm334, %v270, %v400
  %v465 = vpack.c.bf16 %v401, %v401
  %v466 = vpack.c.bf16 %v402, %v402
  %v467 = vpack.c.bf16 %v403, %v403
  %v468 = vpack.c.bf16 %v404, %v404
  %v469 = vpack.c.bf16 %v405, %v405
  %v470 = vpack.c.bf16 %v406, %v406
  %v471 = vpack.c.bf16 %v407, %v407
  %v472 = vpack.c.bf16 %v408, %v408
  %v473 = vpack.c.bf16 %v409, %v409
  %v474 = vpack.c.bf16 %v410, %v410
  %v475 = vpack.c.bf16 %v411, %v411
  %v476 = vpack.c.bf16 %v412, %v412
  %v477 = vpack.c.bf16 %v413, %v413
  %v478 = vpack.c.bf16 %v414, %v414
  %v479 = vpack.c.bf16 %v415, %v415
  %v480 = vpack.c.bf16 %v416, %v416
  %v481 = vpack.c.bf16 %v417, %v417
  %v482 = vpack.c.bf16 %v418, %v418
  %v483 = vpack.c.bf16 %v419, %v419
  %v484 = vpack.c.bf16 %v420, %v420
  %v485 = vpack.c.bf16 %v421, %v421
  %v486 = vpack.c.bf16 %v422, %v422
  %v487 = vpack.c.bf16 %v423, %v423
  %v488 = vpack.c.bf16 %v424, %v424
  %v489 = vpack.c.bf16 %v425, %v425
  %v490 = vpack.c.bf16 %v426, %v426
  %v491 = vpack.c.bf16 %v427, %v427
  %v492 = vpack.c.bf16 %v428, %v428
  %v493 = vpack.c.bf16 %v429, %v429
  %v494 = vpack.c.bf16 %v430, %v430
  %v495 = vpack.c.bf16 %v431, %v431
  %v496 = vpack.c.bf16 %v432, %v432
  %v497 = vpack.c.bf16 %v433, %v433
  %v498 = vpack.c.bf16 %v434, %v434
  %v499 = vpack.c.bf16 %v435, %v435
  %v500 = vpack.c.bf16 %v436, %v436
  %v501 = vpack.c.bf16 %v437, %v437
  %v502 = vpack.c.bf16 %v438, %v438
  %v503 = vpack.c.bf16 %v439, %v439
  %v504 = vpack.c.bf16 %v440, %v440
  %v505 = vpack.c.bf16 %v441, %v441
  %v506 = vpack.c.bf16 %v442, %v442
  %v507 = vpack.c.bf16 %v443, %v443
  %v508 = vpack.c.bf16 %v444, %v444
  %v509 = vpack.c.bf16 %v445, %v445
  %v510 = vpack.c.bf16 %v446, %v446
  %v511 = vpack.c.bf16 %v447, %v447
  %v512 = vpack.c.bf16 %v448, %v448
  %v513 = vpack.c.bf16 %v449, %v449
  %v514 = vpack.c.bf16 %v450, %v450
  %v515 = vpack.c.bf16 %v451, %v451
  %v516 = vpack.c.bf16 %v452, %v452
  %v517 = vpack.c.bf16 %v453, %v453
  %v518 = vpack.c.bf16 %v454, %v454
  %v519 = vpack.c.bf16 %v455, %v455
  %v520 = vpack.c.bf16 %v456, %v456
  %v521 = vpack.c.bf16 %v457, %v457
  %v522 = vpack.c.bf16 %v458, %v458
  %v523 = vpack.c.bf16 %v459, %v459
  %v524 = vpack.c.bf16 %v460, %v460
  %v525 = vpack.c.bf16 %v461, %v461
  %v526 = vpack.c.bf16 %v462, %v462
  %v527 = vpack.c.bf16 %v463, %v463
  %v528 = vpack.c.bf16 %v464, %v464
  %vm529 = vcmask 150528
  %530 = vst.msk [vmem:[%s2] sm:$0xf] %vm529, %v465
  %531 = vst.msk [vmem:[%s2 + $0x4] sm:$0xf] %vm529, %v466
  %532 = vst.msk [vmem:[%s2 + $0x8] sm:$0xf] %vm529, %v467
  %533 = vst.msk [vmem:[%s2 + $0xc] sm:$0xf] %vm529, %v468
  %534 = vst.msk [vmem:[%s2 + $0x10] sm:$0xf] %vm529, %v469
  %535 = vst.msk [vmem:[%s2 + $0x14] sm:$0xf] %vm529, %v470
  %536 = vst.msk [vmem:[%s2 + $0x18] sm:$0xf] %vm529, %v471
  %537 = vst.msk [vmem:[%s2 + $0x1c] sm:$0xf] %vm529, %v472
  %538 = vst.msk [vmem:[%s2 + $0x20] sm:$0xf] %vm529, %v473
  %539 = vst.msk [vmem:[%s2 + $0x24] sm:$0xf] %vm529, %v474
  %540 = vst.msk [vmem:[%s2 + $0x28] sm:$0xf] %vm529, %v475
  %541 = vst.msk [vmem:[%s2 + $0x2c] sm:$0xf] %vm529, %v476
  %542 = vst.msk [vmem:[%s2 + $0x30] sm:$0xf] %vm529, %v477
  %543 = vst.msk [vmem:[%s2 + $0x34] sm:$0xf] %vm529, %v478
  %544 = vst.msk [vmem:[%s2 + $0x38] sm:$0xf] %vm529, %v479
  %545 = vst.msk [vmem:[%s2 + $0x3c] sm:$0xf] %vm529, %v480
  %546 = vst.msk [vmem:[%s2 + $0x40] sm:$0xf] %vm529, %v481
  %547 = vst.msk [vmem:[%s2 + $0x44] sm:$0xf] %vm529, %v482
  %548 = vst.msk [vmem:[%s2 + $0x48] sm:$0xf] %vm529, %v483
  %549 = vst.msk [vmem:[%s2 + $0x4c] sm:$0xf] %vm529, %v484
  %550 = vst.msk [vmem:[%s2 + $0x50] sm:$0xf] %vm529, %v485
  %551 = vst.msk [vmem:[%s2 + $0x54] sm:$0xf] %vm529, %v486
  %552 = vst.msk [vmem:[%s2 + $0x58] sm:$0xf] %vm529, %v487
  %553 = vst.msk [vmem:[%s2 + $0x5c] sm:$0xf] %vm529, %v488
  %554 = vst.msk [vmem:[%s2 + $0x60] sm:$0xf] %vm529, %v489
  %555 = vst.msk [vmem:[%s2 + $0x64] sm:$0xf] %vm529, %v490
  %556 = vst.msk [vmem:[%s2 + $0x68] sm:$0xf] %vm529, %v491
  %557 = vst.msk [vmem:[%s2 + $0x6c] sm:$0xf] %vm529, %v492
  %558 = vst.msk [vmem:[%s2 + $0x70] sm:$0xf] %vm529, %v493
  %559 = vst.msk [vmem:[%s2 + $0x74] sm:$0xf] %vm529, %v494
  %560 = vst.msk [vmem:[%s2 + $0x78] sm:$0xf] %vm529, %v495
  %561 = vst.msk [vmem:[%s2 + $0x7c] sm:$0xf] %vm529, %v496
  %562 = vst.msk [vmem:[%s2 + $0x80] sm:$0xf] %vm529, %v497
  %563 = vst.msk [vmem:[%s2 + $0x84] sm:$0xf] %vm529, %v498
  %564 = vst.msk [vmem:[%s2 + $0x88] sm:$0xf] %vm529, %v499
  %565 = vst.msk [vmem:[%s2 + $0x8c] sm:$0xf] %vm529, %v500
  %566 = vst.msk [vmem:[%s2 + $0x90] sm:$0xf] %vm529, %v501
  %567 = vst.msk [vmem:[%s2 + $0x94] sm:$0xf] %vm529, %v502
  %568 = vst.msk [vmem:[%s2 + $0x98] sm:$0xf] %vm529, %v503
  %569 = vst.msk [vmem:[%s2 + $0x9c] sm:$0xf] %vm529, %v504
  %570 = vst.msk [vmem:[%s2 + $0xa0] sm:$0xf] %vm529, %v505
  %571 = vst.msk [vmem:[%s2 + $0xa4] sm:$0xf] %vm529, %v506
  %572 = vst.msk [vmem:[%s2 + $0xa8] sm:$0xf] %vm529, %v507
  %573 = vst.msk [vmem:[%s2 + $0xac] sm:$0xf] %vm529, %v508
  %574 = vst.msk [vmem:[%s2 + $0xb0] sm:$0xf] %vm529, %v509
  %575 = vst.msk [vmem:[%s2 + $0xb4] sm:$0xf] %vm529, %v510
  %576 = vst.msk [vmem:[%s2 + $0xb8] sm:$0xf] %vm529, %v511
  %577 = vst.msk [vmem:[%s2 + $0xbc] sm:$0xf] %vm529, %v512
  %578 = vst.msk [vmem:[%s2 + $0xc0] sm:$0xf] %vm529, %v513
  %579 = vst.msk [vmem:[%s2 + $0xc4] sm:$0xf] %vm529, %v514
  %580 = vst.msk [vmem:[%s2 + $0xc8] sm:$0xf] %vm529, %v515
  %581 = vst.msk [vmem:[%s2 + $0xcc] sm:$0xf] %vm529, %v516
  %582 = vst.msk [vmem:[%s2 + $0xd0] sm:$0xf] %vm529, %v517
  %583 = vst.msk [vmem:[%s2 + $0xd4] sm:$0xf] %vm529, %v518
  %584 = vst.msk [vmem:[%s2 + $0xd8] sm:$0xf] %vm529, %v519
  %585 = vst.msk [vmem:[%s2 + $0xdc] sm:$0xf] %vm529, %v520
  %586 = vst.msk [vmem:[%s2 + $0xe0] sm:$0xf] %vm529, %v521
  %587 = vst.msk [vmem:[%s2 + $0xe4] sm:$0xf] %vm529, %v522
  %588 = vst.msk [vmem:[%s2 + $0xe8] sm:$0xf] %vm529, %v523
  %589 = vst.msk [vmem:[%s2 + $0xec] sm:$0xf] %vm529, %v524
  %590 = vst.msk [vmem:[%s2 + $0xf0] sm:$0xf] %vm529, %v525
  %591 = vst.msk [vmem:[%s2 + $0xf4] sm:$0xf] %vm529, %v526
  %592 = vst.msk [vmem:[%s2 + $0xf8] sm:$0xf] %vm529, %v527
  %593 = vst.msk [vmem:[%s2 + $0xfc] sm:$0xf] %vm529, %v528
  // Predicated region
  $region10: #{espcnet_forward.19} parent=0 // pred_check
    _
  $region11: #{espcnet_forward.19} parent=0 // pred_check_branch
    %595 = sbr.rel (0) target = $region13
  $region12: #{espcnet_forward.19} parent=0 // pred_region
    _
  $region13: #{espcnet_forward.19} parent=0 // pred_fallthru
    _
  // Predicated region
  $region14: #{espcnet_forward.19} parent=0 // pred_check
    _
  $region15: #{espcnet_forward.19} parent=0 // pred_check_branch
    %597 = sbr.rel (0) target = $region17
  $region16: #{espcnet_forward.19} parent=0 // pred_region
    _
  $region17: #{espcnet_forward.19} parent=0 // pred_fallthru
    _

// kernel: espcnet_forward.18
$region0: #{espcnet_forward.18}
  #allocation0 [shape = 'u32[]', space=smem, size = 0x4, offset = 0x4, fixed_abs, tag = 'smem constant byte address 0x4 - core index']
  #allocation1 [shape = 'u32[72,128]{1,0:T(1,128)}', space=vmem, size = 0x9000, scoped, tag = 'internal scratch']
  #allocation2 [shape = 'f32[512,128]{1,0:T(8,128)}', space=vmem, size = 0x40000, scoped, tag = 'scratch operand']
  %s0 = inlined_call_operand.vmem [shape: bf16[1,512,128], index: 0, kind: input, shape index: {}]
  %s1 = inlined_call_operand.vmem [shape: bf16[1,128,128], index: 1, kind: input, shape index: {}]
  %s2 = inlined_call_operand.vmem [shape: f32[3,128], index: 2, kind: input, shape index: {}]
  %s3 = inlined_call_operand.vmem [shape: bf16[512,128], index: 3, kind: output, shape index: {}]
  %s4 = sld [smem:[#allocation0]]
  $region30: #{espcnet_forward.18} parent=0
    _
  %s6 = ssub.s32 1, %s4
  %s7 = scalar_select 0, %s6, %s4
  // Predicated region
  $region2: #{espcnet_forward.18} parent=0 // pred_check
    _
  $region3: #{espcnet_forward.18} parent=0 // pred_check_branch
    %9 = sbr.rel (0) target = $region5
  $region4: #{espcnet_forward.18} parent=0 // pred_region
    _
  $region5: #{espcnet_forward.18} parent=0 // pred_fallthru
    _
  // Predicated region
  $region6: #{espcnet_forward.18} parent=0 // pred_check
    _
  $region7: #{espcnet_forward.18} parent=0 // pred_check_branch
    %11 = sbr.rel (0) target = $region9
  $region8: #{espcnet_forward.18} parent=0 // pred_region
    _
  $region9: #{espcnet_forward.18} parent=0 // pred_fallthru
    _
  // Predicated region
  $region10: #{espcnet_forward.18} parent=0 // pred_check
    _
  $region11: #{espcnet_forward.18} parent=0 // pred_check_branch
    %13 = sbr.rel (0) target = $region13
  $region12: #{espcnet_forward.18} parent=0 // pred_region
    _
  $region13: #{espcnet_forward.18} parent=0 // pred_fallthru
    _
  %p14 = scmp.eq.s32.totalorder 0, 0
  // Predicated region
  $region14: #{espcnet_forward.18} parent=0 // pred_check
    %p15 = pneg %p14
  $region15: #{espcnet_forward.18} parent=0 // pred_check_branch
    %17 = sbr.rel (%p15) target = $region17
  $region16: #{espcnet_forward.18} parent=0 // pred_region
    %18 = vst [vmem:[#allocation2] sm:$0xff] 0.0
    %19 = vst [vmem:[#allocation2 + $0x8] sm:$0xff] 0.0
    %20 = vst [vmem:[#allocation2 + $0x10] sm:$0xff] 0.0
    %21 = vst [vmem:[#allocation2 + $0x18] sm:$0xff] 0.0
    %22 = vst [vmem:[#allocation2 + $0x20] sm:$0xff] 0.0
    %23 = vst [vmem:[#allocation2 + $0x28] sm:$0xff] 0.0
    %24 = vst [vmem:[#allocation2 + $0x30] sm:$0xff] 0.0
    %25 = vst [vmem:[#allocation2 + $0x38] sm:$0xff] 0.0
    %26 = vst [vmem:[#allocation2 + $0x40] sm:$0xff] 0.0
    %27 = vst [vmem:[#allocation2 + $0x48] sm:$0xff] 0.0
    %28 = vst [vmem:[#allocation2 + $0x50] sm:$0xff] 0.0
    %29 = vst [vmem:[#allocation2 + $0x58] sm:$0xff] 0.0
    %30 = vst [vmem:[#allocation2 + $0x60] sm:$0xff] 0.0
    %31 = vst [vmem:[#allocation2 + $0x68] sm:$0xff] 0.0
    %32 = vst [vmem:[#allocation2 + $0x70] sm:$0xff] 0.0
    %33 = vst [vmem:[#allocation2 + $0x78] sm:$0xff] 0.0
    %34 = vst [vmem:[#allocation2 + $0x80] sm:$0xff] 0.0
    %35 = vst [vmem:[#allocation2 + $0x88] sm:$0xff] 0.0
    %36 = vst [vmem:[#allocation2 + $0x90] sm:$0xff] 0.0
    %37 = vst [vmem:[#allocation2 + $0x98] sm:$0xff] 0.0
    %38 = vst [vmem:[#allocation2 + $0xa0] sm:$0xff] 0.0
    %39 = vst [vmem:[#allocation2 + $0xa8] sm:$0xff] 0.0
    %40 = vst [vmem:[#allocation2 + $0xb0] sm:$0xff] 0.0
    %41 = vst [vmem:[#allocation2 + $0xb8] sm:$0xff] 0.0
    %42 = vst [vmem:[#allocation2 + $0xc0] sm:$0xff] 0.0
    %43 = vst [vmem:[#allocation2 + $0xc8] sm:$0xff] 0.0
    %44 = vst [vmem:[#allocation2 + $0xd0] sm:$0xff] 0.0
    %45 = vst [vmem:[#allocation2 + $0xd8] sm:$0xff] 0.0
    %46 = vst [vmem:[#allocation2 + $0xe0] sm:$0xff] 0.0
    %47 = vst [vmem:[#allocation2 + $0xe8] sm:$0xff] 0.0
    %48 = vst [vmem:[#allocation2 + $0xf0] sm:$0xff] 0.0
    %49 = vst [vmem:[#allocation2 + $0xf8] sm:$0xff] 0.0
    %50 = vst [vmem:[#allocation2 + $0x100] sm:$0xff] 0.0
    %51 = vst [vmem:[#allocation2 + $0x108] sm:$0xff] 0.0
    %52 = vst [vmem:[#allocation2 + $0x110] sm:$0xff] 0.0
    %53 = vst [vmem:[#allocation2 + $0x118] sm:$0xff] 0.0
    %54 = vst [vmem:[#allocation2 + $0x120] sm:$0xff] 0.0
    %55 = vst [vmem:[#allocation2 + $0x128] sm:$0xff] 0.0
    %56 = vst [vmem:[#allocation2 + $0x130] sm:$0xff] 0.0
    %57 = vst [vmem:[#allocation2 + $0x138] sm:$0xff] 0.0
    %58 = vst [vmem:[#allocation2 + $0x140] sm:$0xff] 0.0
    %59 = vst [vmem:[#allocation2 + $0x148] sm:$0xff] 0.0
    %60 = vst [vmem:[#allocation2 + $0x150] sm:$0xff] 0.0
    %61 = vst [vmem:[#allocation2 + $0x158] sm:$0xff] 0.0
    %62 = vst [vmem:[#allocation2 + $0x160] sm:$0xff] 0.0
    %63 = vst [vmem:[#allocation2 + $0x168] sm:$0xff] 0.0
    %64 = vst [vmem:[#allocation2 + $0x170] sm:$0xff] 0.0
    %65 = vst [vmem:[#allocation2 + $0x178] sm:$0xff] 0.0
    %66 = vst [vmem:[#allocation2 + $0x180] sm:$0xff] 0.0
    %67 = vst [vmem:[#allocation2 + $0x188] sm:$0xff] 0.0
    %68 = vst [vmem:[#allocation2 + $0x190] sm:$0xff] 0.0
    %69 = vst [vmem:[#allocation2 + $0x198] sm:$0xff] 0.0
    %70 = vst [vmem:[#allocation2 + $0x1a0] sm:$0xff] 0.0
    %71 = vst [vmem:[#allocation2 + $0x1a8] sm:$0xff] 0.0
    %72 = vst [vmem:[#allocation2 + $0x1b0] sm:$0xff] 0.0
    %73 = vst [vmem:[#allocation2 + $0x1b8] sm:$0xff] 0.0
    %74 = vst [vmem:[#allocation2 + $0x1c0] sm:$0xff] 0.0
    %75 = vst [vmem:[#allocation2 + $0x1c8] sm:$0xff] 0.0
    %76 = vst [vmem:[#allocation2 + $0x1d0] sm:$0xff] 0.0
    %77 = vst [vmem:[#allocation2 + $0x1d8] sm:$0xff] 0.0
    %78 = vst [vmem:[#allocation2 + $0x1e0] sm:$0xff] 0.0
    %79 = vst [vmem:[#allocation2 + $0x1e8] sm:$0xff] 0.0
    %80 = vst [vmem:[#allocation2 + $0x1f0] sm:$0xff] 0.0
    %81 = vst [vmem:[#allocation2 + $0x1f8] sm:$0xff] 0.0
  $region17: #{espcnet_forward.18} parent=0 // pred_fallthru
    _
  %v82 = vld [vmem:[#allocation2] sm:$0xff]
  %v83 = vld [vmem:[#allocation2 + $0x8] sm:$0xff]
  %v84 = vld [vmem:[#allocation2 + $0x10] sm:$0xff]
  %v85 = vld [vmem:[#allocation2 + $0x18] sm:$0xff]
  %v86 = vld [vmem:[#allocation2 + $0x20] sm:$0xff]
  %v87 = vld [vmem:[#allocation2 + $0x28] sm:$0xff]
  %v88 = vld [vmem:[#allocation2 + $0x30] sm:$0xff]
  %v89 = vld [vmem:[#allocation2 + $0x38] sm:$0xff]
  %v90 = vld [vmem:[#allocation2 + $0x40] sm:$0xff]
  %v91 = vld [vmem:[#allocation2 + $0x48] sm:$0xff]
  %v92 = vld [vmem:[#allocation2 + $0x50] sm:$0xff]
  %v93 = vld [vmem:[#allocation2 + $0x58] sm:$0xff]
  %v94 = vld [vmem:[#allocation2 + $0x60] sm:$0xff]
  %v95 = vld [vmem:[#allocation2 + $0x68] sm:$0xff]
  %v96 = vld [vmem:[#allocation2 + $0x70] sm:$0xff]
  %v97 = vld [vmem:[#allocation2 + $0x78] sm:$0xff]
  %v98 = vld [vmem:[#allocation2 + $0x80] sm:$0xff]
  %v99 = vld [vmem:[#allocation2 + $0x88] sm:$0xff]
  %v100 = vld [vmem:[#allocation2 + $0x90] sm:$0xff]
  %v101 = vld [vmem:[#allocation2 + $0x98] sm:$0xff]
  %v102 = vld [vmem:[#allocation2 + $0xa0] sm:$0xff]
  %v103 = vld [vmem:[#allocation2 + $0xa8] sm:$0xff]
  %v104 = vld [vmem:[#allocation2 + $0xb0] sm:$0xff]
  %v105 = vld [vmem:[#allocation2 + $0xb8] sm:$0xff]
  %v106 = vld [vmem:[#allocation2 + $0xc0] sm:$0xff]
  %v107 = vld [vmem:[#allocation2 + $0xc8] sm:$0xff]
  %v108 = vld [vmem:[#allocation2 + $0xd0] sm:$0xff]
  %v109 = vld [vmem:[#allocation2 + $0xd8] sm:$0xff]
  %v110 = vld [vmem:[#allocation2 + $0xe0] sm:$0xff]
  %v111 = vld [vmem:[#allocation2 + $0xe8] sm:$0xff]
  %v112 = vld [vmem:[#allocation2 + $0xf0] sm:$0xff]
  %v113 = vld [vmem:[#allocation2 + $0xf8] sm:$0xff]
  %v114 = vld [vmem:[#allocation2 + $0x100] sm:$0xff]
  %v115 = vld [vmem:[#allocation2 + $0x108] sm:$0xff]
  %v116 = vld [vmem:[#allocation2 + $0x110] sm:$0xff]
  %v117 = vld [vmem:[#allocation2 + $0x118] sm:$0xff]
  %v118 = vld [vmem:[#allocation2 + $0x120] sm:$0xff]
  %v119 = vld [vmem:[#allocation2 + $0x128] sm:$0xff]
  %v120 = vld [vmem:[#allocation2 + $0x130] sm:$0xff]
  %v121 = vld [vmem:[#allocation2 + $0x138] sm:$0xff]
  %v122 = vld [vmem:[#allocation2 + $0x140] sm:$0xff]
  %v123 = vld [vmem:[#allocation2 + $0x148] sm:$0xff]
  %v124 = vld [vmem:[#allocation2 + $0x150] sm:$0xff]
  %v125 = vld [vmem:[#allocation2 + $0x158] sm:$0xff]
  %v126 = vld [vmem:[#allocation2 + $0x160] sm:$0xff]
  %v127 = vld [vmem:[#allocation2 + $0x168] sm:$0xff]
  %v128 = vld [vmem:[#allocation2 + $0x170] sm:$0xff]
  %v129 = vld [vmem:[#allocation2 + $0x178] sm:$0xff]
  %v130 = vld [vmem:[#allocation2 + $0x180] sm:$0xff]
  %v131 = vld [vmem:[#allocation2 + $0x188] sm:$0xff]
  %v132 = vld [vmem:[#allocation2 + $0x190] sm:$0xff]
  %v133 = vld [vmem:[#allocation2 + $0x198] sm:$0xff]
  %v134 = vld [vmem:[#allocation2 + $0x1a0] sm:$0xff]
  %v135 = vld [vmem:[#allocation2 + $0x1a8] sm:$0xff]
  %v136 = vld [vmem:[#allocation2 + $0x1b0] sm:$0xff]
  %v137 = vld [vmem:[#allocation2 + $0x1b8] sm:$0xff]
  %v138 = vld [vmem:[#allocation2 + $0x1c0] sm:$0xff]
  %v139 = vld [vmem:[#allocation2 + $0x1c8] sm:$0xff]
  %v140 = vld [vmem:[#allocation2 + $0x1d0] sm:$0xff]
  %v141 = vld [vmem:[#allocation2 + $0x1d8] sm:$0xff]
  %v142 = vld [vmem:[#allocation2 + $0x1e0] sm:$0xff]
  %v143 = vld [vmem:[#allocation2 + $0x1e8] sm:$0xff]
  %v144 = vld [vmem:[#allocation2 + $0x1f0] sm:$0xff]
  %v145 = vld [vmem:[#allocation2 + $0x1f8] sm:$0xff]
  %v146 = vld [vmem:[%s0] sm:$0xf]
  %v147 = vld [vmem:[%s0 + $0x4] sm:$0xf]
  %v148 = vld [vmem:[%s0 + $0x8] sm:$0xf]
  %v149 = vld [vmem:[%s0 + $0xc] sm:$0xf]
  %v150 = vld [vmem:[%s0 + $0x10] sm:$0xf]
  %v151 = vld [vmem:[%s0 + $0x14] sm:$0xf]
  %v152 = vld [vmem:[%s0 + $0x18] sm:$0xf]
  %v153 = vld [vmem:[%s0 + $0x1c] sm:$0xf]
  %v154 = vld [vmem:[%s0 + $0x20] sm:$0xf]
  %v155 = vld [vmem:[%s0 + $0x24] sm:$0xf]
  %v156 = vld [vmem:[%s0 + $0x28] sm:$0xf]
  %v157 = vld [vmem:[%s0 + $0x2c] sm:$0xf]
  %v158 = vld [vmem:[%s0 + $0x30] sm:$0xf]
  %v159 = vld [vmem:[%s0 + $0x34] sm:$0xf]
  %v160 = vld [vmem:[%s0 + $0x38] sm:$0xf]
  %v161 = vld [vmem:[%s0 + $0x3c] sm:$0xf]
  %v162 = vld [vmem:[%s0 + $0x40] sm:$0xf]
  %v163 = vld [vmem:[%s0 + $0x44] sm:$0xf]
  %v164 = vld [vmem:[%s0 + $0x48] sm:$0xf]
  %v165 = vld [vmem:[%s0 + $0x4c] sm:$0xf]
  %v166 = vld [vmem:[%s0 + $0x50] sm:$0xf]
  %v167 = vld [vmem:[%s0 + $0x54] sm:$0xf]
  %v168 = vld [vmem:[%s0 + $0x58] sm:$0xf]
  %v169 = vld [vmem:[%s0 + $0x5c] sm:$0xf]
  %v170 = vld [vmem:[%s0 + $0x60] sm:$0xf]
  %v171 = vld [vmem:[%s0 + $0x64] sm:$0xf]
  %v172 = vld [vmem:[%s0 + $0x68] sm:$0xf]
  %v173 = vld [vmem:[%s0 + $0x6c] sm:$0xf]
  %v174 = vld [vmem:[%s0 + $0x70] sm:$0xf]
  %v175 = vld [vmem:[%s0 + $0x74] sm:$0xf]
  %v176 = vld [vmem:[%s0 + $0x78] sm:$0xf]
  %v177 = vld [vmem:[%s0 + $0x7c] sm:$0xf]
  %v178 = vld [vmem:[%s0 + $0x80] sm:$0xf]
  %v179 = vld [vmem:[%s0 + $0x84] sm:$0xf]
  %v180 = vld [vmem:[%s0 + $0x88] sm:$0xf]
  %v181 = vld [vmem:[%s0 + $0x8c] sm:$0xf]
  %v182 = vld [vmem:[%s0 + $0x90] sm:$0xf]
  %v183 = vld [vmem:[%s0 + $0x94] sm:$0xf]
  %v184 = vld [vmem:[%s0 + $0x98] sm:$0xf]
  %v185 = vld [vmem:[%s0 + $0x9c] sm:$0xf]
  %v186 = vld [vmem:[%s0 + $0xa0] sm:$0xf]
  %v187 = vld [vmem:[%s0 + $0xa4] sm:$0xf]
  %v188 = vld [vmem:[%s0 + $0xa8] sm:$0xf]
  %v189 = vld [vmem:[%s0 + $0xac] sm:$0xf]
  %v190 = vld [vmem:[%s0 + $0xb0] sm:$0xf]
  %v191 = vld [vmem:[%s0 + $0xb4] sm:$0xf]
  %v192 = vld [vmem:[%s0 + $0xb8] sm:$0xf]
  %v193 = vld [vmem:[%s0 + $0xbc] sm:$0xf]
  %v194 = vld [vmem:[%s0 + $0xc0] sm:$0xf]
  %v195 = vld [vmem:[%s0 + $0xc4] sm:$0xf]
  %v196 = vld [vmem:[%s0 + $0xc8] sm:$0xf]
  %v197 = vld [vmem:[%s0 + $0xcc] sm:$0xf]
  %v198 = vld [vmem:[%s0 + $0xd0] sm:$0xf]
  %v199 = vld [vmem:[%s0 + $0xd4] sm:$0xf]
  %v200 = vld [vmem:[%s0 + $0xd8] sm:$0xf]
  %v201 = vld [vmem:[%s0 + $0xdc] sm:$0xf]
  %v202 = vld [vmem:[%s0 + $0xe0] sm:$0xf]
  %v203 = vld [vmem:[%s0 + $0xe4] sm:$0xf]
  %v204 = vld [vmem:[%s0 + $0xe8] sm:$0xf]
  %v205 = vld [vmem:[%s0 + $0xec] sm:$0xf]
  %v206 = vld [vmem:[%s0 + $0xf0] sm:$0xf]
  %v207 = vld [vmem:[%s0 + $0xf4] sm:$0xf]
  %v208 = vld [vmem:[%s0 + $0xf8] sm:$0xf]
  %v209 = vld [vmem:[%s0 + $0xfc] sm:$0xf]
  %v210 = vld [vmem:[%s1] sm:$0xf]
  %v211 = vld [vmem:[%s1 + $0x4] sm:$0xf]
  %v212 = vld [vmem:[%s1 + $0x8] sm:$0xf]
  %v213 = vld [vmem:[%s1 + $0xc] sm:$0xf]
  %v214 = vld [vmem:[%s1 + $0x10] sm:$0xf]
  %v215 = vld [vmem:[%s1 + $0x14] sm:$0xf]
  %v216 = vld [vmem:[%s1 + $0x18] sm:$0xf]
  %v217 = vld [vmem:[%s1 + $0x1c] sm:$0xf]
  %v218 = vld [vmem:[%s1 + $0x20] sm:$0xf]
  %v219 = vld [vmem:[%s1 + $0x24] sm:$0xf]
  %v220 = vld [vmem:[%s1 + $0x28] sm:$0xf]
  %v221 = vld [vmem:[%s1 + $0x2c] sm:$0xf]
  %v222 = vld [vmem:[%s1 + $0x30] sm:$0xf]
  %v223 = vld [vmem:[%s1 + $0x34] sm:$0xf]
  %v224 = vld [vmem:[%s1 + $0x38] sm:$0xf]
  %v225 = vld [vmem:[%s1 + $0x3c] sm:$0xf]
  %v290 = vunpack.c.l.b16 %v146
  %v291 = vunpack.c.l.b16 %v147
  %v292 = vunpack.c.l.b16 %v148
  %v293 = vunpack.c.l.b16 %v149
  %v294 = vunpack.c.l.b16 %v150
  %v295 = vunpack.c.l.b16 %v151
  %v296 = vunpack.c.l.b16 %v152
  %v297 = vunpack.c.l.b16 %v153
  %v298 = vunpack.c.l.b16 %v154
  %v299 = vunpack.c.l.b16 %v155
  %v300 = vunpack.c.l.b16 %v156
  %v301 = vunpack.c.l.b16 %v157
  %v302 = vunpack.c.l.b16 %v158
  %v303 = vunpack.c.l.b16 %v159
  %v304 = vunpack.c.l.b16 %v160
  %v305 = vunpack.c.l.b16 %v161
  %v306 = vunpack.c.l.b16 %v162
  %v307 = vunpack.c.l.b16 %v163
  %v308 = vunpack.c.l.b16 %v164
  %v309 = vunpack.c.l.b16 %v165
  %v310 = vunpack.c.l.b16 %v166
  %v311 = vunpack.c.l.b16 %v167
  %v312 = vunpack.c.l.b16 %v168
  %v313 = vunpack.c.l.b16 %v169
  %v314 = vunpack.c.l.b16 %v170
  %v315 = vunpack.c.l.b16 %v171
  %v316 = vunpack.c.l.b16 %v172
  %v317 = vunpack.c.l.b16 %v173
  %v318 = vunpack.c.l.b16 %v174
  %v319 = vunpack.c.l.b16 %v175
  %v320 = vunpack.c.l.b16 %v176
  %v321 = vunpack.c.l.b16 %v177
  %v322 = vunpack.c.l.b16 %v178
  %v323 = vunpack.c.l.b16 %v179
  %v324 = vunpack.c.l.b16 %v180
  %v325 = vunpack.c.l.b16 %v181
  %v326 = vunpack.c.l.b16 %v182
  %v327 = vunpack.c.l.b16 %v183
  %v328 = vunpack.c.l.b16 %v184
  %v329 = vunpack.c.l.b16 %v185
  %v330 = vunpack.c.l.b16 %v186
  %v331 = vunpack.c.l.b16 %v187
  %v332 = vunpack.c.l.b16 %v188
  %v333 = vunpack.c.l.b16 %v189
  %v334 = vunpack.c.l.b16 %v190
  %v335 = vunpack.c.l.b16 %v191
  %v336 = vunpack.c.l.b16 %v192
  %v337 = vunpack.c.l.b16 %v193
  %v338 = vunpack.c.l.b16 %v194
  %v339 = vunpack.c.l.b16 %v195
  %v340 = vunpack.c.l.b16 %v196
  %v341 = vunpack.c.l.b16 %v197
  %v342 = vunpack.c.l.b16 %v198
  %v343 = vunpack.c.l.b16 %v199
  %v344 = vunpack.c.l.b16 %v200
  %v345 = vunpack.c.l.b16 %v201
  %v346 = vunpack.c.l.b16 %v202
  %v347 = vunpack.c.l.b16 %v203
  %v348 = vunpack.c.l.b16 %v204
  %v349 = vunpack.c.l.b16 %v205
  %v350 = vunpack.c.l.b16 %v206
  %v351 = vunpack.c.l.b16 %v207
  %v352 = vunpack.c.l.b16 %v208
  %v353 = vunpack.c.l.b16 %v209
  %v354 = vpack.c.b16 %v291, %v290
  %v355 = vpack.c.b16 %v293, %v292
  %v356 = vpack.c.b16 %v295, %v294
  %v357 = vpack.c.b16 %v297, %v296
  %v358 = vpack.c.b16 %v299, %v298
  %v359 = vpack.c.b16 %v301, %v300
  %v360 = vpack.c.b16 %v303, %v302
  %v361 = vpack.c.b16 %v305, %v304
  %v362 = vpack.c.b16 %v307, %v306
  %v363 = vpack.c.b16 %v309, %v308
  %v364 = vpack.c.b16 %v311, %v310
  %v365 = vpack.c.b16 %v313, %v312
  %v366 = vpack.c.b16 %v315, %v314
  %v367 = vpack.c.b16 %v317, %v316
  %v368 = vpack.c.b16 %v319, %v318
  %v369 = vpack.c.b16 %v321, %v320
  %v370 = vpack.c.b16 %v323, %v322
  %v371 = vpack.c.b16 %v325, %v324
  %v372 = vpack.c.b16 %v327, %v326
  %v373 = vpack.c.b16 %v329, %v328
  %v374 = vpack.c.b16 %v331, %v330
  %v375 = vpack.c.b16 %v333, %v332
  %v376 = vpack.c.b16 %v335, %v334
  %v377 = vpack.c.b16 %v337, %v336
  %v378 = vpack.c.b16 %v339, %v338
  %v379 = vpack.c.b16 %v341, %v340
  %v380 = vpack.c.b16 %v343, %v342
  %v381 = vpack.c.b16 %v345, %v344
  %v382 = vpack.c.b16 %v347, %v346
  %v383 = vpack.c.b16 %v349, %v348
  %v384 = vpack.c.b16 %v351, %v350
  %v385 = vpack.c.b16 %v353, %v352
  %v434 = vunpack.c.l.b16 %v210
  %v435 = vunpack.c.l.b16 %v211
  %v436 = vunpack.c.l.b16 %v212
  %v437 = vunpack.c.l.b16 %v213
  %v438 = vunpack.c.l.b16 %v214
  %v439 = vunpack.c.l.b16 %v215
  %v440 = vunpack.c.l.b16 %v216
  %v441 = vunpack.c.l.b16 %v217
  %v442 = vunpack.c.l.b16 %v218
  %v443 = vunpack.c.l.b16 %v219
  %v444 = vunpack.c.l.b16 %v220
  %v445 = vunpack.c.l.b16 %v221
  %v446 = vunpack.c.l.b16 %v222
  %v447 = vunpack.c.l.b16 %v223
  %v448 = vunpack.c.l.b16 %v224
  %v449 = vunpack.c.l.b16 %v225
  %v450 = vpack.c.b16 %v435, %v434
  %v451 = vpack.c.b16 %v437, %v436
  %v452 = vpack.c.b16 %v439, %v438
  %v453 = vpack.c.b16 %v441, %v440
  %v454 = vpack.c.b16 %v443, %v442
  %v455 = vpack.c.b16 %v445, %v444
  %v456 = vpack.c.b16 %v447, %v446
  %v457 = vpack.c.b16 %v449, %v448
  %466 = vmatpush.bf16.msra.mxu0 %v457
  %467 = vmatpush.bf16.msra.mxu0 %v456
  %468 = vmatpush.bf16.msra.mxu0 %v455
  %469 = vmatpush.bf16.msra.mxu0 %v454
  %470 = vmatpush.bf16.msra.mxu0 %v453
  %471 = vmatpush.bf16.msra.mxu0 %v452
  %472 = vmatpush.bf16.msra.mxu0 %v451
  %473 = vmatpush.bf16.msra.mxu0 %v450
  %474 = vmatmul.bf16.gmra.mxu0 %v354
  %v475 = vpop.f32.mrf.mxu0
  %v476 = vadd.f32 0.0, %v475
  %v477 = vpop.f32.mrf.mxu0
  %v478 = vadd.f32 0.0, %v477
  %479 = vmatmul.bf16.gmra.mxu0 %v355
  %v480 = vpop.f32.mrf.mxu0
  %v481 = vadd.f32 0.0, %v480
  %v482 = vpop.f32.mrf.mxu0
  %v483 = vadd.f32 0.0, %v482
  %484 = vmatmul.bf16.gmra.mxu0 %v356
  %v485 = vpop.f32.mrf.mxu0
  %v486 = vadd.f32 0.0, %v485
  %v487 = vpop.f32.mrf.mxu0
  %v488 = vadd.f32 0.0, %v487
  %489 = vmatmul.bf16.gmra.mxu0 %v357
  %v490 = vpop.f32.mrf.mxu0
  %v491 = vadd.f32 0.0, %v490
  %v492 = vpop.f32.mrf.mxu0
  %v493 = vadd.f32 0.0, %v492
  %494 = vmatmul.bf16.gmra.mxu0 %v358
  %v495 = vpop.f32.mrf.mxu0
  %v496 = vadd.f32 0.0, %v495
  %v497 = vpop.f32.mrf.mxu0
  %v498 = vadd.f32 0.0, %v497
  %499 = vmatmul.bf16.gmra.mxu0 %v359
  %v500 = vpop.f32.mrf.mxu0
  %v501 = vadd.f32 0.0, %v500
  %v502 = vpop.f32.mrf.mxu0
  %v503 = vadd.f32 0.0, %v502
  %504 = vmatmul.bf16.gmra.mxu0 %v360
  %v505 = vpop.f32.mrf.mxu0
  %v506 = vadd.f32 0.0, %v505
  %v507 = vpop.f32.mrf.mxu0
  %v508 = vadd.f32 0.0, %v507
  %509 = vmatmul.bf16.gmra.mxu0 %v361
  %v510 = vpop.f32.mrf.mxu0
  %v511 = vadd.f32 0.0, %v510
  %v512 = vpop.f32.mrf.mxu0
  %v513 = vadd.f32 0.0, %v512
  %514 = vmatmul.bf16.gmra.mxu0 %v362
  %v515 = vpop.f32.mrf.mxu0
  %v516 = vadd.f32 0.0, %v515
  %v517 = vpop.f32.mrf.mxu0
  %v518 = vadd.f32 0.0, %v517
  %519 = vmatmul.bf16.gmra.mxu0 %v363
  %v520 = vpop.f32.mrf.mxu0
  %v521 = vadd.f32 0.0, %v520
  %v522 = vpop.f32.mrf.mxu0
  %v523 = vadd.f32 0.0, %v522
  %524 = vmatmul.bf16.gmra.mxu0 %v364
  %v525 = vpop.f32.mrf.mxu0
  %v526 = vadd.f32 0.0, %v525
  %v527 = vpop.f32.mrf.mxu0
  %v528 = vadd.f32 0.0, %v527
  %529 = vmatmul.bf16.gmra.mxu0 %v365
  %v530 = vpop.f32.mrf.mxu0
  %v531 = vadd.f32 0.0, %v530
  %v532 = vpop.f32.mrf.mxu0
  %v533 = vadd.f32 0.0, %v532
  %534 = vmatmul.bf16.gmra.mxu0 %v366
  %v535 = vpop.f32.mrf.mxu0
  %v536 = vadd.f32 0.0, %v535
  %v537 = vpop.f32.mrf.mxu0
  %v538 = vadd.f32 0.0, %v537
  %539 = vmatmul.bf16.gmra.mxu0 %v367
  %v540 = vpop.f32.mrf.mxu0
  %v541 = vadd.f32 0.0, %v540
  %v542 = vpop.f32.mrf.mxu0
  %v543 = vadd.f32 0.0, %v542
  %544 = vmatmul.bf16.gmra.mxu0 %v368
  %v545 = vpop.f32.mrf.mxu0
  %v546 = vadd.f32 0.0, %v545
  %v547 = vpop.f32.mrf.mxu0
  %v548 = vadd.f32 0.0, %v547
  %549 = vmatmul.bf16.gmra.mxu0 %v369
  %v550 = vpop.f32.mrf.mxu0
  %v551 = vadd.f32 0.0, %v550
  %v552 = vpop.f32.mrf.mxu0
  %v553 = vadd.f32 0.0, %v552
  %554 = vmatmul.bf16.gmra.mxu0 %v370
  %v555 = vpop.f32.mrf.mxu0
  %v556 = vadd.f32 0.0, %v555
  %v557 = vpop.f32.mrf.mxu0
  %v558 = vadd.f32 0.0, %v557
  %559 = vmatmul.bf16.gmra.mxu0 %v371
  %v560 = vpop.f32.mrf.mxu0
  %v561 = vadd.f32 0.0, %v560
  %v562 = vpop.f32.mrf.mxu0
  %v563 = vadd.f32 0.0, %v562
  %564 = vmatmul.bf16.gmra.mxu0 %v372
  %v565 = vpop.f32.mrf.mxu0
  %v566 = vadd.f32 0.0, %v565
  %v567 = vpop.f32.mrf.mxu0
  %v568 = vadd.f32 0.0, %v567
  %569 = vmatmul.bf16.gmra.mxu0 %v373
  %v570 = vpop.f32.mrf.mxu0
  %v571 = vadd.f32 0.0, %v570
  %v572 = vpop.f32.mrf.mxu0
  %v573 = vadd.f32 0.0, %v572
  %574 = vmatmul.bf16.gmra.mxu0 %v374
  %v575 = vpop.f32.mrf.mxu0
  %v576 = vadd.f32 0.0, %v575
  %v577 = vpop.f32.mrf.mxu0
  %v578 = vadd.f32 0.0, %v577
  %579 = vmatmul.bf16.gmra.mxu0 %v375
  %v580 = vpop.f32.mrf.mxu0
  %v581 = vadd.f32 0.0, %v580
  %v582 = vpop.f32.mrf.mxu0
  %v583 = vadd.f32 0.0, %v582
  %584 = vmatmul.bf16.gmra.mxu0 %v376
  %v585 = vpop.f32.mrf.mxu0
  %v586 = vadd.f32 0.0, %v585
  %v587 = vpop.f32.mrf.mxu0
  %v588 = vadd.f32 0.0, %v587
  %589 = vmatmul.bf16.gmra.mxu0 %v377
  %v590 = vpop.f32.mrf.mxu0
  %v591 = vadd.f32 0.0, %v590
  %v592 = vpop.f32.mrf.mxu0
  %v593 = vadd.f32 0.0, %v592
  %594 = vmatmul.bf16.gmra.mxu0 %v378
  %v595 = vpop.f32.mrf.mxu0
  %v596 = vadd.f32 0.0, %v595
  %v597 = vpop.f32.mrf.mxu0
  %v598 = vadd.f32 0.0, %v597
  %599 = vmatmul.bf16.gmra.mxu0 %v379
  %v600 = vpop.f32.mrf.mxu0
  %v601 = vadd.f32 0.0, %v600
  %v602 = vpop.f32.mrf.mxu0
  %v603 = vadd.f32 0.0, %v602
  %604 = vmatmul.bf16.gmra.mxu0 %v380
  %v605 = vpop.f32.mrf.mxu0
  %v606 = vadd.f32 0.0, %v605
  %v607 = vpop.f32.mrf.mxu0
  %v608 = vadd.f32 0.0, %v607
  %609 = vmatmul.bf16.gmra.mxu0 %v381
  %v610 = vpop.f32.mrf.mxu0
  %v611 = vadd.f32 0.0, %v610
  %v612 = vpop.f32.mrf.mxu0
  %v613 = vadd.f32 0.0, %v612
  %614 = vmatmul.bf16.gmra.mxu0 %v382
  %v615 = vpop.f32.mrf.mxu0
  %v616 = vadd.f32 0.0, %v615
  %v617 = vpop.f32.mrf.mxu0
  %v618 = vadd.f32 0.0, %v617
  %619 = vmatmul.bf16.gmra.mxu0 %v383
  %v620 = vpop.f32.mrf.mxu0
  %v621 = vadd.f32 0.0, %v620
  %v622 = vpop.f32.mrf.mxu0
  %v623 = vadd.f32 0.0, %v622
  %624 = vmatmul.bf16.gmra.mxu0 %v384
  %v625 = vpop.f32.mrf.mxu0
  %v626 = vadd.f32 0.0, %v625
  %v627 = vpop.f32.mrf.mxu0
  %v628 = vadd.f32 0.0, %v627
  %629 = vmatmul.bf16.gmra.mxu0 %v385
  %v630 = vpop.f32.mrf.mxu0
  %v631 = vadd.f32 0.0, %v630
  %v632 = vpop.f32.mrf.mxu0
  %v633 = vadd.f32 0.0, %v632
  %634 = vdwg.mxu0
  %v635 = vadd.f32 %v82, %v476
  %v636 = vadd.f32 %v83, %v478
  %v637 = vadd.f32 %v84, %v481
  %v638 = vadd.f32 %v85, %v483
  %v639 = vadd.f32 %v86, %v486
  %v640 = vadd.f32 %v87, %v488
  %v641 = vadd.f32 %v88, %v491
  %v642 = vadd.f32 %v89, %v493
  %v643 = vadd.f32 %v90, %v496
  %v644 = vadd.f32 %v91, %v498
  %v645 = vadd.f32 %v92, %v501
  %v646 = vadd.f32 %v93, %v503
  %v647 = vadd.f32 %v94, %v506
  %v648 = vadd.f32 %v95, %v508
  %v649 = vadd.f32 %v96, %v511
  %v650 = vadd.f32 %v97, %v513
  %v651 = vadd.f32 %v98, %v516
  %v652 = vadd.f32 %v99, %v518
  %v653 = vadd.f32 %v100, %v521
  %v654 = vadd.f32 %v101, %v523
  %v655 = vadd.f32 %v102, %v526
  %v656 = vadd.f32 %v103, %v528
  %v657 = vadd.f32 %v104, %v531
  %v658 = vadd.f32 %v105, %v533
  %v659 = vadd.f32 %v106, %v536
  %v660 = vadd.f32 %v107, %v538
  %v661 = vadd.f32 %v108, %v541
  %v662 = vadd.f32 %v109, %v543
  %v663 = vadd.f32 %v110, %v546
  %v664 = vadd.f32 %v111, %v548
  %v665 = vadd.f32 %v112, %v551
  %v666 = vadd.f32 %v113, %v553
  %v667 = vadd.f32 %v114, %v556
  %v668 = vadd.f32 %v115, %v558
  %v669 = vadd.f32 %v116, %v561
  %v670 = vadd.f32 %v117, %v563
  %v671 = vadd.f32 %v118, %v566
  %v672 = vadd.f32 %v119, %v568
  %v673 = vadd.f32 %v120, %v571
  %v674 = vadd.f32 %v121, %v573
  %v675 = vadd.f32 %v122, %v576
  %v676 = vadd.f32 %v123, %v578
  %v677 = vadd.f32 %v124, %v581
  %v678 = vadd.f32 %v125, %v583
  %v679 = vadd.f32 %v126, %v586
  %v680 = vadd.f32 %v127, %v588
  %v681 = vadd.f32 %v128, %v591
  %v682 = vadd.f32 %v129, %v593
  %v683 = vadd.f32 %v130, %v596
  %v684 = vadd.f32 %v131, %v598
  %v685 = vadd.f32 %v132, %v601
  %v686 = vadd.f32 %v133, %v603
  %v687 = vadd.f32 %v134, %v606
  %v688 = vadd.f32 %v135, %v608
  %v689 = vadd.f32 %v136, %v611
  %v690 = vadd.f32 %v137, %v613
  %v691 = vadd.f32 %v138, %v616
  %v692 = vadd.f32 %v139, %v618
  %v693 = vadd.f32 %v140, %v621
  %v694 = vadd.f32 %v141, %v623
  %v695 = vadd.f32 %v142, %v626
  %v696 = vadd.f32 %v143, %v628
  %v697 = vadd.f32 %v144, %v631
  %v698 = vadd.f32 %v145, %v633
  %699 = vst [vmem:[#allocation2] sm:$0xff] %v635
  %700 = vst [vmem:[#allocation2 + $0x8] sm:$0xff] %v636
  %701 = vst [vmem:[#allocation2 + $0x10] sm:$0xff] %v637
  %702 = vst [vmem:[#allocation2 + $0x18] sm:$0xff] %v638
  %703 = vst [vmem:[#allocation2 + $0x20] sm:$0xff] %v639
  %704 = vst [vmem:[#allocation2 + $0x28] sm:$0xff] %v640
  %705 = vst [vmem:[#allocation2 + $0x30] sm:$0xff] %v641
  %706 = vst [vmem:[#allocation2 + $0x38] sm:$0xff] %v642
  %707 = vst [vmem:[#allocation2 + $0x40] sm:$0xff] %v643
  %708 = vst [vmem:[#allocation2 + $0x48] sm:$0xff] %v644
  %709 = vst [vmem:[#allocation2 + $0x50] sm:$0xff] %v645
  %710 = vst [vmem:[#allocation2 + $0x58] sm:$0xff] %v646
  %711 = vst [vmem:[#allocation2 + $0x60] sm:$0xff] %v647
  %712 = vst [vmem:[#allocation2 + $0x68] sm:$0xff] %v648
  %713 = vst [vmem:[#allocation2 + $0x70] sm:$0xff] %v649
  %714 = vst [vmem:[#allocation2 + $0x78] sm:$0xff] %v650
  %715 = vst [vmem:[#allocation2 + $0x80] sm:$0xff] %v651
  %716 = vst [vmem:[#allocation2 + $0x88] sm:$0xff] %v652
  %717 = vst [vmem:[#allocation2 + $0x90] sm:$0xff] %v653
  %718 = vst [vmem:[#allocation2 + $0x98] sm:$0xff] %v654
  %719 = vst [vmem:[#allocation2 + $0xa0] sm:$0xff] %v655
  %720 = vst [vmem:[#allocation2 + $0xa8] sm:$0xff] %v656
  %721 = vst [vmem:[#allocation2 + $0xb0] sm:$0xff] %v657
  %722 = vst [vmem:[#allocation2 + $0xb8] sm:$0xff] %v658
  %723 = vst [vmem:[#allocation2 + $0xc0] sm:$0xff] %v659
  %724 = vst [vmem:[#allocation2 + $0xc8] sm:$0xff] %v660
  %725 = vst [vmem:[#allocation2 + $0xd0] sm:$0xff] %v661
  %726 = vst [vmem:[#allocation2 + $0xd8] sm:$0xff] %v662
  %727 = vst [vmem:[#allocation2 + $0xe0] sm:$0xff] %v663
  %728 = vst [vmem:[#allocation2 + $0xe8] sm:$0xff] %v664
  %729 = vst [vmem:[#allocation2 + $0xf0] sm:$0xff] %v665
  %730 = vst [vmem:[#allocation2 + $0xf8] sm:$0xff] %v666
  %731 = vst [vmem:[#allocation2 + $0x100] sm:$0xff] %v667
  %732 = vst [vmem:[#allocation2 + $0x108] sm:$0xff] %v668
  %733 = vst [vmem:[#allocation2 + $0x110] sm:$0xff] %v669
  %734 = vst [vmem:[#allocation2 + $0x118] sm:$0xff] %v670
  %735 = vst [vmem:[#allocation2 + $0x120] sm:$0xff] %v671
  %736 = vst [vmem:[#allocation2 + $0x128] sm:$0xff] %v672
  %737 = vst [vmem:[#allocation2 + $0x130] sm:$0xff] %v673
  %738 = vst [vmem:[#allocation2 + $0x138] sm:$0xff] %v674
  %739 = vst [vmem:[#allocation2 + $0x140] sm:$0xff] %v675
  %740 = vst [vmem:[#allocation2 + $0x148] sm:$0xff] %v676
  %741 = vst [vmem:[#allocation2 + $0x150] sm:$0xff] %v677
  %742 = vst [vmem:[#allocation2 + $0x158] sm:$0xff] %v678
  %743 = vst [vmem:[#allocation2 + $0x160] sm:$0xff] %v679
  %744 = vst [vmem:[#allocation2 + $0x168] sm:$0xff] %v680
  %745 = vst [vmem:[#allocation2 + $0x170] sm:$0xff] %v681
  %746 = vst [vmem:[#allocation2 + $0x178] sm:$0xff] %v682
  %747 = vst [vmem:[#allocation2 + $0x180] sm:$0xff] %v683
  %748 = vst [vmem:[#allocation2 + $0x188] sm:$0xff] %v684
  %749 = vst [vmem:[#allocation2 + $0x190] sm:$0xff] %v685
  %750 = vst [vmem:[#allocation2 + $0x198] sm:$0xff] %v686
  %751 = vst [vmem:[#allocation2 + $0x1a0] sm:$0xff] %v687
  %752 = vst [vmem:[#allocation2 + $0x1a8] sm:$0xff] %v688
  %753 = vst [vmem:[#allocation2 + $0x1b0] sm:$0xff] %v689
  %754 = vst [vmem:[#allocation2 + $0x1b8] sm:$0xff] %v690
  %755 = vst [vmem:[#allocation2 + $0x1c0] sm:$0xff] %v691
  %756 = vst [vmem:[#allocation2 + $0x1c8] sm:$0xff] %v692
  %757 = vst [vmem:[#allocation2 + $0x1d0] sm:$0xff] %v693
  %758 = vst [vmem:[#allocation2 + $0x1d8] sm:$0xff] %v694
  %759 = vst [vmem:[#allocation2 + $0x1e0] sm:$0xff] %v695
  %760 = vst [vmem:[#allocation2 + $0x1e8] sm:$0xff] %v696
  %761 = vst [vmem:[#allocation2 + $0x1f0] sm:$0xff] %v697
  %762 = vst [vmem:[#allocation2 + $0x1f8] sm:$0xff] %v698
  // Predicated region
  $region18: #{espcnet_forward.18} parent=0 // pred_check
    %p763 = pneg %p14
  $region19: #{espcnet_forward.18} parent=0 // pred_check_branch
    %765 = sbr.rel (%p763) target = $region21
  $region20: #{espcnet_forward.18} parent=0 // pred_region
    %v766 = vld [vmem:[#allocation2] sm:$0xff]
    %v767 = vld [vmem:[#allocation2 + $0x8] sm:$0xff]
    %v768 = vld [vmem:[#allocation2 + $0x10] sm:$0xff]
    %v769 = vld [vmem:[#allocation2 + $0x18] sm:$0xff]
    %v770 = vld [vmem:[#allocation2 + $0x20] sm:$0xff]
    %v771 = vld [vmem:[#allocation2 + $0x28] sm:$0xff]
    %v772 = vld [vmem:[#allocation2 + $0x30] sm:$0xff]
    %v773 = vld [vmem:[#allocation2 + $0x38] sm:$0xff]
    %v774 = vld [vmem:[#allocation2 + $0x40] sm:$0xff]
    %v775 = vld [vmem:[#allocation2 + $0x48] sm:$0xff]
    %v776 = vld [vmem:[#allocation2 + $0x50] sm:$0xff]
    %v777 = vld [vmem:[#allocation2 + $0x58] sm:$0xff]
    %v778 = vld [vmem:[#allocation2 + $0x60] sm:$0xff]
    %v779 = vld [vmem:[#allocation2 + $0x68] sm:$0xff]
    %v780 = vld [vmem:[#allocation2 + $0x70] sm:$0xff]
    %v781 = vld [vmem:[#allocation2 + $0x78] sm:$0xff]
    %v782 = vld [vmem:[#allocation2 + $0x80] sm:$0xff]
    %v783 = vld [vmem:[#allocation2 + $0x88] sm:$0xff]
    %v784 = vld [vmem:[#allocation2 + $0x90] sm:$0xff]
    %v785 = vld [vmem:[#allocation2 + $0x98] sm:$0xff]
    %v786 = vld [vmem:[#allocation2 + $0xa0] sm:$0xff]
    %v787 = vld [vmem:[#allocation2 + $0xa8] sm:$0xff]
    %v788 = vld [vmem:[#allocation2 + $0xb0] sm:$0xff]
    %v789 = vld [vmem:[#allocation2 + $0xb8] sm:$0xff]
    %v790 = vld [vmem:[#allocation2 + $0xc0] sm:$0xff]
    %v791 = vld [vmem:[#allocation2 + $0xc8] sm:$0xff]
    %v792 = vld [vmem:[#allocation2 + $0xd0] sm:$0xff]
    %v793 = vld [vmem:[#allocation2 + $0xd8] sm:$0xff]
    %v794 = vld [vmem:[#allocation2 + $0xe0] sm:$0xff]
    %v795 = vld [vmem:[#allocation2 + $0xe8] sm:$0xff]
    %v796 = vld [vmem:[#allocation2 + $0xf0] sm:$0xff]
    %v797 = vld [vmem:[#allocation2 + $0xf8] sm:$0xff]
    %v798 = vld [vmem:[#allocation2 + $0x100] sm:$0xff]
    %v799 = vld [vmem:[#allocation2 + $0x108] sm:$0xff]
    %v800 = vld [vmem:[#allocation2 + $0x110] sm:$0xff]
    %v801 = vld [vmem:[#allocation2 + $0x118] sm:$0xff]
    %v802 = vld [vmem:[#allocation2 + $0x120] sm:$0xff]
    %v803 = vld [vmem:[#allocation2 + $0x128] sm:$0xff]
    %v804 = vld [vmem:[#allocation2 + $0x130] sm:$0xff]
    %v805 = vld [vmem:[#allocation2 + $0x138] sm:$0xff]
    %v806 = vld [vmem:[#allocation2 + $0x140] sm:$0xff]
    %v807 = vld [vmem:[#allocation2 + $0x148] sm:$0xff]
    %v808 = vld [vmem:[#allocation2 + $0x150] sm:$0xff]
    %v809 = vld [vmem:[#allocation2 + $0x158] sm:$0xff]
    %v810 = vld [vmem:[#allocation2 + $0x160] sm:$0xff]
    %v811 = vld [vmem:[#allocation2 + $0x168] sm:$0xff]
    %v812 = vld [vmem:[#allocation2 + $0x170] sm:$0xff]
    %v813 = vld [vmem:[#allocation2 + $0x178] sm:$0xff]
    %v814 = vld [vmem:[#allocation2 + $0x180] sm:$0xff]
    %v815 = vld [vmem:[#allocation2 + $0x188] sm:$0xff]
    %v816 = vld [vmem:[#allocation2 + $0x190] sm:$0xff]
    %v817 = vld [vmem:[#allocation2 + $0x198] sm:$0xff]
    %v818 = vld [vmem:[#allocation2 + $0x1a0] sm:$0xff]
    %v819 = vld [vmem:[#allocation2 + $0x1a8] sm:$0xff]
    %v820 = vld [vmem:[#allocation2 + $0x1b0] sm:$0xff]
    %v821 = vld [vmem:[#allocation2 + $0x1b8] sm:$0xff]
    %v822 = vld [vmem:[#allocation2 + $0x1c0] sm:$0xff]
    %v823 = vld [vmem:[#allocation2 + $0x1c8] sm:$0xff]
    %v824 = vld [vmem:[#allocation2 + $0x1d0] sm:$0xff]
    %v825 = vld [vmem:[#allocation2 + $0x1d8] sm:$0xff]
    %v826 = vld [vmem:[#allocation2 + $0x1e0] sm:$0xff]
    %v827 = vld [vmem:[#allocation2 + $0x1e8] sm:$0xff]
    %v828 = vld [vmem:[#allocation2 + $0x1f0] sm:$0xff]
    %v829 = vld [vmem:[#allocation2 + $0x1f8] sm:$0xff]
    %v830 = vld [vmem:[%s2 + $0x1] sm:$0x1]
    %v831 = vperm.slane %v830, 0
    %v832 = vadd.f32 %v766, %v831
    %v833 = vadd.f32 %v767, %v831
    %v834 = vadd.f32 %v768, %v831
    %v835 = vadd.f32 %v769, %v831
    %v836 = vadd.f32 %v770, %v831
    %v837 = vadd.f32 %v771, %v831
    %v838 = vadd.f32 %v772, %v831
    %v839 = vadd.f32 %v773, %v831
    %v840 = vadd.f32 %v774, %v831
    %v841 = vadd.f32 %v775, %v831
    %v842 = vadd.f32 %v776, %v831
    %v843 = vadd.f32 %v777, %v831
    %v844 = vadd.f32 %v778, %v831
    %v845 = vadd.f32 %v779, %v831
    %v846 = vadd.f32 %v780, %v831
    %v847 = vadd.f32 %v781, %v831
    %v848 = vadd.f32 %v782, %v831
    %v849 = vadd.f32 %v783, %v831
    %v850 = vadd.f32 %v784, %v831
    %v851 = vadd.f32 %v785, %v831
    %v852 = vadd.f32 %v786, %v831
    %v853 = vadd.f32 %v787, %v831
    %v854 = vadd.f32 %v788, %v831
    %v855 = vadd.f32 %v789, %v831
    %v856 = vadd.f32 %v790, %v831
    %v857 = vadd.f32 %v791, %v831
    %v858 = vadd.f32 %v792, %v831
    %v859 = vadd.f32 %v793, %v831
    %v860 = vadd.f32 %v794, %v831
    %v861 = vadd.f32 %v795, %v831
    %v862 = vadd.f32 %v796, %v831
    %v863 = vadd.f32 %v797, %v831
    %v864 = vadd.f32 %v798, %v831
    %v865 = vadd.f32 %v799, %v831
    %v866 = vadd.f32 %v800, %v831
    %v867 = vadd.f32 %v801, %v831
    %v868 = vadd.f32 %v802, %v831
    %v869 = vadd.f32 %v803, %v831
    %v870 = vadd.f32 %v804, %v831
    %v871 = vadd.f32 %v805, %v831
    %v872 = vadd.f32 %v806, %v831
    %v873 = vadd.f32 %v807, %v831
    %v874 = vadd.f32 %v808, %v831
    %v875 = vadd.f32 %v809, %v831
    %v876 = vadd.f32 %v810, %v831
    %v877 = vadd.f32 %v811, %v831
    %v878 = vadd.f32 %v812, %v831
    %v879 = vadd.f32 %v813, %v831
    %v880 = vadd.f32 %v814, %v831
    %v881 = vadd.f32 %v815, %v831
    %v882 = vadd.f32 %v816, %v831
    %v883 = vadd.f32 %v817, %v831
    %v884 = vadd.f32 %v818, %v831
    %v885 = vadd.f32 %v819, %v831
    %v886 = vadd.f32 %v820, %v831
    %v887 = vadd.f32 %v821, %v831
    %v888 = vadd.f32 %v822, %v831
    %v889 = vadd.f32 %v823, %v831
    %v890 = vadd.f32 %v824, %v831
    %v891 = vadd.f32 %v825, %v831
    %v892 = vadd.f32 %v826, %v831
    %v893 = vadd.f32 %v827, %v831
    %v894 = vadd.f32 %v828, %v831
    %v895 = vadd.f32 %v829, %v831
    %vm896 = vcmp.gt.f32.partialorder %v832, 0.0
    %vm897 = vcmp.gt.f32.partialorder %v833, 0.0
    %vm898 = vcmp.gt.f32.partialorder %v834, 0.0
    %vm899 = vcmp.gt.f32.partialorder %v835, 0.0
    %vm900 = vcmp.gt.f32.partialorder %v836, 0.0
    %vm901 = vcmp.gt.f32.partialorder %v837, 0.0
    %vm902 = vcmp.gt.f32.partialorder %v838, 0.0
    %vm903 = vcmp.gt.f32.partialorder %v839, 0.0
    %vm904 = vcmp.gt.f32.partialorder %v840, 0.0
    %vm905 = vcmp.gt.f32.partialorder %v841, 0.0
    %vm906 = vcmp.gt.f32.partialorder %v842, 0.0
    %vm907 = vcmp.gt.f32.partialorder %v843, 0.0
    %vm908 = vcmp.gt.f32.partialorder %v844, 0.0
    %vm909 = vcmp.gt.f32.partialorder %v845, 0.0
    %vm910 = vcmp.gt.f32.partialorder %v846, 0.0
    %vm911 = vcmp.gt.f32.partialorder %v847, 0.0
    %vm912 = vcmp.gt.f32.partialorder %v848, 0.0
    %vm913 = vcmp.gt.f32.partialorder %v849, 0.0
    %vm914 = vcmp.gt.f32.partialorder %v850, 0.0
    %vm915 = vcmp.gt.f32.partialorder %v851, 0.0
    %vm916 = vcmp.gt.f32.partialorder %v852, 0.0
    %vm917 = vcmp.gt.f32.partialorder %v853, 0.0
    %vm918 = vcmp.gt.f32.partialorder %v854, 0.0
    %vm919 = vcmp.gt.f32.partialorder %v855, 0.0
    %vm920 = vcmp.gt.f32.partialorder %v856, 0.0
    %vm921 = vcmp.gt.f32.partialorder %v857, 0.0
    %vm922 = vcmp.gt.f32.partialorder %v858, 0.0
    %vm923 = vcmp.gt.f32.partialorder %v859, 0.0
    %vm924 = vcmp.gt.f32.partialorder %v860, 0.0
    %vm925 = vcmp.gt.f32.partialorder %v861, 0.0
    %vm926 = vcmp.gt.f32.partialorder %v862, 0.0
    %vm927 = vcmp.gt.f32.partialorder %v863, 0.0
    %vm928 = vcmp.gt.f32.partialorder %v864, 0.0
    %vm929 = vcmp.gt.f32.partialorder %v865, 0.0
    %vm930 = vcmp.gt.f32.partialorder %v866, 0.0
    %vm931 = vcmp.gt.f32.partialorder %v867, 0.0
    %vm932 = vcmp.gt.f32.partialorder %v868, 0.0
    %vm933 = vcmp.gt.f32.partialorder %v869, 0.0
    %vm934 = vcmp.gt.f32.partialorder %v870, 0.0
    %vm935 = vcmp.gt.f32.partialorder %v871, 0.0
    %vm936 = vcmp.gt.f32.partialorder %v872, 0.0
    %vm937 = vcmp.gt.f32.partialorder %v873, 0.0
    %vm938 = vcmp.gt.f32.partialorder %v874, 0.0
    %vm939 = vcmp.gt.f32.partialorder %v875, 0.0
    %vm940 = vcmp.gt.f32.partialorder %v876, 0.0
    %vm941 = vcmp.gt.f32.partialorder %v877, 0.0
    %vm942 = vcmp.gt.f32.partialorder %v878, 0.0
    %vm943 = vcmp.gt.f32.partialorder %v879, 0.0
    %vm944 = vcmp.gt.f32.partialorder %v880, 0.0
    %vm945 = vcmp.gt.f32.partialorder %v881, 0.0
    %vm946 = vcmp.gt.f32.partialorder %v882, 0.0
    %vm947 = vcmp.gt.f32.partialorder %v883, 0.0
    %vm948 = vcmp.gt.f32.partialorder %v884, 0.0
    %vm949 = vcmp.gt.f32.partialorder %v885, 0.0
    %vm950 = vcmp.gt.f32.partialorder %v886, 0.0
    %vm951 = vcmp.gt.f32.partialorder %v887, 0.0
    %vm952 = vcmp.gt.f32.partialorder %v888, 0.0
    %vm953 = vcmp.gt.f32.partialorder %v889, 0.0
    %vm954 = vcmp.gt.f32.partialorder %v890, 0.0
    %vm955 = vcmp.gt.f32.partialorder %v891, 0.0
    %vm956 = vcmp.gt.f32.partialorder %v892, 0.0
    %vm957 = vcmp.gt.f32.partialorder %v893, 0.0
    %vm958 = vcmp.gt.f32.partialorder %v894, 0.0
    %vm959 = vcmp.gt.f32.partialorder %v895, 0.0
    %v960 = vld [vmem:[%s2 + $0x2] sm:$0x1]
    %v961 = vperm.slane %v960, 0
    %v962 = vmul.f32 %v961, %v832
    %v963 = vmul.f32 %v961, %v833
    %v964 = vmul.f32 %v961, %v834
    %v965 = vmul.f32 %v961, %v835
    %v966 = vmul.f32 %v961, %v836
    %v967 = vmul.f32 %v961, %v837
    %v968 = vmul.f32 %v961, %v838
    %v969 = vmul.f32 %v961, %v839
    %v970 = vmul.f32 %v961, %v840
    %v971 = vmul.f32 %v961, %v841
    %v972 = vmul.f32 %v961, %v842
    %v973 = vmul.f32 %v961, %v843
    %v974 = vmul.f32 %v961, %v844
    %v975 = vmul.f32 %v961, %v845
    %v976 = vmul.f32 %v961, %v846
    %v977 = vmul.f32 %v961, %v847
    %v978 = vmul.f32 %v961, %v848
    %v979 = vmul.f32 %v961, %v849
    %v980 = vmul.f32 %v961, %v850
    %v981 = vmul.f32 %v961, %v851
    %v982 = vmul.f32 %v961, %v852
    %v983 = vmul.f32 %v961, %v853
    %v984 = vmul.f32 %v961, %v854
    %v985 = vmul.f32 %v961, %v855
    %v986 = vmul.f32 %v961, %v856
    %v987 = vmul.f32 %v961, %v857
    %v988 = vmul.f32 %v961, %v858
    %v989 = vmul.f32 %v961, %v859
    %v990 = vmul.f32 %v961, %v860
    %v991 = vmul.f32 %v961, %v861
    %v992 = vmul.f32 %v961, %v862
    %v993 = vmul.f32 %v961, %v863
    %v994 = vmul.f32 %v961, %v864
    %v995 = vmul.f32 %v961, %v865
    %v996 = vmul.f32 %v961, %v866
    %v997 = vmul.f32 %v961, %v867
    %v998 = vmul.f32 %v961, %v868
    %v999 = vmul.f32 %v961, %v869
    %v1000 = vmul.f32 %v961, %v870
    %v1001 = vmul.f32 %v961, %v871
    %v1002 = vmul.f32 %v961, %v872
    %v1003 = vmul.f32 %v961, %v873
    %v1004 = vmul.f32 %v961, %v874
    %v1005 = vmul.f32 %v961, %v875
    %v1006 = vmul.f32 %v961, %v876
    %v1007 = vmul.f32 %v961, %v877
    %v1008 = vmul.f32 %v961, %v878
    %v1009 = vmul.f32 %v961, %v879
    %v1010 = vmul.f32 %v961, %v880
    %v1011 = vmul.f32 %v961, %v881
    %v1012 = vmul.f32 %v961, %v882
    %v1013 = vmul.f32 %v961, %v883
    %v1014 = vmul.f32 %v961, %v884
    %v1015 = vmul.f32 %v961, %v885
    %v1016 = vmul.f32 %v961, %v886
    %v1017 = vmul.f32 %v961, %v887
    %v1018 = vmul.f32 %v961, %v888
    %v1019 = vmul.f32 %v961, %v889
    %v1020 = vmul.f32 %v961, %v890
    %v1021 = vmul.f32 %v961, %v891
    %v1022 = vmul.f32 %v961, %v892
    %v1023 = vmul.f32 %v961, %v893
    %v1024 = vmul.f32 %v961, %v894
    %v1025 = vmul.f32 %v961, %v895
    %v1026 = vsel %vm896, %v832, %v962
    %v1027 = vsel %vm897, %v833, %v963
    %v1028 = vsel %vm898, %v834, %v964
    %v1029 = vsel %vm899, %v835, %v965
    %v1030 = vsel %vm900, %v836, %v966
    %v1031 = vsel %vm901, %v837, %v967
    %v1032 = vsel %vm902, %v838, %v968
    %v1033 = vsel %vm903, %v839, %v969
    %v1034 = vsel %vm904, %v840, %v970
    %v1035 = vsel %vm905, %v841, %v971
    %v1036 = vsel %vm906, %v842, %v972
    %v1037 = vsel %vm907, %v843, %v973
    %v1038 = vsel %vm908, %v844, %v974
    %v1039 = vsel %vm909, %v845, %v975
    %v1040 = vsel %vm910, %v846, %v976
    %v1041 = vsel %vm911, %v847, %v977
    %v1042 = vsel %vm912, %v848, %v978
    %v1043 = vsel %vm913, %v849, %v979
    %v1044 = vsel %vm914, %v850, %v980
    %v1045 = vsel %vm915, %v851, %v981
    %v1046 = vsel %vm916, %v852, %v982
    %v1047 = vsel %vm917, %v853, %v983
    %v1048 = vsel %vm918, %v854, %v984
    %v1049 = vsel %vm919, %v855, %v985
    %v1050 = vsel %vm920, %v856, %v986
    %v1051 = vsel %vm921, %v857, %v987
    %v1052 = vsel %vm922, %v858, %v988
    %v1053 = vsel %vm923, %v859, %v989
    %v1054 = vsel %vm924, %v860, %v990
    %v1055 = vsel %vm925, %v861, %v991
    %v1056 = vsel %vm926, %v862, %v992
    %v1057 = vsel %vm927, %v863, %v993
    %v1058 = vsel %vm928, %v864, %v994
    %v1059 = vsel %vm929, %v865, %v995
    %v1060 = vsel %vm930, %v866, %v996
    %v1061 = vsel %vm931, %v867, %v997
    %v1062 = vsel %vm932, %v868, %v998
    %v1063 = vsel %vm933, %v869, %v999
    %v1064 = vsel %vm934, %v870, %v1000
    %v1065 = vsel %vm935, %v871, %v1001
    %v1066 = vsel %vm936, %v872, %v1002
    %v1067 = vsel %vm937, %v873, %v1003
    %v1068 = vsel %vm938, %v874, %v1004
    %v1069 = vsel %vm939, %v875, %v1005
    %v1070 = vsel %vm940, %v876, %v1006
    %v1071 = vsel %vm941, %v877, %v1007
    %v1072 = vsel %vm942, %v878, %v1008
    %v1073 = vsel %vm943, %v879, %v1009
    %v1074 = vsel %vm944, %v880, %v1010
    %v1075 = vsel %vm945, %v881, %v1011
    %v1076 = vsel %vm946, %v882, %v1012
    %v1077 = vsel %vm947, %v883, %v1013
    %v1078 = vsel %vm948, %v884, %v1014
    %v1079 = vsel %vm949, %v885, %v1015
    %v1080 = vsel %vm950, %v886, %v1016
    %v1081 = vsel %vm951, %v887, %v1017
    %v1082 = vsel %vm952, %v888, %v1018
    %v1083 = vsel %vm953, %v889, %v1019
    %v1084 = vsel %vm954, %v890, %v1020
    %v1085 = vsel %vm955, %v891, %v1021
    %v1086 = vsel %vm956, %v892, %v1022
    %v1087 = vsel %vm957, %v893, %v1023
    %v1088 = vsel %vm958, %v894, %v1024
    %v1089 = vsel %vm959, %v895, %v1025
    %v1090 = vpack.c.bf16 %v1026, %v1026
    %v1091 = vpack.c.bf16 %v1027, %v1027
    %v1092 = vpack.c.bf16 %v1028, %v1028
    %v1093 = vpack.c.bf16 %v1029, %v1029
    %v1094 = vpack.c.bf16 %v1030, %v1030
    %v1095 = vpack.c.bf16 %v1031, %v1031
    %v1096 = vpack.c.bf16 %v1032, %v1032
    %v1097 = vpack.c.bf16 %v1033, %v1033
    %v1098 = vpack.c.bf16 %v1034, %v1034
    %v1099 = vpack.c.bf16 %v1035, %v1035
    %v1100 = vpack.c.bf16 %v1036, %v1036
    %v1101 = vpack.c.bf16 %v1037, %v1037
    %v1102 = vpack.c.bf16 %v1038, %v1038
    %v1103 = vpack.c.bf16 %v1039, %v1039
    %v1104 = vpack.c.bf16 %v1040, %v1040
    %v1105 = vpack.c.bf16 %v1041, %v1041
    %v1106 = vpack.c.bf16 %v1042, %v1042
    %v1107 = vpack.c.bf16 %v1043, %v1043
    %v1108 = vpack.c.bf16 %v1044, %v1044
    %v1109 = vpack.c.bf16 %v1045, %v1045
    %v1110 = vpack.c.bf16 %v1046, %v1046
    %v1111 = vpack.c.bf16 %v1047, %v1047
    %v1112 = vpack.c.bf16 %v1048, %v1048
    %v1113 = vpack.c.bf16 %v1049, %v1049
    %v1114 = vpack.c.bf16 %v1050, %v1050
    %v1115 = vpack.c.bf16 %v1051, %v1051
    %v1116 = vpack.c.bf16 %v1052, %v1052
    %v1117 = vpack.c.bf16 %v1053, %v1053
    %v1118 = vpack.c.bf16 %v1054, %v1054
    %v1119 = vpack.c.bf16 %v1055, %v1055
    %v1120 = vpack.c.bf16 %v1056, %v1056
    %v1121 = vpack.c.bf16 %v1057, %v1057
    %v1122 = vpack.c.bf16 %v1058, %v1058
    %v1123 = vpack.c.bf16 %v1059, %v1059
    %v1124 = vpack.c.bf16 %v1060, %v1060
    %v1125 = vpack.c.bf16 %v1061, %v1061
    %v1126 = vpack.c.bf16 %v1062, %v1062
    %v1127 = vpack.c.bf16 %v1063, %v1063
    %v1128 = vpack.c.bf16 %v1064, %v1064
    %v1129 = vpack.c.bf16 %v1065, %v1065
    %v1130 = vpack.c.bf16 %v1066, %v1066
    %v1131 = vpack.c.bf16 %v1067, %v1067
    %v1132 = vpack.c.bf16 %v1068, %v1068
    %v1133 = vpack.c.bf16 %v1069, %v1069
    %v1134 = vpack.c.bf16 %v1070, %v1070
    %v1135 = vpack.c.bf16 %v1071, %v1071
    %v1136 = vpack.c.bf16 %v1072, %v1072
    %v1137 = vpack.c.bf16 %v1073, %v1073
    %v1138 = vpack.c.bf16 %v1074, %v1074
    %v1139 = vpack.c.bf16 %v1075, %v1075
    %v1140 = vpack.c.bf16 %v1076, %v1076
    %v1141 = vpack.c.bf16 %v1077, %v1077
    %v1142 = vpack.c.bf16 %v1078, %v1078
    %v1143 = vpack.c.bf16 %v1079, %v1079
    %v1144 = vpack.c.bf16 %v1080, %v1080
    %v1145 = vpack.c.bf16 %v1081, %v1081
    %v1146 = vpack.c.bf16 %v1082, %v1082
    %v1147 = vpack.c.bf16 %v1083, %v1083
    %v1148 = vpack.c.bf16 %v1084, %v1084
    %v1149 = vpack.c.bf16 %v1085, %v1085
    %v1150 = vpack.c.bf16 %v1086, %v1086
    %v1151 = vpack.c.bf16 %v1087, %v1087
    %v1152 = vpack.c.bf16 %v1088, %v1088
    %v1153 = vpack.c.bf16 %v1089, %v1089
    %1154 = vst [vmem:[%s3] sm:$0xf] %v1090
    %1155 = vst [vmem:[%s3 + $0x4] sm:$0xf] %v1091
    %1156 = vst [vmem:[%s3 + $0x8] sm:$0xf] %v1092
    %1157 = vst [vmem:[%s3 + $0xc] sm:$0xf] %v1093
    %1158 = vst [vmem:[%s3 + $0x10] sm:$0xf] %v1094
    %1159 = vst [vmem:[%s3 + $0x14] sm:$0xf] %v1095
    %1160 = vst [vmem:[%s3 + $0x18] sm:$0xf] %v1096
    %1161 = vst [vmem:[%s3 + $0x1c] sm:$0xf] %v1097
    %1162 = vst [vmem:[%s3 + $0x20] sm:$0xf] %v1098
    %1163 = vst [vmem:[%s3 + $0x24] sm:$0xf] %v1099
    %1164 = vst [vmem:[%s3 + $0x28] sm:$0xf] %v1100
    %1165 = vst [vmem:[%s3 + $0x2c] sm:$0xf] %v1101
    %1166 = vst [vmem:[%s3 + $0x30] sm:$0xf] %v1102
    %1167 = vst [vmem:[%s3 + $0x34] sm:$0xf] %v1103
    %1168 = vst [vmem:[%s3 + $0x38] sm:$0xf] %v1104
    %1169 = vst [vmem:[%s3 + $0x3c] sm:$0xf] %v1105
    %1170 = vst [vmem:[%s3 + $0x40] sm:$0xf] %v1106
    %1171 = vst [vmem:[%s3 + $0x44] sm:$0xf] %v1107
    %1172 = vst [vmem:[%s3 + $0x48] sm:$0xf] %v1108
    %1173 = vst [vmem:[%s3 + $0x4c] sm:$0xf] %v1109
    %1174 = vst [vmem:[%s3 + $0x50] sm:$0xf] %v1110
    %1175 = vst [vmem:[%s3 + $0x54] sm:$0xf] %v1111
    %1176 = vst [vmem:[%s3 + $0x58] sm:$0xf] %v1112
    %1177 = vst [vmem:[%s3 + $0x5c] sm:$0xf] %v1113
    %1178 = vst [vmem:[%s3 + $0x60] sm:$0xf] %v1114
    %1179 = vst [vmem:[%s3 + $0x64] sm:$0xf] %v1115
    %1180 = vst [vmem:[%s3 + $0x68] sm:$0xf] %v1116
    %1181 = vst [vmem:[%s3 + $0x6c] sm:$0xf] %v1117
    %1182 = vst [vmem:[%s3 + $0x70] sm:$0xf] %v1118
    %1183 = vst [vmem:[%s3 + $0x74] sm:$0xf] %v1119
    %1184 = vst [vmem:[%s3 + $0x78] sm:$0xf] %v1120
    %1185 = vst [vmem:[%s3 + $0x7c] sm:$0xf] %v1121
    %1186 = vst [vmem:[%s3 + $0x80] sm:$0xf] %v1122
    %1187 = vst [vmem:[%s3 + $0x84] sm:$0xf] %v1123
    %1188 = vst [vmem:[%s3 + $0x88] sm:$0xf] %v1124
    %1189 = vst [vmem:[%s3 + $0x8c] sm:$0xf] %v1125
    %1190 = vst [vmem:[%s3 + $0x90] sm:$0xf] %v1126
    %1191 = vst [vmem:[%s3 + $0x94] sm:$0xf] %v1127
    %1192 = vst [vmem:[%s3 + $0x98] sm:$0xf] %v1128
    %1193 = vst [vmem:[%s3 + $0x9c] sm:$0xf] %v1129
    %1194 = vst [vmem:[%s3 + $0xa0] sm:$0xf] %v1130
    %1195 = vst [vmem:[%s3 + $0xa4] sm:$0xf] %v1131
    %1196 = vst [vmem:[%s3 + $0xa8] sm:$0xf] %v1132
    %1197 = vst [vmem:[%s3 + $0xac] sm:$0xf] %v1133
    %1198 = vst [vmem:[%s3 + $0xb0] sm:$0xf] %v1134
    %1199 = vst [vmem:[%s3 + $0xb4] sm:$0xf] %v1135
    %1200 = vst [vmem:[%s3 + $0xb8] sm:$0xf] %v1136
    %1201 = vst [vmem:[%s3 + $0xbc] sm:$0xf] %v1137
    %1202 = vst [vmem:[%s3 + $0xc0] sm:$0xf] %v1138
    %1203 = vst [vmem:[%s3 + $0xc4] sm:$0xf] %v1139
    %1204 = vst [vmem:[%s3 + $0xc8] sm:$0xf] %v1140
    %1205 = vst [vmem:[%s3 + $0xcc] sm:$0xf] %v1141
    %1206 = vst [vmem:[%s3 + $0xd0] sm:$0xf] %v1142
    %1207 = vst [vmem:[%s3 + $0xd4] sm:$0xf] %v1143
    %1208 = vst [vmem:[%s3 + $0xd8] sm:$0xf] %v1144
    %1209 = vst [vmem:[%s3 + $0xdc] sm:$0xf] %v1145
    %1210 = vst [vmem:[%s3 + $0xe0] sm:$0xf] %v1146
    %1211 = vst [vmem:[%s3 + $0xe4] sm:$0xf] %v1147
    %1212 = vst [vmem:[%s3 + $0xe8] sm:$0xf] %v1148
    %1213 = vst [vmem:[%s3 + $0xec] sm:$0xf] %v1149
    %1214 = vst [vmem:[%s3 + $0xf0] sm:$0xf] %v1150
    %1215 = vst [vmem:[%s3 + $0xf4] sm:$0xf] %v1151
    %1216 = vst [vmem:[%s3 + $0xf8] sm:$0xf] %v1152
    %1217 = vst [vmem:[%s3 + $0xfc] sm:$0xf] %v1153
  $region21: #{espcnet_forward.18} parent=0 // pred_fallthru
    _
  // Predicated region
  $region22: #{espcnet_forward.18} parent=0 // pred_check
    _
  $region23: #{espcnet_forward.18} parent=0 // pred_check_branch
    %1219 = sbr.rel (0) target = $region25
  $region24: #{espcnet_forward.18} parent=0 // pred_region
    _
  $region25: #{espcnet_forward.18} parent=0 // pred_fallthru
    _
  // Predicated region
  $region26: #{espcnet_forward.18} parent=0 // pred_check
    _
  $region27: #{espcnet_forward.18} parent=0 // pred_check_branch
    %1221 = sbr.rel (0) target = $region29
  $region28: #{espcnet_forward.18} parent=0 // pred_region
    _
  $region29: #{espcnet_forward.18} parent=0 // pred_fallthru
    _

// kernel: espcnet_forward.20
$region0: #{espcnet_forward.20}
  #allocation0 [shape = 'u32[]', space=smem, size = 0x4, offset = 0x4, fixed_abs, tag = 'smem constant byte address 0x4 - core index']
  #allocation1 [shape = 'u32[72,128]{1,0:T(1,128)}', space=vmem, size = 0x9000, scoped, tag = 'internal scratch']
  %s0 = inlined_call_operand.vmem [shape: bf16[128,256], index: 0, kind: input, shape index: {}]
  %s1 = inlined_call_operand.vmem [shape: bf16[256,128], index: 1, kind: input, shape index: {}]
  %s2 = inlined_call_operand.vmem [shape: bf16[128,128], index: 2, kind: output, shape index: {}]
  %s3 = sld [smem:[#allocation0]]
  $region18: #{espcnet_forward.20} parent=0
    _
  %s5 = ssub.s32 1, %s3
  %s6 = scalar_select 0, %s5, %s3
  // Predicated region
  $region2: #{espcnet_forward.20} parent=0 // pred_check
    _
  $region3: #{espcnet_forward.20} parent=0 // pred_check_branch
    %8 = sbr.rel (0) target = $region5
  $region4: #{espcnet_forward.20} parent=0 // pred_region
    _
  $region5: #{espcnet_forward.20} parent=0 // pred_fallthru
    _
  // Predicated region
  $region6: #{espcnet_forward.20} parent=0 // pred_check
    _
  $region7: #{espcnet_forward.20} parent=0 // pred_check_branch
    %10 = sbr.rel (0) target = $region9
  $region8: #{espcnet_forward.20} parent=0 // pred_region
    _
  $region9: #{espcnet_forward.20} parent=0 // pred_fallthru
    _
  %v11 = vld [vmem:[%s0] sm:$0xff]
  %v12 = vld [vmem:[%s0 + $0x8] sm:$0xff]
  %v13 = vld [vmem:[%s0 + $0x10] sm:$0xff]
  %v14 = vld [vmem:[%s0 + $0x18] sm:$0xff]
  %v15 = vld [vmem:[%s0 + $0x20] sm:$0xff]
  %v16 = vld [vmem:[%s0 + $0x28] sm:$0xff]
  %v17 = vld [vmem:[%s0 + $0x30] sm:$0xff]
  %v18 = vld [vmem:[%s0 + $0x38] sm:$0xff]
  %v19 = vld [vmem:[%s0 + $0x40] sm:$0xff]
  %v20 = vld [vmem:[%s0 + $0x48] sm:$0xff]
  %v21 = vld [vmem:[%s0 + $0x50] sm:$0xff]
  %v22 = vld [vmem:[%s0 + $0x58] sm:$0xff]
  %v23 = vld [vmem:[%s0 + $0x60] sm:$0xff]
  %v24 = vld [vmem:[%s0 + $0x68] sm:$0xff]
  %v25 = vld [vmem:[%s0 + $0x70] sm:$0xff]
  %v26 = vld [vmem:[%s0 + $0x78] sm:$0xff]
  %v27 = vld [vmem:[%s1] sm:$0xf]
  %v28 = vld [vmem:[%s1 + $0x4] sm:$0xf]
  %v29 = vld [vmem:[%s1 + $0x8] sm:$0xf]
  %v30 = vld [vmem:[%s1 + $0xc] sm:$0xf]
  %v31 = vld [vmem:[%s1 + $0x10] sm:$0xf]
  %v32 = vld [vmem:[%s1 + $0x14] sm:$0xf]
  %v33 = vld [vmem:[%s1 + $0x18] sm:$0xf]
  %v34 = vld [vmem:[%s1 + $0x1c] sm:$0xf]
  %v35 = vld [vmem:[%s1 + $0x20] sm:$0xf]
  %v36 = vld [vmem:[%s1 + $0x24] sm:$0xf]
  %v37 = vld [vmem:[%s1 + $0x28] sm:$0xf]
  %v38 = vld [vmem:[%s1 + $0x2c] sm:$0xf]
  %v39 = vld [vmem:[%s1 + $0x30] sm:$0xf]
  %v40 = vld [vmem:[%s1 + $0x34] sm:$0xf]
  %v41 = vld [vmem:[%s1 + $0x38] sm:$0xf]
  %v42 = vld [vmem:[%s1 + $0x3c] sm:$0xf]
  %v43 = vld [vmem:[%s1 + $0x40] sm:$0xf]
  %v44 = vld [vmem:[%s1 + $0x44] sm:$0xf]
  %v45 = vld [vmem:[%s1 + $0x48] sm:$0xf]
  %v46 = vld [vmem:[%s1 + $0x4c] sm:$0xf]
  %v47 = vld [vmem:[%s1 + $0x50] sm:$0xf]
  %v48 = vld [vmem:[%s1 + $0x54] sm:$0xf]
  %v49 = vld [vmem:[%s1 + $0x58] sm:$0xf]
  %v50 = vld [vmem:[%s1 + $0x5c] sm:$0xf]
  %v51 = vld [vmem:[%s1 + $0x60] sm:$0xf]
  %v52 = vld [vmem:[%s1 + $0x64] sm:$0xf]
  %v53 = vld [vmem:[%s1 + $0x68] sm:$0xf]
  %v54 = vld [vmem:[%s1 + $0x6c] sm:$0xf]
  %v55 = vld [vmem:[%s1 + $0x70] sm:$0xf]
  %v56 = vld [vmem:[%s1 + $0x74] sm:$0xf]
  %v57 = vld [vmem:[%s1 + $0x78] sm:$0xf]
  %v58 = vld [vmem:[%s1 + $0x7c] sm:$0xf]
  %v75 = vunpack.c.l.b16 %v11
  %v76 = vunpack.c.h.b16 %v11
  %v77 = vunpack.c.l.b16 %v12
  %v78 = vunpack.c.h.b16 %v12
  %v79 = vunpack.c.l.b16 %v13
  %v80 = vunpack.c.h.b16 %v13
  %v81 = vunpack.c.l.b16 %v14
  %v82 = vunpack.c.h.b16 %v14
  %v83 = vunpack.c.l.b16 %v15
  %v84 = vunpack.c.h.b16 %v15
  %v85 = vunpack.c.l.b16 %v16
  %v86 = vunpack.c.h.b16 %v16
  %v87 = vunpack.c.l.b16 %v17
  %v88 = vunpack.c.h.b16 %v17
  %v89 = vunpack.c.l.b16 %v18
  %v90 = vunpack.c.h.b16 %v18
  %v91 = vunpack.c.l.b16 %v19
  %v92 = vunpack.c.h.b16 %v19
  %v93 = vunpack.c.l.b16 %v20
  %v94 = vunpack.c.h.b16 %v20
  %v95 = vunpack.c.l.b16 %v21
  %v96 = vunpack.c.h.b16 %v21
  %v97 = vunpack.c.l.b16 %v22
  %v98 = vunpack.c.h.b16 %v22
  %v99 = vunpack.c.l.b16 %v23
  %v100 = vunpack.c.h.b16 %v23
  %v101 = vunpack.c.l.b16 %v24
  %v102 = vunpack.c.h.b16 %v24
  %v103 = vunpack.c.l.b16 %v25
  %v104 = vunpack.c.h.b16 %v25
  %v105 = vunpack.c.l.b16 %v26
  %v106 = vunpack.c.h.b16 %v26
  %v107 = vpack.c.b16 %v77, %v75
  %v108 = vpack.c.b16 %v78, %v76
  %v109 = vpack.c.b16 %v81, %v79
  %v110 = vpack.c.b16 %v82, %v80
  %v111 = vpack.c.b16 %v85, %v83
  %v112 = vpack.c.b16 %v86, %v84
  %v113 = vpack.c.b16 %v89, %v87
  %v114 = vpack.c.b16 %v90, %v88
  %v115 = vpack.c.b16 %v93, %v91
  %v116 = vpack.c.b16 %v94, %v92
  %v117 = vpack.c.b16 %v97, %v95
  %v118 = vpack.c.b16 %v98, %v96
  %v119 = vpack.c.b16 %v101, %v99
  %v120 = vpack.c.b16 %v102, %v100
  %v121 = vpack.c.b16 %v105, %v103
  %v122 = vpack.c.b16 %v106, %v104
  %v171 = vunpack.c.l.b16 %v27
  %v172 = vunpack.c.l.b16 %v28
  %v173 = vunpack.c.l.b16 %v29
  %v174 = vunpack.c.l.b16 %v30
  %v175 = vunpack.c.l.b16 %v31
  %v176 = vunpack.c.l.b16 %v32
  %v177 = vunpack.c.l.b16 %v33
  %v178 = vunpack.c.l.b16 %v34
  %v179 = vunpack.c.l.b16 %v35
  %v180 = vunpack.c.l.b16 %v36
  %v181 = vunpack.c.l.b16 %v37
  %v182 = vunpack.c.l.b16 %v38
  %v183 = vunpack.c.l.b16 %v39
  %v184 = vunpack.c.l.b16 %v40
  %v185 = vunpack.c.l.b16 %v41
  %v186 = vunpack.c.l.b16 %v42
  %v187 = vunpack.c.l.b16 %v43
  %v188 = vunpack.c.l.b16 %v44
  %v189 = vunpack.c.l.b16 %v45
  %v190 = vunpack.c.l.b16 %v46
  %v191 = vunpack.c.l.b16 %v47
  %v192 = vunpack.c.l.b16 %v48
  %v193 = vunpack.c.l.b16 %v49
  %v194 = vunpack.c.l.b16 %v50
  %v195 = vunpack.c.l.b16 %v51
  %v196 = vunpack.c.l.b16 %v52
  %v197 = vunpack.c.l.b16 %v53
  %v198 = vunpack.c.l.b16 %v54
  %v199 = vunpack.c.l.b16 %v55
  %v200 = vunpack.c.l.b16 %v56
  %v201 = vunpack.c.l.b16 %v57
  %v202 = vunpack.c.l.b16 %v58
  %v203 = vpack.c.b16 %v172, %v171
  %v204 = vpack.c.b16 %v174, %v173
  %v205 = vpack.c.b16 %v176, %v175
  %v206 = vpack.c.b16 %v178, %v177
  %v207 = vpack.c.b16 %v180, %v179
  %v208 = vpack.c.b16 %v182, %v181
  %v209 = vpack.c.b16 %v184, %v183
  %v210 = vpack.c.b16 %v186, %v185
  %v211 = vpack.c.b16 %v188, %v187
  %v212 = vpack.c.b16 %v190, %v189
  %v213 = vpack.c.b16 %v192, %v191
  %v214 = vpack.c.b16 %v194, %v193
  %v215 = vpack.c.b16 %v196, %v195
  %v216 = vpack.c.b16 %v198, %v197
  %v217 = vpack.c.b16 %v200, %v199
  %v218 = vpack.c.b16 %v202, %v201
  %235 = vmatpush.bf16.msra.mxu0 %v210
  %236 = vmatpush.bf16.msra.mxu0 %v209
  %237 = vmatpush.bf16.msra.mxu0 %v208
  %238 = vmatpush.bf16.msra.mxu0 %v207
  %239 = vmatpush.bf16.msra.mxu0 %v206
  %240 = vmatpush.bf16.msra.mxu0 %v205
  %241 = vmatpush.bf16.msra.mxu0 %v204
  %242 = vmatpush.bf16.msra.mxu0 %v203
  %243 = vmatmul.bf16.gmra.mxu0 %v107
  %v244 = vpop.f32.mrf.mxu0
  %v245 = vadd.f32 0.0, %v244
  %v246 = vpop.f32.mrf.mxu0
  %v247 = vadd.f32 0.0, %v246
  %248 = vmatmul.bf16.gmra.mxu0 %v109
  %v249 = vpop.f32.mrf.mxu0
  %v250 = vadd.f32 0.0, %v249
  %v251 = vpop.f32.mrf.mxu0
  %v252 = vadd.f32 0.0, %v251
  %253 = vmatmul.bf16.gmra.mxu0 %v111
  %v254 = vpop.f32.mrf.mxu0
  %v255 = vadd.f32 0.0, %v254
  %v256 = vpop.f32.mrf.mxu0
  %v257 = vadd.f32 0.0, %v256
  %258 = vmatmul.bf16.gmra.mxu0 %v113
  %v259 = vpop.f32.mrf.mxu0
  %v260 = vadd.f32 0.0, %v259
  %v261 = vpop.f32.mrf.mxu0
  %v262 = vadd.f32 0.0, %v261
  %263 = vmatmul.bf16.gmra.mxu0 %v115
  %v264 = vpop.f32.mrf.mxu0
  %v265 = vadd.f32 0.0, %v264
  %v266 = vpop.f32.mrf.mxu0
  %v267 = vadd.f32 0.0, %v266
  %268 = vmatmul.bf16.gmra.mxu0 %v117
  %v269 = vpop.f32.mrf.mxu0
  %v270 = vadd.f32 0.0, %v269
  %v271 = vpop.f32.mrf.mxu0
  %v272 = vadd.f32 0.0, %v271
  %273 = vmatmul.bf16.gmra.mxu0 %v119
  %v274 = vpop.f32.mrf.mxu0
  %v275 = vadd.f32 0.0, %v274
  %v276 = vpop.f32.mrf.mxu0
  %v277 = vadd.f32 0.0, %v276
  %278 = vmatmul.bf16.gmra.mxu0 %v121
  %v279 = vpop.f32.mrf.mxu0
  %v280 = vadd.f32 0.0, %v279
  %v281 = vpop.f32.mrf.mxu0
  %v282 = vadd.f32 0.0, %v281
  %283 = vdwg.mxu0
  %284 = vmatpush.bf16.msra.mxu0 %v218
  %285 = vmatpush.bf16.msra.mxu0 %v217
  %286 = vmatpush.bf16.msra.mxu0 %v216
  %287 = vmatpush.bf16.msra.mxu0 %v215
  %288 = vmatpush.bf16.msra.mxu0 %v214
  %289 = vmatpush.bf16.msra.mxu0 %v213
  %290 = vmatpush.bf16.msra.mxu0 %v212
  %291 = vmatpush.bf16.msra.mxu0 %v211
  %292 = vmatmul.bf16.gmra.mxu0 %v108
  %v293 = vpop.f32.mrf.mxu0
  %v294 = vadd.f32 %v245, %v293
  %v295 = vpop.f32.mrf.mxu0
  %v296 = vadd.f32 %v247, %v295
  %297 = vmatmul.bf16.gmra.mxu0 %v110
  %v298 = vpop.f32.mrf.mxu0
  %v299 = vadd.f32 %v250, %v298
  %v300 = vpop.f32.mrf.mxu0
  %v301 = vadd.f32 %v252, %v300
  %302 = vmatmul.bf16.gmra.mxu0 %v112
  %v303 = vpop.f32.mrf.mxu0
  %v304 = vadd.f32 %v255, %v303
  %v305 = vpop.f32.mrf.mxu0
  %v306 = vadd.f32 %v257, %v305
  %307 = vmatmul.bf16.gmra.mxu0 %v114
  %v308 = vpop.f32.mrf.mxu0
  %v309 = vadd.f32 %v260, %v308
  %v310 = vpop.f32.mrf.mxu0
  %v311 = vadd.f32 %v262, %v310
  %312 = vmatmul.bf16.gmra.mxu0 %v116
  %v313 = vpop.f32.mrf.mxu0
  %v314 = vadd.f32 %v265, %v313
  %v315 = vpop.f32.mrf.mxu0
  %v316 = vadd.f32 %v267, %v315
  %317 = vmatmul.bf16.gmra.mxu0 %v118
  %v318 = vpop.f32.mrf.mxu0
  %v319 = vadd.f32 %v270, %v318
  %v320 = vpop.f32.mrf.mxu0
  %v321 = vadd.f32 %v272, %v320
  %322 = vmatmul.bf16.gmra.mxu0 %v120
  %v323 = vpop.f32.mrf.mxu0
  %v324 = vadd.f32 %v275, %v323
  %v325 = vpop.f32.mrf.mxu0
  %v326 = vadd.f32 %v277, %v325
  %327 = vmatmul.bf16.gmra.mxu0 %v122
  %v328 = vpop.f32.mrf.mxu0
  %v329 = vadd.f32 %v280, %v328
  %v330 = vpop.f32.mrf.mxu0
  %v331 = vadd.f32 %v282, %v330
  %332 = vdwg.mxu0
  %v333 = vpack.c.bf16 %v294, %v294
  %v334 = vpack.c.bf16 %v296, %v296
  %v335 = vpack.c.bf16 %v299, %v299
  %v336 = vpack.c.bf16 %v301, %v301
  %v337 = vpack.c.bf16 %v304, %v304
  %v338 = vpack.c.bf16 %v306, %v306
  %v339 = vpack.c.bf16 %v309, %v309
  %v340 = vpack.c.bf16 %v311, %v311
  %v341 = vpack.c.bf16 %v314, %v314
  %v342 = vpack.c.bf16 %v316, %v316
  %v343 = vpack.c.bf16 %v319, %v319
  %v344 = vpack.c.bf16 %v321, %v321
  %v345 = vpack.c.bf16 %v324, %v324
  %v346 = vpack.c.bf16 %v326, %v326
  %v347 = vpack.c.bf16 %v329, %v329
  %v348 = vpack.c.bf16 %v331, %v331
  %349 = vst [vmem:[%s2] sm:$0xf] %v333
  %350 = vst [vmem:[%s2 + $0x4] sm:$0xf] %v334
  %351 = vst [vmem:[%s2 + $0x8] sm:$0xf] %v335
  %352 = vst [vmem:[%s2 + $0xc] sm:$0xf] %v336
  %353 = vst [vmem:[%s2 + $0x10] sm:$0xf] %v337
  %354 = vst [vmem:[%s2 + $0x14] sm:$0xf] %v338
  %355 = vst [vmem:[%s2 + $0x18] sm:$0xf] %v339
  %356 = vst [vmem:[%s2 + $0x1c] sm:$0xf] %v340
  %357 = vst [vmem:[%s2 + $0x20] sm:$0xf] %v341
  %358 = vst [vmem:[%s2 + $0x24] sm:$0xf] %v342
  %359 = vst [vmem:[%s2 + $0x28] sm:$0xf] %v343
  %360 = vst [vmem:[%s2 + $0x2c] sm:$0xf] %v344
  %361 = vst [vmem:[%s2 + $0x30] sm:$0xf] %v345
  %362 = vst [vmem:[%s2 + $0x34] sm:$0xf] %v346
  %363 = vst [vmem:[%s2 + $0x38] sm:$0xf] %v347
  %364 = vst [vmem:[%s2 + $0x3c] sm:$0xf] %v348
  // Predicated region
  $region10: #{espcnet_forward.20} parent=0 // pred_check
    _
  $region11: #{espcnet_forward.20} parent=0 // pred_check_branch
    %366 = sbr.rel (0) target = $region13
  $region12: #{espcnet_forward.20} parent=0 // pred_region
    _
  $region13: #{espcnet_forward.20} parent=0 // pred_fallthru
    _
  // Predicated region
  $region14: #{espcnet_forward.20} parent=0 // pred_check
    _
  $region15: #{espcnet_forward.20} parent=0 // pred_check_branch
    %368 = sbr.rel (0) target = $region17
  $region16: #{espcnet_forward.20} parent=0 // pred_region
    _
  $region17: #{espcnet_forward.20} parent=0 // pred_fallthru
    _

// kernel: espcnet_forward.22
$region0: #{espcnet_forward.22}
  #allocation0 [shape = 'u32[]', space=smem, size = 0x4, offset = 0x4, fixed_abs, tag = 'smem constant byte address 0x4 - core index']
  #allocation1 [shape = 'u32[72,128]{1,0:T(1,128)}', space=vmem, size = 0x9000, scoped, tag = 'internal scratch']
  %s0 = inlined_call_operand.vmem [shape: bf16[128,128], index: 0, kind: input, shape index: {}]
  %s1 = inlined_call_operand.vmem [shape: bf16[128,128], index: 1, kind: input, shape index: {}]
  %s2 = inlined_call_operand.vmem [shape: bf16[128,128], index: 2, kind: output, shape index: {}]
  %s3 = sld [smem:[#allocation0]]
  $region18: #{espcnet_forward.22} parent=0
    _
  %s5 = ssub.s32 1, %s3
  %s6 = scalar_select 0, %s5, %s3
  // Predicated region
  $region2: #{espcnet_forward.22} parent=0 // pred_check
    _
  $region3: #{espcnet_forward.22} parent=0 // pred_check_branch
    %8 = sbr.rel (0) target = $region5
  $region4: #{espcnet_forward.22} parent=0 // pred_region
    _
  $region5: #{espcnet_forward.22} parent=0 // pred_fallthru
    _
  // Predicated region
  $region6: #{espcnet_forward.22} parent=0 // pred_check
    _
  $region7: #{espcnet_forward.22} parent=0 // pred_check_branch
    %10 = sbr.rel (0) target = $region9
  $region8: #{espcnet_forward.22} parent=0 // pred_region
    _
  $region9: #{espcnet_forward.22} parent=0 // pred_fallthru
    _
  %v11 = vld [vmem:[%s0] sm:$0xf]
  %v12 = vld [vmem:[%s0 + $0x4] sm:$0xf]
  %v13 = vld [vmem:[%s0 + $0x8] sm:$0xf]
  %v14 = vld [vmem:[%s0 + $0xc] sm:$0xf]
  %v15 = vld [vmem:[%s0 + $0x10] sm:$0xf]
  %v16 = vld [vmem:[%s0 + $0x14] sm:$0xf]
  %v17 = vld [vmem:[%s0 + $0x18] sm:$0xf]
  %v18 = vld [vmem:[%s0 + $0x1c] sm:$0xf]
  %v19 = vld [vmem:[%s0 + $0x20] sm:$0xf]
  %v20 = vld [vmem:[%s0 + $0x24] sm:$0xf]
  %v21 = vld [vmem:[%s0 + $0x28] sm:$0xf]
  %v22 = vld [vmem:[%s0 + $0x2c] sm:$0xf]
  %v23 = vld [vmem:[%s0 + $0x30] sm:$0xf]
  %v24 = vld [vmem:[%s0 + $0x34] sm:$0xf]
  %v25 = vld [vmem:[%s0 + $0x38] sm:$0xf]
  %v26 = vld [vmem:[%s0 + $0x3c] sm:$0xf]
  %v27 = vld [vmem:[%s1] sm:$0xf]
  %v28 = vld [vmem:[%s1 + $0x4] sm:$0xf]
  %v29 = vld [vmem:[%s1 + $0x8] sm:$0xf]
  %v30 = vld [vmem:[%s1 + $0xc] sm:$0xf]
  %v31 = vld [vmem:[%s1 + $0x10] sm:$0xf]
  %v32 = vld [vmem:[%s1 + $0x14] sm:$0xf]
  %v33 = vld [vmem:[%s1 + $0x18] sm:$0xf]
  %v34 = vld [vmem:[%s1 + $0x1c] sm:$0xf]
  %v35 = vld [vmem:[%s1 + $0x20] sm:$0xf]
  %v36 = vld [vmem:[%s1 + $0x24] sm:$0xf]
  %v37 = vld [vmem:[%s1 + $0x28] sm:$0xf]
  %v38 = vld [vmem:[%s1 + $0x2c] sm:$0xf]
  %v39 = vld [vmem:[%s1 + $0x30] sm:$0xf]
  %v40 = vld [vmem:[%s1 + $0x34] sm:$0xf]
  %v41 = vld [vmem:[%s1 + $0x38] sm:$0xf]
  %v42 = vld [vmem:[%s1 + $0x3c] sm:$0xf]
  %v59 = vunpack.c.l.b16 %v11
  %v60 = vunpack.c.l.b16 %v12
  %v61 = vunpack.c.l.b16 %v13
  %v62 = vunpack.c.l.b16 %v14
  %v63 = vunpack.c.l.b16 %v15
  %v64 = vunpack.c.l.b16 %v16
  %v65 = vunpack.c.l.b16 %v17
  %v66 = vunpack.c.l.b16 %v18
  %v67 = vunpack.c.l.b16 %v19
  %v68 = vunpack.c.l.b16 %v20
  %v69 = vunpack.c.l.b16 %v21
  %v70 = vunpack.c.l.b16 %v22
  %v71 = vunpack.c.l.b16 %v23
  %v72 = vunpack.c.l.b16 %v24
  %v73 = vunpack.c.l.b16 %v25
  %v74 = vunpack.c.l.b16 %v26
  %v75 = vpack.c.b16 %v60, %v59
  %v76 = vpack.c.b16 %v62, %v61
  %v77 = vpack.c.b16 %v64, %v63
  %v78 = vpack.c.b16 %v66, %v65
  %v79 = vpack.c.b16 %v68, %v67
  %v80 = vpack.c.b16 %v70, %v69
  %v81 = vpack.c.b16 %v72, %v71
  %v82 = vpack.c.b16 %v74, %v73
  %v107 = vunpack.c.l.b16 %v27
  %v108 = vunpack.c.l.b16 %v28
  %v109 = vunpack.c.l.b16 %v29
  %v110 = vunpack.c.l.b16 %v30
  %v111 = vunpack.c.l.b16 %v31
  %v112 = vunpack.c.l.b16 %v32
  %v113 = vunpack.c.l.b16 %v33
  %v114 = vunpack.c.l.b16 %v34
  %v115 = vunpack.c.l.b16 %v35
  %v116 = vunpack.c.l.b16 %v36
  %v117 = vunpack.c.l.b16 %v37
  %v118 = vunpack.c.l.b16 %v38
  %v119 = vunpack.c.l.b16 %v39
  %v120 = vunpack.c.l.b16 %v40
  %v121 = vunpack.c.l.b16 %v41
  %v122 = vunpack.c.l.b16 %v42
  %v123 = vpack.c.b16 %v108, %v107
  %v124 = vpack.c.b16 %v110, %v109
  %v125 = vpack.c.b16 %v112, %v111
  %v126 = vpack.c.b16 %v114, %v113
  %v127 = vpack.c.b16 %v116, %v115
  %v128 = vpack.c.b16 %v118, %v117
  %v129 = vpack.c.b16 %v120, %v119
  %v130 = vpack.c.b16 %v122, %v121
  %139 = vmatpush.bf16.msra.mxu0 %v130
  %140 = vmatpush.bf16.msra.mxu0 %v129
  %141 = vmatpush.bf16.msra.mxu0 %v128
  %142 = vmatpush.bf16.msra.mxu0 %v127
  %143 = vmatpush.bf16.msra.mxu0 %v126
  %144 = vmatpush.bf16.msra.mxu0 %v125
  %145 = vmatpush.bf16.msra.mxu0 %v124
  %146 = vmatpush.bf16.msra.mxu0 %v123
  %147 = vmatmul.bf16.gmra.mxu0 %v75
  %v148 = vpop.f32.mrf.mxu0
  %v149 = vadd.f32 0.0, %v148
  %v150 = vpop.f32.mrf.mxu0
  %v151 = vadd.f32 0.0, %v150
  %152 = vmatmul.bf16.gmra.mxu0 %v76
  %v153 = vpop.f32.mrf.mxu0
  %v154 = vadd.f32 0.0, %v153
  %v155 = vpop.f32.mrf.mxu0
  %v156 = vadd.f32 0.0, %v155
  %157 = vmatmul.bf16.gmra.mxu0 %v77
  %v158 = vpop.f32.mrf.mxu0
  %v159 = vadd.f32 0.0, %v158
  %v160 = vpop.f32.mrf.mxu0
  %v161 = vadd.f32 0.0, %v160
  %162 = vmatmul.bf16.gmra.mxu0 %v78
  %v163 = vpop.f32.mrf.mxu0
  %v164 = vadd.f32 0.0, %v163
  %v165 = vpop.f32.mrf.mxu0
  %v166 = vadd.f32 0.0, %v165
  %167 = vmatmul.bf16.gmra.mxu0 %v79
  %v168 = vpop.f32.mrf.mxu0
  %v169 = vadd.f32 0.0, %v168
  %v170 = vpop.f32.mrf.mxu0
  %v171 = vadd.f32 0.0, %v170
  %172 = vmatmul.bf16.gmra.mxu0 %v80
  %v173 = vpop.f32.mrf.mxu0
  %v174 = vadd.f32 0.0, %v173
  %v175 = vpop.f32.mrf.mxu0
  %v176 = vadd.f32 0.0, %v175
  %177 = vmatmul.bf16.gmra.mxu0 %v81
  %v178 = vpop.f32.mrf.mxu0
  %v179 = vadd.f32 0.0, %v178
  %v180 = vpop.f32.mrf.mxu0
  %v181 = vadd.f32 0.0, %v180
  %182 = vmatmul.bf16.gmra.mxu0 %v82
  %v183 = vpop.f32.mrf.mxu0
  %v184 = vadd.f32 0.0, %v183
  %v185 = vpop.f32.mrf.mxu0
  %v186 = vadd.f32 0.0, %v185
  %187 = vdwg.mxu0
  %v188 = vpack.c.bf16 %v149, %v149
  %v189 = vpack.c.bf16 %v151, %v151
  %v190 = vpack.c.bf16 %v154, %v154
  %v191 = vpack.c.bf16 %v156, %v156
  %v192 = vpack.c.bf16 %v159, %v159
  %v193 = vpack.c.bf16 %v161, %v161
  %v194 = vpack.c.bf16 %v164, %v164
  %v195 = vpack.c.bf16 %v166, %v166
  %v196 = vpack.c.bf16 %v169, %v169
  %v197 = vpack.c.bf16 %v171, %v171
  %v198 = vpack.c.bf16 %v174, %v174
  %v199 = vpack.c.bf16 %v176, %v176
  %v200 = vpack.c.bf16 %v179, %v179
  %v201 = vpack.c.bf16 %v181, %v181
  %v202 = vpack.c.bf16 %v184, %v184
  %v203 = vpack.c.bf16 %v186, %v186
  %204 = vst [vmem:[%s2] sm:$0xf] %v188
  %205 = vst [vmem:[%s2 + $0x4] sm:$0xf] %v189
  %206 = vst [vmem:[%s2 + $0x8] sm:$0xf] %v190
  %207 = vst [vmem:[%s2 + $0xc] sm:$0xf] %v191
  %208 = vst [vmem:[%s2 + $0x10] sm:$0xf] %v192
  %209 = vst [vmem:[%s2 + $0x14] sm:$0xf] %v193
  %210 = vst [vmem:[%s2 + $0x18] sm:$0xf] %v194
  %211 = vst [vmem:[%s2 + $0x1c] sm:$0xf] %v195
  %212 = vst [vmem:[%s2 + $0x20] sm:$0xf] %v196
  %213 = vst [vmem:[%s2 + $0x24] sm:$0xf] %v197
  %214 = vst [vmem:[%s2 + $0x28] sm:$0xf] %v198
  %215 = vst [vmem:[%s2 + $0x2c] sm:$0xf] %v199
  %216 = vst [vmem:[%s2 + $0x30] sm:$0xf] %v200
  %217 = vst [vmem:[%s2 + $0x34] sm:$0xf] %v201
  %218 = vst [vmem:[%s2 + $0x38] sm:$0xf] %v202
  %219 = vst [vmem:[%s2 + $0x3c] sm:$0xf] %v203
  // Predicated region
  $region10: #{espcnet_forward.22} parent=0 // pred_check
    _
  $region11: #{espcnet_forward.22} parent=0 // pred_check_branch
    %221 = sbr.rel (0) target = $region13
  $region12: #{espcnet_forward.22} parent=0 // pred_region
    _
  $region13: #{espcnet_forward.22} parent=0 // pred_fallthru
    _
  // Predicated region
  $region14: #{espcnet_forward.22} parent=0 // pred_check
    _
  $region15: #{espcnet_forward.22} parent=0 // pred_check_branch
    %223 = sbr.rel (0) target = $region17
  $region16: #{espcnet_forward.22} parent=0 // pred_region
    _
  $region17: #{espcnet_forward.22} parent=0 // pred_fallthru
    _

// kernel: espcnet_forward.21
$region0: #{espcnet_forward.21}
  #allocation0 [shape = 'u32[]', space=smem, size = 0x4, offset = 0x4, fixed_abs, tag = 'smem constant byte address 0x4 - core index']
  #allocation1 [shape = 'u32[72,128]{1,0:T(1,128)}', space=vmem, size = 0x9000, scoped, tag = 'internal scratch']
  #allocation2 [shape = 'f32[128,128]{1,0:T(8,128)}', space=vmem, size = 0x10000, scoped, tag = 'scratch operand']
  %s0 = inlined_call_operand.vmem [shape: bf16[5,128,128], index: 0, kind: input, shape index: {}]
  %s1 = inlined_call_operand.vmem [shape: bf16[5,128,128], index: 1, kind: input, shape index: {}]
  %s2 = inlined_call_operand.vmem [shape: f32[3,128], index: 2, kind: input, shape index: {}]
  %s3 = inlined_call_operand.vmem [shape: bf16[128,128], index: 3, kind: output, shape index: {}]
  %s4 = sld [smem:[#allocation0]]
  $region53: #{espcnet_forward.21} parent=0
    _
  %s6 = ssub.s32 1, %s4
  %s7 = scalar_select 0, %s6, %s4
  loop: start=0, step=1, limit=7
  $region2: #{espcnet_forward.21} parent=0 // loop_pre_header
    _
  $region3: #{espcnet_forward.21} parent=0 // loop_header
    %s9 = sphi 0, %s13
    %p10 = scmp.ge.s32.totalorder %s9, 7
    %s16 = sphi 0, %s28
    %s17 = sphi 0, %s24
    %s18 = sphi 0, %s16
    %s19 = sphi 0, %s17
    %s20 = sphi 0, %s18
    %s21 = sphi 0, %s19
    %s33 = sphi 0, %s35
    %s36 = sphi 0, %s33
    %s37 = sphi 0, %s36
    %s53 = sphi 0, %s37
    %s59 = sphi 0, %s61
    %s62 = sphi 0, %s59
    %s63 = sphi 0, %s62
    %s79 = sphi 0, %s63
    %s83 = sphi 0, %s83
    %s85 = sphi 0, %s83
    %s86 = sphi 0, %s85
    %s100 = sphi 0, %s86
    %s106 = sphi 0, %s108
    %s109 = sphi 0, %s106
    %s110 = sphi 0, %s109
    %s126 = sphi 0, %s110
  $region4: #{espcnet_forward.21} parent=0 // loop_header_branch
    %12 = sbr.rel (%p10) target = $region8
  $region5: #{espcnet_forward.21} parent=0 // loop_body
    %s14 = ssub.s32 %s9, 1
    %s15 = ssub.s32 %s9, 2
    %s22 = sadd.s32 1, %s17
    %p23 = scmp.ge.s32.totalorder %s22, 5
    %s24 = scalar_select %p23, 0, %s22
    %s25 = sadd.s32 1, %s16
    %s26 = scalar_select %p23, %s25, %s16
    %p27 = scmp.ge.s32.totalorder %s26, 1
    %s28 = scalar_select %p27, 0, %s26
    %s29 = ssub.s32 %s17, %s24
    %s30 = ssub.s32 %s16, %s28
    %s31 = sor.u32 %s29, %s30
    %p32 = scmp.eq.s32.totalorder %s31, 0
    %s34 = sadd.s32 %s33, 1
    %s35 = scalar_select %p32, %s33, %s34
    %p38 = pneg %p32
    %p39 = scmp.eq.s32.totalorder %s9, 4
    %p40 = por %p38, %p39
    %p41 = scmp.ne.s32.totalorder %s33, %s36
    %p42 = scmp.eq.s32.totalorder %s9, 0
    %p43 = por %p41, %p42
    %p44 = scmp.ne.s32.totalorder %s33, %s36
    %p45 = scmp.eq.s32.totalorder %s14, 4
    %p46 = por %p44, %p45
    %p47 = scmp.ne.s32.totalorder %s36, %s37
    %p48 = scmp.eq.s32.totalorder %s14, 0
    %p49 = por %p47, %p48
    %p50 = scmp.ne.s32.totalorder %s36, %s37
    %p51 = scmp.eq.s32.totalorder %s15, 4
    %p52 = por %p50, %p51
    %p54 = scmp.ne.s32.totalorder %s37, %s53
    %p55 = scmp.eq.s32.totalorder %s15, 0
    %p56 = por %p54, %p55
    %s57 = ssub.s32 %s17, %s24
    %p58 = scmp.eq.s32.totalorder %s57, 0
    %s60 = sadd.s32 %s59, 1
    %s61 = scalar_select %p58, %s59, %s60
    %p64 = pneg %p58
    %p65 = scmp.eq.s32.totalorder %s9, 4
    %p66 = por %p64, %p65
    %p67 = scmp.ne.s32.totalorder %s59, %s62
    %p68 = scmp.eq.s32.totalorder %s9, 0
    %p69 = por %p67, %p68
    %p70 = scmp.ne.s32.totalorder %s59, %s62
    %p71 = scmp.eq.s32.totalorder %s14, 4
    %p72 = por %p70, %p71
    %p73 = scmp.ne.s32.totalorder %s62, %s63
    %p74 = scmp.eq.s32.totalorder %s14, 0
    %p75 = por %p73, %p74
    %p76 = scmp.ne.s32.totalorder %s62, %s63
    %p77 = scmp.eq.s32.totalorder %s15, 4
    %p78 = por %p76, %p77
    %p80 = scmp.ne.s32.totalorder %s63, %s79
    %p81 = scmp.eq.s32.totalorder %s15, 0
    %p82 = por %p80, %p81
    %s84 = sadd.s32 %s83, 1
    %p87 = scmp.eq.s32.totalorder %s9, 4
    %p88 = scmp.ne.s32.totalorder %s83, %s85
    %p89 = scmp.eq.s32.totalorder %s9, 0
    %p90 = por %p88, %p89
    %p91 = scmp.ne.s32.totalorder %s83, %s85
    %p92 = scmp.eq.s32.totalorder %s14, 4
    %p93 = por %p91, %p92
    %p94 = scmp.ne.s32.totalorder %s85, %s86
    %p95 = scmp.eq.s32.totalorder %s14, 0
    %p96 = por %p94, %p95
    %p97 = scmp.ne.s32.totalorder %s85, %s86
    %p98 = scmp.eq.s32.totalorder %s15, 4
    %p99 = por %p97, %p98
    %p101 = scmp.ne.s32.totalorder %s86, %s100
    %p102 = scmp.eq.s32.totalorder %s15, 0
    %p103 = por %p101, %p102
    %s104 = ssub.s32 %s16, %s28
    %p105 = scmp.eq.s32.totalorder %s104, 0
    %s107 = sadd.s32 %s106, 1
    %s108 = scalar_select %p105, %s106, %s107
    %p111 = pneg %p105
    %p112 = scmp.eq.s32.totalorder %s9, 4
    %p113 = por %p111, %p112
    %p114 = scmp.ne.s32.totalorder %s106, %s109
    %p115 = scmp.eq.s32.totalorder %s9, 0
    %p116 = por %p114, %p115
    %p117 = scmp.ne.s32.totalorder %s106, %s109
    %p118 = scmp.eq.s32.totalorder %s14, 4
    %p119 = por %p117, %p118
    %p120 = scmp.ne.s32.totalorder %s109, %s110
    %p121 = scmp.eq.s32.totalorder %s14, 0
    %p122 = por %p120, %p121
    %p123 = scmp.ne.s32.totalorder %s109, %s110
    %p124 = scmp.eq.s32.totalorder %s15, 4
    %p125 = por %p123, %p124
    %p127 = scmp.ne.s32.totalorder %s110, %s126
    %p128 = scmp.eq.s32.totalorder %s15, 0
    %p129 = por %p127, %p128
    %p130 = scmp.le.s32.totalorder 1, %s9
    %p131 = scmp.lt.s32.totalorder %s9, 6
    %p132 = pnand %p130, %p131
    %p133 = pneg %p132
    // Predicated region
    $region9: #{espcnet_forward.21} parent=5 // pred_check
      _
    $region10: #{espcnet_forward.21} parent=5 // pred_check_branch
      %135 = sbr.rel (%p132) target = $region12
    $region11: #{espcnet_forward.21} parent=5 // pred_region
      %s136 = ssub.s32 %s9, 1
      // Predicated region
      $region13: #{espcnet_forward.21} parent=11 // pred_check
        %p137 = pneg %p96
      $region14: #{espcnet_forward.21} parent=11 // pred_check_branch
        %139 = sbr.rel (%p137) target = $region16
      $region15: #{espcnet_forward.21} parent=11 // pred_region
        _
      $region16: #{espcnet_forward.21} parent=11 // pred_fallthru
        _
    $region12: #{espcnet_forward.21} parent=5 // pred_fallthru
      _
    %p140 = scmp.lt.s32.totalorder %s9, 5
    // Predicated region
    $region17: #{espcnet_forward.21} parent=5 // pred_check
      %p141 = pneg %p140
    $region18: #{espcnet_forward.21} parent=5 // pred_check_branch
      %143 = sbr.rel (%p141) target = $region20
    $region19: #{espcnet_forward.21} parent=5 // pred_region
      // Predicated region
      $region21: #{espcnet_forward.21} parent=19 // pred_check
        %p144 = pneg %p43
      $region22: #{espcnet_forward.21} parent=19 // pred_check_branch
        %146 = sbr.rel (%p144) target = $region24
      $region23: #{espcnet_forward.21} parent=19 // pred_region
        %s147 = smul.u32 16, %s16
        %p148 = scmp.lt.s32.totalorder %s17, 4
        %s149 = scalar_select %p148, %s17, 4
        %p150 = scmp.lt.s32.totalorder %s147, 15
        %s151 = scalar_select %p150, %s147, 15
        %s152 = smul.addr %s149, 16
        %s153 = sadd.s32 %s151, %s152
        %s154 = smul.addr %s153, 4
        %s155 = scalar_lea.vmem %s0, %s154
        %s156 = smul.u32 16, %s16
      $region24: #{espcnet_forward.21} parent=19 // pred_fallthru
        _
      // Predicated region
      $region25: #{espcnet_forward.21} parent=19 // pred_check
        %p157 = pneg %p69
      $region26: #{espcnet_forward.21} parent=19 // pred_check_branch
        %159 = sbr.rel (%p157) target = $region28
      $region27: #{espcnet_forward.21} parent=19 // pred_region
        %p160 = scmp.lt.s32.totalorder %s17, 4
        %s161 = scalar_select %p160, %s17, 4
        %s162 = smul.addr %s161, 16
        %s163 = smul.addr %s162, 4
        %s164 = scalar_lea.vmem %s1, %s163
      $region28: #{espcnet_forward.21} parent=19 // pred_fallthru
        _
    $region20: #{espcnet_forward.21} parent=5 // pred_fallthru
      _
    %p165 = scmp.le.s32.totalorder 1, %s9
    %p166 = scmp.lt.s32.totalorder %s9, 6
    %p167 = pnand %p165, %p166
    %p168 = pneg %p167
    // Predicated region
    $region29: #{espcnet_forward.21} parent=5 // pred_check
      _
    $region30: #{espcnet_forward.21} parent=5 // pred_check_branch
      %170 = sbr.rel (%p167) target = $region32
    $region31: #{espcnet_forward.21} parent=5 // pred_region
      %s171 = ssub.s32 %s9, 1
      %s172 = smul.u32 16, %s18
      %p173 = scmp.lt.s32.totalorder %s19, 4
      %s174 = scalar_select %p173, %s19, 4
      %p175 = scmp.lt.s32.totalorder %s172, 15
      %s176 = scalar_select %p175, %s172, 15
      %s177 = smul.addr %s174, 16
      %s178 = sadd.s32 %s176, %s177
      %s179 = smul.addr %s178, 4
      %s180 = scalar_lea.vmem %s0, %s179
      %p181 = pneg %p49
      %p182 = pneg %p46
      %p183 = scmp.lt.s32.totalorder %s19, 4
      %s184 = scalar_select %p183, %s19, 4
      %s185 = smul.addr %s184, 16
      %s186 = smul.addr %s185, 4
      %s187 = scalar_lea.vmem %s1, %s186
      %p188 = pneg %p75
      %p189 = pneg %p72
      %p190 = pneg %p96
      %p191 = pneg %p93
      %p192 = pneg %p122
      %p193 = pneg %p119
      %s194 = smul.u32 16, %s18
      %p195 = scmp.lt.s32.totalorder %s194, 15
      %s196 = scalar_select %p195, %s194, 15
      %s197 = smul.addr %s196, 4
      %s198 = scalar_lea.vmem %s3, %s197
      %s199 = smul.u32 16, %s18
      %p200 = scmp.lt.s32.totalorder %s19, 4
      %s201 = scalar_select %p200, %s19, 4
      %p202 = scmp.lt.s32.totalorder %s199, 15
      %s203 = scalar_select %p202, %s199, 15
      %s204 = smul.addr %s201, 16
      %s205 = sadd.s32 %s203, %s204
      %s206 = smul.addr %s205, 4
      %s207 = scalar_lea.vmem %s0, %s206
      %s208 = smul.u32 16, %s18
      %p209 = scmp.lt.s32.totalorder %s19, 4
      %s210 = scalar_select %p209, %s19, 4
      %s211 = smul.addr %s210, 16
      %s212 = smul.addr %s211, 4
      %s213 = scalar_lea.vmem %s1, %s212
      %s214 = smul.u32 16, %s18
      %p215 = scmp.lt.s32.totalorder %s214, 15
      %s216 = scalar_select %p215, %s214, 15
      %s217 = smul.addr %s216, 4
      %s218 = scalar_lea.vmem %s3, %s217
      %s219 = smul.u32 16, %s18
      %p220 = scmp.eq.s32.totalorder %s19, 0
      // Predicated region
      $region33: #{espcnet_forward.21} parent=31 // pred_check
        %p221 = pneg %p220
      $region34: #{espcnet_forward.21} parent=31 // pred_check_branch
        %223 = sbr.rel (%p221) target = $region36
      $region35: #{espcnet_forward.21} parent=31 // pred_region
        %224 = vst [vmem:[#allocation2] sm:$0xff] 0.0
        %225 = vst [vmem:[#allocation2 + $0x8] sm:$0xff] 0.0
        %226 = vst [vmem:[#allocation2 + $0x10] sm:$0xff] 0.0
        %227 = vst [vmem:[#allocation2 + $0x18] sm:$0xff] 0.0
        %228 = vst [vmem:[#allocation2 + $0x20] sm:$0xff] 0.0
        %229 = vst [vmem:[#allocation2 + $0x28] sm:$0xff] 0.0
        %230 = vst [vmem:[#allocation2 + $0x30] sm:$0xff] 0.0
        %231 = vst [vmem:[#allocation2 + $0x38] sm:$0xff] 0.0
        %232 = vst [vmem:[#allocation2 + $0x40] sm:$0xff] 0.0
        %233 = vst [vmem:[#allocation2 + $0x48] sm:$0xff] 0.0
        %234 = vst [vmem:[#allocation2 + $0x50] sm:$0xff] 0.0
        %235 = vst [vmem:[#allocation2 + $0x58] sm:$0xff] 0.0
        %236 = vst [vmem:[#allocation2 + $0x60] sm:$0xff] 0.0
        %237 = vst [vmem:[#allocation2 + $0x68] sm:$0xff] 0.0
        %238 = vst [vmem:[#allocation2 + $0x70] sm:$0xff] 0.0
        %239 = vst [vmem:[#allocation2 + $0x78] sm:$0xff] 0.0
      $region36: #{espcnet_forward.21} parent=31 // pred_fallthru
        _
      %v240 = vld [vmem:[#allocation2] sm:$0xff]
      %v241 = vld [vmem:[#allocation2 + $0x8] sm:$0xff]
      %v242 = vld [vmem:[#allocation2 + $0x10] sm:$0xff]
      %v243 = vld [vmem:[#allocation2 + $0x18] sm:$0xff]
      %v244 = vld [vmem:[#allocation2 + $0x20] sm:$0xff]
      %v245 = vld [vmem:[#allocation2 + $0x28] sm:$0xff]
      %v246 = vld [vmem:[#allocation2 + $0x30] sm:$0xff]
      %v247 = vld [vmem:[#allocation2 + $0x38] sm:$0xff]
      %v248 = vld [vmem:[#allocation2 + $0x40] sm:$0xff]
      %v249 = vld [vmem:[#allocation2 + $0x48] sm:$0xff]
      %v250 = vld [vmem:[#allocation2 + $0x50] sm:$0xff]
      %v251 = vld [vmem:[#allocation2 + $0x58] sm:$0xff]
      %v252 = vld [vmem:[#allocation2 + $0x60] sm:$0xff]
      %v253 = vld [vmem:[#allocation2 + $0x68] sm:$0xff]
      %v254 = vld [vmem:[#allocation2 + $0x70] sm:$0xff]
      %v255 = vld [vmem:[#allocation2 + $0x78] sm:$0xff]
      %v256 = vld [vmem:[%s207] sm:$0xf]
      %v257 = vld [vmem:[%s207 + $0x4] sm:$0xf]
      %v258 = vld [vmem:[%s207 + $0x8] sm:$0xf]
      %v259 = vld [vmem:[%s207 + $0xc] sm:$0xf]
      %v260 = vld [vmem:[%s207 + $0x10] sm:$0xf]
      %v261 = vld [vmem:[%s207 + $0x14] sm:$0xf]
      %v262 = vld [vmem:[%s207 + $0x18] sm:$0xf]
      %v263 = vld [vmem:[%s207 + $0x1c] sm:$0xf]
      %v264 = vld [vmem:[%s207 + $0x20] sm:$0xf]
      %v265 = vld [vmem:[%s207 + $0x24] sm:$0xf]
      %v266 = vld [vmem:[%s207 + $0x28] sm:$0xf]
      %v267 = vld [vmem:[%s207 + $0x2c] sm:$0xf]
      %v268 = vld [vmem:[%s207 + $0x30] sm:$0xf]
      %v269 = vld [vmem:[%s207 + $0x34] sm:$0xf]
      %v270 = vld [vmem:[%s207 + $0x38] sm:$0xf]
      %v271 = vld [vmem:[%s207 + $0x3c] sm:$0xf]
      %v272 = vld [vmem:[%s213] sm:$0xf]
      %v273 = vld [vmem:[%s213 + $0x4] sm:$0xf]
      %v274 = vld [vmem:[%s213 + $0x8] sm:$0xf]
      %v275 = vld [vmem:[%s213 + $0xc] sm:$0xf]
      %v276 = vld [vmem:[%s213 + $0x10] sm:$0xf]
      %v277 = vld [vmem:[%s213 + $0x14] sm:$0xf]
      %v278 = vld [vmem:[%s213 + $0x18] sm:$0xf]
      %v279 = vld [vmem:[%s213 + $0x1c] sm:$0xf]
      %v280 = vld [vmem:[%s213 + $0x20] sm:$0xf]
      %v281 = vld [vmem:[%s213 + $0x24] sm:$0xf]
      %v282 = vld [vmem:[%s213 + $0x28] sm:$0xf]
      %v283 = vld [vmem:[%s213 + $0x2c] sm:$0xf]
      %v284 = vld [vmem:[%s213 + $0x30] sm:$0xf]
      %v285 = vld [vmem:[%s213 + $0x34] sm:$0xf]
      %v286 = vld [vmem:[%s213 + $0x38] sm:$0xf]
      %v287 = vld [vmem:[%s213 + $0x3c] sm:$0xf]
      %v304 = vunpack.c.l.b16 %v256
      %v305 = vunpack.c.l.b16 %v257
      %v306 = vunpack.c.l.b16 %v258
      %v307 = vunpack.c.l.b16 %v259
      %v308 = vunpack.c.l.b16 %v260
      %v309 = vunpack.c.l.b16 %v261
      %v310 = vunpack.c.l.b16 %v262
      %v311 = vunpack.c.l.b16 %v263
      %v312 = vunpack.c.l.b16 %v264
      %v313 = vunpack.c.l.b16 %v265
      %v314 = vunpack.c.l.b16 %v266
      %v315 = vunpack.c.l.b16 %v267
      %v316 = vunpack.c.l.b16 %v268
      %v317 = vunpack.c.l.b16 %v269
      %v318 = vunpack.c.l.b16 %v270
      %v319 = vunpack.c.l.b16 %v271
      %v320 = vpack.c.b16 %v305, %v304
      %v321 = vpack.c.b16 %v307, %v306
      %v322 = vpack.c.b16 %v309, %v308
      %v323 = vpack.c.b16 %v311, %v310
      %v324 = vpack.c.b16 %v313, %v312
      %v325 = vpack.c.b16 %v315, %v314
      %v326 = vpack.c.b16 %v317, %v316
      %v327 = vpack.c.b16 %v319, %v318
      %v352 = vunpack.c.l.b16 %v272
      %v353 = vunpack.c.l.b16 %v273
      %v354 = vunpack.c.l.b16 %v274
      %v355 = vunpack.c.l.b16 %v275
      %v356 = vunpack.c.l.b16 %v276
      %v357 = vunpack.c.l.b16 %v277
      %v358 = vunpack.c.l.b16 %v278
      %v359 = vunpack.c.l.b16 %v279
      %v360 = vunpack.c.l.b16 %v280
      %v361 = vunpack.c.l.b16 %v281
      %v362 = vunpack.c.l.b16 %v282
      %v363 = vunpack.c.l.b16 %v283
      %v364 = vunpack.c.l.b16 %v284
      %v365 = vunpack.c.l.b16 %v285
      %v366 = vunpack.c.l.b16 %v286
      %v367 = vunpack.c.l.b16 %v287
      %v368 = vpack.c.b16 %v353, %v352
      %v369 = vpack.c.b16 %v355, %v354
      %v370 = vpack.c.b16 %v357, %v356
      %v371 = vpack.c.b16 %v359, %v358
      %v372 = vpack.c.b16 %v361, %v360
      %v373 = vpack.c.b16 %v363, %v362
      %v374 = vpack.c.b16 %v365, %v364
      %v375 = vpack.c.b16 %v367, %v366
      %384 = vmatpush.bf16.msra.mxu0 %v375
      %385 = vmatpush.bf16.msra.mxu0 %v374
      %386 = vmatpush.bf16.msra.mxu0 %v373
      %387 = vmatpush.bf16.msra.mxu0 %v372
      %388 = vmatpush.bf16.msra.mxu0 %v371
      %389 = vmatpush.bf16.msra.mxu0 %v370
      %390 = vmatpush.bf16.msra.mxu0 %v369
      %391 = vmatpush.bf16.msra.mxu0 %v368
      %392 = vmatmul.bf16.gmra.mxu0 %v320
      %v393 = vpop.f32.mrf.mxu0
      %v394 = vadd.f32 0.0, %v393
      %v395 = vpop.f32.mrf.mxu0
      %v396 = vadd.f32 0.0, %v395
      %397 = vmatmul.bf16.gmra.mxu0 %v321
      %v398 = vpop.f32.mrf.mxu0
      %v399 = vadd.f32 0.0, %v398
      %v400 = vpop.f32.mrf.mxu0
      %v401 = vadd.f32 0.0, %v400
      %402 = vmatmul.bf16.gmra.mxu0 %v322
      %v403 = vpop.f32.mrf.mxu0
      %v404 = vadd.f32 0.0, %v403
      %v405 = vpop.f32.mrf.mxu0
      %v406 = vadd.f32 0.0, %v405
      %407 = vmatmul.bf16.gmra.mxu0 %v323
      %v408 = vpop.f32.mrf.mxu0
      %v409 = vadd.f32 0.0, %v408
      %v410 = vpop.f32.mrf.mxu0
      %v411 = vadd.f32 0.0, %v410
      %412 = vmatmul.bf16.gmra.mxu0 %v324
      %v413 = vpop.f32.mrf.mxu0
      %v414 = vadd.f32 0.0, %v413
      %v415 = vpop.f32.mrf.mxu0
      %v416 = vadd.f32 0.0, %v415
      %417 = vmatmul.bf16.gmra.mxu0 %v325
      %v418 = vpop.f32.mrf.mxu0
      %v419 = vadd.f32 0.0, %v418
      %v420 = vpop.f32.mrf.mxu0
      %v421 = vadd.f32 0.0, %v420
      %422 = vmatmul.bf16.gmra.mxu0 %v326
      %v423 = vpop.f32.mrf.mxu0
      %v424 = vadd.f32 0.0, %v423
      %v425 = vpop.f32.mrf.mxu0
      %v426 = vadd.f32 0.0, %v425
      %427 = vmatmul.bf16.gmra.mxu0 %v327
      %v428 = vpop.f32.mrf.mxu0
      %v429 = vadd.f32 0.0, %v428
      %v430 = vpop.f32.mrf.mxu0
      %v431 = vadd.f32 0.0, %v430
      %432 = vdwg.mxu0
      %v433 = vadd.f32 %v240, %v394
      %v434 = vadd.f32 %v241, %v396
      %v435 = vadd.f32 %v242, %v399
      %v436 = vadd.f32 %v243, %v401
      %v437 = vadd.f32 %v244, %v404
      %v438 = vadd.f32 %v245, %v406
      %v439 = vadd.f32 %v246, %v409
      %v440 = vadd.f32 %v247, %v411
      %v441 = vadd.f32 %v248, %v414
      %v442 = vadd.f32 %v249, %v416
      %v443 = vadd.f32 %v250, %v419
      %v444 = vadd.f32 %v251, %v421
      %v445 = vadd.f32 %v252, %v424
      %v446 = vadd.f32 %v253, %v426
      %v447 = vadd.f32 %v254, %v429
      %v448 = vadd.f32 %v255, %v431
      %449 = vst [vmem:[#allocation2] sm:$0xff] %v433
      %450 = vst [vmem:[#allocation2 + $0x8] sm:$0xff] %v434
      %451 = vst [vmem:[#allocation2 + $0x10] sm:$0xff] %v435
      %452 = vst [vmem:[#allocation2 + $0x18] sm:$0xff] %v436
      %453 = vst [vmem:[#allocation2 + $0x20] sm:$0xff] %v437
      %454 = vst [vmem:[#allocation2 + $0x28] sm:$0xff] %v438
      %455 = vst [vmem:[#allocation2 + $0x30] sm:$0xff] %v439
      %456 = vst [vmem:[#allocation2 + $0x38] sm:$0xff] %v440
      %457 = vst [vmem:[#allocation2 + $0x40] sm:$0xff] %v441
      %458 = vst [vmem:[#allocation2 + $0x48] sm:$0xff] %v442
      %459 = vst [vmem:[#allocation2 + $0x50] sm:$0xff] %v443
      %460 = vst [vmem:[#allocation2 + $0x58] sm:$0xff] %v444
      %461 = vst [vmem:[#allocation2 + $0x60] sm:$0xff] %v445
      %462 = vst [vmem:[#allocation2 + $0x68] sm:$0xff] %v446
      %463 = vst [vmem:[#allocation2 + $0x70] sm:$0xff] %v447
      %464 = vst [vmem:[#allocation2 + $0x78] sm:$0xff] %v448
      %p465 = scmp.eq.s32.totalorder %s19, 4
      // Predicated region
      $region37: #{espcnet_forward.21} parent=31 // pred_check
        %p466 = pneg %p465
      $region38: #{espcnet_forward.21} parent=31 // pred_check_branch
        %468 = sbr.rel (%p466) target = $region40
      $region39: #{espcnet_forward.21} parent=31 // pred_region
        %v469 = vld [vmem:[#allocation2] sm:$0xff]
        %v470 = vld [vmem:[#allocation2 + $0x8] sm:$0xff]
        %v471 = vld [vmem:[#allocation2 + $0x10] sm:$0xff]
        %v472 = vld [vmem:[#allocation2 + $0x18] sm:$0xff]
        %v473 = vld [vmem:[#allocation2 + $0x20] sm:$0xff]
        %v474 = vld [vmem:[#allocation2 + $0x28] sm:$0xff]
        %v475 = vld [vmem:[#allocation2 + $0x30] sm:$0xff]
        %v476 = vld [vmem:[#allocation2 + $0x38] sm:$0xff]
        %v477 = vld [vmem:[#allocation2 + $0x40] sm:$0xff]
        %v478 = vld [vmem:[#allocation2 + $0x48] sm:$0xff]
        %v479 = vld [vmem:[#allocation2 + $0x50] sm:$0xff]
        %v480 = vld [vmem:[#allocation2 + $0x58] sm:$0xff]
        %v481 = vld [vmem:[#allocation2 + $0x60] sm:$0xff]
        %v482 = vld [vmem:[#allocation2 + $0x68] sm:$0xff]
        %v483 = vld [vmem:[#allocation2 + $0x70] sm:$0xff]
        %v484 = vld [vmem:[#allocation2 + $0x78] sm:$0xff]
        %v485 = vld [vmem:[%s2 + $0x1] sm:$0x1]
        %v486 = vperm.slane %v485, 0
        %v487 = vadd.f32 %v469, %v486
        %v488 = vadd.f32 %v470, %v486
        %v489 = vadd.f32 %v471, %v486
        %v490 = vadd.f32 %v472, %v486
        %v491 = vadd.f32 %v473, %v486
        %v492 = vadd.f32 %v474, %v486
        %v493 = vadd.f32 %v475, %v486
        %v494 = vadd.f32 %v476, %v486
        %v495 = vadd.f32 %v477, %v486
        %v496 = vadd.f32 %v478, %v486
        %v497 = vadd.f32 %v479, %v486
        %v498 = vadd.f32 %v480, %v486
        %v499 = vadd.f32 %v481, %v486
        %v500 = vadd.f32 %v482, %v486
        %v501 = vadd.f32 %v483, %v486
        %v502 = vadd.f32 %v484, %v486
        %vm503 = vcmp.gt.f32.partialorder %v487, 0.0
        %vm504 = vcmp.gt.f32.partialorder %v488, 0.0
        %vm505 = vcmp.gt.f32.partialorder %v489, 0.0
        %vm506 = vcmp.gt.f32.partialorder %v490, 0.0
        %vm507 = vcmp.gt.f32.partialorder %v491, 0.0
        %vm508 = vcmp.gt.f32.partialorder %v492, 0.0
        %vm509 = vcmp.gt.f32.partialorder %v493, 0.0
        %vm510 = vcmp.gt.f32.partialorder %v494, 0.0
        %vm511 = vcmp.gt.f32.partialorder %v495, 0.0
        %vm512 = vcmp.gt.f32.partialorder %v496, 0.0
        %vm513 = vcmp.gt.f32.partialorder %v497, 0.0
        %vm514 = vcmp.gt.f32.partialorder %v498, 0.0
        %vm515 = vcmp.gt.f32.partialorder %v499, 0.0
        %vm516 = vcmp.gt.f32.partialorder %v500, 0.0
        %vm517 = vcmp.gt.f32.partialorder %v501, 0.0
        %vm518 = vcmp.gt.f32.partialorder %v502, 0.0
        %v519 = vld [vmem:[%s2 + $0x2] sm:$0x1]
        %v520 = vperm.slane %v519, 0
        %v521 = vmul.f32 %v520, %v487
        %v522 = vmul.f32 %v520, %v488
        %v523 = vmul.f32 %v520, %v489
        %v524 = vmul.f32 %v520, %v490
        %v525 = vmul.f32 %v520, %v491
        %v526 = vmul.f32 %v520, %v492
        %v527 = vmul.f32 %v520, %v493
        %v528 = vmul.f32 %v520, %v494
        %v529 = vmul.f32 %v520, %v495
        %v530 = vmul.f32 %v520, %v496
        %v531 = vmul.f32 %v520, %v497
        %v532 = vmul.f32 %v520, %v498
        %v533 = vmul.f32 %v520, %v499
        %v534 = vmul.f32 %v520, %v500
        %v535 = vmul.f32 %v520, %v501
        %v536 = vmul.f32 %v520, %v502
        %v537 = vsel %vm503, %v487, %v521
        %v538 = vsel %vm504, %v488, %v522
        %v539 = vsel %vm505, %v489, %v523
        %v540 = vsel %vm506, %v490, %v524
        %v541 = vsel %vm507, %v491, %v525
        %v542 = vsel %vm508, %v492, %v526
        %v543 = vsel %vm509, %v493, %v527
        %v544 = vsel %vm510, %v494, %v528
        %v545 = vsel %vm511, %v495, %v529
        %v546 = vsel %vm512, %v496, %v530
        %v547 = vsel %vm513, %v497, %v531
        %v548 = vsel %vm514, %v498, %v532
        %v549 = vsel %vm515, %v499, %v533
        %v550 = vsel %vm516, %v500, %v534
        %v551 = vsel %vm517, %v501, %v535
        %v552 = vsel %vm518, %v502, %v536
        %v553 = vpack.c.bf16 %v537, %v537
        %v554 = vpack.c.bf16 %v538, %v538
        %v555 = vpack.c.bf16 %v539, %v539
        %v556 = vpack.c.bf16 %v540, %v540
        %v557 = vpack.c.bf16 %v541, %v541
        %v558 = vpack.c.bf16 %v542, %v542
        %v559 = vpack.c.bf16 %v543, %v543
        %v560 = vpack.c.bf16 %v544, %v544
        %v561 = vpack.c.bf16 %v545, %v545
        %v562 = vpack.c.bf16 %v546, %v546
        %v563 = vpack.c.bf16 %v547, %v547
        %v564 = vpack.c.bf16 %v548, %v548
        %v565 = vpack.c.bf16 %v549, %v549
        %v566 = vpack.c.bf16 %v550, %v550
        %v567 = vpack.c.bf16 %v551, %v551
        %v568 = vpack.c.bf16 %v552, %v552
        %569 = vst [vmem:[%s218] sm:$0xf] %v553
        %570 = vst [vmem:[%s218 + $0x4] sm:$0xf] %v554
        %571 = vst [vmem:[%s218 + $0x8] sm:$0xf] %v555
        %572 = vst [vmem:[%s218 + $0xc] sm:$0xf] %v556
        %573 = vst [vmem:[%s218 + $0x10] sm:$0xf] %v557
        %574 = vst [vmem:[%s218 + $0x14] sm:$0xf] %v558
        %575 = vst [vmem:[%s218 + $0x18] sm:$0xf] %v559
        %576 = vst [vmem:[%s218 + $0x1c] sm:$0xf] %v560
        %577 = vst [vmem:[%s218 + $0x20] sm:$0xf] %v561
        %578 = vst [vmem:[%s218 + $0x24] sm:$0xf] %v562
        %579 = vst [vmem:[%s218 + $0x28] sm:$0xf] %v563
        %580 = vst [vmem:[%s218 + $0x2c] sm:$0xf] %v564
        %581 = vst [vmem:[%s218 + $0x30] sm:$0xf] %v565
        %582 = vst [vmem:[%s218 + $0x34] sm:$0xf] %v566
        %583 = vst [vmem:[%s218 + $0x38] sm:$0xf] %v567
        %584 = vst [vmem:[%s218 + $0x3c] sm:$0xf] %v568
      $region40: #{espcnet_forward.21} parent=31 // pred_fallthru
        _
      %s585 = smul.u32 16, %s18
      %p586 = scmp.lt.s32.totalorder %s585, 15
      %s587 = scalar_select %p586, %s585, 15
      %s588 = smul.addr %s587, 4
      %s589 = scalar_lea.vmem %s3, %s588
      // Predicated region
      $region41: #{espcnet_forward.21} parent=31 // pred_check
        %p590 = pneg %p119
      $region42: #{espcnet_forward.21} parent=31 // pred_check_branch
        %592 = sbr.rel (%p590) target = $region44
      $region43: #{espcnet_forward.21} parent=31 // pred_region
        %s593 = smul.u32 16, %s18
      $region44: #{espcnet_forward.21} parent=31 // pred_fallthru
        _
      // Predicated region
      $region45: #{espcnet_forward.21} parent=31 // pred_check
        %p594 = pneg %p119
      $region46: #{espcnet_forward.21} parent=31 // pred_check_branch
        %596 = sbr.rel (%p594) target = $region48
      $region47: #{espcnet_forward.21} parent=31 // pred_region
        %s597 = smul.u32 16, %s18
        %p598 = scmp.lt.s32.totalorder %s597, 15
        %s599 = scalar_select %p598, %s597, 15
        %s600 = smul.addr %s599, 4
        %s601 = scalar_lea.vmem %s3, %s600
      $region48: #{espcnet_forward.21} parent=31 // pred_fallthru
        _
    $region32: #{espcnet_forward.21} parent=5 // pred_fallthru
      _
    %p602 = scmp.le.s32.totalorder 2, %s9
    // Predicated region
    $region49: #{espcnet_forward.21} parent=5 // pred_check
      %p603 = pneg %p602
    $region50: #{espcnet_forward.21} parent=5 // pred_check_branch
      %605 = sbr.rel (%p603) target = $region52
    $region51: #{espcnet_forward.21} parent=5 // pred_region
      %s606 = ssub.s32 %s9, 2
    $region52: #{espcnet_forward.21} parent=5 // pred_fallthru
      _
  $region6: #{espcnet_forward.21} parent=0 // loop_footer
    %s13 = sadd.s32 1, %s9
  $region7: #{espcnet_forward.21} parent=0 // loop_footer_branch
    %8 = sbr.rel target = $region3
  $region8: #{espcnet_forward.21} parent=0 // loop_exit
    _

// kernel: espcnet_forward.23
$region0: #{espcnet_forward.23}
  #allocation0 [shape = 'u32[]', space=smem, size = 0x4, offset = 0x4, fixed_abs, tag = 'smem constant byte address 0x4 - core index']
  #allocation1 [shape = 'u32[72,128]{1,0:T(1,128)}', space=vmem, size = 0x9000, scoped, tag = 'internal scratch']
  #allocation2 [shape = 'f32[128,128]{1,0:T(8,128)}', space=vmem, size = 0x10000, scoped, tag = 'scratch operand']
  %s0 = inlined_call_operand.vmem [shape: bf16[5,128,128], index: 0, kind: input, shape index: {}]
  %s1 = inlined_call_operand.vmem [shape: bf16[5,128,128], index: 1, kind: input, shape index: {}]
  %s2 = inlined_call_operand.vmem [shape: f32[3,128], index: 2, kind: input, shape index: {}]
  %s3 = inlined_call_operand.vmem [shape: bf16[128,128], index: 3, kind: input, shape index: {}]
  %s4 = inlined_call_operand.vmem [shape: bf16[128,128], index: 4, kind: output, shape index: {}]
  %s5 = sld [smem:[#allocation0]]
  $region57: #{espcnet_forward.23} parent=0
    _
  %s7 = ssub.s32 1, %s5
  %s8 = scalar_select 0, %s7, %s5
  loop: start=0, step=1, limit=7
  $region2: #{espcnet_forward.23} parent=0 // loop_pre_header
    _
  $region3: #{espcnet_forward.23} parent=0 // loop_header
    %s10 = sphi 0, %s14
    %p11 = scmp.ge.s32.totalorder %s10, 7
    %s17 = sphi 0, %s29
    %s18 = sphi 0, %s25
    %s19 = sphi 0, %s17
    %s20 = sphi 0, %s18
    %s21 = sphi 0, %s19
    %s22 = sphi 0, %s20
    %s34 = sphi 0, %s36
    %s37 = sphi 0, %s34
    %s38 = sphi 0, %s37
    %s54 = sphi 0, %s38
    %s60 = sphi 0, %s62
    %s63 = sphi 0, %s60
    %s64 = sphi 0, %s63
    %s80 = sphi 0, %s64
    %s84 = sphi 0, %s84
    %s86 = sphi 0, %s84
    %s87 = sphi 0, %s86
    %s101 = sphi 0, %s87
    %s107 = sphi 0, %s109
    %s110 = sphi 0, %s107
    %s111 = sphi 0, %s110
    %s127 = sphi 0, %s111
    %s133 = sphi 0, %s135
    %s136 = sphi 0, %s133
    %s137 = sphi 0, %s136
    %s153 = sphi 0, %s137
  $region4: #{espcnet_forward.23} parent=0 // loop_header_branch
    %13 = sbr.rel (%p11) target = $region8
  $region5: #{espcnet_forward.23} parent=0 // loop_body
    %s15 = ssub.s32 %s10, 1
    %s16 = ssub.s32 %s10, 2
    %s23 = sadd.s32 1, %s18
    %p24 = scmp.ge.s32.totalorder %s23, 5
    %s25 = scalar_select %p24, 0, %s23
    %s26 = sadd.s32 1, %s17
    %s27 = scalar_select %p24, %s26, %s17
    %p28 = scmp.ge.s32.totalorder %s27, 1
    %s29 = scalar_select %p28, 0, %s27
    %s30 = ssub.s32 %s18, %s25
    %s31 = ssub.s32 %s17, %s29
    %s32 = sor.u32 %s30, %s31
    %p33 = scmp.eq.s32.totalorder %s32, 0
    %s35 = sadd.s32 %s34, 1
    %s36 = scalar_select %p33, %s34, %s35
    %p39 = pneg %p33
    %p40 = scmp.eq.s32.totalorder %s10, 4
    %p41 = por %p39, %p40
    %p42 = scmp.ne.s32.totalorder %s34, %s37
    %p43 = scmp.eq.s32.totalorder %s10, 0
    %p44 = por %p42, %p43
    %p45 = scmp.ne.s32.totalorder %s34, %s37
    %p46 = scmp.eq.s32.totalorder %s15, 4
    %p47 = por %p45, %p46
    %p48 = scmp.ne.s32.totalorder %s37, %s38
    %p49 = scmp.eq.s32.totalorder %s15, 0
    %p50 = por %p48, %p49
    %p51 = scmp.ne.s32.totalorder %s37, %s38
    %p52 = scmp.eq.s32.totalorder %s16, 4
    %p53 = por %p51, %p52
    %p55 = scmp.ne.s32.totalorder %s38, %s54
    %p56 = scmp.eq.s32.totalorder %s16, 0
    %p57 = por %p55, %p56
    %s58 = ssub.s32 %s18, %s25
    %p59 = scmp.eq.s32.totalorder %s58, 0
    %s61 = sadd.s32 %s60, 1
    %s62 = scalar_select %p59, %s60, %s61
    %p65 = pneg %p59
    %p66 = scmp.eq.s32.totalorder %s10, 4
    %p67 = por %p65, %p66
    %p68 = scmp.ne.s32.totalorder %s60, %s63
    %p69 = scmp.eq.s32.totalorder %s10, 0
    %p70 = por %p68, %p69
    %p71 = scmp.ne.s32.totalorder %s60, %s63
    %p72 = scmp.eq.s32.totalorder %s15, 4
    %p73 = por %p71, %p72
    %p74 = scmp.ne.s32.totalorder %s63, %s64
    %p75 = scmp.eq.s32.totalorder %s15, 0
    %p76 = por %p74, %p75
    %p77 = scmp.ne.s32.totalorder %s63, %s64
    %p78 = scmp.eq.s32.totalorder %s16, 4
    %p79 = por %p77, %p78
    %p81 = scmp.ne.s32.totalorder %s64, %s80
    %p82 = scmp.eq.s32.totalorder %s16, 0
    %p83 = por %p81, %p82
    %s85 = sadd.s32 %s84, 1
    %p88 = scmp.eq.s32.totalorder %s10, 4
    %p89 = scmp.ne.s32.totalorder %s84, %s86
    %p90 = scmp.eq.s32.totalorder %s10, 0
    %p91 = por %p89, %p90
    %p92 = scmp.ne.s32.totalorder %s84, %s86
    %p93 = scmp.eq.s32.totalorder %s15, 4
    %p94 = por %p92, %p93
    %p95 = scmp.ne.s32.totalorder %s86, %s87
    %p96 = scmp.eq.s32.totalorder %s15, 0
    %p97 = por %p95, %p96
    %p98 = scmp.ne.s32.totalorder %s86, %s87
    %p99 = scmp.eq.s32.totalorder %s16, 4
    %p100 = por %p98, %p99
    %p102 = scmp.ne.s32.totalorder %s87, %s101
    %p103 = scmp.eq.s32.totalorder %s16, 0
    %p104 = por %p102, %p103
    %s105 = ssub.s32 %s17, %s29
    %p106 = scmp.eq.s32.totalorder %s105, 0
    %s108 = sadd.s32 %s107, 1
    %s109 = scalar_select %p106, %s107, %s108
    %p112 = pneg %p106
    %p113 = scmp.eq.s32.totalorder %s10, 4
    %p114 = por %p112, %p113
    %p115 = scmp.ne.s32.totalorder %s107, %s110
    %p116 = scmp.eq.s32.totalorder %s10, 0
    %p117 = por %p115, %p116
    %p118 = scmp.ne.s32.totalorder %s107, %s110
    %p119 = scmp.eq.s32.totalorder %s15, 4
    %p120 = por %p118, %p119
    %p121 = scmp.ne.s32.totalorder %s110, %s111
    %p122 = scmp.eq.s32.totalorder %s15, 0
    %p123 = por %p121, %p122
    %p124 = scmp.ne.s32.totalorder %s110, %s111
    %p125 = scmp.eq.s32.totalorder %s16, 4
    %p126 = por %p124, %p125
    %p128 = scmp.ne.s32.totalorder %s111, %s127
    %p129 = scmp.eq.s32.totalorder %s16, 0
    %p130 = por %p128, %p129
    %s131 = ssub.s32 %s17, %s29
    %p132 = scmp.eq.s32.totalorder %s131, 0
    %s134 = sadd.s32 %s133, 1
    %s135 = scalar_select %p132, %s133, %s134
    %p138 = pneg %p132
    %p139 = scmp.eq.s32.totalorder %s10, 4
    %p140 = por %p138, %p139
    %p141 = scmp.ne.s32.totalorder %s133, %s136
    %p142 = scmp.eq.s32.totalorder %s10, 0
    %p143 = por %p141, %p142
    %p144 = scmp.ne.s32.totalorder %s133, %s136
    %p145 = scmp.eq.s32.totalorder %s15, 4
    %p146 = por %p144, %p145
    %p147 = scmp.ne.s32.totalorder %s136, %s137
    %p148 = scmp.eq.s32.totalorder %s15, 0
    %p149 = por %p147, %p148
    %p150 = scmp.ne.s32.totalorder %s136, %s137
    %p151 = scmp.eq.s32.totalorder %s16, 4
    %p152 = por %p150, %p151
    %p154 = scmp.ne.s32.totalorder %s137, %s153
    %p155 = scmp.eq.s32.totalorder %s16, 0
    %p156 = por %p154, %p155
    %p157 = scmp.le.s32.totalorder 1, %s10
    %p158 = scmp.lt.s32.totalorder %s10, 6
    %p159 = pnand %p157, %p158
    %p160 = pneg %p159
    // Predicated region
    $region9: #{espcnet_forward.23} parent=5 // pred_check
      _
    $region10: #{espcnet_forward.23} parent=5 // pred_check_branch
      %162 = sbr.rel (%p159) target = $region12
    $region11: #{espcnet_forward.23} parent=5 // pred_region
      %s163 = ssub.s32 %s10, 1
      // Predicated region
      $region13: #{espcnet_forward.23} parent=11 // pred_check
        %p164 = pneg %p97
      $region14: #{espcnet_forward.23} parent=11 // pred_check_branch
        %166 = sbr.rel (%p164) target = $region16
      $region15: #{espcnet_forward.23} parent=11 // pred_region
        _
      $region16: #{espcnet_forward.23} parent=11 // pred_fallthru
        _
      // Predicated region
      $region17: #{espcnet_forward.23} parent=11 // pred_check
        %p167 = pneg %p123
      $region18: #{espcnet_forward.23} parent=11 // pred_check_branch
        %169 = sbr.rel (%p167) target = $region20
      $region19: #{espcnet_forward.23} parent=11 // pred_region
        %s170 = smul.u32 16, %s19
        %p171 = scmp.lt.s32.totalorder %s170, 15
        %s172 = scalar_select %p171, %s170, 15
        %s173 = smul.addr %s172, 4
        %s174 = scalar_lea.vmem %s3, %s173
        %s175 = smul.u32 16, %s19
      $region20: #{espcnet_forward.23} parent=11 // pred_fallthru
        _
    $region12: #{espcnet_forward.23} parent=5 // pred_fallthru
      _
    %p176 = scmp.lt.s32.totalorder %s10, 5
    // Predicated region
    $region21: #{espcnet_forward.23} parent=5 // pred_check
      %p177 = pneg %p176
    $region22: #{espcnet_forward.23} parent=5 // pred_check_branch
      %179 = sbr.rel (%p177) target = $region24
    $region23: #{espcnet_forward.23} parent=5 // pred_region
      // Predicated region
      $region25: #{espcnet_forward.23} parent=23 // pred_check
        %p180 = pneg %p44
      $region26: #{espcnet_forward.23} parent=23 // pred_check_branch
        %182 = sbr.rel (%p180) target = $region28
      $region27: #{espcnet_forward.23} parent=23 // pred_region
        %s183 = smul.u32 16, %s17
        %p184 = scmp.lt.s32.totalorder %s18, 4
        %s185 = scalar_select %p184, %s18, 4
        %p186 = scmp.lt.s32.totalorder %s183, 15
        %s187 = scalar_select %p186, %s183, 15
        %s188 = smul.addr %s185, 16
        %s189 = sadd.s32 %s187, %s188
        %s190 = smul.addr %s189, 4
        %s191 = scalar_lea.vmem %s0, %s190
        %s192 = smul.u32 16, %s17
      $region28: #{espcnet_forward.23} parent=23 // pred_fallthru
        _
      // Predicated region
      $region29: #{espcnet_forward.23} parent=23 // pred_check
        %p193 = pneg %p70
      $region30: #{espcnet_forward.23} parent=23 // pred_check_branch
        %195 = sbr.rel (%p193) target = $region32
      $region31: #{espcnet_forward.23} parent=23 // pred_region
        %p196 = scmp.lt.s32.totalorder %s18, 4
        %s197 = scalar_select %p196, %s18, 4
        %s198 = smul.addr %s197, 16
        %s199 = smul.addr %s198, 4
        %s200 = scalar_lea.vmem %s1, %s199
      $region32: #{espcnet_forward.23} parent=23 // pred_fallthru
        _
    $region24: #{espcnet_forward.23} parent=5 // pred_fallthru
      _
    %p201 = scmp.le.s32.totalorder 1, %s10
    %p202 = scmp.lt.s32.totalorder %s10, 6
    %p203 = pnand %p201, %p202
    %p204 = pneg %p203
    // Predicated region
    $region33: #{espcnet_forward.23} parent=5 // pred_check
      _
    $region34: #{espcnet_forward.23} parent=5 // pred_check_branch
      %206 = sbr.rel (%p203) target = $region36
    $region35: #{espcnet_forward.23} parent=5 // pred_region
      %s207 = ssub.s32 %s10, 1
      %s208 = smul.u32 16, %s19
      %p209 = scmp.lt.s32.totalorder %s20, 4
      %s210 = scalar_select %p209, %s20, 4
      %p211 = scmp.lt.s32.totalorder %s208, 15
      %s212 = scalar_select %p211, %s208, 15
      %s213 = smul.addr %s210, 16
      %s214 = sadd.s32 %s212, %s213
      %s215 = smul.addr %s214, 4
      %s216 = scalar_lea.vmem %s0, %s215
      %p217 = pneg %p50
      %p218 = pneg %p47
      %p219 = scmp.lt.s32.totalorder %s20, 4
      %s220 = scalar_select %p219, %s20, 4
      %s221 = smul.addr %s220, 16
      %s222 = smul.addr %s221, 4
      %s223 = scalar_lea.vmem %s1, %s222
      %p224 = pneg %p76
      %p225 = pneg %p73
      %p226 = pneg %p97
      %p227 = pneg %p94
      %s228 = smul.u32 16, %s19
      %p229 = scmp.lt.s32.totalorder %s228, 15
      %s230 = scalar_select %p229, %s228, 15
      %s231 = smul.addr %s230, 4
      %s232 = scalar_lea.vmem %s3, %s231
      %p233 = pneg %p123
      %p234 = pneg %p120
      %p235 = pneg %p149
      %p236 = pneg %p146
      %s237 = smul.u32 16, %s19
      %p238 = scmp.lt.s32.totalorder %s237, 15
      %s239 = scalar_select %p238, %s237, 15
      %s240 = smul.addr %s239, 4
      %s241 = scalar_lea.vmem %s4, %s240
      %s242 = smul.u32 16, %s19
      %p243 = scmp.lt.s32.totalorder %s20, 4
      %s244 = scalar_select %p243, %s20, 4
      %p245 = scmp.lt.s32.totalorder %s242, 15
      %s246 = scalar_select %p245, %s242, 15
      %s247 = smul.addr %s244, 16
      %s248 = sadd.s32 %s246, %s247
      %s249 = smul.addr %s248, 4
      %s250 = scalar_lea.vmem %s0, %s249
      %s251 = smul.u32 16, %s19
      %p252 = scmp.lt.s32.totalorder %s20, 4
      %s253 = scalar_select %p252, %s20, 4
      %s254 = smul.addr %s253, 16
      %s255 = smul.addr %s254, 4
      %s256 = scalar_lea.vmem %s1, %s255
      %s257 = smul.u32 16, %s19
      %p258 = scmp.lt.s32.totalorder %s257, 15
      %s259 = scalar_select %p258, %s257, 15
      %s260 = smul.addr %s259, 4
      %s261 = scalar_lea.vmem %s3, %s260
      %s262 = smul.u32 16, %s19
      %s263 = smul.u32 16, %s19
      %p264 = scmp.lt.s32.totalorder %s263, 15
      %s265 = scalar_select %p264, %s263, 15
      %s266 = smul.addr %s265, 4
      %s267 = scalar_lea.vmem %s4, %s266
      %s268 = smul.u32 16, %s19
      %p269 = scmp.eq.s32.totalorder %s20, 0
      // Predicated region
      $region37: #{espcnet_forward.23} parent=35 // pred_check
        %p270 = pneg %p269
      $region38: #{espcnet_forward.23} parent=35 // pred_check_branch
        %272 = sbr.rel (%p270) target = $region40
      $region39: #{espcnet_forward.23} parent=35 // pred_region
        %v273 = vld [vmem:[%s261] sm:$0xf]
        %v274 = vld [vmem:[%s261 + $0x4] sm:$0xf]
        %v275 = vld [vmem:[%s261 + $0x8] sm:$0xf]
        %v276 = vld [vmem:[%s261 + $0xc] sm:$0xf]
        %v277 = vld [vmem:[%s261 + $0x10] sm:$0xf]
        %v278 = vld [vmem:[%s261 + $0x14] sm:$0xf]
        %v279 = vld [vmem:[%s261 + $0x18] sm:$0xf]
        %v280 = vld [vmem:[%s261 + $0x1c] sm:$0xf]
        %v281 = vld [vmem:[%s261 + $0x20] sm:$0xf]
        %v282 = vld [vmem:[%s261 + $0x24] sm:$0xf]
        %v283 = vld [vmem:[%s261 + $0x28] sm:$0xf]
        %v284 = vld [vmem:[%s261 + $0x2c] sm:$0xf]
        %v285 = vld [vmem:[%s261 + $0x30] sm:$0xf]
        %v286 = vld [vmem:[%s261 + $0x34] sm:$0xf]
        %v287 = vld [vmem:[%s261 + $0x38] sm:$0xf]
        %v288 = vld [vmem:[%s261 + $0x3c] sm:$0xf]
        %v289 = vunpack.c.l.bf16 %v273
        %v290 = vunpack.c.l.bf16 %v274
        %v291 = vunpack.c.l.bf16 %v275
        %v292 = vunpack.c.l.bf16 %v276
        %v293 = vunpack.c.l.bf16 %v277
        %v294 = vunpack.c.l.bf16 %v278
        %v295 = vunpack.c.l.bf16 %v279
        %v296 = vunpack.c.l.bf16 %v280
        %v297 = vunpack.c.l.bf16 %v281
        %v298 = vunpack.c.l.bf16 %v282
        %v299 = vunpack.c.l.bf16 %v283
        %v300 = vunpack.c.l.bf16 %v284
        %v301 = vunpack.c.l.bf16 %v285
        %v302 = vunpack.c.l.bf16 %v286
        %v303 = vunpack.c.l.bf16 %v287
        %v304 = vunpack.c.l.bf16 %v288
        %v305 = vld [vmem:[%s2] sm:$0x1]
        %v306 = vperm.slane %v305, 0
        %v307 = vmul.f32 %v289, %v306
        %v308 = vmul.f32 %v290, %v306
        %v309 = vmul.f32 %v291, %v306
        %v310 = vmul.f32 %v292, %v306
        %v311 = vmul.f32 %v293, %v306
        %v312 = vmul.f32 %v294, %v306
        %v313 = vmul.f32 %v295, %v306
        %v314 = vmul.f32 %v296, %v306
        %v315 = vmul.f32 %v297, %v306
        %v316 = vmul.f32 %v298, %v306
        %v317 = vmul.f32 %v299, %v306
        %v318 = vmul.f32 %v300, %v306
        %v319 = vmul.f32 %v301, %v306
        %v320 = vmul.f32 %v302, %v306
        %v321 = vmul.f32 %v303, %v306
        %v322 = vmul.f32 %v304, %v306
        %323 = vst [vmem:[#allocation2] sm:$0xff] %v307
        %324 = vst [vmem:[#allocation2 + $0x8] sm:$0xff] %v308
        %325 = vst [vmem:[#allocation2 + $0x10] sm:$0xff] %v309
        %326 = vst [vmem:[#allocation2 + $0x18] sm:$0xff] %v310
        %327 = vst [vmem:[#allocation2 + $0x20] sm:$0xff] %v311
        %328 = vst [vmem:[#allocation2 + $0x28] sm:$0xff] %v312
        %329 = vst [vmem:[#allocation2 + $0x30] sm:$0xff] %v313
        %330 = vst [vmem:[#allocation2 + $0x38] sm:$0xff] %v314
        %331 = vst [vmem:[#allocation2 + $0x40] sm:$0xff] %v315
        %332 = vst [vmem:[#allocation2 + $0x48] sm:$0xff] %v316
        %333 = vst [vmem:[#allocation2 + $0x50] sm:$0xff] %v317
        %334 = vst [vmem:[#allocation2 + $0x58] sm:$0xff] %v318
        %335 = vst [vmem:[#allocation2 + $0x60] sm:$0xff] %v319
        %336 = vst [vmem:[#allocation2 + $0x68] sm:$0xff] %v320
        %337 = vst [vmem:[#allocation2 + $0x70] sm:$0xff] %v321
        %338 = vst [vmem:[#allocation2 + $0x78] sm:$0xff] %v322
      $region40: #{espcnet_forward.23} parent=35 // pred_fallthru
        _
      %v339 = vld [vmem:[#allocation2] sm:$0xff]
      %v340 = vld [vmem:[#allocation2 + $0x8] sm:$0xff]
      %v341 = vld [vmem:[#allocation2 + $0x10] sm:$0xff]
      %v342 = vld [vmem:[#allocation2 + $0x18] sm:$0xff]
      %v343 = vld [vmem:[#allocation2 + $0x20] sm:$0xff]
      %v344 = vld [vmem:[#allocation2 + $0x28] sm:$0xff]
      %v345 = vld [vmem:[#allocation2 + $0x30] sm:$0xff]
      %v346 = vld [vmem:[#allocation2 + $0x38] sm:$0xff]
      %v347 = vld [vmem:[#allocation2 + $0x40] sm:$0xff]
      %v348 = vld [vmem:[#allocation2 + $0x48] sm:$0xff]
      %v349 = vld [vmem:[#allocation2 + $0x50] sm:$0xff]
      %v350 = vld [vmem:[#allocation2 + $0x58] sm:$0xff]
      %v351 = vld [vmem:[#allocation2 + $0x60] sm:$0xff]
      %v352 = vld [vmem:[#allocation2 + $0x68] sm:$0xff]
      %v353 = vld [vmem:[#allocation2 + $0x70] sm:$0xff]
      %v354 = vld [vmem:[#allocation2 + $0x78] sm:$0xff]
      %v355 = vld [vmem:[%s250] sm:$0xf]
      %v356 = vld [vmem:[%s250 + $0x4] sm:$0xf]
      %v357 = vld [vmem:[%s250 + $0x8] sm:$0xf]
      %v358 = vld [vmem:[%s250 + $0xc] sm:$0xf]
      %v359 = vld [vmem:[%s250 + $0x10] sm:$0xf]
      %v360 = vld [vmem:[%s250 + $0x14] sm:$0xf]
      %v361 = vld [vmem:[%s250 + $0x18] sm:$0xf]
      %v362 = vld [vmem:[%s250 + $0x1c] sm:$0xf]
      %v363 = vld [vmem:[%s250 + $0x20] sm:$0xf]
      %v364 = vld [vmem:[%s250 + $0x24] sm:$0xf]
      %v365 = vld [vmem:[%s250 + $0x28] sm:$0xf]
      %v366 = vld [vmem:[%s250 + $0x2c] sm:$0xf]
      %v367 = vld [vmem:[%s250 + $0x30] sm:$0xf]
      %v368 = vld [vmem:[%s250 + $0x34] sm:$0xf]
      %v369 = vld [vmem:[%s250 + $0x38] sm:$0xf]
      %v370 = vld [vmem:[%s250 + $0x3c] sm:$0xf]
      %v371 = vld [vmem:[%s256] sm:$0xf]
      %v372 = vld [vmem:[%s256 + $0x4] sm:$0xf]
      %v373 = vld [vmem:[%s256 + $0x8] sm:$0xf]
      %v374 = vld [vmem:[%s256 + $0xc] sm:$0xf]
      %v375 = vld [vmem:[%s256 + $0x10] sm:$0xf]
      %v376 = vld [vmem:[%s256 + $0x14] sm:$0xf]
      %v377 = vld [vmem:[%s256 + $0x18] sm:$0xf]
      %v378 = vld [vmem:[%s256 + $0x1c] sm:$0xf]
      %v379 = vld [vmem:[%s256 + $0x20] sm:$0xf]
      %v380 = vld [vmem:[%s256 + $0x24] sm:$0xf]
      %v381 = vld [vmem:[%s256 + $0x28] sm:$0xf]
      %v382 = vld [vmem:[%s256 + $0x2c] sm:$0xf]
      %v383 = vld [vmem:[%s256 + $0x30] sm:$0xf]
      %v384 = vld [vmem:[%s256 + $0x34] sm:$0xf]
      %v385 = vld [vmem:[%s256 + $0x38] sm:$0xf]
      %v386 = vld [vmem:[%s256 + $0x3c] sm:$0xf]
      %v403 = vunpack.c.l.b16 %v355
      %v404 = vunpack.c.l.b16 %v356
      %v405 = vunpack.c.l.b16 %v357
      %v406 = vunpack.c.l.b16 %v358
      %v407 = vunpack.c.l.b16 %v359
      %v408 = vunpack.c.l.b16 %v360
      %v409 = vunpack.c.l.b16 %v361
      %v410 = vunpack.c.l.b16 %v362
      %v411 = vunpack.c.l.b16 %v363
      %v412 = vunpack.c.l.b16 %v364
      %v413 = vunpack.c.l.b16 %v365
      %v414 = vunpack.c.l.b16 %v366
      %v415 = vunpack.c.l.b16 %v367
      %v416 = vunpack.c.l.b16 %v368
      %v417 = vunpack.c.l.b16 %v369
      %v418 = vunpack.c.l.b16 %v370
      %v419 = vpack.c.b16 %v404, %v403
      %v420 = vpack.c.b16 %v406, %v405
      %v421 = vpack.c.b16 %v408, %v407
      %v422 = vpack.c.b16 %v410, %v409
      %v423 = vpack.c.b16 %v412, %v411
      %v424 = vpack.c.b16 %v414, %v413
      %v425 = vpack.c.b16 %v416, %v415
      %v426 = vpack.c.b16 %v418, %v417
      %v451 = vunpack.c.l.b16 %v371
      %v452 = vunpack.c.l.b16 %v372
      %v453 = vunpack.c.l.b16 %v373
      %v454 = vunpack.c.l.b16 %v374
      %v455 = vunpack.c.l.b16 %v375
      %v456 = vunpack.c.l.b16 %v376
      %v457 = vunpack.c.l.b16 %v377
      %v458 = vunpack.c.l.b16 %v378
      %v459 = vunpack.c.l.b16 %v379
      %v460 = vunpack.c.l.b16 %v380
      %v461 = vunpack.c.l.b16 %v381
      %v462 = vunpack.c.l.b16 %v382
      %v463 = vunpack.c.l.b16 %v383
      %v464 = vunpack.c.l.b16 %v384
      %v465 = vunpack.c.l.b16 %v385
      %v466 = vunpack.c.l.b16 %v386
      %v467 = vpack.c.b16 %v452, %v451
      %v468 = vpack.c.b16 %v454, %v453
      %v469 = vpack.c.b16 %v456, %v455
      %v470 = vpack.c.b16 %v458, %v457
      %v471 = vpack.c.b16 %v460, %v459
      %v472 = vpack.c.b16 %v462, %v461
      %v473 = vpack.c.b16 %v464, %v463
      %v474 = vpack.c.b16 %v466, %v465
      %483 = vmatpush.bf16.msra.mxu0 %v474
      %484 = vmatpush.bf16.msra.mxu0 %v473
      %485 = vmatpush.bf16.msra.mxu0 %v472
      %486 = vmatpush.bf16.msra.mxu0 %v471
      %487 = vmatpush.bf16.msra.mxu0 %v470
      %488 = vmatpush.bf16.msra.mxu0 %v469
      %489 = vmatpush.bf16.msra.mxu0 %v468
      %490 = vmatpush.bf16.msra.mxu0 %v467
      %491 = vmatmul.bf16.gmra.mxu0 %v419
      %v492 = vpop.f32.mrf.mxu0
      %v493 = vadd.f32 0.0, %v492
      %v494 = vpop.f32.mrf.mxu0
      %v495 = vadd.f32 0.0, %v494
      %496 = vmatmul.bf16.gmra.mxu0 %v420
      %v497 = vpop.f32.mrf.mxu0
      %v498 = vadd.f32 0.0, %v497
      %v499 = vpop.f32.mrf.mxu0
      %v500 = vadd.f32 0.0, %v499
      %501 = vmatmul.bf16.gmra.mxu0 %v421
      %v502 = vpop.f32.mrf.mxu0
      %v503 = vadd.f32 0.0, %v502
      %v504 = vpop.f32.mrf.mxu0
      %v505 = vadd.f32 0.0, %v504
      %506 = vmatmul.bf16.gmra.mxu0 %v422
      %v507 = vpop.f32.mrf.mxu0
      %v508 = vadd.f32 0.0, %v507
      %v509 = vpop.f32.mrf.mxu0
      %v510 = vadd.f32 0.0, %v509
      %511 = vmatmul.bf16.gmra.mxu0 %v423
      %v512 = vpop.f32.mrf.mxu0
      %v513 = vadd.f32 0.0, %v512
      %v514 = vpop.f32.mrf.mxu0
      %v515 = vadd.f32 0.0, %v514
      %516 = vmatmul.bf16.gmra.mxu0 %v424
      %v517 = vpop.f32.mrf.mxu0
      %v518 = vadd.f32 0.0, %v517
      %v519 = vpop.f32.mrf.mxu0
      %v520 = vadd.f32 0.0, %v519
      %521 = vmatmul.bf16.gmra.mxu0 %v425
      %v522 = vpop.f32.mrf.mxu0
      %v523 = vadd.f32 0.0, %v522
      %v524 = vpop.f32.mrf.mxu0
      %v525 = vadd.f32 0.0, %v524
      %526 = vmatmul.bf16.gmra.mxu0 %v426
      %v527 = vpop.f32.mrf.mxu0
      %v528 = vadd.f32 0.0, %v527
      %v529 = vpop.f32.mrf.mxu0
      %v530 = vadd.f32 0.0, %v529
      %531 = vdwg.mxu0
      %v532 = vadd.f32 %v339, %v493
      %v533 = vadd.f32 %v340, %v495
      %v534 = vadd.f32 %v341, %v498
      %v535 = vadd.f32 %v342, %v500
      %v536 = vadd.f32 %v343, %v503
      %v537 = vadd.f32 %v344, %v505
      %v538 = vadd.f32 %v345, %v508
      %v539 = vadd.f32 %v346, %v510
      %v540 = vadd.f32 %v347, %v513
      %v541 = vadd.f32 %v348, %v515
      %v542 = vadd.f32 %v349, %v518
      %v543 = vadd.f32 %v350, %v520
      %v544 = vadd.f32 %v351, %v523
      %v545 = vadd.f32 %v352, %v525
      %v546 = vadd.f32 %v353, %v528
      %v547 = vadd.f32 %v354, %v530
      %548 = vst [vmem:[#allocation2] sm:$0xff] %v532
      %549 = vst [vmem:[#allocation2 + $0x8] sm:$0xff] %v533
      %550 = vst [vmem:[#allocation2 + $0x10] sm:$0xff] %v534
      %551 = vst [vmem:[#allocation2 + $0x18] sm:$0xff] %v535
      %552 = vst [vmem:[#allocation2 + $0x20] sm:$0xff] %v536
      %553 = vst [vmem:[#allocation2 + $0x28] sm:$0xff] %v537
      %554 = vst [vmem:[#allocation2 + $0x30] sm:$0xff] %v538
      %555 = vst [vmem:[#allocation2 + $0x38] sm:$0xff] %v539
      %556 = vst [vmem:[#allocation2 + $0x40] sm:$0xff] %v540
      %557 = vst [vmem:[#allocation2 + $0x48] sm:$0xff] %v541
      %558 = vst [vmem:[#allocation2 + $0x50] sm:$0xff] %v542
      %559 = vst [vmem:[#allocation2 + $0x58] sm:$0xff] %v543
      %560 = vst [vmem:[#allocation2 + $0x60] sm:$0xff] %v544
      %561 = vst [vmem:[#allocation2 + $0x68] sm:$0xff] %v545
      %562 = vst [vmem:[#allocation2 + $0x70] sm:$0xff] %v546
      %563 = vst [vmem:[#allocation2 + $0x78] sm:$0xff] %v547
      %p564 = scmp.eq.s32.totalorder %s20, 4
      // Predicated region
      $region41: #{espcnet_forward.23} parent=35 // pred_check
        %p565 = pneg %p564
      $region42: #{espcnet_forward.23} parent=35 // pred_check_branch
        %567 = sbr.rel (%p565) target = $region44
      $region43: #{espcnet_forward.23} parent=35 // pred_region
        %v568 = vld [vmem:[#allocation2] sm:$0xff]
        %v569 = vld [vmem:[#allocation2 + $0x8] sm:$0xff]
        %v570 = vld [vmem:[#allocation2 + $0x10] sm:$0xff]
        %v571 = vld [vmem:[#allocation2 + $0x18] sm:$0xff]
        %v572 = vld [vmem:[#allocation2 + $0x20] sm:$0xff]
        %v573 = vld [vmem:[#allocation2 + $0x28] sm:$0xff]
        %v574 = vld [vmem:[#allocation2 + $0x30] sm:$0xff]
        %v575 = vld [vmem:[#allocation2 + $0x38] sm:$0xff]
        %v576 = vld [vmem:[#allocation2 + $0x40] sm:$0xff]
        %v577 = vld [vmem:[#allocation2 + $0x48] sm:$0xff]
        %v578 = vld [vmem:[#allocation2 + $0x50] sm:$0xff]
        %v579 = vld [vmem:[#allocation2 + $0x58] sm:$0xff]
        %v580 = vld [vmem:[#allocation2 + $0x60] sm:$0xff]
        %v581 = vld [vmem:[#allocation2 + $0x68] sm:$0xff]
        %v582 = vld [vmem:[#allocation2 + $0x70] sm:$0xff]
        %v583 = vld [vmem:[#allocation2 + $0x78] sm:$0xff]
        %v584 = vld [vmem:[%s2 + $0x1] sm:$0x1]
        %v585 = vperm.slane %v584, 0
        %v586 = vadd.f32 %v568, %v585
        %v587 = vadd.f32 %v569, %v585
        %v588 = vadd.f32 %v570, %v585
        %v589 = vadd.f32 %v571, %v585
        %v590 = vadd.f32 %v572, %v585
        %v591 = vadd.f32 %v573, %v585
        %v592 = vadd.f32 %v574, %v585
        %v593 = vadd.f32 %v575, %v585
        %v594 = vadd.f32 %v576, %v585
        %v595 = vadd.f32 %v577, %v585
        %v596 = vadd.f32 %v578, %v585
        %v597 = vadd.f32 %v579, %v585
        %v598 = vadd.f32 %v580, %v585
        %v599 = vadd.f32 %v581, %v585
        %v600 = vadd.f32 %v582, %v585
        %v601 = vadd.f32 %v583, %v585
        %vm602 = vcmp.gt.f32.partialorder %v586, 0.0
        %vm603 = vcmp.gt.f32.partialorder %v587, 0.0
        %vm604 = vcmp.gt.f32.partialorder %v588, 0.0
        %vm605 = vcmp.gt.f32.partialorder %v589, 0.0
        %vm606 = vcmp.gt.f32.partialorder %v590, 0.0
        %vm607 = vcmp.gt.f32.partialorder %v591, 0.0
        %vm608 = vcmp.gt.f32.partialorder %v592, 0.0
        %vm609 = vcmp.gt.f32.partialorder %v593, 0.0
        %vm610 = vcmp.gt.f32.partialorder %v594, 0.0
        %vm611 = vcmp.gt.f32.partialorder %v595, 0.0
        %vm612 = vcmp.gt.f32.partialorder %v596, 0.0
        %vm613 = vcmp.gt.f32.partialorder %v597, 0.0
        %vm614 = vcmp.gt.f32.partialorder %v598, 0.0
        %vm615 = vcmp.gt.f32.partialorder %v599, 0.0
        %vm616 = vcmp.gt.f32.partialorder %v600, 0.0
        %vm617 = vcmp.gt.f32.partialorder %v601, 0.0
        %v618 = vld [vmem:[%s2 + $0x2] sm:$0x1]
        %v619 = vperm.slane %v618, 0
        %v620 = vmul.f32 %v619, %v586
        %v621 = vmul.f32 %v619, %v587
        %v622 = vmul.f32 %v619, %v588
        %v623 = vmul.f32 %v619, %v589
        %v624 = vmul.f32 %v619, %v590
        %v625 = vmul.f32 %v619, %v591
        %v626 = vmul.f32 %v619, %v592
        %v627 = vmul.f32 %v619, %v593
        %v628 = vmul.f32 %v619, %v594
        %v629 = vmul.f32 %v619, %v595
        %v630 = vmul.f32 %v619, %v596
        %v631 = vmul.f32 %v619, %v597
        %v632 = vmul.f32 %v619, %v598
        %v633 = vmul.f32 %v619, %v599
        %v634 = vmul.f32 %v619, %v600
        %v635 = vmul.f32 %v619, %v601
        %v636 = vsel %vm602, %v586, %v620
        %v637 = vsel %vm603, %v587, %v621
        %v638 = vsel %vm604, %v588, %v622
        %v639 = vsel %vm605, %v589, %v623
        %v640 = vsel %vm606, %v590, %v624
        %v641 = vsel %vm607, %v591, %v625
        %v642 = vsel %vm608, %v592, %v626
        %v643 = vsel %vm609, %v593, %v627
        %v644 = vsel %vm610, %v594, %v628
        %v645 = vsel %vm611, %v595, %v629
        %v646 = vsel %vm612, %v596, %v630
        %v647 = vsel %vm613, %v597, %v631
        %v648 = vsel %vm614, %v598, %v632
        %v649 = vsel %vm615, %v599, %v633
        %v650 = vsel %vm616, %v600, %v634
        %v651 = vsel %vm617, %v601, %v635
        %v652 = vpack.c.bf16 %v636, %v636
        %v653 = vpack.c.bf16 %v637, %v637
        %v654 = vpack.c.bf16 %v638, %v638
        %v655 = vpack.c.bf16 %v639, %v639
        %v656 = vpack.c.bf16 %v640, %v640
        %v657 = vpack.c.bf16 %v641, %v641
        %v658 = vpack.c.bf16 %v642, %v642
        %v659 = vpack.c.bf16 %v643, %v643
        %v660 = vpack.c.bf16 %v644, %v644
        %v661 = vpack.c.bf16 %v645, %v645
        %v662 = vpack.c.bf16 %v646, %v646
        %v663 = vpack.c.bf16 %v647, %v647
        %v664 = vpack.c.bf16 %v648, %v648
        %v665 = vpack.c.bf16 %v649, %v649
        %v666 = vpack.c.bf16 %v650, %v650
        %v667 = vpack.c.bf16 %v651, %v651
        %668 = vst [vmem:[%s267] sm:$0xf] %v652
        %669 = vst [vmem:[%s267 + $0x4] sm:$0xf] %v653
        %670 = vst [vmem:[%s267 + $0x8] sm:$0xf] %v654
        %671 = vst [vmem:[%s267 + $0xc] sm:$0xf] %v655
        %672 = vst [vmem:[%s267 + $0x10] sm:$0xf] %v656
        %673 = vst [vmem:[%s267 + $0x14] sm:$0xf] %v657
        %674 = vst [vmem:[%s267 + $0x18] sm:$0xf] %v658
        %675 = vst [vmem:[%s267 + $0x1c] sm:$0xf] %v659
        %676 = vst [vmem:[%s267 + $0x20] sm:$0xf] %v660
        %677 = vst [vmem:[%s267 + $0x24] sm:$0xf] %v661
        %678 = vst [vmem:[%s267 + $0x28] sm:$0xf] %v662
        %679 = vst [vmem:[%s267 + $0x2c] sm:$0xf] %v663
        %680 = vst [vmem:[%s267 + $0x30] sm:$0xf] %v664
        %681 = vst [vmem:[%s267 + $0x34] sm:$0xf] %v665
        %682 = vst [vmem:[%s267 + $0x38] sm:$0xf] %v666
        %683 = vst [vmem:[%s267 + $0x3c] sm:$0xf] %v667
      $region44: #{espcnet_forward.23} parent=35 // pred_fallthru
        _
      %s684 = smul.u32 16, %s19
      %p685 = scmp.lt.s32.totalorder %s684, 15
      %s686 = scalar_select %p685, %s684, 15
      %s687 = smul.addr %s686, 4
      %s688 = scalar_lea.vmem %s4, %s687
      // Predicated region
      $region45: #{espcnet_forward.23} parent=35 // pred_check
        %p689 = pneg %p146
      $region46: #{espcnet_forward.23} parent=35 // pred_check_branch
        %691 = sbr.rel (%p689) target = $region48
      $region47: #{espcnet_forward.23} parent=35 // pred_region
        %s692 = smul.u32 16, %s19
      $region48: #{espcnet_forward.23} parent=35 // pred_fallthru
        _
      // Predicated region
      $region49: #{espcnet_forward.23} parent=35 // pred_check
        %p693 = pneg %p146
      $region50: #{espcnet_forward.23} parent=35 // pred_check_branch
        %695 = sbr.rel (%p693) target = $region52
      $region51: #{espcnet_forward.23} parent=35 // pred_region
        %s696 = smul.u32 16, %s19
        %p697 = scmp.lt.s32.totalorder %s696, 15
        %s698 = scalar_select %p697, %s696, 15
        %s699 = smul.addr %s698, 4
        %s700 = scalar_lea.vmem %s4, %s699
      $region52: #{espcnet_forward.23} parent=35 // pred_fallthru
        _
    $region36: #{espcnet_forward.23} parent=5 // pred_fallthru
      _
    %p701 = scmp.le.s32.totalorder 2, %s10
    // Predicated region
    $region53: #{espcnet_forward.23} parent=5 // pred_check
      %p702 = pneg %p701
    $region54: #{espcnet_forward.23} parent=5 // pred_check_branch
      %704 = sbr.rel (%p702) target = $region56
    $region55: #{espcnet_forward.23} parent=5 // pred_region
      %s705 = ssub.s32 %s10, 2
    $region56: #{espcnet_forward.23} parent=5 // pred_fallthru
      _
  $region6: #{espcnet_forward.23} parent=0 // loop_footer
    %s14 = sadd.s32 1, %s10
  $region7: #{espcnet_forward.23} parent=0 // loop_footer_branch
    %9 = sbr.rel target = $region3
  $region8: #{espcnet_forward.23} parent=0 // loop_exit
    _

// kernel: espcnet_forward.26
$region0: #{espcnet_forward.26}
  #allocation0 [shape = 'u32[]', space=smem, size = 0x4, offset = 0x4, fixed_abs, tag = 'smem constant byte address 0x4 - core index']
  #allocation1 [shape = 'u32[72,128]{1,0:T(1,128)}', space=vmem, size = 0x9000, scoped, tag = 'internal scratch']
  %s0 = inlined_call_operand.vmem [shape: bf16[128,131], index: 0, kind: input, shape index: {}]
  %s1 = inlined_call_operand.vmem [shape: f32[3,131], index: 1, kind: input, shape index: {}]
  %s2 = inlined_call_operand.vmem [shape: bf16[128,131], index: 2, kind: output, shape index: {}]
  %s3 = sld [smem:[#allocation0]]
  $region18: #{espcnet_forward.26} parent=0
    _
  %s5 = ssub.s32 1, %s3
  %s6 = scalar_select 0, %s5, %s3
  // Predicated region
  $region2: #{espcnet_forward.26} parent=0 // pred_check
    _
  $region3: #{espcnet_forward.26} parent=0 // pred_check_branch
    %8 = sbr.rel (0) target = $region5
  $region4: #{espcnet_forward.26} parent=0 // pred_region
    _
  $region5: #{espcnet_forward.26} parent=0 // pred_fallthru
    _
  // Predicated region
  $region6: #{espcnet_forward.26} parent=0 // pred_check
    _
  $region7: #{espcnet_forward.26} parent=0 // pred_check_branch
    %10 = sbr.rel (0) target = $region9
  $region8: #{espcnet_forward.26} parent=0 // pred_region
    _
  $region9: #{espcnet_forward.26} parent=0 // pred_fallthru
    _
  %v11 = vld [vmem:[%s0] sm:$0xff]
  %v12 = vld [vmem:[%s0 + $0x8] sm:$0xff]
  %v13 = vld [vmem:[%s0 + $0x10] sm:$0xff]
  %v14 = vld [vmem:[%s0 + $0x18] sm:$0xff]
  %v15 = vld [vmem:[%s0 + $0x20] sm:$0xff]
  %v16 = vld [vmem:[%s0 + $0x28] sm:$0xff]
  %v17 = vld [vmem:[%s0 + $0x30] sm:$0xff]
  %v18 = vld [vmem:[%s0 + $0x38] sm:$0xff]
  %v19 = vld [vmem:[%s0 + $0x40] sm:$0xff]
  %v20 = vld [vmem:[%s0 + $0x48] sm:$0xff]
  %v21 = vld [vmem:[%s0 + $0x50] sm:$0xff]
  %v22 = vld [vmem:[%s0 + $0x58] sm:$0xff]
  %v23 = vld [vmem:[%s0 + $0x60] sm:$0xff]
  %v24 = vld [vmem:[%s0 + $0x68] sm:$0xff]
  %v25 = vld [vmem:[%s0 + $0x70] sm:$0xff]
  %v26 = vld [vmem:[%s0 + $0x78] sm:$0xff]
  %v27 = vunpack.c.l.bf16 %v11
  %v28 = vunpack.c.h.bf16 %v11
  %v29 = vunpack.c.l.bf16 %v12
  %v30 = vunpack.c.h.bf16 %v12
  %v31 = vunpack.c.l.bf16 %v13
  %v32 = vunpack.c.h.bf16 %v13
  %v33 = vunpack.c.l.bf16 %v14
  %v34 = vunpack.c.h.bf16 %v14
  %v35 = vunpack.c.l.bf16 %v15
  %v36 = vunpack.c.h.bf16 %v15
  %v37 = vunpack.c.l.bf16 %v16
  %v38 = vunpack.c.h.bf16 %v16
  %v39 = vunpack.c.l.bf16 %v17
  %v40 = vunpack.c.h.bf16 %v17
  %v41 = vunpack.c.l.bf16 %v18
  %v42 = vunpack.c.h.bf16 %v18
  %v43 = vunpack.c.l.bf16 %v19
  %v44 = vunpack.c.h.bf16 %v19
  %v45 = vunpack.c.l.bf16 %v20
  %v46 = vunpack.c.h.bf16 %v20
  %v47 = vunpack.c.l.bf16 %v21
  %v48 = vunpack.c.h.bf16 %v21
  %v49 = vunpack.c.l.bf16 %v22
  %v50 = vunpack.c.h.bf16 %v22
  %v51 = vunpack.c.l.bf16 %v23
  %v52 = vunpack.c.h.bf16 %v23
  %v53 = vunpack.c.l.bf16 %v24
  %v54 = vunpack.c.h.bf16 %v24
  %v55 = vunpack.c.l.bf16 %v25
  %v56 = vunpack.c.h.bf16 %v25
  %v57 = vunpack.c.l.bf16 %v26
  %v58 = vunpack.c.h.bf16 %v26
  %v59 = vld [vmem:[%s1] ss:$4 sm:$0x3]
  %v61 = vperm.slane %v59, 0
  %v62 = vperm.slane %v59, 1
  %v65 = vmul.f32 %v27, %v61
  %v66 = vmul.f32 %v28, %v62
  %v67 = vmul.f32 %v29, %v61
  %v68 = vmul.f32 %v30, %v62
  %v69 = vmul.f32 %v31, %v61
  %v70 = vmul.f32 %v32, %v62
  %v71 = vmul.f32 %v33, %v61
  %v72 = vmul.f32 %v34, %v62
  %v73 = vmul.f32 %v35, %v61
  %v74 = vmul.f32 %v36, %v62
  %v75 = vmul.f32 %v37, %v61
  %v76 = vmul.f32 %v38, %v62
  %v77 = vmul.f32 %v39, %v61
  %v78 = vmul.f32 %v40, %v62
  %v79 = vmul.f32 %v41, %v61
  %v80 = vmul.f32 %v42, %v62
  %v81 = vmul.f32 %v43, %v61
  %v82 = vmul.f32 %v44, %v62
  %v83 = vmul.f32 %v45, %v61
  %v84 = vmul.f32 %v46, %v62
  %v85 = vmul.f32 %v47, %v61
  %v86 = vmul.f32 %v48, %v62
  %v87 = vmul.f32 %v49, %v61
  %v88 = vmul.f32 %v50, %v62
  %v89 = vmul.f32 %v51, %v61
  %v90 = vmul.f32 %v52, %v62
  %v91 = vmul.f32 %v53, %v61
  %v92 = vmul.f32 %v54, %v62
  %v93 = vmul.f32 %v55, %v61
  %v94 = vmul.f32 %v56, %v62
  %v95 = vmul.f32 %v57, %v61
  %v96 = vmul.f32 %v58, %v62
  %s97 = scalar_lea.vmem %s1, 1
  %v98 = vld [vmem:[%s97] ss:$4 sm:$0x3]
  %v100 = vperm.slane %v98, 0
  %v101 = vperm.slane %v98, 1
  %v104 = vadd.f32 %v65, %v100
  %v105 = vadd.f32 %v66, %v101
  %v106 = vadd.f32 %v67, %v100
  %v107 = vadd.f32 %v68, %v101
  %v108 = vadd.f32 %v69, %v100
  %v109 = vadd.f32 %v70, %v101
  %v110 = vadd.f32 %v71, %v100
  %v111 = vadd.f32 %v72, %v101
  %v112 = vadd.f32 %v73, %v100
  %v113 = vadd.f32 %v74, %v101
  %v114 = vadd.f32 %v75, %v100
  %v115 = vadd.f32 %v76, %v101
  %v116 = vadd.f32 %v77, %v100
  %v117 = vadd.f32 %v78, %v101
  %v118 = vadd.f32 %v79, %v100
  %v119 = vadd.f32 %v80, %v101
  %v120 = vadd.f32 %v81, %v100
  %v121 = vadd.f32 %v82, %v101
  %v122 = vadd.f32 %v83, %v100
  %v123 = vadd.f32 %v84, %v101
  %v124 = vadd.f32 %v85, %v100
  %v125 = vadd.f32 %v86, %v101
  %v126 = vadd.f32 %v87, %v100
  %v127 = vadd.f32 %v88, %v101
  %v128 = vadd.f32 %v89, %v100
  %v129 = vadd.f32 %v90, %v101
  %v130 = vadd.f32 %v91, %v100
  %v131 = vadd.f32 %v92, %v101
  %v132 = vadd.f32 %v93, %v100
  %v133 = vadd.f32 %v94, %v101
  %v134 = vadd.f32 %v95, %v100
  %v135 = vadd.f32 %v96, %v101
  %vm136 = vcmp.gt.f32.partialorder %v104, 0.0
  %vm137 = vcmp.gt.f32.partialorder %v105, 0.0
  %vm138 = vcmp.gt.f32.partialorder %v106, 0.0
  %vm139 = vcmp.gt.f32.partialorder %v107, 0.0
  %vm140 = vcmp.gt.f32.partialorder %v108, 0.0
  %vm141 = vcmp.gt.f32.partialorder %v109, 0.0
  %vm142 = vcmp.gt.f32.partialorder %v110, 0.0
  %vm143 = vcmp.gt.f32.partialorder %v111, 0.0
  %vm144 = vcmp.gt.f32.partialorder %v112, 0.0
  %vm145 = vcmp.gt.f32.partialorder %v113, 0.0
  %vm146 = vcmp.gt.f32.partialorder %v114, 0.0
  %vm147 = vcmp.gt.f32.partialorder %v115, 0.0
  %vm148 = vcmp.gt.f32.partialorder %v116, 0.0
  %vm149 = vcmp.gt.f32.partialorder %v117, 0.0
  %vm150 = vcmp.gt.f32.partialorder %v118, 0.0
  %vm151 = vcmp.gt.f32.partialorder %v119, 0.0
  %vm152 = vcmp.gt.f32.partialorder %v120, 0.0
  %vm153 = vcmp.gt.f32.partialorder %v121, 0.0
  %vm154 = vcmp.gt.f32.partialorder %v122, 0.0
  %vm155 = vcmp.gt.f32.partialorder %v123, 0.0
  %vm156 = vcmp.gt.f32.partialorder %v124, 0.0
  %vm157 = vcmp.gt.f32.partialorder %v125, 0.0
  %vm158 = vcmp.gt.f32.partialorder %v126, 0.0
  %vm159 = vcmp.gt.f32.partialorder %v127, 0.0
  %vm160 = vcmp.gt.f32.partialorder %v128, 0.0
  %vm161 = vcmp.gt.f32.partialorder %v129, 0.0
  %vm162 = vcmp.gt.f32.partialorder %v130, 0.0
  %vm163 = vcmp.gt.f32.partialorder %v131, 0.0
  %vm164 = vcmp.gt.f32.partialorder %v132, 0.0
  %vm165 = vcmp.gt.f32.partialorder %v133, 0.0
  %vm166 = vcmp.gt.f32.partialorder %v134, 0.0
  %vm167 = vcmp.gt.f32.partialorder %v135, 0.0
  %s168 = scalar_lea.vmem %s1, 2
  %v169 = vld [vmem:[%s168] ss:$4 sm:$0x3]
  %v171 = vperm.slane %v169, 0
  %v172 = vperm.slane %v169, 1
  %v175 = vmul.f32 %v171, %v104
  %v176 = vmul.f32 %v172, %v105
  %v177 = vmul.f32 %v171, %v106
  %v178 = vmul.f32 %v172, %v107
  %v179 = vmul.f32 %v171, %v108
  %v180 = vmul.f32 %v172, %v109
  %v181 = vmul.f32 %v171, %v110
  %v182 = vmul.f32 %v172, %v111
  %v183 = vmul.f32 %v171, %v112
  %v184 = vmul.f32 %v172, %v113
  %v185 = vmul.f32 %v171, %v114
  %v186 = vmul.f32 %v172, %v115
  %v187 = vmul.f32 %v171, %v116
  %v188 = vmul.f32 %v172, %v117
  %v189 = vmul.f32 %v171, %v118
  %v190 = vmul.f32 %v172, %v119
  %v191 = vmul.f32 %v171, %v120
  %v192 = vmul.f32 %v172, %v121
  %v193 = vmul.f32 %v171, %v122
  %v194 = vmul.f32 %v172, %v123
  %v195 = vmul.f32 %v171, %v124
  %v196 = vmul.f32 %v172, %v125
  %v197 = vmul.f32 %v171, %v126
  %v198 = vmul.f32 %v172, %v127
  %v199 = vmul.f32 %v171, %v128
  %v200 = vmul.f32 %v172, %v129
  %v201 = vmul.f32 %v171, %v130
  %v202 = vmul.f32 %v172, %v131
  %v203 = vmul.f32 %v171, %v132
  %v204 = vmul.f32 %v172, %v133
  %v205 = vmul.f32 %v171, %v134
  %v206 = vmul.f32 %v172, %v135
  %v207 = vsel %vm136, %v104, %v175
  %v208 = vsel %vm137, %v105, %v176
  %v209 = vsel %vm138, %v106, %v177
  %v210 = vsel %vm139, %v107, %v178
  %v211 = vsel %vm140, %v108, %v179
  %v212 = vsel %vm141, %v109, %v180
  %v213 = vsel %vm142, %v110, %v181
  %v214 = vsel %vm143, %v111, %v182
  %v215 = vsel %vm144, %v112, %v183
  %v216 = vsel %vm145, %v113, %v184
  %v217 = vsel %vm146, %v114, %v185
  %v218 = vsel %vm147, %v115, %v186
  %v219 = vsel %vm148, %v116, %v187
  %v220 = vsel %vm149, %v117, %v188
  %v221 = vsel %vm150, %v118, %v189
  %v222 = vsel %vm151, %v119, %v190
  %v223 = vsel %vm152, %v120, %v191
  %v224 = vsel %vm153, %v121, %v192
  %v225 = vsel %vm154, %v122, %v193
  %v226 = vsel %vm155, %v123, %v194
  %v227 = vsel %vm156, %v124, %v195
  %v228 = vsel %vm157, %v125, %v196
  %v229 = vsel %vm158, %v126, %v197
  %v230 = vsel %vm159, %v127, %v198
  %v231 = vsel %vm160, %v128, %v199
  %v232 = vsel %vm161, %v129, %v200
  %v233 = vsel %vm162, %v130, %v201
  %v234 = vsel %vm163, %v131, %v202
  %v235 = vsel %vm164, %v132, %v203
  %v236 = vsel %vm165, %v133, %v204
  %v237 = vsel %vm166, %v134, %v205
  %v238 = vsel %vm167, %v135, %v206
  %v239 = vpack.c.bf16 %v208, %v207
  %v240 = vpack.c.bf16 %v210, %v209
  %v241 = vpack.c.bf16 %v212, %v211
  %v242 = vpack.c.bf16 %v214, %v213
  %v243 = vpack.c.bf16 %v216, %v215
  %v244 = vpack.c.bf16 %v218, %v217
  %v245 = vpack.c.bf16 %v220, %v219
  %v246 = vpack.c.bf16 %v222, %v221
  %v247 = vpack.c.bf16 %v224, %v223
  %v248 = vpack.c.bf16 %v226, %v225
  %v249 = vpack.c.bf16 %v228, %v227
  %v250 = vpack.c.bf16 %v230, %v229
  %v251 = vpack.c.bf16 %v232, %v231
  %v252 = vpack.c.bf16 %v234, %v233
  %v253 = vpack.c.bf16 %v236, %v235
  %v254 = vpack.c.bf16 %v238, %v237
  %vm255 = vcmask 1043456
  %vm256 = vcmask 23556
  %vm257 = vmor %vm256, %vm255
  %258 = vst.msk [vmem:[%s2] sm:$0xff] %vm257, %v239
  %259 = vst.msk [vmem:[%s2 + $0x8] sm:$0xff] %vm257, %v240
  %260 = vst.msk [vmem:[%s2 + $0x10] sm:$0xff] %vm257, %v241
  %261 = vst.msk [vmem:[%s2 + $0x18] sm:$0xff] %vm257, %v242
  %262 = vst.msk [vmem:[%s2 + $0x20] sm:$0xff] %vm257, %v243
  %263 = vst.msk [vmem:[%s2 + $0x28] sm:$0xff] %vm257, %v244
  %264 = vst.msk [vmem:[%s2 + $0x30] sm:$0xff] %vm257, %v245
  %265 = vst.msk [vmem:[%s2 + $0x38] sm:$0xff] %vm257, %v246
  %266 = vst.msk [vmem:[%s2 + $0x40] sm:$0xff] %vm257, %v247
  %267 = vst.msk [vmem:[%s2 + $0x48] sm:$0xff] %vm257, %v248
  %268 = vst.msk [vmem:[%s2 + $0x50] sm:$0xff] %vm257, %v249
  %269 = vst.msk [vmem:[%s2 + $0x58] sm:$0xff] %vm257, %v250
  %270 = vst.msk [vmem:[%s2 + $0x60] sm:$0xff] %vm257, %v251
  %271 = vst.msk [vmem:[%s2 + $0x68] sm:$0xff] %vm257, %v252
  %272 = vst.msk [vmem:[%s2 + $0x70] sm:$0xff] %vm257, %v253
  %273 = vst.msk [vmem:[%s2 + $0x78] sm:$0xff] %vm257, %v254
  // Predicated region
  $region10: #{espcnet_forward.26} parent=0 // pred_check
    _
  $region11: #{espcnet_forward.26} parent=0 // pred_check_branch
    %275 = sbr.rel (0) target = $region13
  $region12: #{espcnet_forward.26} parent=0 // pred_region
    _
  $region13: #{espcnet_forward.26} parent=0 // pred_fallthru
    _
  // Predicated region
  $region14: #{espcnet_forward.26} parent=0 // pred_check
    _
  $region15: #{espcnet_forward.26} parent=0 // pred_check_branch
    %277 = sbr.rel (0) target = $region17
  $region16: #{espcnet_forward.26} parent=0 // pred_region
    _
  $region17: #{espcnet_forward.26} parent=0 // pred_fallthru
    _

// kernel: espcnet_forward.27
$region0: #{espcnet_forward.27}
  #allocation0 [shape = 'u32[]', space=smem, size = 0x4, offset = 0x4, fixed_abs, tag = 'smem constant byte address 0x4 - core index']
  #allocation1 [shape = 'u32[72,128]{1,0:T(1,128)}', space=vmem, size = 0x9000, scoped, tag = 'internal scratch']
  %s0 = inlined_call_operand.vmem [shape: bf16[32,1280], index: 0, kind: input, shape index: {}]
  %s1 = inlined_call_operand.vmem [shape: bf16[1280,128], index: 1, kind: input, shape index: {}]
  %s2 = inlined_call_operand.vmem [shape: bf16[32,128], index: 2, kind: output, shape index: {}]
  %s3 = sld [smem:[#allocation0]]
  $region18: #{espcnet_forward.27} parent=0
    _
  %s5 = ssub.s32 1, %s3
  %s6 = scalar_select 0, %s5, %s3
  // Predicated region
  $region2: #{espcnet_forward.27} parent=0 // pred_check
    _
  $region3: #{espcnet_forward.27} parent=0 // pred_check_branch
    %8 = sbr.rel (0) target = $region5
  $region4: #{espcnet_forward.27} parent=0 // pred_region
    _
  $region5: #{espcnet_forward.27} parent=0 // pred_fallthru
    _
  // Predicated region
  $region6: #{espcnet_forward.27} parent=0 // pred_check
    _
  $region7: #{espcnet_forward.27} parent=0 // pred_check_branch
    %10 = sbr.rel (0) target = $region9
  $region8: #{espcnet_forward.27} parent=0 // pred_region
    _
  $region9: #{espcnet_forward.27} parent=0 // pred_fallthru
    _
  %v11 = vld [vmem:[%s0] sm:$0xff]
  %v12 = vld [vmem:[%s0 + $0x8] sm:$0xff]
  %v13 = vld [vmem:[%s0 + $0x10] sm:$0xff]
  %v14 = vld [vmem:[%s0 + $0x18] sm:$0xff]
  %v15 = vld [vmem:[%s0 + $0x20] sm:$0xff]
  %v16 = vld [vmem:[%s0 + $0x28] sm:$0xff]
  %v17 = vld [vmem:[%s0 + $0x30] sm:$0xff]
  %v18 = vld [vmem:[%s0 + $0x38] sm:$0xff]
  %v19 = vld [vmem:[%s0 + $0x40] sm:$0xff]
  %v20 = vld [vmem:[%s0 + $0x48] sm:$0xff]
  %v21 = vld [vmem:[%s0 + $0x50] sm:$0xff]
  %v22 = vld [vmem:[%s0 + $0x58] sm:$0xff]
  %v23 = vld [vmem:[%s0 + $0x60] sm:$0xff]
  %v24 = vld [vmem:[%s0 + $0x68] sm:$0xff]
  %v25 = vld [vmem:[%s0 + $0x70] sm:$0xff]
  %v26 = vld [vmem:[%s0 + $0x78] sm:$0xff]
  %v27 = vld [vmem:[%s0 + $0x80] sm:$0xff]
  %v28 = vld [vmem:[%s0 + $0x88] sm:$0xff]
  %v29 = vld [vmem:[%s0 + $0x90] sm:$0xff]
  %v30 = vld [vmem:[%s0 + $0x98] sm:$0xff]
  %v31 = vld [vmem:[%s1] sm:$0xf]
  %v32 = vld [vmem:[%s1 + $0x4] sm:$0xf]
  %v33 = vld [vmem:[%s1 + $0x8] sm:$0xf]
  %v34 = vld [vmem:[%s1 + $0xc] sm:$0xf]
  %v35 = vld [vmem:[%s1 + $0x10] sm:$0xf]
  %v36 = vld [vmem:[%s1 + $0x14] sm:$0xf]
  %v37 = vld [vmem:[%s1 + $0x18] sm:$0xf]
  %v38 = vld [vmem:[%s1 + $0x1c] sm:$0xf]
  %v39 = vld [vmem:[%s1 + $0x20] sm:$0xf]
  %v40 = vld [vmem:[%s1 + $0x24] sm:$0xf]
  %v41 = vld [vmem:[%s1 + $0x28] sm:$0xf]
  %v42 = vld [vmem:[%s1 + $0x2c] sm:$0xf]
  %v43 = vld [vmem:[%s1 + $0x30] sm:$0xf]
  %v44 = vld [vmem:[%s1 + $0x34] sm:$0xf]
  %v45 = vld [vmem:[%s1 + $0x38] sm:$0xf]
  %v46 = vld [vmem:[%s1 + $0x3c] sm:$0xf]
  %v47 = vld [vmem:[%s1 + $0x40] sm:$0xf]
  %v48 = vld [vmem:[%s1 + $0x44] sm:$0xf]
  %v49 = vld [vmem:[%s1 + $0x48] sm:$0xf]
  %v50 = vld [vmem:[%s1 + $0x4c] sm:$0xf]
  %v51 = vld [vmem:[%s1 + $0x50] sm:$0xf]
  %v52 = vld [vmem:[%s1 + $0x54] sm:$0xf]
  %v53 = vld [vmem:[%s1 + $0x58] sm:$0xf]
  %v54 = vld [vmem:[%s1 + $0x5c] sm:$0xf]
  %v55 = vld [vmem:[%s1 + $0x60] sm:$0xf]
  %v56 = vld [vmem:[%s1 + $0x64] sm:$0xf]
  %v57 = vld [vmem:[%s1 + $0x68] sm:$0xf]
  %v58 = vld [vmem:[%s1 + $0x6c] sm:$0xf]
  %v59 = vld [vmem:[%s1 + $0x70] sm:$0xf]
  %v60 = vld [vmem:[%s1 + $0x74] sm:$0xf]
  %v61 = vld [vmem:[%s1 + $0x78] sm:$0xf]
  %v62 = vld [vmem:[%s1 + $0x7c] sm:$0xf]
  %v63 = vld [vmem:[%s1 + $0x80] sm:$0xf]
  %v64 = vld [vmem:[%s1 + $0x84] sm:$0xf]
  %v65 = vld [vmem:[%s1 + $0x88] sm:$0xf]
  %v66 = vld [vmem:[%s1 + $0x8c] sm:$0xf]
  %v67 = vld [vmem:[%s1 + $0x90] sm:$0xf]
  %v68 = vld [vmem:[%s1 + $0x94] sm:$0xf]
  %v69 = vld [vmem:[%s1 + $0x98] sm:$0xf]
  %v70 = vld [vmem:[%s1 + $0x9c] sm:$0xf]
  %v71 = vld [vmem:[%s1 + $0xa0] sm:$0xf]
  %v72 = vld [vmem:[%s1 + $0xa4] sm:$0xf]
  %v73 = vld [vmem:[%s1 + $0xa8] sm:$0xf]
  %v74 = vld [vmem:[%s1 + $0xac] sm:$0xf]
  %v75 = vld [vmem:[%s1 + $0xb0] sm:$0xf]
  %v76 = vld [vmem:[%s1 + $0xb4] sm:$0xf]
  %v77 = vld [vmem:[%s1 + $0xb8] sm:$0xf]
  %v78 = vld [vmem:[%s1 + $0xbc] sm:$0xf]
  %v79 = vld [vmem:[%s1 + $0xc0] sm:$0xf]
  %v80 = vld [vmem:[%s1 + $0xc4] sm:$0xf]
  %v81 = vld [vmem:[%s1 + $0xc8] sm:$0xf]
  %v82 = vld [vmem:[%s1 + $0xcc] sm:$0xf]
  %v83 = vld [vmem:[%s1 + $0xd0] sm:$0xf]
  %v84 = vld [vmem:[%s1 + $0xd4] sm:$0xf]
  %v85 = vld [vmem:[%s1 + $0xd8] sm:$0xf]
  %v86 = vld [vmem:[%s1 + $0xdc] sm:$0xf]
  %v87 = vld [vmem:[%s1 + $0xe0] sm:$0xf]
  %v88 = vld [vmem:[%s1 + $0xe4] sm:$0xf]
  %v89 = vld [vmem:[%s1 + $0xe8] sm:$0xf]
  %v90 = vld [vmem:[%s1 + $0xec] sm:$0xf]
  %v91 = vld [vmem:[%s1 + $0xf0] sm:$0xf]
  %v92 = vld [vmem:[%s1 + $0xf4] sm:$0xf]
  %v93 = vld [vmem:[%s1 + $0xf8] sm:$0xf]
  %v94 = vld [vmem:[%s1 + $0xfc] sm:$0xf]
  %v95 = vld [vmem:[%s1 + $0x100] sm:$0xf]
  %v96 = vld [vmem:[%s1 + $0x104] sm:$0xf]
  %v97 = vld [vmem:[%s1 + $0x108] sm:$0xf]
  %v98 = vld [vmem:[%s1 + $0x10c] sm:$0xf]
  %v99 = vld [vmem:[%s1 + $0x110] sm:$0xf]
  %v100 = vld [vmem:[%s1 + $0x114] sm:$0xf]
  %v101 = vld [vmem:[%s1 + $0x118] sm:$0xf]
  %v102 = vld [vmem:[%s1 + $0x11c] sm:$0xf]
  %v103 = vld [vmem:[%s1 + $0x120] sm:$0xf]
  %v104 = vld [vmem:[%s1 + $0x124] sm:$0xf]
  %v105 = vld [vmem:[%s1 + $0x128] sm:$0xf]
  %v106 = vld [vmem:[%s1 + $0x12c] sm:$0xf]
  %v107 = vld [vmem:[%s1 + $0x130] sm:$0xf]
  %v108 = vld [vmem:[%s1 + $0x134] sm:$0xf]
  %v109 = vld [vmem:[%s1 + $0x138] sm:$0xf]
  %v110 = vld [vmem:[%s1 + $0x13c] sm:$0xf]
  %v111 = vld [vmem:[%s1 + $0x140] sm:$0xf]
  %v112 = vld [vmem:[%s1 + $0x144] sm:$0xf]
  %v113 = vld [vmem:[%s1 + $0x148] sm:$0xf]
  %v114 = vld [vmem:[%s1 + $0x14c] sm:$0xf]
  %v115 = vld [vmem:[%s1 + $0x150] sm:$0xf]
  %v116 = vld [vmem:[%s1 + $0x154] sm:$0xf]
  %v117 = vld [vmem:[%s1 + $0x158] sm:$0xf]
  %v118 = vld [vmem:[%s1 + $0x15c] sm:$0xf]
  %v119 = vld [vmem:[%s1 + $0x160] sm:$0xf]
  %v120 = vld [vmem:[%s1 + $0x164] sm:$0xf]
  %v121 = vld [vmem:[%s1 + $0x168] sm:$0xf]
  %v122 = vld [vmem:[%s1 + $0x16c] sm:$0xf]
  %v123 = vld [vmem:[%s1 + $0x170] sm:$0xf]
  %v124 = vld [vmem:[%s1 + $0x174] sm:$0xf]
  %v125 = vld [vmem:[%s1 + $0x178] sm:$0xf]
  %v126 = vld [vmem:[%s1 + $0x17c] sm:$0xf]
  %v127 = vld [vmem:[%s1 + $0x180] sm:$0xf]
  %v128 = vld [vmem:[%s1 + $0x184] sm:$0xf]
  %v129 = vld [vmem:[%s1 + $0x188] sm:$0xf]
  %v130 = vld [vmem:[%s1 + $0x18c] sm:$0xf]
  %v131 = vld [vmem:[%s1 + $0x190] sm:$0xf]
  %v132 = vld [vmem:[%s1 + $0x194] sm:$0xf]
  %v133 = vld [vmem:[%s1 + $0x198] sm:$0xf]
  %v134 = vld [vmem:[%s1 + $0x19c] sm:$0xf]
  %v135 = vld [vmem:[%s1 + $0x1a0] sm:$0xf]
  %v136 = vld [vmem:[%s1 + $0x1a4] sm:$0xf]
  %v137 = vld [vmem:[%s1 + $0x1a8] sm:$0xf]
  %v138 = vld [vmem:[%s1 + $0x1ac] sm:$0xf]
  %v139 = vld [vmem:[%s1 + $0x1b0] sm:$0xf]
  %v140 = vld [vmem:[%s1 + $0x1b4] sm:$0xf]
  %v141 = vld [vmem:[%s1 + $0x1b8] sm:$0xf]
  %v142 = vld [vmem:[%s1 + $0x1bc] sm:$0xf]
  %v143 = vld [vmem:[%s1 + $0x1c0] sm:$0xf]
  %v144 = vld [vmem:[%s1 + $0x1c4] sm:$0xf]
  %v145 = vld [vmem:[%s1 + $0x1c8] sm:$0xf]
  %v146 = vld [vmem:[%s1 + $0x1cc] sm:$0xf]
  %v147 = vld [vmem:[%s1 + $0x1d0] sm:$0xf]
  %v148 = vld [vmem:[%s1 + $0x1d4] sm:$0xf]
  %v149 = vld [vmem:[%s1 + $0x1d8] sm:$0xf]
  %v150 = vld [vmem:[%s1 + $0x1dc] sm:$0xf]
  %v151 = vld [vmem:[%s1 + $0x1e0] sm:$0xf]
  %v152 = vld [vmem:[%s1 + $0x1e4] sm:$0xf]
  %v153 = vld [vmem:[%s1 + $0x1e8] sm:$0xf]
  %v154 = vld [vmem:[%s1 + $0x1ec] sm:$0xf]
  %v155 = vld [vmem:[%s1 + $0x1f0] sm:$0xf]
  %v156 = vld [vmem:[%s1 + $0x1f4] sm:$0xf]
  %v157 = vld [vmem:[%s1 + $0x1f8] sm:$0xf]
  %v158 = vld [vmem:[%s1 + $0x1fc] sm:$0xf]
  %v159 = vld [vmem:[%s1 + $0x200] sm:$0xf]
  %v160 = vld [vmem:[%s1 + $0x204] sm:$0xf]
  %v161 = vld [vmem:[%s1 + $0x208] sm:$0xf]
  %v162 = vld [vmem:[%s1 + $0x20c] sm:$0xf]
  %v163 = vld [vmem:[%s1 + $0x210] sm:$0xf]
  %v164 = vld [vmem:[%s1 + $0x214] sm:$0xf]
  %v165 = vld [vmem:[%s1 + $0x218] sm:$0xf]
  %v166 = vld [vmem:[%s1 + $0x21c] sm:$0xf]
  %v167 = vld [vmem:[%s1 + $0x220] sm:$0xf]
  %v168 = vld [vmem:[%s1 + $0x224] sm:$0xf]
  %v169 = vld [vmem:[%s1 + $0x228] sm:$0xf]
  %v170 = vld [vmem:[%s1 + $0x22c] sm:$0xf]
  %v171 = vld [vmem:[%s1 + $0x230] sm:$0xf]
  %v172 = vld [vmem:[%s1 + $0x234] sm:$0xf]
  %v173 = vld [vmem:[%s1 + $0x238] sm:$0xf]
  %v174 = vld [vmem:[%s1 + $0x23c] sm:$0xf]
  %v175 = vld [vmem:[%s1 + $0x240] sm:$0xf]
  %v176 = vld [vmem:[%s1 + $0x244] sm:$0xf]
  %v177 = vld [vmem:[%s1 + $0x248] sm:$0xf]
  %v178 = vld [vmem:[%s1 + $0x24c] sm:$0xf]
  %v179 = vld [vmem:[%s1 + $0x250] sm:$0xf]
  %v180 = vld [vmem:[%s1 + $0x254] sm:$0xf]
  %v181 = vld [vmem:[%s1 + $0x258] sm:$0xf]
  %v182 = vld [vmem:[%s1 + $0x25c] sm:$0xf]
  %v183 = vld [vmem:[%s1 + $0x260] sm:$0xf]
  %v184 = vld [vmem:[%s1 + $0x264] sm:$0xf]
  %v185 = vld [vmem:[%s1 + $0x268] sm:$0xf]
  %v186 = vld [vmem:[%s1 + $0x26c] sm:$0xf]
  %v187 = vld [vmem:[%s1 + $0x270] sm:$0xf]
  %v188 = vld [vmem:[%s1 + $0x274] sm:$0xf]
  %v189 = vld [vmem:[%s1 + $0x278] sm:$0xf]
  %v190 = vld [vmem:[%s1 + $0x27c] sm:$0xf]
  %v211 = vunpack.c.l.b16 %v11
  %v212 = vunpack.c.h.b16 %v11
  %v213 = vunpack.c.l.b16 %v12
  %v214 = vunpack.c.h.b16 %v12
  %v215 = vunpack.c.l.b16 %v13
  %v216 = vunpack.c.h.b16 %v13
  %v217 = vunpack.c.l.b16 %v14
  %v218 = vunpack.c.h.b16 %v14
  %v219 = vunpack.c.l.b16 %v15
  %v220 = vunpack.c.h.b16 %v15
  %v221 = vunpack.c.l.b16 %v16
  %v222 = vunpack.c.h.b16 %v16
  %v223 = vunpack.c.l.b16 %v17
  %v224 = vunpack.c.h.b16 %v17
  %v225 = vunpack.c.l.b16 %v18
  %v226 = vunpack.c.h.b16 %v18
  %v227 = vunpack.c.l.b16 %v19
  %v228 = vunpack.c.h.b16 %v19
  %v229 = vunpack.c.l.b16 %v20
  %v230 = vunpack.c.h.b16 %v20
  %v231 = vunpack.c.l.b16 %v21
  %v232 = vunpack.c.h.b16 %v21
  %v233 = vunpack.c.l.b16 %v22
  %v234 = vunpack.c.h.b16 %v22
  %v235 = vunpack.c.l.b16 %v23
  %v236 = vunpack.c.h.b16 %v23
  %v237 = vunpack.c.l.b16 %v24
  %v238 = vunpack.c.h.b16 %v24
  %v239 = vunpack.c.l.b16 %v25
  %v240 = vunpack.c.h.b16 %v25
  %v241 = vunpack.c.l.b16 %v26
  %v242 = vunpack.c.h.b16 %v26
  %v243 = vunpack.c.l.b16 %v27
  %v244 = vunpack.c.h.b16 %v27
  %v245 = vunpack.c.l.b16 %v28
  %v246 = vunpack.c.h.b16 %v28
  %v247 = vunpack.c.l.b16 %v29
  %v248 = vunpack.c.h.b16 %v29
  %v249 = vunpack.c.l.b16 %v30
  %v250 = vunpack.c.h.b16 %v30
  %v251 = vpack.c.b16 %v221, %v211
  %v252 = vpack.c.b16 %v222, %v212
  %v253 = vpack.c.b16 %v223, %v213
  %v254 = vpack.c.b16 %v224, %v214
  %v255 = vpack.c.b16 %v225, %v215
  %v256 = vpack.c.b16 %v226, %v216
  %v257 = vpack.c.b16 %v227, %v217
  %v258 = vpack.c.b16 %v228, %v218
  %v259 = vpack.c.b16 %v229, %v219
  %v260 = vpack.c.b16 %v230, %v220
  %v261 = vpack.c.b16 %v241, %v231
  %v262 = vpack.c.b16 %v242, %v232
  %v263 = vpack.c.b16 %v243, %v233
  %v264 = vpack.c.b16 %v244, %v234
  %v265 = vpack.c.b16 %v245, %v235
  %v266 = vpack.c.b16 %v246, %v236
  %v267 = vpack.c.b16 %v247, %v237
  %v268 = vpack.c.b16 %v248, %v238
  %v269 = vpack.c.b16 %v249, %v239
  %v270 = vpack.c.b16 %v250, %v240
  %v451 = vunpack.c.l.b16 %v31
  %v452 = vunpack.c.l.b16 %v32
  %v453 = vunpack.c.l.b16 %v33
  %v454 = vunpack.c.l.b16 %v34
  %v455 = vunpack.c.l.b16 %v35
  %v456 = vunpack.c.l.b16 %v36
  %v457 = vunpack.c.l.b16 %v37
  %v458 = vunpack.c.l.b16 %v38
  %v459 = vunpack.c.l.b16 %v39
  %v460 = vunpack.c.l.b16 %v40
  %v461 = vunpack.c.l.b16 %v41
  %v462 = vunpack.c.l.b16 %v42
  %v463 = vunpack.c.l.b16 %v43
  %v464 = vunpack.c.l.b16 %v44
  %v465 = vunpack.c.l.b16 %v45
  %v466 = vunpack.c.l.b16 %v46
  %v467 = vunpack.c.l.b16 %v47
  %v468 = vunpack.c.l.b16 %v48
  %v469 = vunpack.c.l.b16 %v49
  %v470 = vunpack.c.l.b16 %v50
  %v471 = vunpack.c.l.b16 %v51
  %v472 = vunpack.c.l.b16 %v52
  %v473 = vunpack.c.l.b16 %v53
  %v474 = vunpack.c.l.b16 %v54
  %v475 = vunpack.c.l.b16 %v55
  %v476 = vunpack.c.l.b16 %v56
  %v477 = vunpack.c.l.b16 %v57
  %v478 = vunpack.c.l.b16 %v58
  %v479 = vunpack.c.l.b16 %v59
  %v480 = vunpack.c.l.b16 %v60
  %v481 = vunpack.c.l.b16 %v61
  %v482 = vunpack.c.l.b16 %v62
  %v483 = vunpack.c.l.b16 %v63
  %v484 = vunpack.c.l.b16 %v64
  %v485 = vunpack.c.l.b16 %v65
  %v486 = vunpack.c.l.b16 %v66
  %v487 = vunpack.c.l.b16 %v67
  %v488 = vunpack.c.l.b16 %v68
  %v489 = vunpack.c.l.b16 %v69
  %v490 = vunpack.c.l.b16 %v70
  %v491 = vunpack.c.l.b16 %v71
  %v492 = vunpack.c.l.b16 %v72
  %v493 = vunpack.c.l.b16 %v73
  %v494 = vunpack.c.l.b16 %v74
  %v495 = vunpack.c.l.b16 %v75
  %v496 = vunpack.c.l.b16 %v76
  %v497 = vunpack.c.l.b16 %v77
  %v498 = vunpack.c.l.b16 %v78
  %v499 = vunpack.c.l.b16 %v79
  %v500 = vunpack.c.l.b16 %v80
  %v501 = vunpack.c.l.b16 %v81
  %v502 = vunpack.c.l.b16 %v82
  %v503 = vunpack.c.l.b16 %v83
  %v504 = vunpack.c.l.b16 %v84
  %v505 = vunpack.c.l.b16 %v85
  %v506 = vunpack.c.l.b16 %v86
  %v507 = vunpack.c.l.b16 %v87
  %v508 = vunpack.c.l.b16 %v88
  %v509 = vunpack.c.l.b16 %v89
  %v510 = vunpack.c.l.b16 %v90
  %v511 = vunpack.c.l.b16 %v91
  %v512 = vunpack.c.l.b16 %v92
  %v513 = vunpack.c.l.b16 %v93
  %v514 = vunpack.c.l.b16 %v94
  %v515 = vunpack.c.l.b16 %v95
  %v516 = vunpack.c.l.b16 %v96
  %v517 = vunpack.c.l.b16 %v97
  %v518 = vunpack.c.l.b16 %v98
  %v519 = vunpack.c.l.b16 %v99
  %v520 = vunpack.c.l.b16 %v100
  %v521 = vunpack.c.l.b16 %v101
  %v522 = vunpack.c.l.b16 %v102
  %v523 = vunpack.c.l.b16 %v103
  %v524 = vunpack.c.l.b16 %v104
  %v525 = vunpack.c.l.b16 %v105
  %v526 = vunpack.c.l.b16 %v106
  %v527 = vunpack.c.l.b16 %v107
  %v528 = vunpack.c.l.b16 %v108
  %v529 = vunpack.c.l.b16 %v109
  %v530 = vunpack.c.l.b16 %v110
  %v531 = vunpack.c.l.b16 %v111
  %v532 = vunpack.c.l.b16 %v112
  %v533 = vunpack.c.l.b16 %v113
  %v534 = vunpack.c.l.b16 %v114
  %v535 = vunpack.c.l.b16 %v115
  %v536 = vunpack.c.l.b16 %v116
  %v537 = vunpack.c.l.b16 %v117
  %v538 = vunpack.c.l.b16 %v118
  %v539 = vunpack.c.l.b16 %v119
  %v540 = vunpack.c.l.b16 %v120
  %v541 = vunpack.c.l.b16 %v121
  %v542 = vunpack.c.l.b16 %v122
  %v543 = vunpack.c.l.b16 %v123
  %v544 = vunpack.c.l.b16 %v124
  %v545 = vunpack.c.l.b16 %v125
  %v546 = vunpack.c.l.b16 %v126
  %v547 = vunpack.c.l.b16 %v127
  %v548 = vunpack.c.l.b16 %v128
  %v549 = vunpack.c.l.b16 %v129
  %v550 = vunpack.c.l.b16 %v130
  %v551 = vunpack.c.l.b16 %v131
  %v552 = vunpack.c.l.b16 %v132
  %v553 = vunpack.c.l.b16 %v133
  %v554 = vunpack.c.l.b16 %v134
  %v555 = vunpack.c.l.b16 %v135
  %v556 = vunpack.c.l.b16 %v136
  %v557 = vunpack.c.l.b16 %v137
  %v558 = vunpack.c.l.b16 %v138
  %v559 = vunpack.c.l.b16 %v139
  %v560 = vunpack.c.l.b16 %v140
  %v561 = vunpack.c.l.b16 %v141
  %v562 = vunpack.c.l.b16 %v142
  %v563 = vunpack.c.l.b16 %v143
  %v564 = vunpack.c.l.b16 %v144
  %v565 = vunpack.c.l.b16 %v145
  %v566 = vunpack.c.l.b16 %v146
  %v567 = vunpack.c.l.b16 %v147
  %v568 = vunpack.c.l.b16 %v148
  %v569 = vunpack.c.l.b16 %v149
  %v570 = vunpack.c.l.b16 %v150
  %v571 = vunpack.c.l.b16 %v151
  %v572 = vunpack.c.l.b16 %v152
  %v573 = vunpack.c.l.b16 %v153
  %v574 = vunpack.c.l.b16 %v154
  %v575 = vunpack.c.l.b16 %v155
  %v576 = vunpack.c.l.b16 %v156
  %v577 = vunpack.c.l.b16 %v157
  %v578 = vunpack.c.l.b16 %v158
  %v579 = vunpack.c.l.b16 %v159
  %v580 = vunpack.c.l.b16 %v160
  %v581 = vunpack.c.l.b16 %v161
  %v582 = vunpack.c.l.b16 %v162
  %v583 = vunpack.c.l.b16 %v163
  %v584 = vunpack.c.l.b16 %v164
  %v585 = vunpack.c.l.b16 %v165
  %v586 = vunpack.c.l.b16 %v166
  %v587 = vunpack.c.l.b16 %v167
  %v588 = vunpack.c.l.b16 %v168
  %v589 = vunpack.c.l.b16 %v169
  %v590 = vunpack.c.l.b16 %v170
  %v591 = vunpack.c.l.b16 %v171
  %v592 = vunpack.c.l.b16 %v172
  %v593 = vunpack.c.l.b16 %v173
  %v594 = vunpack.c.l.b16 %v174
  %v595 = vunpack.c.l.b16 %v175
  %v596 = vunpack.c.l.b16 %v176
  %v597 = vunpack.c.l.b16 %v177
  %v598 = vunpack.c.l.b16 %v178
  %v599 = vunpack.c.l.b16 %v179
  %v600 = vunpack.c.l.b16 %v180
  %v601 = vunpack.c.l.b16 %v181
  %v602 = vunpack.c.l.b16 %v182
  %v603 = vunpack.c.l.b16 %v183
  %v604 = vunpack.c.l.b16 %v184
  %v605 = vunpack.c.l.b16 %v185
  %v606 = vunpack.c.l.b16 %v186
  %v607 = vunpack.c.l.b16 %v187
  %v608 = vunpack.c.l.b16 %v188
  %v609 = vunpack.c.l.b16 %v189
  %v610 = vunpack.c.l.b16 %v190
  %v611 = vpack.c.b16 %v452, %v451
  %v612 = vpack.c.b16 %v454, %v453
  %v613 = vpack.c.b16 %v456, %v455
  %v614 = vpack.c.b16 %v458, %v457
  %v615 = vpack.c.b16 %v460, %v459
  %v616 = vpack.c.b16 %v462, %v461
  %v617 = vpack.c.b16 %v464, %v463
  %v618 = vpack.c.b16 %v466, %v465
  %v619 = vpack.c.b16 %v468, %v467
  %v620 = vpack.c.b16 %v470, %v469
  %v621 = vpack.c.b16 %v472, %v471
  %v622 = vpack.c.b16 %v474, %v473
  %v623 = vpack.c.b16 %v476, %v475
  %v624 = vpack.c.b16 %v478, %v477
  %v625 = vpack.c.b16 %v480, %v479
  %v626 = vpack.c.b16 %v482, %v481
  %v627 = vpack.c.b16 %v484, %v483
  %v628 = vpack.c.b16 %v486, %v485
  %v629 = vpack.c.b16 %v488, %v487
  %v630 = vpack.c.b16 %v490, %v489
  %v631 = vpack.c.b16 %v492, %v491
  %v632 = vpack.c.b16 %v494, %v493
  %v633 = vpack.c.b16 %v496, %v495
  %v634 = vpack.c.b16 %v498, %v497
  %v635 = vpack.c.b16 %v500, %v499
  %v636 = vpack.c.b16 %v502, %v501
  %v637 = vpack.c.b16 %v504, %v503
  %v638 = vpack.c.b16 %v506, %v505
  %v639 = vpack.c.b16 %v508, %v507
  %v640 = vpack.c.b16 %v510, %v509
  %v641 = vpack.c.b16 %v512, %v511
  %v642 = vpack.c.b16 %v514, %v513
  %v643 = vpack.c.b16 %v516, %v515
  %v644 = vpack.c.b16 %v518, %v517
  %v645 = vpack.c.b16 %v520, %v519
  %v646 = vpack.c.b16 %v522, %v521
  %v647 = vpack.c.b16 %v524, %v523
  %v648 = vpack.c.b16 %v526, %v525
  %v649 = vpack.c.b16 %v528, %v527
  %v650 = vpack.c.b16 %v530, %v529
  %v651 = vpack.c.b16 %v532, %v531
  %v652 = vpack.c.b16 %v534, %v533
  %v653 = vpack.c.b16 %v536, %v535
  %v654 = vpack.c.b16 %v538, %v537
  %v655 = vpack.c.b16 %v540, %v539
  %v656 = vpack.c.b16 %v542, %v541
  %v657 = vpack.c.b16 %v544, %v543
  %v658 = vpack.c.b16 %v546, %v545
  %v659 = vpack.c.b16 %v548, %v547
  %v660 = vpack.c.b16 %v550, %v549
  %v661 = vpack.c.b16 %v552, %v551
  %v662 = vpack.c.b16 %v554, %v553
  %v663 = vpack.c.b16 %v556, %v555
  %v664 = vpack.c.b16 %v558, %v557
  %v665 = vpack.c.b16 %v560, %v559
  %v666 = vpack.c.b16 %v562, %v561
  %v667 = vpack.c.b16 %v564, %v563
  %v668 = vpack.c.b16 %v566, %v565
  %v669 = vpack.c.b16 %v568, %v567
  %v670 = vpack.c.b16 %v570, %v569
  %v671 = vpack.c.b16 %v572, %v571
  %v672 = vpack.c.b16 %v574, %v573
  %v673 = vpack.c.b16 %v576, %v575
  %v674 = vpack.c.b16 %v578, %v577
  %v675 = vpack.c.b16 %v580, %v579
  %v676 = vpack.c.b16 %v582, %v581
  %v677 = vpack.c.b16 %v584, %v583
  %v678 = vpack.c.b16 %v586, %v585
  %v679 = vpack.c.b16 %v588, %v587
  %v680 = vpack.c.b16 %v590, %v589
  %v681 = vpack.c.b16 %v592, %v591
  %v682 = vpack.c.b16 %v594, %v593
  %v683 = vpack.c.b16 %v596, %v595
  %v684 = vpack.c.b16 %v598, %v597
  %v685 = vpack.c.b16 %v600, %v599
  %v686 = vpack.c.b16 %v602, %v601
  %v687 = vpack.c.b16 %v604, %v603
  %v688 = vpack.c.b16 %v606, %v605
  %v689 = vpack.c.b16 %v608, %v607
  %v690 = vpack.c.b16 %v610, %v609
  %771 = vmatpush.bf16.msra.mxu0 %v618
  %772 = vmatpush.bf16.msra.mxu0 %v617
  %773 = vmatpush.bf16.msra.mxu0 %v616
  %774 = vmatpush.bf16.msra.mxu0 %v615
  %775 = vmatpush.bf16.msra.mxu0 %v614
  %776 = vmatpush.bf16.msra.mxu0 %v613
  %777 = vmatpush.bf16.msra.mxu0 %v612
  %778 = vmatpush.bf16.msra.mxu0 %v611
  %779 = vmatmul.bf16.gmra.mxu0 %v251
  %v780 = vpop.f32.mrf.mxu0
  %v781 = vadd.f32 0.0, %v780
  %v782 = vpop.f32.mrf.mxu0
  %v783 = vadd.f32 0.0, %v782
  %784 = vmatmul.bf16.gmra.mxu0 %v261
  %v785 = vpop.f32.mrf.mxu0
  %v786 = vadd.f32 0.0, %v785
  %v787 = vpop.f32.mrf.mxu0
  %v788 = vadd.f32 0.0, %v787
  %789 = vdwg.mxu0
  %790 = vmatpush.bf16.msra.mxu0 %v626
  %791 = vmatpush.bf16.msra.mxu0 %v625
  %792 = vmatpush.bf16.msra.mxu0 %v624
  %793 = vmatpush.bf16.msra.mxu0 %v623
  %794 = vmatpush.bf16.msra.mxu0 %v622
  %795 = vmatpush.bf16.msra.mxu0 %v621
  %796 = vmatpush.bf16.msra.mxu0 %v620
  %797 = vmatpush.bf16.msra.mxu0 %v619
  %798 = vmatmul.bf16.gmra.mxu0 %v252
  %v799 = vpop.f32.mrf.mxu0
  %v800 = vadd.f32 %v781, %v799
  %v801 = vpop.f32.mrf.mxu0
  %v802 = vadd.f32 %v783, %v801
  %803 = vmatmul.bf16.gmra.mxu0 %v262
  %v804 = vpop.f32.mrf.mxu0
  %v805 = vadd.f32 %v786, %v804
  %v806 = vpop.f32.mrf.mxu0
  %v807 = vadd.f32 %v788, %v806
  %808 = vdwg.mxu0
  %809 = vmatpush.bf16.msra.mxu0 %v634
  %810 = vmatpush.bf16.msra.mxu0 %v633
  %811 = vmatpush.bf16.msra.mxu0 %v632
  %812 = vmatpush.bf16.msra.mxu0 %v631
  %813 = vmatpush.bf16.msra.mxu0 %v630
  %814 = vmatpush.bf16.msra.mxu0 %v629
  %815 = vmatpush.bf16.msra.mxu0 %v628
  %816 = vmatpush.bf16.msra.mxu0 %v627
  %817 = vmatmul.bf16.gmra.mxu0 %v253
  %v818 = vpop.f32.mrf.mxu0
  %v819 = vadd.f32 %v800, %v818
  %v820 = vpop.f32.mrf.mxu0
  %v821 = vadd.f32 %v802, %v820
  %822 = vmatmul.bf16.gmra.mxu0 %v263
  %v823 = vpop.f32.mrf.mxu0
  %v824 = vadd.f32 %v805, %v823
  %v825 = vpop.f32.mrf.mxu0
  %v826 = vadd.f32 %v807, %v825
  %827 = vdwg.mxu0
  %828 = vmatpush.bf16.msra.mxu0 %v642
  %829 = vmatpush.bf16.msra.mxu0 %v641
  %830 = vmatpush.bf16.msra.mxu0 %v640
  %831 = vmatpush.bf16.msra.mxu0 %v639
  %832 = vmatpush.bf16.msra.mxu0 %v638
  %833 = vmatpush.bf16.msra.mxu0 %v637
  %834 = vmatpush.bf16.msra.mxu0 %v636
  %835 = vmatpush.bf16.msra.mxu0 %v635
  %836 = vmatmul.bf16.gmra.mxu0 %v254
  %v837 = vpop.f32.mrf.mxu0
  %v838 = vadd.f32 %v819, %v837
  %v839 = vpop.f32.mrf.mxu0
  %v840 = vadd.f32 %v821, %v839
  %841 = vmatmul.bf16.gmra.mxu0 %v264
  %v842 = vpop.f32.mrf.mxu0
  %v843 = vadd.f32 %v824, %v842
  %v844 = vpop.f32.mrf.mxu0
  %v845 = vadd.f32 %v826, %v844
  %846 = vdwg.mxu0
  %847 = vmatpush.bf16.msra.mxu0 %v650
  %848 = vmatpush.bf16.msra.mxu0 %v649
  %849 = vmatpush.bf16.msra.mxu0 %v648
  %850 = vmatpush.bf16.msra.mxu0 %v647
  %851 = vmatpush.bf16.msra.mxu0 %v646
  %852 = vmatpush.bf16.msra.mxu0 %v645
  %853 = vmatpush.bf16.msra.mxu0 %v644
  %854 = vmatpush.bf16.msra.mxu0 %v643
  %855 = vmatmul.bf16.gmra.mxu0 %v255
  %v856 = vpop.f32.mrf.mxu0
  %v857 = vadd.f32 %v838, %v856
  %v858 = vpop.f32.mrf.mxu0
  %v859 = vadd.f32 %v840, %v858
  %860 = vmatmul.bf16.gmra.mxu0 %v265
  %v861 = vpop.f32.mrf.mxu0
  %v862 = vadd.f32 %v843, %v861
  %v863 = vpop.f32.mrf.mxu0
  %v864 = vadd.f32 %v845, %v863
  %865 = vdwg.mxu0
  %866 = vmatpush.bf16.msra.mxu0 %v658
  %867 = vmatpush.bf16.msra.mxu0 %v657
  %868 = vmatpush.bf16.msra.mxu0 %v656
  %869 = vmatpush.bf16.msra.mxu0 %v655
  %870 = vmatpush.bf16.msra.mxu0 %v654
  %871 = vmatpush.bf16.msra.mxu0 %v653
  %872 = vmatpush.bf16.msra.mxu0 %v652
  %873 = vmatpush.bf16.msra.mxu0 %v651
  %874 = vmatmul.bf16.gmra.mxu0 %v256
  %v875 = vpop.f32.mrf.mxu0
  %v876 = vadd.f32 %v857, %v875
  %v877 = vpop.f32.mrf.mxu0
  %v878 = vadd.f32 %v859, %v877
  %879 = vmatmul.bf16.gmra.mxu0 %v266
  %v880 = vpop.f32.mrf.mxu0
  %v881 = vadd.f32 %v862, %v880
  %v882 = vpop.f32.mrf.mxu0
  %v883 = vadd.f32 %v864, %v882
  %884 = vdwg.mxu0
  %885 = vmatpush.bf16.msra.mxu0 %v666
  %886 = vmatpush.bf16.msra.mxu0 %v665
  %887 = vmatpush.bf16.msra.mxu0 %v664
  %888 = vmatpush.bf16.msra.mxu0 %v663
  %889 = vmatpush.bf16.msra.mxu0 %v662
  %890 = vmatpush.bf16.msra.mxu0 %v661
  %891 = vmatpush.bf16.msra.mxu0 %v660
  %892 = vmatpush.bf16.msra.mxu0 %v659
  %893 = vmatmul.bf16.gmra.mxu0 %v257
  %v894 = vpop.f32.mrf.mxu0
  %v895 = vadd.f32 %v876, %v894
  %v896 = vpop.f32.mrf.mxu0
  %v897 = vadd.f32 %v878, %v896
  %898 = vmatmul.bf16.gmra.mxu0 %v267
  %v899 = vpop.f32.mrf.mxu0
  %v900 = vadd.f32 %v881, %v899
  %v901 = vpop.f32.mrf.mxu0
  %v902 = vadd.f32 %v883, %v901
  %903 = vdwg.mxu0
  %904 = vmatpush.bf16.msra.mxu0 %v674
  %905 = vmatpush.bf16.msra.mxu0 %v673
  %906 = vmatpush.bf16.msra.mxu0 %v672
  %907 = vmatpush.bf16.msra.mxu0 %v671
  %908 = vmatpush.bf16.msra.mxu0 %v670
  %909 = vmatpush.bf16.msra.mxu0 %v669
  %910 = vmatpush.bf16.msra.mxu0 %v668
  %911 = vmatpush.bf16.msra.mxu0 %v667
  %912 = vmatmul.bf16.gmra.mxu0 %v258
  %v913 = vpop.f32.mrf.mxu0
  %v914 = vadd.f32 %v895, %v913
  %v915 = vpop.f32.mrf.mxu0
  %v916 = vadd.f32 %v897, %v915
  %917 = vmatmul.bf16.gmra.mxu0 %v268
  %v918 = vpop.f32.mrf.mxu0
  %v919 = vadd.f32 %v900, %v918
  %v920 = vpop.f32.mrf.mxu0
  %v921 = vadd.f32 %v902, %v920
  %922 = vdwg.mxu0
  %923 = vmatpush.bf16.msra.mxu0 %v682
  %924 = vmatpush.bf16.msra.mxu0 %v681
  %925 = vmatpush.bf16.msra.mxu0 %v680
  %926 = vmatpush.bf16.msra.mxu0 %v679
  %927 = vmatpush.bf16.msra.mxu0 %v678
  %928 = vmatpush.bf16.msra.mxu0 %v677
  %929 = vmatpush.bf16.msra.mxu0 %v676
  %930 = vmatpush.bf16.msra.mxu0 %v675
  %931 = vmatmul.bf16.gmra.mxu0 %v259
  %v932 = vpop.f32.mrf.mxu0
  %v933 = vadd.f32 %v914, %v932
  %v934 = vpop.f32.mrf.mxu0
  %v935 = vadd.f32 %v916, %v934
  %936 = vmatmul.bf16.gmra.mxu0 %v269
  %v937 = vpop.f32.mrf.mxu0
  %v938 = vadd.f32 %v919, %v937
  %v939 = vpop.f32.mrf.mxu0
  %v940 = vadd.f32 %v921, %v939
  %941 = vdwg.mxu0
  %942 = vmatpush.bf16.msra.mxu0 %v690
  %943 = vmatpush.bf16.msra.mxu0 %v689
  %944 = vmatpush.bf16.msra.mxu0 %v688
  %945 = vmatpush.bf16.msra.mxu0 %v687
  %946 = vmatpush.bf16.msra.mxu0 %v686
  %947 = vmatpush.bf16.msra.mxu0 %v685
  %948 = vmatpush.bf16.msra.mxu0 %v684
  %949 = vmatpush.bf16.msra.mxu0 %v683
  %950 = vmatmul.bf16.gmra.mxu0 %v260
  %v951 = vpop.f32.mrf.mxu0
  %v952 = vadd.f32 %v933, %v951
  %v953 = vpop.f32.mrf.mxu0
  %v954 = vadd.f32 %v935, %v953
  %955 = vmatmul.bf16.gmra.mxu0 %v270
  %v956 = vpop.f32.mrf.mxu0
  %v957 = vadd.f32 %v938, %v956
  %v958 = vpop.f32.mrf.mxu0
  %v959 = vadd.f32 %v940, %v958
  %960 = vdwg.mxu0
  %v961 = vpack.c.bf16 %v952, %v952
  %v962 = vpack.c.bf16 %v954, %v954
  %v963 = vpack.c.bf16 %v957, %v957
  %v964 = vpack.c.bf16 %v959, %v959
  %965 = vst [vmem:[%s2] sm:$0xf] %v961
  %966 = vst [vmem:[%s2 + $0x4] sm:$0xf] %v962
  %967 = vst [vmem:[%s2 + $0x8] sm:$0xf] %v963
  %968 = vst [vmem:[%s2 + $0xc] sm:$0xf] %v964
  // Predicated region
  $region10: #{espcnet_forward.27} parent=0 // pred_check
    _
  $region11: #{espcnet_forward.27} parent=0 // pred_check_branch
    %970 = sbr.rel (0) target = $region13
  $region12: #{espcnet_forward.27} parent=0 // pred_region
    _
  $region13: #{espcnet_forward.27} parent=0 // pred_fallthru
    _
  // Predicated region
  $region14: #{espcnet_forward.27} parent=0 // pred_check
    _
  $region15: #{espcnet_forward.27} parent=0 // pred_check_branch
    %972 = sbr.rel (0) target = $region17
  $region16: #{espcnet_forward.27} parent=0 // pred_region
    _
  $region17: #{espcnet_forward.27} parent=0 // pred_fallthru
    _

// kernel: espcnet_forward.29
$region0: #{espcnet_forward.29}
  #allocation0 [shape = 'u32[]', space=smem, size = 0x4, offset = 0x4, fixed_abs, tag = 'smem constant byte address 0x4 - core index']
  #allocation1 [shape = 'u32[72,128]{1,0:T(1,128)}', space=vmem, size = 0x9000, scoped, tag = 'internal scratch']
  %s0 = inlined_call_operand.vmem [shape: bf16[32,128], index: 0, kind: input, shape index: {}]
  %s1 = inlined_call_operand.vmem [shape: bf16[128,128], index: 1, kind: input, shape index: {}]
  %s2 = inlined_call_operand.vmem [shape: bf16[32,128], index: 2, kind: output, shape index: {}]
  %s3 = sld [smem:[#allocation0]]
  $region18: #{espcnet_forward.29} parent=0
    _
  %s5 = ssub.s32 1, %s3
  %s6 = scalar_select 0, %s5, %s3
  // Predicated region
  $region2: #{espcnet_forward.29} parent=0 // pred_check
    _
  $region3: #{espcnet_forward.29} parent=0 // pred_check_branch
    %8 = sbr.rel (0) target = $region5
  $region4: #{espcnet_forward.29} parent=0 // pred_region
    _
  $region5: #{espcnet_forward.29} parent=0 // pred_fallthru
    _
  // Predicated region
  $region6: #{espcnet_forward.29} parent=0 // pred_check
    _
  $region7: #{espcnet_forward.29} parent=0 // pred_check_branch
    %10 = sbr.rel (0) target = $region9
  $region8: #{espcnet_forward.29} parent=0 // pred_region
    _
  $region9: #{espcnet_forward.29} parent=0 // pred_fallthru
    _
  %v11 = vld [vmem:[%s0] sm:$0xf]
  %v12 = vld [vmem:[%s0 + $0x4] sm:$0xf]
  %v13 = vld [vmem:[%s0 + $0x8] sm:$0xf]
  %v14 = vld [vmem:[%s0 + $0xc] sm:$0xf]
  %v15 = vld [vmem:[%s1] sm:$0xf]
  %v16 = vld [vmem:[%s1 + $0x4] sm:$0xf]
  %v17 = vld [vmem:[%s1 + $0x8] sm:$0xf]
  %v18 = vld [vmem:[%s1 + $0xc] sm:$0xf]
  %v19 = vld [vmem:[%s1 + $0x10] sm:$0xf]
  %v20 = vld [vmem:[%s1 + $0x14] sm:$0xf]
  %v21 = vld [vmem:[%s1 + $0x18] sm:$0xf]
  %v22 = vld [vmem:[%s1 + $0x1c] sm:$0xf]
  %v23 = vld [vmem:[%s1 + $0x20] sm:$0xf]
  %v24 = vld [vmem:[%s1 + $0x24] sm:$0xf]
  %v25 = vld [vmem:[%s1 + $0x28] sm:$0xf]
  %v26 = vld [vmem:[%s1 + $0x2c] sm:$0xf]
  %v27 = vld [vmem:[%s1 + $0x30] sm:$0xf]
  %v28 = vld [vmem:[%s1 + $0x34] sm:$0xf]
  %v29 = vld [vmem:[%s1 + $0x38] sm:$0xf]
  %v30 = vld [vmem:[%s1 + $0x3c] sm:$0xf]
  %v35 = vunpack.c.l.b16 %v11
  %v36 = vunpack.c.l.b16 %v12
  %v37 = vunpack.c.l.b16 %v13
  %v38 = vunpack.c.l.b16 %v14
  %v39 = vpack.c.b16 %v36, %v35
  %v40 = vpack.c.b16 %v38, %v37
  %v59 = vunpack.c.l.b16 %v15
  %v60 = vunpack.c.l.b16 %v16
  %v61 = vunpack.c.l.b16 %v17
  %v62 = vunpack.c.l.b16 %v18
  %v63 = vunpack.c.l.b16 %v19
  %v64 = vunpack.c.l.b16 %v20
  %v65 = vunpack.c.l.b16 %v21
  %v66 = vunpack.c.l.b16 %v22
  %v67 = vunpack.c.l.b16 %v23
  %v68 = vunpack.c.l.b16 %v24
  %v69 = vunpack.c.l.b16 %v25
  %v70 = vunpack.c.l.b16 %v26
  %v71 = vunpack.c.l.b16 %v27
  %v72 = vunpack.c.l.b16 %v28
  %v73 = vunpack.c.l.b16 %v29
  %v74 = vunpack.c.l.b16 %v30
  %v75 = vpack.c.b16 %v60, %v59
  %v76 = vpack.c.b16 %v62, %v61
  %v77 = vpack.c.b16 %v64, %v63
  %v78 = vpack.c.b16 %v66, %v65
  %v79 = vpack.c.b16 %v68, %v67
  %v80 = vpack.c.b16 %v70, %v69
  %v81 = vpack.c.b16 %v72, %v71
  %v82 = vpack.c.b16 %v74, %v73
  %91 = vmatpush.bf16.msra.mxu0 %v82
  %92 = vmatpush.bf16.msra.mxu0 %v81
  %93 = vmatpush.bf16.msra.mxu0 %v80
  %94 = vmatpush.bf16.msra.mxu0 %v79
  %95 = vmatpush.bf16.msra.mxu0 %v78
  %96 = vmatpush.bf16.msra.mxu0 %v77
  %97 = vmatpush.bf16.msra.mxu0 %v76
  %98 = vmatpush.bf16.msra.mxu0 %v75
  %99 = vmatmul.bf16.gmra.mxu0 %v39
  %v100 = vpop.f32.mrf.mxu0
  %v101 = vadd.f32 0.0, %v100
  %v102 = vpop.f32.mrf.mxu0
  %v103 = vadd.f32 0.0, %v102
  %104 = vmatmul.bf16.gmra.mxu0 %v40
  %v105 = vpop.f32.mrf.mxu0
  %v106 = vadd.f32 0.0, %v105
  %v107 = vpop.f32.mrf.mxu0
  %v108 = vadd.f32 0.0, %v107
  %109 = vdwg.mxu0
  %v110 = vpack.c.bf16 %v101, %v101
  %v111 = vpack.c.bf16 %v103, %v103
  %v112 = vpack.c.bf16 %v106, %v106
  %v113 = vpack.c.bf16 %v108, %v108
  %114 = vst [vmem:[%s2] sm:$0xf] %v110
  %115 = vst [vmem:[%s2 + $0x4] sm:$0xf] %v111
  %116 = vst [vmem:[%s2 + $0x8] sm:$0xf] %v112
  %117 = vst [vmem:[%s2 + $0xc] sm:$0xf] %v113
  // Predicated region
  $region10: #{espcnet_forward.29} parent=0 // pred_check
    _
  $region11: #{espcnet_forward.29} parent=0 // pred_check_branch
    %119 = sbr.rel (0) target = $region13
  $region12: #{espcnet_forward.29} parent=0 // pred_region
    _
  $region13: #{espcnet_forward.29} parent=0 // pred_fallthru
    _
  // Predicated region
  $region14: #{espcnet_forward.29} parent=0 // pred_check
    _
  $region15: #{espcnet_forward.29} parent=0 // pred_check_branch
    %121 = sbr.rel (0) target = $region17
  $region16: #{espcnet_forward.29} parent=0 // pred_region
    _
  $region17: #{espcnet_forward.29} parent=0 // pred_fallthru
    _

// kernel: espcnet_forward.28
$region0: #{espcnet_forward.28}
  #allocation0 [shape = 'u32[]', space=smem, size = 0x4, offset = 0x4, fixed_abs, tag = 'smem constant byte address 0x4 - core index']
  #allocation1 [shape = 'u32[72,128]{1,0:T(1,128)}', space=vmem, size = 0x9000, scoped, tag = 'internal scratch']
  #allocation2 [shape = 'f32[32,128]{1,0:T(8,128)}', space=vmem, size = 0x4000, scoped, tag = 'scratch operand']
  %s0 = inlined_call_operand.vmem [shape: bf16[5,32,256], index: 0, kind: input, shape index: {}]
  %s1 = inlined_call_operand.vmem [shape: bf16[5,256,128], index: 1, kind: input, shape index: {}]
  %s2 = inlined_call_operand.vmem [shape: f32[3,128], index: 2, kind: input, shape index: {}]
  %s3 = inlined_call_operand.vmem [shape: bf16[32,128], index: 3, kind: output, shape index: {}]
  %s4 = sld [smem:[#allocation0]]
  $region53: #{espcnet_forward.28} parent=0
    _
  %s6 = ssub.s32 1, %s4
  %s7 = scalar_select 0, %s6, %s4
  loop: start=0, step=1, limit=7
  $region2: #{espcnet_forward.28} parent=0 // loop_pre_header
    _
  $region3: #{espcnet_forward.28} parent=0 // loop_header
    %s9 = sphi 0, %s13
    %p10 = scmp.ge.s32.totalorder %s9, 7
    %s16 = sphi 0, %s28
    %s17 = sphi 0, %s24
    %s18 = sphi 0, %s16
    %s19 = sphi 0, %s17
    %s20 = sphi 0, %s18
    %s21 = sphi 0, %s19
    %s33 = sphi 0, %s35
    %s36 = sphi 0, %s33
    %s37 = sphi 0, %s36
    %s53 = sphi 0, %s37
    %s59 = sphi 0, %s61
    %s62 = sphi 0, %s59
    %s63 = sphi 0, %s62
    %s79 = sphi 0, %s63
    %s83 = sphi 0, %s83
    %s85 = sphi 0, %s83
    %s86 = sphi 0, %s85
    %s100 = sphi 0, %s86
    %s106 = sphi 0, %s108
    %s109 = sphi 0, %s106
    %s110 = sphi 0, %s109
    %s126 = sphi 0, %s110
  $region4: #{espcnet_forward.28} parent=0 // loop_header_branch
    %12 = sbr.rel (%p10) target = $region8
  $region5: #{espcnet_forward.28} parent=0 // loop_body
    %s14 = ssub.s32 %s9, 1
    %s15 = ssub.s32 %s9, 2
    %s22 = sadd.s32 1, %s17
    %p23 = scmp.ge.s32.totalorder %s22, 5
    %s24 = scalar_select %p23, 0, %s22
    %s25 = sadd.s32 1, %s16
    %s26 = scalar_select %p23, %s25, %s16
    %p27 = scmp.ge.s32.totalorder %s26, 1
    %s28 = scalar_select %p27, 0, %s26
    %s29 = ssub.s32 %s17, %s24
    %s30 = ssub.s32 %s16, %s28
    %s31 = sor.u32 %s29, %s30
    %p32 = scmp.eq.s32.totalorder %s31, 0
    %s34 = sadd.s32 %s33, 1
    %s35 = scalar_select %p32, %s33, %s34
    %p38 = pneg %p32
    %p39 = scmp.eq.s32.totalorder %s9, 4
    %p40 = por %p38, %p39
    %p41 = scmp.ne.s32.totalorder %s33, %s36
    %p42 = scmp.eq.s32.totalorder %s9, 0
    %p43 = por %p41, %p42
    %p44 = scmp.ne.s32.totalorder %s33, %s36
    %p45 = scmp.eq.s32.totalorder %s14, 4
    %p46 = por %p44, %p45
    %p47 = scmp.ne.s32.totalorder %s36, %s37
    %p48 = scmp.eq.s32.totalorder %s14, 0
    %p49 = por %p47, %p48
    %p50 = scmp.ne.s32.totalorder %s36, %s37
    %p51 = scmp.eq.s32.totalorder %s15, 4
    %p52 = por %p50, %p51
    %p54 = scmp.ne.s32.totalorder %s37, %s53
    %p55 = scmp.eq.s32.totalorder %s15, 0
    %p56 = por %p54, %p55
    %s57 = ssub.s32 %s17, %s24
    %p58 = scmp.eq.s32.totalorder %s57, 0
    %s60 = sadd.s32 %s59, 1
    %s61 = scalar_select %p58, %s59, %s60
    %p64 = pneg %p58
    %p65 = scmp.eq.s32.totalorder %s9, 4
    %p66 = por %p64, %p65
    %p67 = scmp.ne.s32.totalorder %s59, %s62
    %p68 = scmp.eq.s32.totalorder %s9, 0
    %p69 = por %p67, %p68
    %p70 = scmp.ne.s32.totalorder %s59, %s62
    %p71 = scmp.eq.s32.totalorder %s14, 4
    %p72 = por %p70, %p71
    %p73 = scmp.ne.s32.totalorder %s62, %s63
    %p74 = scmp.eq.s32.totalorder %s14, 0
    %p75 = por %p73, %p74
    %p76 = scmp.ne.s32.totalorder %s62, %s63
    %p77 = scmp.eq.s32.totalorder %s15, 4
    %p78 = por %p76, %p77
    %p80 = scmp.ne.s32.totalorder %s63, %s79
    %p81 = scmp.eq.s32.totalorder %s15, 0
    %p82 = por %p80, %p81
    %s84 = sadd.s32 %s83, 1
    %p87 = scmp.eq.s32.totalorder %s9, 4
    %p88 = scmp.ne.s32.totalorder %s83, %s85
    %p89 = scmp.eq.s32.totalorder %s9, 0
    %p90 = por %p88, %p89
    %p91 = scmp.ne.s32.totalorder %s83, %s85
    %p92 = scmp.eq.s32.totalorder %s14, 4
    %p93 = por %p91, %p92
    %p94 = scmp.ne.s32.totalorder %s85, %s86
    %p95 = scmp.eq.s32.totalorder %s14, 0
    %p96 = por %p94, %p95
    %p97 = scmp.ne.s32.totalorder %s85, %s86
    %p98 = scmp.eq.s32.totalorder %s15, 4
    %p99 = por %p97, %p98
    %p101 = scmp.ne.s32.totalorder %s86, %s100
    %p102 = scmp.eq.s32.totalorder %s15, 0
    %p103 = por %p101, %p102
    %s104 = ssub.s32 %s16, %s28
    %p105 = scmp.eq.s32.totalorder %s104, 0
    %s107 = sadd.s32 %s106, 1
    %s108 = scalar_select %p105, %s106, %s107
    %p111 = pneg %p105
    %p112 = scmp.eq.s32.totalorder %s9, 4
    %p113 = por %p111, %p112
    %p114 = scmp.ne.s32.totalorder %s106, %s109
    %p115 = scmp.eq.s32.totalorder %s9, 0
    %p116 = por %p114, %p115
    %p117 = scmp.ne.s32.totalorder %s106, %s109
    %p118 = scmp.eq.s32.totalorder %s14, 4
    %p119 = por %p117, %p118
    %p120 = scmp.ne.s32.totalorder %s109, %s110
    %p121 = scmp.eq.s32.totalorder %s14, 0
    %p122 = por %p120, %p121
    %p123 = scmp.ne.s32.totalorder %s109, %s110
    %p124 = scmp.eq.s32.totalorder %s15, 4
    %p125 = por %p123, %p124
    %p127 = scmp.ne.s32.totalorder %s110, %s126
    %p128 = scmp.eq.s32.totalorder %s15, 0
    %p129 = por %p127, %p128
    %p130 = scmp.le.s32.totalorder 1, %s9
    %p131 = scmp.lt.s32.totalorder %s9, 6
    %p132 = pnand %p130, %p131
    %p133 = pneg %p132
    // Predicated region
    $region9: #{espcnet_forward.28} parent=5 // pred_check
      _
    $region10: #{espcnet_forward.28} parent=5 // pred_check_branch
      %135 = sbr.rel (%p132) target = $region12
    $region11: #{espcnet_forward.28} parent=5 // pred_region
      %s136 = ssub.s32 %s9, 1
      // Predicated region
      $region13: #{espcnet_forward.28} parent=11 // pred_check
        %p137 = pneg %p96
      $region14: #{espcnet_forward.28} parent=11 // pred_check_branch
        %139 = sbr.rel (%p137) target = $region16
      $region15: #{espcnet_forward.28} parent=11 // pred_region
        _
      $region16: #{espcnet_forward.28} parent=11 // pred_fallthru
        _
    $region12: #{espcnet_forward.28} parent=5 // pred_fallthru
      _
    %p140 = scmp.lt.s32.totalorder %s9, 5
    // Predicated region
    $region17: #{espcnet_forward.28} parent=5 // pred_check
      %p141 = pneg %p140
    $region18: #{espcnet_forward.28} parent=5 // pred_check_branch
      %143 = sbr.rel (%p141) target = $region20
    $region19: #{espcnet_forward.28} parent=5 // pred_region
      // Predicated region
      $region21: #{espcnet_forward.28} parent=19 // pred_check
        %p144 = pneg %p43
      $region22: #{espcnet_forward.28} parent=19 // pred_check_branch
        %146 = sbr.rel (%p144) target = $region24
      $region23: #{espcnet_forward.28} parent=19 // pred_region
        %s147 = smul.u32 4, %s16
        %p148 = scmp.lt.s32.totalorder %s17, 4
        %s149 = scalar_select %p148, %s17, 4
        %p150 = scmp.lt.s32.totalorder %s147, 3
        %s151 = scalar_select %p150, %s147, 3
        %s152 = smul.addr %s151, 2
        %s153 = smul.addr %s149, 8
        %s154 = sadd.s32 %s152, %s153
        %s155 = smul.addr %s154, 4
        %s156 = scalar_lea.vmem %s0, %s155
        %s157 = smul.u32 4, %s16
      $region24: #{espcnet_forward.28} parent=19 // pred_fallthru
        _
      // Predicated region
      $region25: #{espcnet_forward.28} parent=19 // pred_check
        %p158 = pneg %p69
      $region26: #{espcnet_forward.28} parent=19 // pred_check_branch
        %160 = sbr.rel (%p158) target = $region28
      $region27: #{espcnet_forward.28} parent=19 // pred_region
        %p161 = scmp.lt.s32.totalorder %s17, 4
        %s162 = scalar_select %p161, %s17, 4
        %s163 = smul.addr %s162, 32
        %s164 = smul.addr %s163, 4
        %s165 = scalar_lea.vmem %s1, %s164
      $region28: #{espcnet_forward.28} parent=19 // pred_fallthru
        _
    $region20: #{espcnet_forward.28} parent=5 // pred_fallthru
      _
    %p166 = scmp.le.s32.totalorder 1, %s9
    %p167 = scmp.lt.s32.totalorder %s9, 6
    %p168 = pnand %p166, %p167
    %p169 = pneg %p168
    // Predicated region
    $region29: #{espcnet_forward.28} parent=5 // pred_check
      _
    $region30: #{espcnet_forward.28} parent=5 // pred_check_branch
      %171 = sbr.rel (%p168) target = $region32
    $region31: #{espcnet_forward.28} parent=5 // pred_region
      %s172 = ssub.s32 %s9, 1
      %s173 = smul.u32 4, %s18
      %p174 = scmp.lt.s32.totalorder %s19, 4
      %s175 = scalar_select %p174, %s19, 4
      %p176 = scmp.lt.s32.totalorder %s173, 3
      %s177 = scalar_select %p176, %s173, 3
      %s178 = smul.addr %s177, 2
      %s179 = smul.addr %s175, 8
      %s180 = sadd.s32 %s178, %s179
      %s181 = smul.addr %s180, 4
      %s182 = scalar_lea.vmem %s0, %s181
      %p183 = pneg %p49
      %p184 = pneg %p46
      %p185 = scmp.lt.s32.totalorder %s19, 4
      %s186 = scalar_select %p185, %s19, 4
      %s187 = smul.addr %s186, 32
      %s188 = smul.addr %s187, 4
      %s189 = scalar_lea.vmem %s1, %s188
      %p190 = pneg %p75
      %p191 = pneg %p72
      %p192 = pneg %p96
      %p193 = pneg %p93
      %p194 = pneg %p122
      %p195 = pneg %p119
      %s196 = smul.u32 4, %s18
      %p197 = scmp.lt.s32.totalorder %s196, 3
      %s198 = scalar_select %p197, %s196, 3
      %s199 = smul.addr %s198, 4
      %s200 = scalar_lea.vmem %s3, %s199
      %s201 = smul.u32 4, %s18
      %p202 = scmp.lt.s32.totalorder %s19, 4
      %s203 = scalar_select %p202, %s19, 4
      %p204 = scmp.lt.s32.totalorder %s201, 3
      %s205 = scalar_select %p204, %s201, 3
      %s206 = smul.addr %s205, 2
      %s207 = smul.addr %s203, 8
      %s208 = sadd.s32 %s206, %s207
      %s209 = smul.addr %s208, 4
      %s210 = scalar_lea.vmem %s0, %s209
      %s211 = smul.u32 4, %s18
      %p212 = scmp.lt.s32.totalorder %s19, 4
      %s213 = scalar_select %p212, %s19, 4
      %s214 = smul.addr %s213, 32
      %s215 = smul.addr %s214, 4
      %s216 = scalar_lea.vmem %s1, %s215
      %s217 = smul.u32 4, %s18
      %p218 = scmp.lt.s32.totalorder %s217, 3
      %s219 = scalar_select %p218, %s217, 3
      %s220 = smul.addr %s219, 4
      %s221 = scalar_lea.vmem %s3, %s220
      %s222 = smul.u32 4, %s18
      %p223 = scmp.eq.s32.totalorder %s19, 0
      // Predicated region
      $region33: #{espcnet_forward.28} parent=31 // pred_check
        %p224 = pneg %p223
      $region34: #{espcnet_forward.28} parent=31 // pred_check_branch
        %226 = sbr.rel (%p224) target = $region36
      $region35: #{espcnet_forward.28} parent=31 // pred_region
        %227 = vst [vmem:[#allocation2] sm:$0xff] 0.0
        %228 = vst [vmem:[#allocation2 + $0x8] sm:$0xff] 0.0
        %229 = vst [vmem:[#allocation2 + $0x10] sm:$0xff] 0.0
        %230 = vst [vmem:[#allocation2 + $0x18] sm:$0xff] 0.0
      $region36: #{espcnet_forward.28} parent=31 // pred_fallthru
        _
      %v231 = vld [vmem:[#allocation2] sm:$0xff]
      %v232 = vld [vmem:[#allocation2 + $0x8] sm:$0xff]
      %v233 = vld [vmem:[#allocation2 + $0x10] sm:$0xff]
      %v234 = vld [vmem:[#allocation2 + $0x18] sm:$0xff]
      %v235 = vld [vmem:[%s210] sm:$0xff]
      %v236 = vld [vmem:[%s210 + $0x8] sm:$0xff]
      %v237 = vld [vmem:[%s210 + $0x10] sm:$0xff]
      %v238 = vld [vmem:[%s210 + $0x18] sm:$0xff]
      %v239 = vld [vmem:[%s216] sm:$0xf]
      %v240 = vld [vmem:[%s216 + $0x4] sm:$0xf]
      %v241 = vld [vmem:[%s216 + $0x8] sm:$0xf]
      %v242 = vld [vmem:[%s216 + $0xc] sm:$0xf]
      %v243 = vld [vmem:[%s216 + $0x10] sm:$0xf]
      %v244 = vld [vmem:[%s216 + $0x14] sm:$0xf]
      %v245 = vld [vmem:[%s216 + $0x18] sm:$0xf]
      %v246 = vld [vmem:[%s216 + $0x1c] sm:$0xf]
      %v247 = vld [vmem:[%s216 + $0x20] sm:$0xf]
      %v248 = vld [vmem:[%s216 + $0x24] sm:$0xf]
      %v249 = vld [vmem:[%s216 + $0x28] sm:$0xf]
      %v250 = vld [vmem:[%s216 + $0x2c] sm:$0xf]
      %v251 = vld [vmem:[%s216 + $0x30] sm:$0xf]
      %v252 = vld [vmem:[%s216 + $0x34] sm:$0xf]
      %v253 = vld [vmem:[%s216 + $0x38] sm:$0xf]
      %v254 = vld [vmem:[%s216 + $0x3c] sm:$0xf]
      %v255 = vld [vmem:[%s216 + $0x40] sm:$0xf]
      %v256 = vld [vmem:[%s216 + $0x44] sm:$0xf]
      %v257 = vld [vmem:[%s216 + $0x48] sm:$0xf]
      %v258 = vld [vmem:[%s216 + $0x4c] sm:$0xf]
      %v259 = vld [vmem:[%s216 + $0x50] sm:$0xf]
      %v260 = vld [vmem:[%s216 + $0x54] sm:$0xf]
      %v261 = vld [vmem:[%s216 + $0x58] sm:$0xf]
      %v262 = vld [vmem:[%s216 + $0x5c] sm:$0xf]
      %v263 = vld [vmem:[%s216 + $0x60] sm:$0xf]
      %v264 = vld [vmem:[%s216 + $0x64] sm:$0xf]
      %v265 = vld [vmem:[%s216 + $0x68] sm:$0xf]
      %v266 = vld [vmem:[%s216 + $0x6c] sm:$0xf]
      %v267 = vld [vmem:[%s216 + $0x70] sm:$0xf]
      %v268 = vld [vmem:[%s216 + $0x74] sm:$0xf]
      %v269 = vld [vmem:[%s216 + $0x78] sm:$0xf]
      %v270 = vld [vmem:[%s216 + $0x7c] sm:$0xf]
      %v275 = vunpack.c.l.b16 %v235
      %v276 = vunpack.c.h.b16 %v235
      %v277 = vunpack.c.l.b16 %v236
      %v278 = vunpack.c.h.b16 %v236
      %v279 = vunpack.c.l.b16 %v237
      %v280 = vunpack.c.h.b16 %v237
      %v281 = vunpack.c.l.b16 %v238
      %v282 = vunpack.c.h.b16 %v238
      %v283 = vpack.c.b16 %v277, %v275
      %v284 = vpack.c.b16 %v278, %v276
      %v285 = vpack.c.b16 %v281, %v279
      %v286 = vpack.c.b16 %v282, %v280
      %v323 = vunpack.c.l.b16 %v239
      %v324 = vunpack.c.l.b16 %v240
      %v325 = vunpack.c.l.b16 %v241
      %v326 = vunpack.c.l.b16 %v242
      %v327 = vunpack.c.l.b16 %v243
      %v328 = vunpack.c.l.b16 %v244
      %v329 = vunpack.c.l.b16 %v245
      %v330 = vunpack.c.l.b16 %v246
      %v331 = vunpack.c.l.b16 %v247
      %v332 = vunpack.c.l.b16 %v248
      %v333 = vunpack.c.l.b16 %v249
      %v334 = vunpack.c.l.b16 %v250
      %v335 = vunpack.c.l.b16 %v251
      %v336 = vunpack.c.l.b16 %v252
      %v337 = vunpack.c.l.b16 %v253
      %v338 = vunpack.c.l.b16 %v254
      %v339 = vunpack.c.l.b16 %v255
      %v340 = vunpack.c.l.b16 %v256
      %v341 = vunpack.c.l.b16 %v257
      %v342 = vunpack.c.l.b16 %v258
      %v343 = vunpack.c.l.b16 %v259
      %v344 = vunpack.c.l.b16 %v260
      %v345 = vunpack.c.l.b16 %v261
      %v346 = vunpack.c.l.b16 %v262
      %v347 = vunpack.c.l.b16 %v263
      %v348 = vunpack.c.l.b16 %v264
      %v349 = vunpack.c.l.b16 %v265
      %v350 = vunpack.c.l.b16 %v266
      %v351 = vunpack.c.l.b16 %v267
      %v352 = vunpack.c.l.b16 %v268
      %v353 = vunpack.c.l.b16 %v269
      %v354 = vunpack.c.l.b16 %v270
      %v355 = vpack.c.b16 %v324, %v323
      %v356 = vpack.c.b16 %v326, %v325
      %v357 = vpack.c.b16 %v328, %v327
      %v358 = vpack.c.b16 %v330, %v329
      %v359 = vpack.c.b16 %v332, %v331
      %v360 = vpack.c.b16 %v334, %v333
      %v361 = vpack.c.b16 %v336, %v335
      %v362 = vpack.c.b16 %v338, %v337
      %v363 = vpack.c.b16 %v340, %v339
      %v364 = vpack.c.b16 %v342, %v341
      %v365 = vpack.c.b16 %v344, %v343
      %v366 = vpack.c.b16 %v346, %v345
      %v367 = vpack.c.b16 %v348, %v347
      %v368 = vpack.c.b16 %v350, %v349
      %v369 = vpack.c.b16 %v352, %v351
      %v370 = vpack.c.b16 %v354, %v353
      %387 = vmatpush.bf16.msra.mxu0 %v362
      %388 = vmatpush.bf16.msra.mxu0 %v361
      %389 = vmatpush.bf16.msra.mxu0 %v360
      %390 = vmatpush.bf16.msra.mxu0 %v359
      %391 = vmatpush.bf16.msra.mxu0 %v358
      %392 = vmatpush.bf16.msra.mxu0 %v357
      %393 = vmatpush.bf16.msra.mxu0 %v356
      %394 = vmatpush.bf16.msra.mxu0 %v355
      %395 = vmatmul.bf16.gmra.mxu0 %v283
      %v396 = vpop.f32.mrf.mxu0
      %v397 = vadd.f32 0.0, %v396
      %v398 = vpop.f32.mrf.mxu0
      %v399 = vadd.f32 0.0, %v398
      %400 = vmatmul.bf16.gmra.mxu0 %v285
      %v401 = vpop.f32.mrf.mxu0
      %v402 = vadd.f32 0.0, %v401
      %v403 = vpop.f32.mrf.mxu0
      %v404 = vadd.f32 0.0, %v403
      %405 = vdwg.mxu0
      %406 = vmatpush.bf16.msra.mxu0 %v370
      %407 = vmatpush.bf16.msra.mxu0 %v369
      %408 = vmatpush.bf16.msra.mxu0 %v368
      %409 = vmatpush.bf16.msra.mxu0 %v367
      %410 = vmatpush.bf16.msra.mxu0 %v366
      %411 = vmatpush.bf16.msra.mxu0 %v365
      %412 = vmatpush.bf16.msra.mxu0 %v364
      %413 = vmatpush.bf16.msra.mxu0 %v363
      %414 = vmatmul.bf16.gmra.mxu0 %v284
      %v415 = vpop.f32.mrf.mxu0
      %v416 = vadd.f32 %v397, %v415
      %v417 = vpop.f32.mrf.mxu0
      %v418 = vadd.f32 %v399, %v417
      %419 = vmatmul.bf16.gmra.mxu0 %v286
      %v420 = vpop.f32.mrf.mxu0
      %v421 = vadd.f32 %v402, %v420
      %v422 = vpop.f32.mrf.mxu0
      %v423 = vadd.f32 %v404, %v422
      %424 = vdwg.mxu0
      %v425 = vadd.f32 %v231, %v416
      %v426 = vadd.f32 %v232, %v418
      %v427 = vadd.f32 %v233, %v421
      %v428 = vadd.f32 %v234, %v423
      %429 = vst [vmem:[#allocation2] sm:$0xff] %v425
      %430 = vst [vmem:[#allocation2 + $0x8] sm:$0xff] %v426
      %431 = vst [vmem:[#allocation2 + $0x10] sm:$0xff] %v427
      %432 = vst [vmem:[#allocation2 + $0x18] sm:$0xff] %v428
      %p433 = scmp.eq.s32.totalorder %s19, 4
      // Predicated region
      $region37: #{espcnet_forward.28} parent=31 // pred_check
        %p434 = pneg %p433
      $region38: #{espcnet_forward.28} parent=31 // pred_check_branch
        %436 = sbr.rel (%p434) target = $region40
      $region39: #{espcnet_forward.28} parent=31 // pred_region
        %v437 = vld [vmem:[#allocation2] sm:$0xff]
        %v438 = vld [vmem:[#allocation2 + $0x8] sm:$0xff]
        %v439 = vld [vmem:[#allocation2 + $0x10] sm:$0xff]
        %v440 = vld [vmem:[#allocation2 + $0x18] sm:$0xff]
        %v441 = vld [vmem:[%s2 + $0x1] sm:$0x1]
        %v442 = vperm.slane %v441, 0
        %v443 = vadd.f32 %v437, %v442
        %v444 = vadd.f32 %v438, %v442
        %v445 = vadd.f32 %v439, %v442
        %v446 = vadd.f32 %v440, %v442
        %vm447 = vcmp.gt.f32.partialorder %v443, 0.0
        %vm448 = vcmp.gt.f32.partialorder %v444, 0.0
        %vm449 = vcmp.gt.f32.partialorder %v445, 0.0
        %vm450 = vcmp.gt.f32.partialorder %v446, 0.0
        %v451 = vld [vmem:[%s2 + $0x2] sm:$0x1]
        %v452 = vperm.slane %v451, 0
        %v453 = vmul.f32 %v452, %v443
        %v454 = vmul.f32 %v452, %v444
        %v455 = vmul.f32 %v452, %v445
        %v456 = vmul.f32 %v452, %v446
        %v457 = vsel %vm447, %v443, %v453
        %v458 = vsel %vm448, %v444, %v454
        %v459 = vsel %vm449, %v445, %v455
        %v460 = vsel %vm450, %v446, %v456
        %v461 = vpack.c.bf16 %v457, %v457
        %v462 = vpack.c.bf16 %v458, %v458
        %v463 = vpack.c.bf16 %v459, %v459
        %v464 = vpack.c.bf16 %v460, %v460
        %465 = vst [vmem:[%s221] sm:$0xf] %v461
        %466 = vst [vmem:[%s221 + $0x4] sm:$0xf] %v462
        %467 = vst [vmem:[%s221 + $0x8] sm:$0xf] %v463
        %468 = vst [vmem:[%s221 + $0xc] sm:$0xf] %v464
      $region40: #{espcnet_forward.28} parent=31 // pred_fallthru
        _
      %s469 = smul.u32 4, %s18
      %p470 = scmp.lt.s32.totalorder %s469, 3
      %s471 = scalar_select %p470, %s469, 3
      %s472 = smul.addr %s471, 4
      %s473 = scalar_lea.vmem %s3, %s472
      // Predicated region
      $region41: #{espcnet_forward.28} parent=31 // pred_check
        %p474 = pneg %p119
      $region42: #{espcnet_forward.28} parent=31 // pred_check_branch
        %476 = sbr.rel (%p474) target = $region44
      $region43: #{espcnet_forward.28} parent=31 // pred_region
        %s477 = smul.u32 4, %s18
      $region44: #{espcnet_forward.28} parent=31 // pred_fallthru
        _
      // Predicated region
      $region45: #{espcnet_forward.28} parent=31 // pred_check
        %p478 = pneg %p119
      $region46: #{espcnet_forward.28} parent=31 // pred_check_branch
        %480 = sbr.rel (%p478) target = $region48
      $region47: #{espcnet_forward.28} parent=31 // pred_region
        %s481 = smul.u32 4, %s18
        %p482 = scmp.lt.s32.totalorder %s481, 3
        %s483 = scalar_select %p482, %s481, 3
        %s484 = smul.addr %s483, 4
        %s485 = scalar_lea.vmem %s3, %s484
      $region48: #{espcnet_forward.28} parent=31 // pred_fallthru
        _
    $region32: #{espcnet_forward.28} parent=5 // pred_fallthru
      _
    %p486 = scmp.le.s32.totalorder 2, %s9
    // Predicated region
    $region49: #{espcnet_forward.28} parent=5 // pred_check
      %p487 = pneg %p486
    $region50: #{espcnet_forward.28} parent=5 // pred_check_branch
      %489 = sbr.rel (%p487) target = $region52
    $region51: #{espcnet_forward.28} parent=5 // pred_region
      %s490 = ssub.s32 %s9, 2
    $region52: #{espcnet_forward.28} parent=5 // pred_fallthru
      _
  $region6: #{espcnet_forward.28} parent=0 // loop_footer
    %s13 = sadd.s32 1, %s9
  $region7: #{espcnet_forward.28} parent=0 // loop_footer_branch
    %8 = sbr.rel target = $region3
  $region8: #{espcnet_forward.28} parent=0 // loop_exit
    _

// kernel: espcnet_forward.30
$region0: #{espcnet_forward.30}
  #allocation0 [shape = 'u32[]', space=smem, size = 0x4, offset = 0x4, fixed_abs, tag = 'smem constant byte address 0x4 - core index']
  #allocation1 [shape = 'u32[72,128]{1,0:T(1,128)}', space=vmem, size = 0x9000, scoped, tag = 'internal scratch']
  #allocation2 [shape = 'f32[32,128]{1,0:T(8,128)}', space=vmem, size = 0x4000, scoped, tag = 'scratch operand']
  %s0 = inlined_call_operand.vmem [shape: bf16[5,32,256], index: 0, kind: input, shape index: {}]
  %s1 = inlined_call_operand.vmem [shape: bf16[5,256,128], index: 1, kind: input, shape index: {}]
  %s2 = inlined_call_operand.vmem [shape: f32[3,128], index: 2, kind: input, shape index: {}]
  %s3 = inlined_call_operand.vmem [shape: bf16[32,128], index: 3, kind: input, shape index: {}]
  %s4 = inlined_call_operand.vmem [shape: bf16[32,128], index: 4, kind: output, shape index: {}]
  %s5 = sld [smem:[#allocation0]]
  $region57: #{espcnet_forward.30} parent=0
    _
  %s7 = ssub.s32 1, %s5
  %s8 = scalar_select 0, %s7, %s5
  loop: start=0, step=1, limit=7
  $region2: #{espcnet_forward.30} parent=0 // loop_pre_header
    _
  $region3: #{espcnet_forward.30} parent=0 // loop_header
    %s10 = sphi 0, %s14
    %p11 = scmp.ge.s32.totalorder %s10, 7
    %s17 = sphi 0, %s29
    %s18 = sphi 0, %s25
    %s19 = sphi 0, %s17
    %s20 = sphi 0, %s18
    %s21 = sphi 0, %s19
    %s22 = sphi 0, %s20
    %s34 = sphi 0, %s36
    %s37 = sphi 0, %s34
    %s38 = sphi 0, %s37
    %s54 = sphi 0, %s38
    %s60 = sphi 0, %s62
    %s63 = sphi 0, %s60
    %s64 = sphi 0, %s63
    %s80 = sphi 0, %s64
    %s84 = sphi 0, %s84
    %s86 = sphi 0, %s84
    %s87 = sphi 0, %s86
    %s101 = sphi 0, %s87
    %s107 = sphi 0, %s109
    %s110 = sphi 0, %s107
    %s111 = sphi 0, %s110
    %s127 = sphi 0, %s111
    %s133 = sphi 0, %s135
    %s136 = sphi 0, %s133
    %s137 = sphi 0, %s136
    %s153 = sphi 0, %s137
  $region4: #{espcnet_forward.30} parent=0 // loop_header_branch
    %13 = sbr.rel (%p11) target = $region8
  $region5: #{espcnet_forward.30} parent=0 // loop_body
    %s15 = ssub.s32 %s10, 1
    %s16 = ssub.s32 %s10, 2
    %s23 = sadd.s32 1, %s18
    %p24 = scmp.ge.s32.totalorder %s23, 5
    %s25 = scalar_select %p24, 0, %s23
    %s26 = sadd.s32 1, %s17
    %s27 = scalar_select %p24, %s26, %s17
    %p28 = scmp.ge.s32.totalorder %s27, 1
    %s29 = scalar_select %p28, 0, %s27
    %s30 = ssub.s32 %s18, %s25
    %s31 = ssub.s32 %s17, %s29
    %s32 = sor.u32 %s30, %s31
    %p33 = scmp.eq.s32.totalorder %s32, 0
    %s35 = sadd.s32 %s34, 1
    %s36 = scalar_select %p33, %s34, %s35
    %p39 = pneg %p33
    %p40 = scmp.eq.s32.totalorder %s10, 4
    %p41 = por %p39, %p40
    %p42 = scmp.ne.s32.totalorder %s34, %s37
    %p43 = scmp.eq.s32.totalorder %s10, 0
    %p44 = por %p42, %p43
    %p45 = scmp.ne.s32.totalorder %s34, %s37
    %p46 = scmp.eq.s32.totalorder %s15, 4
    %p47 = por %p45, %p46
    %p48 = scmp.ne.s32.totalorder %s37, %s38
    %p49 = scmp.eq.s32.totalorder %s15, 0
    %p50 = por %p48, %p49
    %p51 = scmp.ne.s32.totalorder %s37, %s38
    %p52 = scmp.eq.s32.totalorder %s16, 4
    %p53 = por %p51, %p52
    %p55 = scmp.ne.s32.totalorder %s38, %s54
    %p56 = scmp.eq.s32.totalorder %s16, 0
    %p57 = por %p55, %p56
    %s58 = ssub.s32 %s18, %s25
    %p59 = scmp.eq.s32.totalorder %s58, 0
    %s61 = sadd.s32 %s60, 1
    %s62 = scalar_select %p59, %s60, %s61
    %p65 = pneg %p59
    %p66 = scmp.eq.s32.totalorder %s10, 4
    %p67 = por %p65, %p66
    %p68 = scmp.ne.s32.totalorder %s60, %s63
    %p69 = scmp.eq.s32.totalorder %s10, 0
    %p70 = por %p68, %p69
    %p71 = scmp.ne.s32.totalorder %s60, %s63
    %p72 = scmp.eq.s32.totalorder %s15, 4
    %p73 = por %p71, %p72
    %p74 = scmp.ne.s32.totalorder %s63, %s64
    %p75 = scmp.eq.s32.totalorder %s15, 0
    %p76 = por %p74, %p75
    %p77 = scmp.ne.s32.totalorder %s63, %s64
    %p78 = scmp.eq.s32.totalorder %s16, 4
    %p79 = por %p77, %p78
    %p81 = scmp.ne.s32.totalorder %s64, %s80
    %p82 = scmp.eq.s32.totalorder %s16, 0
    %p83 = por %p81, %p82
    %s85 = sadd.s32 %s84, 1
    %p88 = scmp.eq.s32.totalorder %s10, 4
    %p89 = scmp.ne.s32.totalorder %s84, %s86
    %p90 = scmp.eq.s32.totalorder %s10, 0
    %p91 = por %p89, %p90
    %p92 = scmp.ne.s32.totalorder %s84, %s86
    %p93 = scmp.eq.s32.totalorder %s15, 4
    %p94 = por %p92, %p93
    %p95 = scmp.ne.s32.totalorder %s86, %s87
    %p96 = scmp.eq.s32.totalorder %s15, 0
    %p97 = por %p95, %p96
    %p98 = scmp.ne.s32.totalorder %s86, %s87
    %p99 = scmp.eq.s32.totalorder %s16, 4
    %p100 = por %p98, %p99
    %p102 = scmp.ne.s32.totalorder %s87, %s101
    %p103 = scmp.eq.s32.totalorder %s16, 0
    %p104 = por %p102, %p103
    %s105 = ssub.s32 %s17, %s29
    %p106 = scmp.eq.s32.totalorder %s105, 0
    %s108 = sadd.s32 %s107, 1
    %s109 = scalar_select %p106, %s107, %s108
    %p112 = pneg %p106
    %p113 = scmp.eq.s32.totalorder %s10, 4
    %p114 = por %p112, %p113
    %p115 = scmp.ne.s32.totalorder %s107, %s110
    %p116 = scmp.eq.s32.totalorder %s10, 0
    %p117 = por %p115, %p116
    %p118 = scmp.ne.s32.totalorder %s107, %s110
    %p119 = scmp.eq.s32.totalorder %s15, 4
    %p120 = por %p118, %p119
    %p121 = scmp.ne.s32.totalorder %s110, %s111
    %p122 = scmp.eq.s32.totalorder %s15, 0
    %p123 = por %p121, %p122
    %p124 = scmp.ne.s32.totalorder %s110, %s111
    %p125 = scmp.eq.s32.totalorder %s16, 4
    %p126 = por %p124, %p125
    %p128 = scmp.ne.s32.totalorder %s111, %s127
    %p129 = scmp.eq.s32.totalorder %s16, 0
    %p130 = por %p128, %p129
    %s131 = ssub.s32 %s17, %s29
    %p132 = scmp.eq.s32.totalorder %s131, 0
    %s134 = sadd.s32 %s133, 1
    %s135 = scalar_select %p132, %s133, %s134
    %p138 = pneg %p132
    %p139 = scmp.eq.s32.totalorder %s10, 4
    %p140 = por %p138, %p139
    %p141 = scmp.ne.s32.totalorder %s133, %s136
    %p142 = scmp.eq.s32.totalorder %s10, 0
    %p143 = por %p141, %p142
    %p144 = scmp.ne.s32.totalorder %s133, %s136
    %p145 = scmp.eq.s32.totalorder %s15, 4
    %p146 = por %p144, %p145
    %p147 = scmp.ne.s32.totalorder %s136, %s137
    %p148 = scmp.eq.s32.totalorder %s15, 0
    %p149 = por %p147, %p148
    %p150 = scmp.ne.s32.totalorder %s136, %s137
    %p151 = scmp.eq.s32.totalorder %s16, 4
    %p152 = por %p150, %p151
    %p154 = scmp.ne.s32.totalorder %s137, %s153
    %p155 = scmp.eq.s32.totalorder %s16, 0
    %p156 = por %p154, %p155
    %p157 = scmp.le.s32.totalorder 1, %s10
    %p158 = scmp.lt.s32.totalorder %s10, 6
    %p159 = pnand %p157, %p158
    %p160 = pneg %p159
    // Predicated region
    $region9: #{espcnet_forward.30} parent=5 // pred_check
      _
    $region10: #{espcnet_forward.30} parent=5 // pred_check_branch
      %162 = sbr.rel (%p159) target = $region12
    $region11: #{espcnet_forward.30} parent=5 // pred_region
      %s163 = ssub.s32 %s10, 1
      // Predicated region
      $region13: #{espcnet_forward.30} parent=11 // pred_check
        %p164 = pneg %p97
      $region14: #{espcnet_forward.30} parent=11 // pred_check_branch
        %166 = sbr.rel (%p164) target = $region16
      $region15: #{espcnet_forward.30} parent=11 // pred_region
        _
      $region16: #{espcnet_forward.30} parent=11 // pred_fallthru
        _
      // Predicated region
      $region17: #{espcnet_forward.30} parent=11 // pred_check
        %p167 = pneg %p123
      $region18: #{espcnet_forward.30} parent=11 // pred_check_branch
        %169 = sbr.rel (%p167) target = $region20
      $region19: #{espcnet_forward.30} parent=11 // pred_region
        %s170 = smul.u32 4, %s19
        %p171 = scmp.lt.s32.totalorder %s170, 3
        %s172 = scalar_select %p171, %s170, 3
        %s173 = smul.addr %s172, 4
        %s174 = scalar_lea.vmem %s3, %s173
        %s175 = smul.u32 4, %s19
      $region20: #{espcnet_forward.30} parent=11 // pred_fallthru
        _
    $region12: #{espcnet_forward.30} parent=5 // pred_fallthru
      _
    %p176 = scmp.lt.s32.totalorder %s10, 5
    // Predicated region
    $region21: #{espcnet_forward.30} parent=5 // pred_check
      %p177 = pneg %p176
    $region22: #{espcnet_forward.30} parent=5 // pred_check_branch
      %179 = sbr.rel (%p177) target = $region24
    $region23: #{espcnet_forward.30} parent=5 // pred_region
      // Predicated region
      $region25: #{espcnet_forward.30} parent=23 // pred_check
        %p180 = pneg %p44
      $region26: #{espcnet_forward.30} parent=23 // pred_check_branch
        %182 = sbr.rel (%p180) target = $region28
      $region27: #{espcnet_forward.30} parent=23 // pred_region
        %s183 = smul.u32 4, %s17
        %p184 = scmp.lt.s32.totalorder %s18, 4
        %s185 = scalar_select %p184, %s18, 4
        %p186 = scmp.lt.s32.totalorder %s183, 3
        %s187 = scalar_select %p186, %s183, 3
        %s188 = smul.addr %s187, 2
        %s189 = smul.addr %s185, 8
        %s190 = sadd.s32 %s188, %s189
        %s191 = smul.addr %s190, 4
        %s192 = scalar_lea.vmem %s0, %s191
        %s193 = smul.u32 4, %s17
      $region28: #{espcnet_forward.30} parent=23 // pred_fallthru
        _
      // Predicated region
      $region29: #{espcnet_forward.30} parent=23 // pred_check
        %p194 = pneg %p70
      $region30: #{espcnet_forward.30} parent=23 // pred_check_branch
        %196 = sbr.rel (%p194) target = $region32
      $region31: #{espcnet_forward.30} parent=23 // pred_region
        %p197 = scmp.lt.s32.totalorder %s18, 4
        %s198 = scalar_select %p197, %s18, 4
        %s199 = smul.addr %s198, 32
        %s200 = smul.addr %s199, 4
        %s201 = scalar_lea.vmem %s1, %s200
      $region32: #{espcnet_forward.30} parent=23 // pred_fallthru
        _
    $region24: #{espcnet_forward.30} parent=5 // pred_fallthru
      _
    %p202 = scmp.le.s32.totalorder 1, %s10
    %p203 = scmp.lt.s32.totalorder %s10, 6
    %p204 = pnand %p202, %p203
    %p205 = pneg %p204
    // Predicated region
    $region33: #{espcnet_forward.30} parent=5 // pred_check
      _
    $region34: #{espcnet_forward.30} parent=5 // pred_check_branch
      %207 = sbr.rel (%p204) target = $region36
    $region35: #{espcnet_forward.30} parent=5 // pred_region
      %s208 = ssub.s32 %s10, 1
      %s209 = smul.u32 4, %s19
      %p210 = scmp.lt.s32.totalorder %s20, 4
      %s211 = scalar_select %p210, %s20, 4
      %p212 = scmp.lt.s32.totalorder %s209, 3
      %s213 = scalar_select %p212, %s209, 3
      %s214 = smul.addr %s213, 2
      %s215 = smul.addr %s211, 8
      %s216 = sadd.s32 %s214, %s215
      %s217 = smul.addr %s216, 4
      %s218 = scalar_lea.vmem %s0, %s217
      %p219 = pneg %p50
      %p220 = pneg %p47
      %p221 = scmp.lt.s32.totalorder %s20, 4
      %s222 = scalar_select %p221, %s20, 4
      %s223 = smul.addr %s222, 32
      %s224 = smul.addr %s223, 4
      %s225 = scalar_lea.vmem %s1, %s224
      %p226 = pneg %p76
      %p227 = pneg %p73
      %p228 = pneg %p97
      %p229 = pneg %p94
      %s230 = smul.u32 4, %s19
      %p231 = scmp.lt.s32.totalorder %s230, 3
      %s232 = scalar_select %p231, %s230, 3
      %s233 = smul.addr %s232, 4
      %s234 = scalar_lea.vmem %s3, %s233
      %p235 = pneg %p123
      %p236 = pneg %p120
      %p237 = pneg %p149
      %p238 = pneg %p146
      %s239 = smul.u32 4, %s19
      %p240 = scmp.lt.s32.totalorder %s239, 3
      %s241 = scalar_select %p240, %s239, 3
      %s242 = smul.addr %s241, 4
      %s243 = scalar_lea.vmem %s4, %s242
      %s244 = smul.u32 4, %s19
      %p245 = scmp.lt.s32.totalorder %s20, 4
      %s246 = scalar_select %p245, %s20, 4
      %p247 = scmp.lt.s32.totalorder %s244, 3
      %s248 = scalar_select %p247, %s244, 3
      %s249 = smul.addr %s248, 2
      %s250 = smul.addr %s246, 8
      %s251 = sadd.s32 %s249, %s250
      %s252 = smul.addr %s251, 4
      %s253 = scalar_lea.vmem %s0, %s252
      %s254 = smul.u32 4, %s19
      %p255 = scmp.lt.s32.totalorder %s20, 4
      %s256 = scalar_select %p255, %s20, 4
      %s257 = smul.addr %s256, 32
      %s258 = smul.addr %s257, 4
      %s259 = scalar_lea.vmem %s1, %s258
      %s260 = smul.u32 4, %s19
      %p261 = scmp.lt.s32.totalorder %s260, 3
      %s262 = scalar_select %p261, %s260, 3
      %s263 = smul.addr %s262, 4
      %s264 = scalar_lea.vmem %s3, %s263
      %s265 = smul.u32 4, %s19
      %s266 = smul.u32 4, %s19
      %p267 = scmp.lt.s32.totalorder %s266, 3
      %s268 = scalar_select %p267, %s266, 3
      %s269 = smul.addr %s268, 4
      %s270 = scalar_lea.vmem %s4, %s269
      %s271 = smul.u32 4, %s19
      %p272 = scmp.eq.s32.totalorder %s20, 0
      // Predicated region
      $region37: #{espcnet_forward.30} parent=35 // pred_check
        %p273 = pneg %p272
      $region38: #{espcnet_forward.30} parent=35 // pred_check_branch
        %275 = sbr.rel (%p273) target = $region40
      $region39: #{espcnet_forward.30} parent=35 // pred_region
        %v276 = vld [vmem:[%s264] sm:$0xf]
        %v277 = vld [vmem:[%s264 + $0x4] sm:$0xf]
        %v278 = vld [vmem:[%s264 + $0x8] sm:$0xf]
        %v279 = vld [vmem:[%s264 + $0xc] sm:$0xf]
        %v280 = vunpack.c.l.bf16 %v276
        %v281 = vunpack.c.l.bf16 %v277
        %v282 = vunpack.c.l.bf16 %v278
        %v283 = vunpack.c.l.bf16 %v279
        %v284 = vld [vmem:[%s2] sm:$0x1]
        %v285 = vperm.slane %v284, 0
        %v286 = vmul.f32 %v280, %v285
        %v287 = vmul.f32 %v281, %v285
        %v288 = vmul.f32 %v282, %v285
        %v289 = vmul.f32 %v283, %v285
        %290 = vst [vmem:[#allocation2] sm:$0xff] %v286
        %291 = vst [vmem:[#allocation2 + $0x8] sm:$0xff] %v287
        %292 = vst [vmem:[#allocation2 + $0x10] sm:$0xff] %v288
        %293 = vst [vmem:[#allocation2 + $0x18] sm:$0xff] %v289
      $region40: #{espcnet_forward.30} parent=35 // pred_fallthru
        _
      %v294 = vld [vmem:[#allocation2] sm:$0xff]
      %v295 = vld [vmem:[#allocation2 + $0x8] sm:$0xff]
      %v296 = vld [vmem:[#allocation2 + $0x10] sm:$0xff]
      %v297 = vld [vmem:[#allocation2 + $0x18] sm:$0xff]
      %v298 = vld [vmem:[%s253] sm:$0xff]
      %v299 = vld [vmem:[%s253 + $0x8] sm:$0xff]
      %v300 = vld [vmem:[%s253 + $0x10] sm:$0xff]
      %v301 = vld [vmem:[%s253 + $0x18] sm:$0xff]
      %v302 = vld [vmem:[%s259] sm:$0xf]
      %v303 = vld [vmem:[%s259 + $0x4] sm:$0xf]
      %v304 = vld [vmem:[%s259 + $0x8] sm:$0xf]
      %v305 = vld [vmem:[%s259 + $0xc] sm:$0xf]
      %v306 = vld [vmem:[%s259 + $0x10] sm:$0xf]
      %v307 = vld [vmem:[%s259 + $0x14] sm:$0xf]
      %v308 = vld [vmem:[%s259 + $0x18] sm:$0xf]
      %v309 = vld [vmem:[%s259 + $0x1c] sm:$0xf]
      %v310 = vld [vmem:[%s259 + $0x20] sm:$0xf]
      %v311 = vld [vmem:[%s259 + $0x24] sm:$0xf]
      %v312 = vld [vmem:[%s259 + $0x28] sm:$0xf]
      %v313 = vld [vmem:[%s259 + $0x2c] sm:$0xf]
      %v314 = vld [vmem:[%s259 + $0x30] sm:$0xf]
      %v315 = vld [vmem:[%s259 + $0x34] sm:$0xf]
      %v316 = vld [vmem:[%s259 + $0x38] sm:$0xf]
      %v317 = vld [vmem:[%s259 + $0x3c] sm:$0xf]
      %v318 = vld [vmem:[%s259 + $0x40] sm:$0xf]
      %v319 = vld [vmem:[%s259 + $0x44] sm:$0xf]
      %v320 = vld [vmem:[%s259 + $0x48] sm:$0xf]
      %v321 = vld [vmem:[%s259 + $0x4c] sm:$0xf]
      %v322 = vld [vmem:[%s259 + $0x50] sm:$0xf]
      %v323 = vld [vmem:[%s259 + $0x54] sm:$0xf]
      %v324 = vld [vmem:[%s259 + $0x58] sm:$0xf]
      %v325 = vld [vmem:[%s259 + $0x5c] sm:$0xf]
      %v326 = vld [vmem:[%s259 + $0x60] sm:$0xf]
      %v327 = vld [vmem:[%s259 + $0x64] sm:$0xf]
      %v328 = vld [vmem:[%s259 + $0x68] sm:$0xf]
      %v329 = vld [vmem:[%s259 + $0x6c] sm:$0xf]
      %v330 = vld [vmem:[%s259 + $0x70] sm:$0xf]
      %v331 = vld [vmem:[%s259 + $0x74] sm:$0xf]
      %v332 = vld [vmem:[%s259 + $0x78] sm:$0xf]
      %v333 = vld [vmem:[%s259 + $0x7c] sm:$0xf]
      %v338 = vunpack.c.l.b16 %v298
      %v339 = vunpack.c.h.b16 %v298
      %v340 = vunpack.c.l.b16 %v299
      %v341 = vunpack.c.h.b16 %v299
      %v342 = vunpack.c.l.b16 %v300
      %v343 = vunpack.c.h.b16 %v300
      %v344 = vunpack.c.l.b16 %v301
      %v345 = vunpack.c.h.b16 %v301
      %v346 = vpack.c.b16 %v340, %v338
      %v347 = vpack.c.b16 %v341, %v339
      %v348 = vpack.c.b16 %v344, %v342
      %v349 = vpack.c.b16 %v345, %v343
      %v386 = vunpack.c.l.b16 %v302
      %v387 = vunpack.c.l.b16 %v303
      %v388 = vunpack.c.l.b16 %v304
      %v389 = vunpack.c.l.b16 %v305
      %v390 = vunpack.c.l.b16 %v306
      %v391 = vunpack.c.l.b16 %v307
      %v392 = vunpack.c.l.b16 %v308
      %v393 = vunpack.c.l.b16 %v309
      %v394 = vunpack.c.l.b16 %v310
      %v395 = vunpack.c.l.b16 %v311
      %v396 = vunpack.c.l.b16 %v312
      %v397 = vunpack.c.l.b16 %v313
      %v398 = vunpack.c.l.b16 %v314
      %v399 = vunpack.c.l.b16 %v315
      %v400 = vunpack.c.l.b16 %v316
      %v401 = vunpack.c.l.b16 %v317
      %v402 = vunpack.c.l.b16 %v318
      %v403 = vunpack.c.l.b16 %v319
      %v404 = vunpack.c.l.b16 %v320
      %v405 = vunpack.c.l.b16 %v321
      %v406 = vunpack.c.l.b16 %v322
      %v407 = vunpack.c.l.b16 %v323
      %v408 = vunpack.c.l.b16 %v324
      %v409 = vunpack.c.l.b16 %v325
      %v410 = vunpack.c.l.b16 %v326
      %v411 = vunpack.c.l.b16 %v327
      %v412 = vunpack.c.l.b16 %v328
      %v413 = vunpack.c.l.b16 %v329
      %v414 = vunpack.c.l.b16 %v330
      %v415 = vunpack.c.l.b16 %v331
      %v416 = vunpack.c.l.b16 %v332
      %v417 = vunpack.c.l.b16 %v333
      %v418 = vpack.c.b16 %v387, %v386
      %v419 = vpack.c.b16 %v389, %v388
      %v420 = vpack.c.b16 %v391, %v390
      %v421 = vpack.c.b16 %v393, %v392
      %v422 = vpack.c.b16 %v395, %v394
      %v423 = vpack.c.b16 %v397, %v396
      %v424 = vpack.c.b16 %v399, %v398
      %v425 = vpack.c.b16 %v401, %v400
      %v426 = vpack.c.b16 %v403, %v402
      %v427 = vpack.c.b16 %v405, %v404
      %v428 = vpack.c.b16 %v407, %v406
      %v429 = vpack.c.b16 %v409, %v408
      %v430 = vpack.c.b16 %v411, %v410
      %v431 = vpack.c.b16 %v413, %v412
      %v432 = vpack.c.b16 %v415, %v414
      %v433 = vpack.c.b16 %v417, %v416
      %450 = vmatpush.bf16.msra.mxu0 %v425
      %451 = vmatpush.bf16.msra.mxu0 %v424
      %452 = vmatpush.bf16.msra.mxu0 %v423
      %453 = vmatpush.bf16.msra.mxu0 %v422
      %454 = vmatpush.bf16.msra.mxu0 %v421
      %455 = vmatpush.bf16.msra.mxu0 %v420
      %456 = vmatpush.bf16.msra.mxu0 %v419
      %457 = vmatpush.bf16.msra.mxu0 %v418
      %458 = vmatmul.bf16.gmra.mxu0 %v346
      %v459 = vpop.f32.mrf.mxu0
      %v460 = vadd.f32 0.0, %v459
      %v461 = vpop.f32.mrf.mxu0
      %v462 = vadd.f32 0.0, %v461
      %463 = vmatmul.bf16.gmra.mxu0 %v348
      %v464 = vpop.f32.mrf.mxu0
      %v465 = vadd.f32 0.0, %v464
      %v466 = vpop.f32.mrf.mxu0
      %v467 = vadd.f32 0.0, %v466
      %468 = vdwg.mxu0
      %469 = vmatpush.bf16.msra.mxu0 %v433
      %470 = vmatpush.bf16.msra.mxu0 %v432
      %471 = vmatpush.bf16.msra.mxu0 %v431
      %472 = vmatpush.bf16.msra.mxu0 %v430
      %473 = vmatpush.bf16.msra.mxu0 %v429
      %474 = vmatpush.bf16.msra.mxu0 %v428
      %475 = vmatpush.bf16.msra.mxu0 %v427
      %476 = vmatpush.bf16.msra.mxu0 %v426
      %477 = vmatmul.bf16.gmra.mxu0 %v347
      %v478 = vpop.f32.mrf.mxu0
      %v479 = vadd.f32 %v460, %v478
      %v480 = vpop.f32.mrf.mxu0
      %v481 = vadd.f32 %v462, %v480
      %482 = vmatmul.bf16.gmra.mxu0 %v349
      %v483 = vpop.f32.mrf.mxu0
      %v484 = vadd.f32 %v465, %v483
      %v485 = vpop.f32.mrf.mxu0
      %v486 = vadd.f32 %v467, %v485
      %487 = vdwg.mxu0
      %v488 = vadd.f32 %v294, %v479
      %v489 = vadd.f32 %v295, %v481
      %v490 = vadd.f32 %v296, %v484
      %v491 = vadd.f32 %v297, %v486
      %492 = vst [vmem:[#allocation2] sm:$0xff] %v488
      %493 = vst [vmem:[#allocation2 + $0x8] sm:$0xff] %v489
      %494 = vst [vmem:[#allocation2 + $0x10] sm:$0xff] %v490
      %495 = vst [vmem:[#allocation2 + $0x18] sm:$0xff] %v491
      %p496 = scmp.eq.s32.totalorder %s20, 4
      // Predicated region
      $region41: #{espcnet_forward.30} parent=35 // pred_check
        %p497 = pneg %p496
      $region42: #{espcnet_forward.30} parent=35 // pred_check_branch
        %499 = sbr.rel (%p497) target = $region44
      $region43: #{espcnet_forward.30} parent=35 // pred_region
        %v500 = vld [vmem:[#allocation2] sm:$0xff]
        %v501 = vld [vmem:[#allocation2 + $0x8] sm:$0xff]
        %v502 = vld [vmem:[#allocation2 + $0x10] sm:$0xff]
        %v503 = vld [vmem:[#allocation2 + $0x18] sm:$0xff]
        %v504 = vld [vmem:[%s2 + $0x1] sm:$0x1]
        %v505 = vperm.slane %v504, 0
        %v506 = vadd.f32 %v500, %v505
        %v507 = vadd.f32 %v501, %v505
        %v508 = vadd.f32 %v502, %v505
        %v509 = vadd.f32 %v503, %v505
        %vm510 = vcmp.gt.f32.partialorder %v506, 0.0
        %vm511 = vcmp.gt.f32.partialorder %v507, 0.0
        %vm512 = vcmp.gt.f32.partialorder %v508, 0.0
        %vm513 = vcmp.gt.f32.partialorder %v509, 0.0
        %v514 = vld [vmem:[%s2 + $0x2] sm:$0x1]
        %v515 = vperm.slane %v514, 0
        %v516 = vmul.f32 %v515, %v506
        %v517 = vmul.f32 %v515, %v507
        %v518 = vmul.f32 %v515, %v508
        %v519 = vmul.f32 %v515, %v509
        %v520 = vsel %vm510, %v506, %v516
        %v521 = vsel %vm511, %v507, %v517
        %v522 = vsel %vm512, %v508, %v518
        %v523 = vsel %vm513, %v509, %v519
        %v524 = vpack.c.bf16 %v520, %v520
        %v525 = vpack.c.bf16 %v521, %v521
        %v526 = vpack.c.bf16 %v522, %v522
        %v527 = vpack.c.bf16 %v523, %v523
        %528 = vst [vmem:[%s270] sm:$0xf] %v524
        %529 = vst [vmem:[%s270 + $0x4] sm:$0xf] %v525
        %530 = vst [vmem:[%s270 + $0x8] sm:$0xf] %v526
        %531 = vst [vmem:[%s270 + $0xc] sm:$0xf] %v527
      $region44: #{espcnet_forward.30} parent=35 // pred_fallthru
        _
      %s532 = smul.u32 4, %s19
      %p533 = scmp.lt.s32.totalorder %s532, 3
      %s534 = scalar_select %p533, %s532, 3
      %s535 = smul.addr %s534, 4
      %s536 = scalar_lea.vmem %s4, %s535
      // Predicated region
      $region45: #{espcnet_forward.30} parent=35 // pred_check
        %p537 = pneg %p146
      $region46: #{espcnet_forward.30} parent=35 // pred_check_branch
        %539 = sbr.rel (%p537) target = $region48
      $region47: #{espcnet_forward.30} parent=35 // pred_region
        %s540 = smul.u32 4, %s19
      $region48: #{espcnet_forward.30} parent=35 // pred_fallthru
        _
      // Predicated region
      $region49: #{espcnet_forward.30} parent=35 // pred_check
        %p541 = pneg %p146
      $region50: #{espcnet_forward.30} parent=35 // pred_check_branch
        %543 = sbr.rel (%p541) target = $region52
      $region51: #{espcnet_forward.30} parent=35 // pred_region
        %s544 = smul.u32 4, %s19
        %p545 = scmp.lt.s32.totalorder %s544, 3
        %s546 = scalar_select %p545, %s544, 3
        %s547 = smul.addr %s546, 4
        %s548 = scalar_lea.vmem %s4, %s547
      $region52: #{espcnet_forward.30} parent=35 // pred_fallthru
        _
    $region36: #{espcnet_forward.30} parent=5 // pred_fallthru
      _
    %p549 = scmp.le.s32.totalorder 2, %s10
    // Predicated region
    $region53: #{espcnet_forward.30} parent=5 // pred_check
      %p550 = pneg %p549
    $region54: #{espcnet_forward.30} parent=5 // pred_check_branch
      %552 = sbr.rel (%p550) target = $region56
    $region55: #{espcnet_forward.30} parent=5 // pred_region
      %s553 = ssub.s32 %s10, 2
    $region56: #{espcnet_forward.30} parent=5 // pred_fallthru
      _
  $region6: #{espcnet_forward.30} parent=0 // loop_footer
    %s14 = sadd.s32 1, %s10
  $region7: #{espcnet_forward.30} parent=0 // loop_footer_branch
    %9 = sbr.rel target = $region3
  $region8: #{espcnet_forward.30} parent=0 // loop_exit
    _

// kernel: espcnet_forward.35
$region0: #{espcnet_forward.35}
  #allocation0 [shape = 'u32[]', space=smem, size = 0x4, offset = 0x4, fixed_abs, tag = 'smem constant byte address 0x4 - core index']
  #allocation1 [shape = 'u32[72,128]{1,0:T(1,128)}', space=vmem, size = 0x9000, scoped, tag = 'internal scratch']
  %s0 = inlined_call_operand.vmem [shape: bf16[32,256], index: 0, kind: input, shape index: {}]
  %s1 = inlined_call_operand.vmem [shape: f32[3,256], index: 1, kind: input, shape index: {}]
  %s2 = inlined_call_operand.vmem [shape: bf16[256,128], index: 2, kind: input, shape index: {}]
  %s3 = inlined_call_operand.vmem [shape: f32[32,128], index: 3, kind: output, shape index: {}]
  %s4 = sld [smem:[#allocation0]]
  $region22: #{espcnet_forward.35} parent=0
    _
  %s6 = ssub.s32 1, %s4
  %s7 = scalar_select 0, %s6, %s4
  // Predicated region
  $region2: #{espcnet_forward.35} parent=0 // pred_check
    _
  $region3: #{espcnet_forward.35} parent=0 // pred_check_branch
    %9 = sbr.rel (0) target = $region5
  $region4: #{espcnet_forward.35} parent=0 // pred_region
    _
  $region5: #{espcnet_forward.35} parent=0 // pred_fallthru
    _
  // Predicated region
  $region6: #{espcnet_forward.35} parent=0 // pred_check
    _
  $region7: #{espcnet_forward.35} parent=0 // pred_check_branch
    %11 = sbr.rel (0) target = $region9
  $region8: #{espcnet_forward.35} parent=0 // pred_region
    _
  $region9: #{espcnet_forward.35} parent=0 // pred_fallthru
    _
  // Predicated region
  $region10: #{espcnet_forward.35} parent=0 // pred_check
    _
  $region11: #{espcnet_forward.35} parent=0 // pred_check_branch
    %13 = sbr.rel (0) target = $region13
  $region12: #{espcnet_forward.35} parent=0 // pred_region
    _
  $region13: #{espcnet_forward.35} parent=0 // pred_fallthru
    _
  %v14 = vld [vmem:[%s0] sm:$0xff]
  %v15 = vld [vmem:[%s0 + $0x8] sm:$0xff]
  %v16 = vld [vmem:[%s0 + $0x10] sm:$0xff]
  %v17 = vld [vmem:[%s0 + $0x18] sm:$0xff]
  %v18 = vunpack.c.l.bf16 %v14
  %v19 = vunpack.c.h.bf16 %v14
  %v20 = vunpack.c.l.bf16 %v15
  %v21 = vunpack.c.h.bf16 %v15
  %v22 = vunpack.c.l.bf16 %v16
  %v23 = vunpack.c.h.bf16 %v16
  %v24 = vunpack.c.l.bf16 %v17
  %v25 = vunpack.c.h.bf16 %v17
  %v26 = vld [vmem:[%s1] ss:$4 sm:$0x3]
  %v28 = vperm.slane %v26, 0
  %v29 = vperm.slane %v26, 1
  %v32 = vmul.f32 %v18, %v28
  %v33 = vmul.f32 %v19, %v29
  %v34 = vmul.f32 %v20, %v28
  %v35 = vmul.f32 %v21, %v29
  %v36 = vmul.f32 %v22, %v28
  %v37 = vmul.f32 %v23, %v29
  %v38 = vmul.f32 %v24, %v28
  %v39 = vmul.f32 %v25, %v29
  %s40 = scalar_lea.vmem %s1, 1
  %v41 = vld [vmem:[%s40] ss:$4 sm:$0x3]
  %v43 = vperm.slane %v41, 0
  %v44 = vperm.slane %v41, 1
  %v47 = vadd.f32 %v32, %v43
  %v48 = vadd.f32 %v33, %v44
  %v49 = vadd.f32 %v34, %v43
  %v50 = vadd.f32 %v35, %v44
  %v51 = vadd.f32 %v36, %v43
  %v52 = vadd.f32 %v37, %v44
  %v53 = vadd.f32 %v38, %v43
  %v54 = vadd.f32 %v39, %v44
  %vm55 = vcmp.gt.f32.partialorder %v47, 0.0
  %vm56 = vcmp.gt.f32.partialorder %v48, 0.0
  %vm57 = vcmp.gt.f32.partialorder %v49, 0.0
  %vm58 = vcmp.gt.f32.partialorder %v50, 0.0
  %vm59 = vcmp.gt.f32.partialorder %v51, 0.0
  %vm60 = vcmp.gt.f32.partialorder %v52, 0.0
  %vm61 = vcmp.gt.f32.partialorder %v53, 0.0
  %vm62 = vcmp.gt.f32.partialorder %v54, 0.0
  %s63 = scalar_lea.vmem %s1, 2
  %v64 = vld [vmem:[%s63] ss:$4 sm:$0x3]
  %v66 = vperm.slane %v64, 0
  %v67 = vperm.slane %v64, 1
  %v70 = vmul.f32 %v66, %v47
  %v71 = vmul.f32 %v67, %v48
  %v72 = vmul.f32 %v66, %v49
  %v73 = vmul.f32 %v67, %v50
  %v74 = vmul.f32 %v66, %v51
  %v75 = vmul.f32 %v67, %v52
  %v76 = vmul.f32 %v66, %v53
  %v77 = vmul.f32 %v67, %v54
  %v78 = vsel %vm55, %v47, %v70
  %v79 = vsel %vm56, %v48, %v71
  %v80 = vsel %vm57, %v49, %v72
  %v81 = vsel %vm58, %v50, %v73
  %v82 = vsel %vm59, %v51, %v74
  %v83 = vsel %vm60, %v52, %v75
  %v84 = vsel %vm61, %v53, %v76
  %v85 = vsel %vm62, %v54, %v77
  %v86 = vpack.c.bf16 %v80, %v78
  %v87 = vpack.c.bf16 %v81, %v79
  %v88 = vpack.c.bf16 %v84, %v82
  %v89 = vpack.c.bf16 %v85, %v83
  %v90 = vld [vmem:[%s2] sm:$0xf]
  %v91 = vld [vmem:[%s2 + $0x4] sm:$0xf]
  %v92 = vld [vmem:[%s2 + $0x8] sm:$0xf]
  %v93 = vld [vmem:[%s2 + $0xc] sm:$0xf]
  %v94 = vld [vmem:[%s2 + $0x10] sm:$0xf]
  %v95 = vld [vmem:[%s2 + $0x14] sm:$0xf]
  %v96 = vld [vmem:[%s2 + $0x18] sm:$0xf]
  %v97 = vld [vmem:[%s2 + $0x1c] sm:$0xf]
  %v98 = vld [vmem:[%s2 + $0x20] sm:$0xf]
  %v99 = vld [vmem:[%s2 + $0x24] sm:$0xf]
  %v100 = vld [vmem:[%s2 + $0x28] sm:$0xf]
  %v101 = vld [vmem:[%s2 + $0x2c] sm:$0xf]
  %v102 = vld [vmem:[%s2 + $0x30] sm:$0xf]
  %v103 = vld [vmem:[%s2 + $0x34] sm:$0xf]
  %v104 = vld [vmem:[%s2 + $0x38] sm:$0xf]
  %v105 = vld [vmem:[%s2 + $0x3c] sm:$0xf]
  %v106 = vld [vmem:[%s2 + $0x40] sm:$0xf]
  %v107 = vld [vmem:[%s2 + $0x44] sm:$0xf]
  %v108 = vld [vmem:[%s2 + $0x48] sm:$0xf]
  %v109 = vld [vmem:[%s2 + $0x4c] sm:$0xf]
  %v110 = vld [vmem:[%s2 + $0x50] sm:$0xf]
  %v111 = vld [vmem:[%s2 + $0x54] sm:$0xf]
  %v112 = vld [vmem:[%s2 + $0x58] sm:$0xf]
  %v113 = vld [vmem:[%s2 + $0x5c] sm:$0xf]
  %v114 = vld [vmem:[%s2 + $0x60] sm:$0xf]
  %v115 = vld [vmem:[%s2 + $0x64] sm:$0xf]
  %v116 = vld [vmem:[%s2 + $0x68] sm:$0xf]
  %v117 = vld [vmem:[%s2 + $0x6c] sm:$0xf]
  %v118 = vld [vmem:[%s2 + $0x70] sm:$0xf]
  %v119 = vld [vmem:[%s2 + $0x74] sm:$0xf]
  %v120 = vld [vmem:[%s2 + $0x78] sm:$0xf]
  %v121 = vld [vmem:[%s2 + $0x7c] sm:$0xf]
  %v154 = vunpack.c.l.b16 %v90
  %v155 = vunpack.c.l.b16 %v91
  %v156 = vunpack.c.l.b16 %v92
  %v157 = vunpack.c.l.b16 %v93
  %v158 = vunpack.c.l.b16 %v94
  %v159 = vunpack.c.l.b16 %v95
  %v160 = vunpack.c.l.b16 %v96
  %v161 = vunpack.c.l.b16 %v97
  %v162 = vunpack.c.l.b16 %v98
  %v163 = vunpack.c.l.b16 %v99
  %v164 = vunpack.c.l.b16 %v100
  %v165 = vunpack.c.l.b16 %v101
  %v166 = vunpack.c.l.b16 %v102
  %v167 = vunpack.c.l.b16 %v103
  %v168 = vunpack.c.l.b16 %v104
  %v169 = vunpack.c.l.b16 %v105
  %v170 = vunpack.c.l.b16 %v106
  %v171 = vunpack.c.l.b16 %v107
  %v172 = vunpack.c.l.b16 %v108
  %v173 = vunpack.c.l.b16 %v109
  %v174 = vunpack.c.l.b16 %v110
  %v175 = vunpack.c.l.b16 %v111
  %v176 = vunpack.c.l.b16 %v112
  %v177 = vunpack.c.l.b16 %v113
  %v178 = vunpack.c.l.b16 %v114
  %v179 = vunpack.c.l.b16 %v115
  %v180 = vunpack.c.l.b16 %v116
  %v181 = vunpack.c.l.b16 %v117
  %v182 = vunpack.c.l.b16 %v118
  %v183 = vunpack.c.l.b16 %v119
  %v184 = vunpack.c.l.b16 %v120
  %v185 = vunpack.c.l.b16 %v121
  %v186 = vpack.c.b16 %v155, %v154
  %v187 = vpack.c.b16 %v157, %v156
  %v188 = vpack.c.b16 %v159, %v158
  %v189 = vpack.c.b16 %v161, %v160
  %v190 = vpack.c.b16 %v163, %v162
  %v191 = vpack.c.b16 %v165, %v164
  %v192 = vpack.c.b16 %v167, %v166
  %v193 = vpack.c.b16 %v169, %v168
  %v194 = vpack.c.b16 %v171, %v170
  %v195 = vpack.c.b16 %v173, %v172
  %v196 = vpack.c.b16 %v175, %v174
  %v197 = vpack.c.b16 %v177, %v176
  %v198 = vpack.c.b16 %v179, %v178
  %v199 = vpack.c.b16 %v181, %v180
  %v200 = vpack.c.b16 %v183, %v182
  %v201 = vpack.c.b16 %v185, %v184
  %218 = vmatpush.bf16.msra.mxu0 %v193
  %219 = vmatpush.bf16.msra.mxu0 %v192
  %220 = vmatpush.bf16.msra.mxu0 %v191
  %221 = vmatpush.bf16.msra.mxu0 %v190
  %222 = vmatpush.bf16.msra.mxu0 %v189
  %223 = vmatpush.bf16.msra.mxu0 %v188
  %224 = vmatpush.bf16.msra.mxu0 %v187
  %225 = vmatpush.bf16.msra.mxu0 %v186
  %226 = vmatmul.bf16.gmra.mxu0 %v86
  %v227 = vpop.f32.mrf.mxu0
  %v228 = vadd.f32 0.0, %v227
  %v229 = vpop.f32.mrf.mxu0
  %v230 = vadd.f32 0.0, %v229
  %231 = vmatmul.bf16.gmra.mxu0 %v88
  %v232 = vpop.f32.mrf.mxu0
  %v233 = vadd.f32 0.0, %v232
  %v234 = vpop.f32.mrf.mxu0
  %v235 = vadd.f32 0.0, %v234
  %236 = vdwg.mxu0
  %237 = vmatpush.bf16.msra.mxu0 %v201
  %238 = vmatpush.bf16.msra.mxu0 %v200
  %239 = vmatpush.bf16.msra.mxu0 %v199
  %240 = vmatpush.bf16.msra.mxu0 %v198
  %241 = vmatpush.bf16.msra.mxu0 %v197
  %242 = vmatpush.bf16.msra.mxu0 %v196
  %243 = vmatpush.bf16.msra.mxu0 %v195
  %244 = vmatpush.bf16.msra.mxu0 %v194
  %245 = vmatmul.bf16.gmra.mxu0 %v87
  %v246 = vpop.f32.mrf.mxu0
  %v247 = vadd.f32 %v228, %v246
  %v248 = vpop.f32.mrf.mxu0
  %v249 = vadd.f32 %v230, %v248
  %250 = vmatmul.bf16.gmra.mxu0 %v89
  %v251 = vpop.f32.mrf.mxu0
  %v252 = vadd.f32 %v233, %v251
  %v253 = vpop.f32.mrf.mxu0
  %v254 = vadd.f32 %v235, %v253
  %255 = vdwg.mxu0
  %256 = vst [vmem:[%s3] sm:$0xff] %v247
  %257 = vst [vmem:[%s3 + $0x8] sm:$0xff] %v249
  %258 = vst [vmem:[%s3 + $0x10] sm:$0xff] %v252
  %259 = vst [vmem:[%s3 + $0x18] sm:$0xff] %v254
  // Predicated region
  $region14: #{espcnet_forward.35} parent=0 // pred_check
    _
  $region15: #{espcnet_forward.35} parent=0 // pred_check_branch
    %261 = sbr.rel (0) target = $region17
  $region16: #{espcnet_forward.35} parent=0 // pred_region
    _
  $region17: #{espcnet_forward.35} parent=0 // pred_fallthru
    _
  // Predicated region
  $region18: #{espcnet_forward.35} parent=0 // pred_check
    _
  $region19: #{espcnet_forward.35} parent=0 // pred_check_branch
    %263 = sbr.rel (0) target = $region21
  $region20: #{espcnet_forward.35} parent=0 // pred_region
    _
  $region21: #{espcnet_forward.35} parent=0 // pred_fallthru
    _

</llo_original>
